<compile_context>
chip_gen: v7x
topology: tpu7x:2x2x1
jax: 0.10.0
libtpu: 0.0.40
codegen_flags: <defaults>
</compile_context>

<pallas_src>
import functools
import math

import jax
import jax.numpy as jnp
from jax.experimental import pallas as pl
from jax.experimental.pallas import tpu as pltpu

BN_EPS = 1e-5


# ---------------------------------------------------------------------------
# In-kernel helpers: zero-boundary shifts and the 3x3 depthwise conv.
# ---------------------------------------------------------------------------
def _shift_down(p):
    """out[i] = p[i-1], out[0] = 0 (outer/row axis: cheap concat)."""
    z = jnp.zeros((1,) + p.shape[1:], p.dtype)
    return jnp.concatenate([z, p[:-1]], axis=0)


def _shift_up(p):
    """out[i] = p[i+1], out[-1] = 0."""
    z = jnp.zeros((1,) + p.shape[1:], p.dtype)
    return jnp.concatenate([p[1:], z], axis=0)


def _shift_right(p):
    """out[:, j] = p[:, j-1], out[:, 0] = 0 (sublane axis)."""
    z = jnp.zeros(p.shape[:1] + (1,) + p.shape[2:], p.dtype)
    return jnp.concatenate([z, p[:, :-1]], axis=1)


def _shift_left(p):
    """out[:, j] = p[:, j+1], out[:, -1] = 0."""
    z = jnp.zeros(p.shape[:1] + (1,) + p.shape[2:], p.dtype)
    return jnp.concatenate([p[:, 1:], z], axis=1)


def _dw3x3(src, w, b, stride):
    """3x3 depthwise conv (padding=1, given stride) on an (H, W, C) f32 value.

    `w` is (9, C) (tap index kh*3+kw), `b` is (1, C); returns (Ho, Wo, C) f32.
    No halo scratch: boundary zeros come from register-level shifted views.
    For stride==2 the nine taps are accumulated directly at the strided output
    positions (phase-selected inputs), so the MAC count is Ho*Wo, not H*W.
    """
    H, W, C = src.shape

    def tap(k):
        return w[k:k + 1, :].reshape(1, 1, C)

    if stride == 2:
        Ho, Wo = H // 2, W // 2
        # Row phases (outer-dim split: cheap).
        r4 = src.reshape(Ho, 2, W, C)
        re = r4[:, 0:1].reshape(Ho, W, C)          # even input rows
        ro = r4[:, 1:2].reshape(Ho, W, C)          # odd input rows

        def col_phases(t):
            t4 = t.reshape(Ho, Wo, 2, C)
            return (t4[:, :, 0:1, :].reshape(Ho, Wo, C),
                    t4[:, :, 1:2, :].reshape(Ho, Wo, C))

        ree, reo = col_phases(re)
        roe, roo = col_phases(ro)
        reo_l = _shift_right(reo)                  # even rows, cols 2*ow-1
        roo_l = _shift_right(roo)                  # odd rows,  cols 2*ow-1
        srcs = (
            (_shift_down(roo_l), _shift_down(roe), _shift_down(roo)),  # kh=0
            (reo_l, ree, reo),                                         # kh=1
            (roo_l, roe, roo),                                         # kh=2
        )
        acc = jnp.zeros((Ho, Wo, C), jnp.float32)
        for kh in range(3):
            for kw in range(3):
                acc = acc + srcs[kh][kw] * tap(kh * 3 + kw)
        return acc + b.reshape(1, 1, C)

    # Full-resolution taps (stride 1, and the stride-3 fallback below).
    col_src = (_shift_right(src), src, _shift_left(src))
    acc = jnp.zeros((H, W, C), jnp.float32)
    for kh in range(3):
        for kw in range(3):
            s = col_src[kw]
            if kh == 0:
                s = _shift_down(s)
            elif kh == 2:
                s = _shift_up(s)
            acc = acc + s * tap(kh * 3 + kw)
    acc = acc + b.reshape(1, 1, C)
    if stride == 1:
        return acc
    # TODO(synk): stride==3 (never used in ShuffleNetV2) keeps the simple
    # full-resolution compute followed by a reshape subsample.
    Ho, Wo = H // stride, W // stride
    acc = acc.reshape(Ho, stride, W, C)[:, 0:1].reshape(Ho, W, C)
    acc = acc.reshape(Ho, Wo, stride, C)[:, :, 0:1, :].reshape(Ho, Wo, C)
    return acc


# ---------------------------------------------------------------------------
# Fused stride>1 kernel: branch1 (dw3x3 s + 1x1 + ReLU) and
# branch2 (1x1 + ReLU -> dw3x3 s -> 1x1 + ReLU), sharing the x block.
# Output block layout: rows [0:Ho] = branch1, rows [Ho:2Ho] = branch2.
# ---------------------------------------------------------------------------
def _fused_downsample_kernel(x_ref, wdw1_ref, bdw1_ref, w1_ref, b1_ref,
                             w21_ref, b21_ref, wdw2_ref, bdw2_ref,
                             w23_ref, b23_ref, o_ref, *, stride):
    _, H, W, Cin = x_ref.shape
    bf = w1_ref.shape[1]
    Ho, Wo = H // stride, W // stride

    x = x_ref[0]                                   # (H, W, Cin) bf16
    xf = x.astype(jnp.float32)

    # branch1: depthwise 3x3 stride s (+BN) -> 1x1 conv (+BN) -> ReLU
    d1 = _dw3x3(xf, wdw1_ref[...], bdw1_ref[...], stride)
    y1 = jnp.dot(d1.reshape(Ho * Wo, Cin).astype(jnp.bfloat16), w1_ref[...],
                 preferred_element_type=jnp.float32)
    y1 = jnp.maximum(y1 + b1_ref[...], 0.0)

    # branch2: 1x1 (+BN) ReLU -> depthwise 3x3 stride s (+BN) -> 1x1 (+BN) ReLU
    h = jnp.dot(x.reshape(H * W, Cin), w21_ref[...],
                preferred_element_type=jnp.float32)
    h = jnp.maximum(h + b21_ref[...], 0.0)
    d2 = _dw3x3(h.reshape(H, W, bf), wdw2_ref[...], bdw2_ref[...], stride)
    y2 = jnp.dot(d2.reshape(Ho * Wo, bf).astype(jnp.bfloat16), w23_ref[...],
                 preferred_element_type=jnp.float32)
    y2 = jnp.maximum(y2 + b23_ref[...], 0.0)

    o_ref[0, 0:Ho] = y1.reshape(Ho, Wo, bf).astype(o_ref.dtype)
    o_ref[0, Ho:2 * Ho] = y2.reshape(Ho, Wo, bf).astype(o_ref.dtype)


# ---------------------------------------------------------------------------
# Fused stride==1 kernel: identity half (channels [0,bf)) passes through,
# branch2 runs on channels [bf, 2bf) (selected in-kernel, no wrapper slice).
# ---------------------------------------------------------------------------
def _fused_unit_kernel(x_ref, w21_ref, b21_ref, wdw2_ref, bdw2_ref,
                       w23_ref, b23_ref, o_ref):
    _, H, W, C = x_ref.shape
    bf = C // 2

    x1 = x_ref[0, :, :, :bf]                       # identity half (bf16)
    x2 = x_ref[0, :, :, bf:]                       # branch2 input (bf16)

    h = jnp.dot(x2.reshape(H * W, bf), w21_ref[...],
                preferred_element_type=jnp.float32)
    h = jnp.maximum(h + b21_ref[...], 0.0)
    d2 = _dw3x3(h.reshape(H, W, bf), wdw2_ref[...], bdw2_ref[...], 1)
    y2 = jnp.dot(d2.reshape(H * W, bf).astype(jnp.bfloat16), w23_ref[...],
                 preferred_element_type=jnp.float32)
    y2 = jnp.maximum(y2 + b23_ref[...], 0.0)

    o_ref[0, 0:H] = x1.astype(o_ref.dtype)
    o_ref[0, H:2 * H] = y2.reshape(H, W, bf).astype(o_ref.dtype)


# ---------------------------------------------------------------------------
# pallas_call wrappers (one launch per block).
# ---------------------------------------------------------------------------
def _weight_spec(arr):
    return pl.BlockSpec(arr.shape, lambda n: (0, 0))


def _call_downsample(x, params, stride):
    N, H, W, Cin = x.shape
    b1p, b2p = params["branch1"], params["branch2"]
    bf = b2p["w1"].shape[1]
    # TODO(synk): odd spatial extents with stride>1 (PyTorch floor-div output
    # size) are not supported by the phase-select subsample.
    assert H % stride == 0 and W % stride == 0
    Ho, Wo = H // stride, W // stride

    flops = 2 * N * (9 * Ho * Wo * Cin + Ho * Wo * Cin * bf
                     + H * W * Cin * bf + 9 * Ho * Wo * bf + Ho * Wo * bf * bf)
    bytes_accessed = (N * H * W * Cin * 2 + N * 2 * Ho * Wo * bf * 2
                      + (9 * Cin + Cin) * 4 + Cin * bf * 2 + bf * 4
                      + Cin * bf * 2 + (9 * bf + 2 * bf) * 4
                      + bf * bf * 2 + bf * 4)

    kernel = functools.partial(_fused_downsample_kernel, stride=stride)
    return pl.pallas_call(
        kernel,
        out_shape=jax.ShapeDtypeStruct((N, 2 * Ho, Wo, bf), jnp.bfloat16),
        grid=(N,),
        in_specs=[
            pl.BlockSpec((1, H, W, Cin), lambda n: (n, 0, 0, 0)),
            _weight_spec(b1p["wdw"]), _weight_spec(b1p["bdw"]),
            _weight_spec(b1p["w"]), _weight_spec(b1p["b"]),
            _weight_spec(b2p["w1"]), _weight_spec(b2p["b1"]),
            _weight_spec(b2p["wdw"]), _weight_spec(b2p["b2"]),
            _weight_spec(b2p["w3"]), _weight_spec(b2p["b3"]),
        ],
        out_specs=pl.BlockSpec((1, 2 * Ho, Wo, bf), lambda n: (n, 0, 0, 0)),
        compiler_params=pltpu.CompilerParams(dimension_semantics=("parallel",)),
        cost_estimate=pl.CostEstimate(flops=flops, transcendentals=0,
                                      bytes_accessed=bytes_accessed),
    )(x, b1p["wdw"], b1p["bdw"], b1p["w"], b1p["b"],
      b2p["w1"], b2p["b1"], b2p["wdw"], b2p["b2"], b2p["w3"], b2p["b3"])


def _call_unit(x, params):
    N, H, W, C = x.shape
    b2p = params["branch2"]
    bf = b2p["w1"].shape[1]

    flops = 2 * N * (2 * H * W * bf * bf + 9 * H * W * bf)
    bytes_accessed = (N * H * W * C * 2 + N * 2 * H * W * bf * 2
                      + 2 * bf * bf * 2 + (9 * bf + 3 * bf) * 4)

    return pl.pallas_call(
        _fused_unit_kernel,
        out_shape=jax.ShapeDtypeStruct((N, 2 * H, W, bf), jnp.bfloat16),
        grid=(N,),
        in_specs=[
            pl.BlockSpec((1, H, W, C), lambda n: (n, 0, 0, 0)),
            _weight_spec(b2p["w1"]), _weight_spec(b2p["b1"]),
            _weight_spec(b2p["wdw"]), _weight_spec(b2p["b2"]),
            _weight_spec(b2p["w3"]), _weight_spec(b2p["b3"]),
        ],
        out_specs=pl.BlockSpec((1, 2 * H, W, bf), lambda n: (n, 0, 0, 0)),
        compiler_params=pltpu.CompilerParams(dimension_semantics=("parallel",)),
        cost_estimate=pl.CostEstimate(flops=flops, transcendentals=0,
                                      bytes_accessed=bytes_accessed),
    )(x, b2p["w1"], b2p["b1"], b2p["wdw"], b2p["b2"], b2p["w3"], b2p["b3"])


# ---------------------------------------------------------------------------
# Module forward (NCHW in / NCHW out), incl. channel_shuffle(groups=2).
# ---------------------------------------------------------------------------
def inverted_residual_forward(x_nchw, params):
    stride = params["stride"]
    # NCHW -> NHWC with the bf16 cast fused into the same XLA pass.
    x = jnp.transpose(x_nchw, (0, 2, 3, 1)).astype(jnp.bfloat16)
    if stride == 1:
        k = _call_unit(x, params)                  # (N, 2*H, W, bf)
    else:
        k = _call_downsample(x, params, stride)    # (N, 2*Ho, Wo, bf)
    N, HH, Wo, bf = k.shape
    Ho = HH // 2
    # cat((b1, b2), dim=C) + channel_shuffle(groups=2) == channel interleave
    # (c = 2*i + branch); realized inside the NHWC->NCHW output transpose.
    k5 = k.reshape(N, 2, Ho, Wo, bf)
    out = jnp.transpose(k5, (0, 4, 1, 2, 3)).reshape(N, 2 * bf, Ho, Wo)
    return out.astype(jnp.float32)


# ---------------------------------------------------------------------------
# Deterministic parameters with eval-mode BatchNorm folded into the convs.
# True channel counts everywhere (no padding to 128).
# ---------------------------------------------------------------------------
def init_params(key, inp, oup, stride):
    if not 1 <= stride <= 3:
        raise ValueError("illegal stride value")
    bf = oup // 2
    assert stride != 1 or inp == (bf << 1)
    ks = jax.random.split(key, 5)

    def bn_fold(c):
        # Eval-mode BN at PyTorch init (gamma=1, beta=0, mean=0, var=1).
        # TODO(synk): training-mode BatchNorm batch statistics not reproduced.
        s = jnp.full((c,), 1.0 / math.sqrt(1.0 + BN_EPS), jnp.float32)
        b = jnp.zeros((c,), jnp.float32)
        return s, b

    def conv1x1(k, cin, cout):
        w = jax.random.normal(k, (cin, cout), jnp.float32) * math.sqrt(2.0 / cin)
        s, b = bn_fold(cout)
        return (w * s[None, :]).astype(jnp.bfloat16), b.reshape(1, cout)

    def dwconv(k, c):
        w = jax.random.normal(k, (9, c), jnp.float32) * math.sqrt(2.0 / 9.0)
        s, b = bn_fold(c)
        return w * s[None, :], b.reshape(1, c)      # f32: depthwise is VPU work

    params = {"stride": stride, "bf": bf}
    if stride > 1:
        wdw1, bdw1 = dwconv(ks[0], inp)
        w1, b1 = conv1x1(ks[1], inp, bf)
        params["branch1"] = {"wdw": wdw1, "bdw": bdw1, "w": w1, "b": b1}
        cin2 = inp
    else:
        params["branch1"] = None
        cin2 = bf
    w21, b21 = conv1x1(ks[2], cin2, bf)
    wdw2, bdw2 = dwconv(ks[3], bf)
    w23, b23 = conv1x1(ks[4], bf, bf)
    params["branch2"] = {"w1": w21, "b1": b21, "wdw": wdw2, "b2": bdw2,
                         "w3": w23, "b3": b23}
    return params


if __name__ == "__main__":
    key = jax.random.PRNGKey(0)
    kx, kp1, kp2 = jax.random.split(key, 3)
    x = jax.random.normal(kx, (2, 32, 16, 16), jnp.float32)       # NCHW

    # stride-2 block (downsample): (2, 32, 16, 16) -> (2, 64, 8, 8)
    p_s2 = init_params(kp1, inp=32, oup=64, stride=2)
    out_s2 = jax.block_until_ready(inverted_residual_forward(x, p_s2))
    assert out_s2.shape == (2, 64, 8, 8), out_s2.shape

    # stride-1 block (identity / split path): (2, 32, 16, 16) -> (2, 32, 16, 16)
    p_s1 = init_params(kp2, inp=32, oup=32, stride=1)
    out_s1 = jax.block_until_ready(inverted_residual_forward(x, p_s1))
    assert out_s1.shape == (2, 32, 16, 16), out_s1.shape

    assert out_s2.dtype == jnp.float32 and out_s1.dtype == jnp.float32
    assert bool(jnp.all(jnp.isfinite(out_s2))) and bool(jnp.all(jnp.isfinite(out_s1)))
    print("KERNEL_OK")
</pallas_src>

<mosaic_0001>
module attributes {stable_mosaic.version = 11 : i64} {
  func.func @_fused_downsample_kernel(%arg0: i32, %arg1: memref<1x16x16x32xbf16, #tpu.memory_space<vmem>>, %arg2: memref<9x32xf32, #tpu.memory_space<vmem>>, %arg3: memref<1x32xf32, #tpu.memory_space<vmem>>, %arg4: memref<32x32xbf16, #tpu.memory_space<vmem>>, %arg5: memref<1x32xf32, #tpu.memory_space<vmem>>, %arg6: memref<32x32xbf16, #tpu.memory_space<vmem>>, %arg7: memref<1x32xf32, #tpu.memory_space<vmem>>, %arg8: memref<9x32xf32, #tpu.memory_space<vmem>>, %arg9: memref<1x32xf32, #tpu.memory_space<vmem>>, %arg10: memref<32x32xbf16, #tpu.memory_space<vmem>>, %arg11: memref<1x32xf32, #tpu.memory_space<vmem>>, %arg12: memref<1x16x8x32xbf16, #tpu.memory_space<vmem>>) attributes {dimension_semantics = [#tpu.dimension_semantics<parallel>], iteration_bounds = array<i64: 2>, scalar_prefetch = 0 : i64, scratch_operands = 0 : i64, tpu.core_type = #tpu.core_type<tc>, window_params = [{transform_indices = @transform_0, window_bounds = array<i64: 1, 16, 16, 32>}, {pipeline_mode = #tpu.pipeline_mode<synchronous>, transform_indices = @transform_1, window_bounds = array<i64: 9, 32>}, {pipeline_mode = #tpu.pipeline_mode<synchronous>, transform_indices = @transform_2, window_bounds = array<i64: 1, 32>}, {pipeline_mode = #tpu.pipeline_mode<synchronous>, transform_indices = @transform_3, window_bounds = array<i64: 32, 32>}, {pipeline_mode = #tpu.pipeline_mode<synchronous>, transform_indices = @transform_4, window_bounds = array<i64: 1, 32>}, {pipeline_mode = #tpu.pipeline_mode<synchronous>, transform_indices = @transform_5, window_bounds = array<i64: 32, 32>}, {pipeline_mode = #tpu.pipeline_mode<synchronous>, transform_indices = @transform_6, window_bounds = array<i64: 1, 32>}, {pipeline_mode = #tpu.pipeline_mode<synchronous>, transform_indices = @transform_7, window_bounds = array<i64: 9, 32>}, {pipeline_mode = #tpu.pipeline_mode<synchronous>, transform_indices = @transform_8, window_bounds = array<i64: 1, 32>}, {pipeline_mode = #tpu.pipeline_mode<synchronous>, transform_indices = @transform_9, window_bounds = array<i64: 32, 32>}, {pipeline_mode = #tpu.pipeline_mode<synchronous>, transform_indices = @transform_10, window_bounds = array<i64: 1, 32>}, {transform_indices = @transform_11, window_bounds = array<i64: 1, 16, 8, 32>}]} {
    %c0 = arith.constant 0 : index
    %c0_0 = arith.constant 0 : index
    %c0_1 = arith.constant 0 : index
    %c0_2 = arith.constant 0 : index
    %0 = vector.load %arg1[%c0, %c0_0, %c0_1, %c0_2] : memref<1x16x16x32xbf16, #tpu.memory_space<vmem>>, vector<1x16x16x32xbf16>
    %1 = vector.shape_cast %0 : vector<1x16x16x32xbf16> to vector<16x16x32xbf16>
    %2 = arith.extf %1 : vector<16x16x32xbf16> to vector<16x16x32xf32>
    %c0_3 = arith.constant 0 : index
    %c0_4 = arith.constant 0 : index
    %3 = vector.load %arg2[%c0_3, %c0_4] : memref<9x32xf32, #tpu.memory_space<vmem>>, vector<9x32xf32>
    %c0_5 = arith.constant 0 : index
    %c0_6 = arith.constant 0 : index
    %4 = vector.load %arg3[%c0_5, %c0_6] : memref<1x32xf32, #tpu.memory_space<vmem>>, vector<1x32xf32>
    %5 = vector.shape_cast %2 : vector<16x16x32xf32> to vector<8x2x16x32xf32>
    %6 = vector.extract_strided_slice %5 {offsets = [0, 0, 0, 0], sizes = [8, 1, 16, 32], strides = [1, 1, 1, 1]} : vector<8x2x16x32xf32> to vector<8x1x16x32xf32>
    %7 = vector.shape_cast %6 : vector<8x1x16x32xf32> to vector<8x16x32xf32>
    %8 = vector.extract_strided_slice %5 {offsets = [0, 1, 0, 0], sizes = [8, 1, 16, 32], strides = [1, 1, 1, 1]} : vector<8x2x16x32xf32> to vector<8x1x16x32xf32>
    %9 = vector.shape_cast %8 : vector<8x1x16x32xf32> to vector<8x16x32xf32>
    %10 = vector.shape_cast %7 : vector<8x16x32xf32> to vector<8x8x2x32xf32>
    %11 = vector.extract_strided_slice %10 {offsets = [0, 0, 0, 0], sizes = [8, 8, 1, 32], strides = [1, 1, 1, 1]} : vector<8x8x2x32xf32> to vector<8x8x1x32xf32>
    %12 = vector.shape_cast %11 : vector<8x8x1x32xf32> to vector<8x8x32xf32>
    %13 = vector.extract_strided_slice %10 {offsets = [0, 0, 1, 0], sizes = [8, 8, 1, 32], strides = [1, 1, 1, 1]} : vector<8x8x2x32xf32> to vector<8x8x1x32xf32>
    %14 = vector.shape_cast %13 : vector<8x8x1x32xf32> to vector<8x8x32xf32>
    %15 = vector.shape_cast %9 : vector<8x16x32xf32> to vector<8x8x2x32xf32>
    %16 = vector.extract_strided_slice %15 {offsets = [0, 0, 0, 0], sizes = [8, 8, 1, 32], strides = [1, 1, 1, 1]} : vector<8x8x2x32xf32> to vector<8x8x1x32xf32>
    %17 = vector.shape_cast %16 : vector<8x8x1x32xf32> to vector<8x8x32xf32>
    %18 = vector.extract_strided_slice %15 {offsets = [0, 0, 1, 0], sizes = [8, 8, 1, 32], strides = [1, 1, 1, 1]} : vector<8x8x2x32xf32> to vector<8x8x1x32xf32>
    %19 = vector.shape_cast %18 : vector<8x8x1x32xf32> to vector<8x8x32xf32>
    %cst = arith.constant 0.000000e+00 : f32
    %20 = vector.broadcast %cst : f32 to vector<8x1x32xf32>
    %21 = vector.extract_strided_slice %14 {offsets = [0, 0, 0], sizes = [8, 7, 32], strides = [1, 1, 1]} : vector<8x8x32xf32> to vector<8x7x32xf32>
    %22 = tpu.concatenate %20, %21 in 1 : vector<8x1x32xf32>, vector<8x7x32xf32> -> vector<8x8x32xf32>
    %cst_7 = arith.constant 0.000000e+00 : f32
    %23 = vector.broadcast %cst_7 : f32 to vector<8x1x32xf32>
    %24 = vector.extract_strided_slice %19 {offsets = [0, 0, 0], sizes = [8, 7, 32], strides = [1, 1, 1]} : vector<8x8x32xf32> to vector<8x7x32xf32>
    %25 = tpu.concatenate %23, %24 in 1 : vector<8x1x32xf32>, vector<8x7x32xf32> -> vector<8x8x32xf32>
    %cst_8 = arith.constant 0.000000e+00 : f32
    %26 = vector.broadcast %cst_8 : f32 to vector<1x8x32xf32>
    %27 = vector.extract_strided_slice %25 {offsets = [0, 0, 0], sizes = [7, 8, 32], strides = [1, 1, 1]} : vector<8x8x32xf32> to vector<7x8x32xf32>
    %28 = tpu.concatenate %26, %27 in 0 : vector<1x8x32xf32>, vector<7x8x32xf32> -> vector<8x8x32xf32>
    %cst_9 = arith.constant 0.000000e+00 : f32
    %29 = vector.broadcast %cst_9 : f32 to vector<1x8x32xf32>
    %30 = vector.extract_strided_slice %17 {offsets = [0, 0, 0], sizes = [7, 8, 32], strides = [1, 1, 1]} : vector<8x8x32xf32> to vector<7x8x32xf32>
    %31 = tpu.concatenate %29, %30 in 0 : vector<1x8x32xf32>, vector<7x8x32xf32> -> vector<8x8x32xf32>
    %cst_10 = arith.constant 0.000000e+00 : f32
    %32 = vector.broadcast %cst_10 : f32 to vector<1x8x32xf32>
    %33 = vector.extract_strided_slice %19 {offsets = [0, 0, 0], sizes = [7, 8, 32], strides = [1, 1, 1]} : vector<8x8x32xf32> to vector<7x8x32xf32>
    %34 = tpu.concatenate %32, %33 in 0 : vector<1x8x32xf32>, vector<7x8x32xf32> -> vector<8x8x32xf32>
    %cst_11 = arith.constant 0.000000e+00 : f32
    %35 = vector.broadcast %cst_11 : f32 to vector<8x8x32xf32>
    %36 = vector.extract_strided_slice %3 {offsets = [0, 0], sizes = [1, 32], strides = [1, 1]} : vector<9x32xf32> to vector<1x32xf32>
    %37 = vector.shape_cast %36 : vector<1x32xf32> to vector<1x1x32xf32>
    %38 = vector.broadcast %37 : vector<1x1x32xf32> to vector<8x8x32xf32>
    %39 = arith.mulf %28, %38 : vector<8x8x32xf32>
    %40 = arith.addf %35, %39 : vector<8x8x32xf32>
    %41 = vector.extract_strided_slice %3 {offsets = [1, 0], sizes = [1, 32], strides = [1, 1]} : vector<9x32xf32> to vector<1x32xf32>
    %42 = vector.shape_cast %41 : vector<1x32xf32> to vector<1x1x32xf32>
    %43 = vector.broadcast %42 : vector<1x1x32xf32> to vector<8x8x32xf32>
    %44 = arith.mulf %31, %43 : vector<8x8x32xf32>
    %45 = arith.addf %40, %44 : vector<8x8x32xf32>
    %46 = vector.extract_strided_slice %3 {offsets = [2, 0], sizes = [1, 32], strides = [1, 1]} : vector<9x32xf32> to vector<1x32xf32>
    %47 = vector.shape_cast %46 : vector<1x32xf32> to vector<1x1x32xf32>
    %48 = vector.broadcast %47 : vector<1x1x32xf32> to vector<8x8x32xf32>
    %49 = arith.mulf %34, %48 : vector<8x8x32xf32>
    %50 = arith.addf %45, %49 : vector<8x8x32xf32>
    %51 = vector.extract_strided_slice %3 {offsets = [3, 0], sizes = [1, 32], strides = [1, 1]} : vector<9x32xf32> to vector<1x32xf32>
    %52 = vector.shape_cast %51 : vector<1x32xf32> to vector<1x1x32xf32>
    %53 = vector.broadcast %52 : vector<1x1x32xf32> to vector<8x8x32xf32>
    %54 = arith.mulf %22, %53 : vector<8x8x32xf32>
    %55 = arith.addf %50, %54 : vector<8x8x32xf32>
    %56 = vector.extract_strided_slice %3 {offsets = [4, 0], sizes = [1, 32], strides = [1, 1]} : vector<9x32xf32> to vector<1x32xf32>
    %57 = vector.shape_cast %56 : vector<1x32xf32> to vector<1x1x32xf32>
    %58 = vector.broadcast %57 : vector<1x1x32xf32> to vector<8x8x32xf32>
    %59 = arith.mulf %12, %58 : vector<8x8x32xf32>
    %60 = arith.addf %55, %59 : vector<8x8x32xf32>
    %61 = vector.extract_strided_slice %3 {offsets = [5, 0], sizes = [1, 32], strides = [1, 1]} : vector<9x32xf32> to vector<1x32xf32>
    %62 = vector.shape_cast %61 : vector<1x32xf32> to vector<1x1x32xf32>
    %63 = vector.broadcast %62 : vector<1x1x32xf32> to vector<8x8x32xf32>
    %64 = arith.mulf %14, %63 : vector<8x8x32xf32>
    %65 = arith.addf %60, %64 : vector<8x8x32xf32>
    %66 = vector.extract_strided_slice %3 {offsets = [6, 0], sizes = [1, 32], strides = [1, 1]} : vector<9x32xf32> to vector<1x32xf32>
    %67 = vector.shape_cast %66 : vector<1x32xf32> to vector<1x1x32xf32>
    %68 = vector.broadcast %67 : vector<1x1x32xf32> to vector<8x8x32xf32>
    %69 = arith.mulf %25, %68 : vector<8x8x32xf32>
    %70 = arith.addf %65, %69 : vector<8x8x32xf32>
    %71 = vector.extract_strided_slice %3 {offsets = [7, 0], sizes = [1, 32], strides = [1, 1]} : vector<9x32xf32> to vector<1x32xf32>
    %72 = vector.shape_cast %71 : vector<1x32xf32> to vector<1x1x32xf32>
    %73 = vector.broadcast %72 : vector<1x1x32xf32> to vector<8x8x32xf32>
    %74 = arith.mulf %17, %73 : vector<8x8x32xf32>
    %75 = arith.addf %70, %74 : vector<8x8x32xf32>
    %76 = vector.extract_strided_slice %3 {offsets = [8, 0], sizes = [1, 32], strides = [1, 1]} : vector<9x32xf32> to vector<1x32xf32>
    %77 = vector.shape_cast %76 : vector<1x32xf32> to vector<1x1x32xf32>
    %78 = vector.broadcast %77 : vector<1x1x32xf32> to vector<8x8x32xf32>
    %79 = arith.mulf %19, %78 : vector<8x8x32xf32>
    %80 = arith.addf %75, %79 : vector<8x8x32xf32>
    %81 = vector.shape_cast %4 : vector<1x32xf32> to vector<1x1x32xf32>
    %82 = vector.broadcast %81 : vector<1x1x32xf32> to vector<8x8x32xf32>
    %83 = arith.addf %80, %82 : vector<8x8x32xf32>
    %84 = vector.shape_cast %83 : vector<8x8x32xf32> to vector<64x32xf32>
    %85 = arith.truncf %84 : vector<64x32xf32> to vector<64x32xbf16>
    %c0_12 = arith.constant 0 : index
    %c0_13 = arith.constant 0 : index
    %86 = vector.load %arg4[%c0_12, %c0_13] : memref<32x32xbf16, #tpu.memory_space<vmem>>, vector<32x32xbf16>
    %cst_14 = arith.constant dense<0.000000e+00> : vector<64x32xf32>
    %87 = tpu.matmul %85, %86, %cst_14 {dimension_numbers = #tpu.dot_dimension_numbers<[1], [0], [0], [1], [0, 0, 1, 1], [], []>} : vector<64x32xbf16>, vector<32x32xbf16>, vector<64x32xf32> -> vector<64x32xf32>
    %c0_15 = arith.constant 0 : index
    %c0_16 = arith.constant 0 : index
    %88 = vector.load %arg5[%c0_15, %c0_16] : memref<1x32xf32, #tpu.memory_space<vmem>>, vector<1x32xf32>
    %89 = vector.broadcast %88 : vector<1x32xf32> to vector<64x32xf32>
    %90 = arith.addf %87, %89 : vector<64x32xf32>
    %cst_17 = arith.constant 0.000000e+00 : f32
    %91 = vector.broadcast %cst_17 : f32 to vector<64x32xf32>
    %92 = arith.maximumf %90, %91 : vector<64x32xf32>
    %93 = vector.shape_cast %1 : vector<16x16x32xbf16> to vector<256x32xbf16>
    %c0_18 = arith.constant 0 : index
    %c0_19 = arith.constant 0 : index
    %94 = vector.load %arg6[%c0_18, %c0_19] : memref<32x32xbf16, #tpu.memory_space<vmem>>, vector<32x32xbf16>
    %cst_20 = arith.constant dense<0.000000e+00> : vector<256x32xf32>
    %95 = tpu.matmul %93, %94, %cst_20 {dimension_numbers = #tpu.dot_dimension_numbers<[1], [0], [0], [1], [0, 0, 1, 1], [], []>} : vector<256x32xbf16>, vector<32x32xbf16>, vector<256x32xf32> -> vector<256x32xf32>
    %c0_21 = arith.constant 0 : index
    %c0_22 = arith.constant 0 : index
    %96 = vector.load %arg7[%c0_21, %c0_22] : memref<1x32xf32, #tpu.memory_space<vmem>>, vector<1x32xf32>
    %97 = vector.broadcast %96 : vector<1x32xf32> to vector<256x32xf32>
    %98 = arith.addf %95, %97 : vector<256x32xf32>
    %cst_23 = arith.constant 0.000000e+00 : f32
    %99 = vector.broadcast %cst_23 : f32 to vector<256x32xf32>
    %100 = arith.maximumf %98, %99 : vector<256x32xf32>
    %101 = vector.shape_cast %100 : vector<256x32xf32> to vector<16x16x32xf32>
    %c0_24 = arith.constant 0 : index
    %c0_25 = arith.constant 0 : index
    %102 = vector.load %arg8[%c0_24, %c0_25] : memref<9x32xf32, #tpu.memory_space<vmem>>, vector<9x32xf32>
    %c0_26 = arith.constant 0 : index
    %c0_27 = arith.constant 0 : index
    %103 = vector.load %arg9[%c0_26, %c0_27] : memref<1x32xf32, #tpu.memory_space<vmem>>, vector<1x32xf32>
    %104 = vector.shape_cast %101 : vector<16x16x32xf32> to vector<8x2x16x32xf32>
    %105 = vector.extract_strided_slice %104 {offsets = [0, 0, 0, 0], sizes = [8, 1, 16, 32], strides = [1, 1, 1, 1]} : vector<8x2x16x32xf32> to vector<8x1x16x32xf32>
    %106 = vector.shape_cast %105 : vector<8x1x16x32xf32> to vector<8x16x32xf32>
    %107 = vector.extract_strided_slice %104 {offsets = [0, 1, 0, 0], sizes = [8, 1, 16, 32], strides = [1, 1, 1, 1]} : vector<8x2x16x32xf32> to vector<8x1x16x32xf32>
    %108 = vector.shape_cast %107 : vector<8x1x16x32xf32> to vector<8x16x32xf32>
    %109 = vector.shape_cast %106 : vector<8x16x32xf32> to vector<8x8x2x32xf32>
    %110 = vector.extract_strided_slice %109 {offsets = [0, 0, 0, 0], sizes = [8, 8, 1, 32], strides = [1, 1, 1, 1]} : vector<8x8x2x32xf32> to vector<8x8x1x32xf32>
    %111 = vector.shape_cast %110 : vector<8x8x1x32xf32> to vector<8x8x32xf32>
    %112 = vector.extract_strided_slice %109 {offsets = [0, 0, 1, 0], sizes = [8, 8, 1, 32], strides = [1, 1, 1, 1]} : vector<8x8x2x32xf32> to vector<8x8x1x32xf32>
    %113 = vector.shape_cast %112 : vector<8x8x1x32xf32> to vector<8x8x32xf32>
    %114 = vector.shape_cast %108 : vector<8x16x32xf32> to vector<8x8x2x32xf32>
    %115 = vector.extract_strided_slice %114 {offsets = [0, 0, 0, 0], sizes = [8, 8, 1, 32], strides = [1, 1, 1, 1]} : vector<8x8x2x32xf32> to vector<8x8x1x32xf32>
    %116 = vector.shape_cast %115 : vector<8x8x1x32xf32> to vector<8x8x32xf32>
    %117 = vector.extract_strided_slice %114 {offsets = [0, 0, 1, 0], sizes = [8, 8, 1, 32], strides = [1, 1, 1, 1]} : vector<8x8x2x32xf32> to vector<8x8x1x32xf32>
    %118 = vector.shape_cast %117 : vector<8x8x1x32xf32> to vector<8x8x32xf32>
    %cst_28 = arith.constant 0.000000e+00 : f32
    %119 = vector.broadcast %cst_28 : f32 to vector<8x1x32xf32>
    %120 = vector.extract_strided_slice %113 {offsets = [0, 0, 0], sizes = [8, 7, 32], strides = [1, 1, 1]} : vector<8x8x32xf32> to vector<8x7x32xf32>
    %121 = tpu.concatenate %119, %120 in 1 : vector<8x1x32xf32>, vector<8x7x32xf32> -> vector<8x8x32xf32>
    %cst_29 = arith.constant 0.000000e+00 : f32
    %122 = vector.broadcast %cst_29 : f32 to vector<8x1x32xf32>
    %123 = vector.extract_strided_slice %118 {offsets = [0, 0, 0], sizes = [8, 7, 32], strides = [1, 1, 1]} : vector<8x8x32xf32> to vector<8x7x32xf32>
    %124 = tpu.concatenate %122, %123 in 1 : vector<8x1x32xf32>, vector<8x7x32xf32> -> vector<8x8x32xf32>
    %cst_30 = arith.constant 0.000000e+00 : f32
    %125 = vector.broadcast %cst_30 : f32 to vector<1x8x32xf32>
    %126 = vector.extract_strided_slice %124 {offsets = [0, 0, 0], sizes = [7, 8, 32], strides = [1, 1, 1]} : vector<8x8x32xf32> to vector<7x8x32xf32>
    %127 = tpu.concatenate %125, %126 in 0 : vector<1x8x32xf32>, vector<7x8x32xf32> -> vector<8x8x32xf32>
    %cst_31 = arith.constant 0.000000e+00 : f32
    %128 = vector.broadcast %cst_31 : f32 to vector<1x8x32xf32>
    %129 = vector.extract_strided_slice %116 {offsets = [0, 0, 0], sizes = [7, 8, 32], strides = [1, 1, 1]} : vector<8x8x32xf32> to vector<7x8x32xf32>
    %130 = tpu.concatenate %128, %129 in 0 : vector<1x8x32xf32>, vector<7x8x32xf32> -> vector<8x8x32xf32>
    %cst_32 = arith.constant 0.000000e+00 : f32
    %131 = vector.broadcast %cst_32 : f32 to vector<1x8x32xf32>
    %132 = vector.extract_strided_slice %118 {offsets = [0, 0, 0], sizes = [7, 8, 32], strides = [1, 1, 1]} : vector<8x8x32xf32> to vector<7x8x32xf32>
    %133 = tpu.concatenate %131, %132 in 0 : vector<1x8x32xf32>, vector<7x8x32xf32> -> vector<8x8x32xf32>
    %cst_33 = arith.constant 0.000000e+00 : f32
    %134 = vector.broadcast %cst_33 : f32 to vector<8x8x32xf32>
    %135 = vector.extract_strided_slice %102 {offsets = [0, 0], sizes = [1, 32], strides = [1, 1]} : vector<9x32xf32> to vector<1x32xf32>
    %136 = vector.shape_cast %135 : vector<1x32xf32> to vector<1x1x32xf32>
    %137 = vector.broadcast %136 : vector<1x1x32xf32> to vector<8x8x32xf32>
    %138 = arith.mulf %127, %137 : vector<8x8x32xf32>
    %139 = arith.addf %134, %138 : vector<8x8x32xf32>
    %140 = vector.extract_strided_slice %102 {offsets = [1, 0], sizes = [1, 32], strides = [1, 1]} : vector<9x32xf32> to vector<1x32xf32>
    %141 = vector.shape_cast %140 : vector<1x32xf32> to vector<1x1x32xf32>
    %142 = vector.broadcast %141 : vector<1x1x32xf32> to vector<8x8x32xf32>
    %143 = arith.mulf %130, %142 : vector<8x8x32xf32>
    %144 = arith.addf %139, %143 : vector<8x8x32xf32>
    %145 = vector.extract_strided_slice %102 {offsets = [2, 0], sizes = [1, 32], strides = [1, 1]} : vector<9x32xf32> to vector<1x32xf32>
    %146 = vector.shape_cast %145 : vector<1x32xf32> to vector<1x1x32xf32>
    %147 = vector.broadcast %146 : vector<1x1x32xf32> to vector<8x8x32xf32>
    %148 = arith.mulf %133, %147 : vector<8x8x32xf32>
    %149 = arith.addf %144, %148 : vector<8x8x32xf32>
    %150 = vector.extract_strided_slice %102 {offsets = [3, 0], sizes = [1, 32], strides = [1, 1]} : vector<9x32xf32> to vector<1x32xf32>
    %151 = vector.shape_cast %150 : vector<1x32xf32> to vector<1x1x32xf32>
    %152 = vector.broadcast %151 : vector<1x1x32xf32> to vector<8x8x32xf32>
    %153 = arith.mulf %121, %152 : vector<8x8x32xf32>
    %154 = arith.addf %149, %153 : vector<8x8x32xf32>
    %155 = vector.extract_strided_slice %102 {offsets = [4, 0], sizes = [1, 32], strides = [1, 1]} : vector<9x32xf32> to vector<1x32xf32>
    %156 = vector.shape_cast %155 : vector<1x32xf32> to vector<1x1x32xf32>
    %157 = vector.broadcast %156 : vector<1x1x32xf32> to vector<8x8x32xf32>
    %158 = arith.mulf %111, %157 : vector<8x8x32xf32>
    %159 = arith.addf %154, %158 : vector<8x8x32xf32>
    %160 = vector.extract_strided_slice %102 {offsets = [5, 0], sizes = [1, 32], strides = [1, 1]} : vector<9x32xf32> to vector<1x32xf32>
    %161 = vector.shape_cast %160 : vector<1x32xf32> to vector<1x1x32xf32>
    %162 = vector.broadcast %161 : vector<1x1x32xf32> to vector<8x8x32xf32>
    %163 = arith.mulf %113, %162 : vector<8x8x32xf32>
    %164 = arith.addf %159, %163 : vector<8x8x32xf32>
    %165 = vector.extract_strided_slice %102 {offsets = [6, 0], sizes = [1, 32], strides = [1, 1]} : vector<9x32xf32> to vector<1x32xf32>
    %166 = vector.shape_cast %165 : vector<1x32xf32> to vector<1x1x32xf32>
    %167 = vector.broadcast %166 : vector<1x1x32xf32> to vector<8x8x32xf32>
    %168 = arith.mulf %124, %167 : vector<8x8x32xf32>
    %169 = arith.addf %164, %168 : vector<8x8x32xf32>
    %170 = vector.extract_strided_slice %102 {offsets = [7, 0], sizes = [1, 32], strides = [1, 1]} : vector<9x32xf32> to vector<1x32xf32>
    %171 = vector.shape_cast %170 : vector<1x32xf32> to vector<1x1x32xf32>
    %172 = vector.broadcast %171 : vector<1x1x32xf32> to vector<8x8x32xf32>
    %173 = arith.mulf %116, %172 : vector<8x8x32xf32>
    %174 = arith.addf %169, %173 : vector<8x8x32xf32>
    %175 = vector.extract_strided_slice %102 {offsets = [8, 0], sizes = [1, 32], strides = [1, 1]} : vector<9x32xf32> to vector<1x32xf32>
    %176 = vector.shape_cast %175 : vector<1x32xf32> to vector<1x1x32xf32>
    %177 = vector.broadcast %176 : vector<1x1x32xf32> to vector<8x8x32xf32>
    %178 = arith.mulf %118, %177 : vector<8x8x32xf32>
    %179 = arith.addf %174, %178 : vector<8x8x32xf32>
    %180 = vector.shape_cast %103 : vector<1x32xf32> to vector<1x1x32xf32>
    %181 = vector.broadcast %180 : vector<1x1x32xf32> to vector<8x8x32xf32>
    %182 = arith.addf %179, %181 : vector<8x8x32xf32>
    %183 = vector.shape_cast %182 : vector<8x8x32xf32> to vector<64x32xf32>
    %184 = arith.truncf %183 : vector<64x32xf32> to vector<64x32xbf16>
    %c0_34 = arith.constant 0 : index
    %c0_35 = arith.constant 0 : index
    %185 = vector.load %arg10[%c0_34, %c0_35] : memref<32x32xbf16, #tpu.memory_space<vmem>>, vector<32x32xbf16>
    %cst_36 = arith.constant dense<0.000000e+00> : vector<64x32xf32>
    %186 = tpu.matmul %184, %185, %cst_36 {dimension_numbers = #tpu.dot_dimension_numbers<[1], [0], [0], [1], [0, 0, 1, 1], [], []>} : vector<64x32xbf16>, vector<32x32xbf16>, vector<64x32xf32> -> vector<64x32xf32>
    %c0_37 = arith.constant 0 : index
    %c0_38 = arith.constant 0 : index
    %187 = vector.load %arg11[%c0_37, %c0_38] : memref<1x32xf32, #tpu.memory_space<vmem>>, vector<1x32xf32>
    %188 = vector.broadcast %187 : vector<1x32xf32> to vector<64x32xf32>
    %189 = arith.addf %186, %188 : vector<64x32xf32>
    %cst_39 = arith.constant 0.000000e+00 : f32
    %190 = vector.broadcast %cst_39 : f32 to vector<64x32xf32>
    %191 = arith.maximumf %189, %190 : vector<64x32xf32>
    %192 = vector.shape_cast %92 : vector<64x32xf32> to vector<8x8x32xf32>
    %193 = arith.truncf %192 : vector<8x8x32xf32> to vector<8x8x32xbf16>
    %c0_40 = arith.constant 0 : index
    %c0_41 = arith.constant 0 : index
    %c0_42 = arith.constant 0 : index
    %c0_43 = arith.constant 0 : index
    %194 = vector.load %arg12[%c0_40, %c0_41, %c0_42, %c0_43] : memref<1x16x8x32xbf16, #tpu.memory_space<vmem>>, vector<1x8x8x32xbf16>
    %195 = vector.shape_cast %194 : vector<1x8x8x32xbf16> to vector<8x8x32xbf16>
    %196 = vector.shape_cast %193 : vector<8x8x32xbf16> to vector<1x8x8x32xbf16>
    tpu.vector_store %arg12[%c0_40, %c0_41, %c0_42, %c0_43], %196 {strides = array<i32>} : memref<1x16x8x32xbf16, #tpu.memory_space<vmem>>, vector<1x8x8x32xbf16>,
    %197 = vector.shape_cast %191 : vector<64x32xf32> to vector<8x8x32xf32>
    %198 = arith.truncf %197 : vector<8x8x32xf32> to vector<8x8x32xbf16>
    %c0_44 = arith.constant 0 : index
    %c8 = arith.constant 8 : index
    %c0_45 = arith.constant 0 : index
    %c0_46 = arith.constant 0 : index
    %199 = vector.load %arg12[%c0_44, %c8, %c0_45, %c0_46] : memref<1x16x8x32xbf16, #tpu.memory_space<vmem>>, vector<1x8x8x32xbf16>
    %200 = vector.shape_cast %199 : vector<1x8x8x32xbf16> to vector<8x8x32xbf16>
    %201 = vector.shape_cast %198 : vector<8x8x32xbf16> to vector<1x8x8x32xbf16>
    tpu.vector_store %arg12[%c0_44, %c8, %c0_45, %c0_46], %201 {strides = array<i32>} : memref<1x16x8x32xbf16, #tpu.memory_space<vmem>>, vector<1x8x8x32xbf16>,
    return
  }
  func.func @transform_0(%arg0: i32) -> (i32, i32, i32, i32) {
    %c0_i32 = arith.constant 0 : i32
    %c0_i32_0 = arith.constant 0 : i32
    %c0_i32_1 = arith.constant 0 : i32
    %c0_i32_2 = arith.constant 0 : i32
    return %arg0, %c0_i32, %c0_i32_0, %c0_i32_1 : i32, i32, i32, i32
  }
  func.func @transform_1(%arg0: i32) -> (i32, i32) {
    %c0_i32 = arith.constant 0 : i32
    %c0_i32_0 = arith.constant 0 : i32
    %c0_i32_1 = arith.constant 0 : i32
    return %c0_i32, %c0_i32_0 : i32, i32
  }
  func.func @transform_2(%arg0: i32) -> (i32, i32) {
    %c0_i32 = arith.constant 0 : i32
    %c0_i32_0 = arith.constant 0 : i32
    %c0_i32_1 = arith.constant 0 : i32
    return %c0_i32, %c0_i32_0 : i32, i32
  }
  func.func @transform_3(%arg0: i32) -> (i32, i32) {
    %c0_i32 = arith.constant 0 : i32
    %c0_i32_0 = arith.constant 0 : i32
    %c0_i32_1 = arith.constant 0 : i32
    return %c0_i32, %c0_i32_0 : i32, i32
  }
  func.func @transform_4(%arg0: i32) -> (i32, i32) {
    %c0_i32 = arith.constant 0 : i32
    %c0_i32_0 = arith.constant 0 : i32
    %c0_i32_1 = arith.constant 0 : i32
    return %c0_i32, %c0_i32_0 : i32, i32
  }
  func.func @transform_5(%arg0: i32) -> (i32, i32) {
    %c0_i32 = arith.constant 0 : i32
    %c0_i32_0 = arith.constant 0 : i32
    %c0_i32_1 = arith.constant 0 : i32
    return %c0_i32, %c0_i32_0 : i32, i32
  }
  func.func @transform_6(%arg0: i32) -> (i32, i32) {
    %c0_i32 = arith.constant 0 : i32
    %c0_i32_0 = arith.constant 0 : i32
    %c0_i32_1 = arith.constant 0 : i32
    return %c0_i32, %c0_i32_0 : i32, i32
  }
  func.func @transform_7(%arg0: i32) -> (i32, i32) {
    %c0_i32 = arith.constant 0 : i32
    %c0_i32_0 = arith.constant 0 : i32
    %c0_i32_1 = arith.constant 0 : i32
    return %c0_i32, %c0_i32_0 : i32, i32
  }
  func.func @transform_8(%arg0: i32) -> (i32, i32) {
    %c0_i32 = arith.constant 0 : i32
    %c0_i32_0 = arith.constant 0 : i32
    %c0_i32_1 = arith.constant 0 : i32
    return %c0_i32, %c0_i32_0 : i32, i32
  }
  func.func @transform_9(%arg0: i32) -> (i32, i32) {
    %c0_i32 = arith.constant 0 : i32
    %c0_i32_0 = arith.constant 0 : i32
    %c0_i32_1 = arith.constant 0 : i32
    return %c0_i32, %c0_i32_0 : i32, i32
  }
  func.func @transform_10(%arg0: i32) -> (i32, i32) {
    %c0_i32 = arith.constant 0 : i32
    %c0_i32_0 = arith.constant 0 : i32
    %c0_i32_1 = arith.constant 0 : i32
    return %c0_i32, %c0_i32_0 : i32, i32
  }
  func.func @transform_11(%arg0: i32) -> (i32, i32, i32, i32) {
    %c0_i32 = arith.constant 0 : i32
    %c0_i32_0 = arith.constant 0 : i32
    %c0_i32_1 = arith.constant 0 : i32
    %c0_i32_2 = arith.constant 0 : i32
    return %arg0, %c0_i32, %c0_i32_0, %c0_i32_1 : i32, i32, i32, i32
  }
}

</mosaic_0001>

<llo_original>
// kernel: tpu_custom_call.1
$region0: #{tpu_custom_call.1}
  #allocation0 [shape = 'u32[]', space=smem, size = 0x4, offset = 0x4, fixed_abs, tag = 'smem constant byte address 0x4 - core index']
  #allocation1 [shape = 'u32[144,128]{1,0:T(1,128)}', space=vmem, size = 0x12000, scoped, tag = 'internal scratch']
  %s0 = inlined_call_operand.hbm [shape: bf16[2,16,16,32], index: 0, kind: input, shape index: {}]
  %s1 = inlined_call_operand.hbm [shape: f32[9,32], index: 1, kind: input, shape index: {}]
  %s2 = inlined_call_operand.vmem [shape: f32[1,32], index: 2, kind: input, shape index: {}]
  %s3 = inlined_call_operand.hbm [shape: bf16[32,32], index: 3, kind: input, shape index: {}]
  %s4 = inlined_call_operand.vmem [shape: f32[1,32], index: 4, kind: input, shape index: {}]
  %s5 = inlined_call_operand.vmem [shape: bf16[32,32], index: 5, kind: input, shape index: {}]
  %s6 = inlined_call_operand.hbm [shape: f32[1,32], index: 6, kind: input, shape index: {}]
  %s7 = inlined_call_operand.hbm [shape: f32[9,32], index: 7, kind: input, shape index: {}]
  %s8 = inlined_call_operand.hbm [shape: f32[1,32], index: 8, kind: input, shape index: {}]
  %s9 = inlined_call_operand.vmem [shape: bf16[32,32], index: 9, kind: input, shape index: {}]
  %s10 = inlined_call_operand.vmem [shape: f32[1,32], index: 10, kind: input, shape index: {}]
  %s11 = inlined_call_operand.hbm [shape: bf16[2,16,8,32], index: 11, kind: output, shape index: {}]
  %s12 = sld [smem:[#allocation0]]
  $region101: #{tpu_custom_call.1} parent=0
    _
  %s14 = ssub.s32 1, %s12
  %s15 = scalar_select 0, %s14, %s12
  $region1: #{tpu_custom_call.1} parent=0
    #allocation2 [shape = 'u8[131072]{0}', space=vmem, size = 0x20000, scoped, tag = 'input window, operand 0']
    #allocation3 [shape = 's32[2]{0}', space=sflag, size = 0x8, scoped, tag = 'scoped memory for tpu_custom_call.1']
    #allocation4 [shape = 's32[2]{0}', space=sflag, size = 0x8, scoped, tag = 'scoped memory for tpu_custom_call.1']
    #allocation5 [shape = 'u8[8192]{0}', space=vmem, size = 0x2000, scoped, tag = 'input window, operand 1, single buffered']
    #allocation6 [shape = 's32[1]{0}', space=sflag, size = 0x4, scoped, tag = 'scoped memory for tpu_custom_call.1']
    #allocation7 [shape = 'u8[8192]{0}', space=vmem, size = 0x2000, scoped, tag = 'input window, operand 3, single buffered']
    #allocation8 [shape = 'u8[512]{0}', space=vmem, size = 0x400, scoped, tag = 'input window, operand 6, single buffered']
    #allocation9 [shape = 's32[1]{0}', space=sflag, size = 0x4, scoped, tag = 'scoped memory for tpu_custom_call.1']
    #allocation10 [shape = 'u8[8192]{0}', space=vmem, size = 0x2000, scoped, tag = 'input window, operand 7, single buffered']
    #allocation11 [shape = 'u8[512]{0}', space=vmem, size = 0x400, scoped, tag = 'input window, operand 8, single buffered']
    #allocation12 [shape = 's32[1]{0}', space=sflag, size = 0x4, scoped, tag = 'scoped memory for tpu_custom_call.1']
    #allocation13 [shape = 'u8[65536]{0}', space=vmem, size = 0x10000, scoped, tag = 'output window, operand 0']
    %16 = vsyncpa [#allocation3], 0
    %s17 = scalar_lea.sflag [#allocation3], 1
    %18 = vsyncpa %s17, 0
    %19 = vsyncpa [#allocation6], 0
    %20 = vsyncpa [#allocation9], 0
    %21 = vsyncpa [#allocation12], 0
    %22 = vsyncpa [#allocation4], 0
    %s23 = scalar_lea.sflag [#allocation4], 1
    %24 = vsyncpa %s23, 0
    loop: start=0, step=1, limit=4
    $region2: #{tpu_custom_call.1} parent=1 // loop_pre_header
      _
    $region3: #{tpu_custom_call.1} parent=1 // loop_header
      %s26 = sphi 0, %s30
      %p27 = scmp.ge.s32.totalorder %s26, 4
      %s36 = sphi 0, %s38
      %s39 = sphi 0, %s36
      %s40 = sphi 0, %s39
      %s56 = sphi 0, %s40
      %s60 = sphi 0, %s60
      %s62 = sphi 0, %s60
      %s63 = sphi 0, %s62
      %s77 = sphi 0, %s63
      %s81 = sphi 0, %s81
      %s83 = sphi 0, %s81
      %s84 = sphi 0, %s83
      %s98 = sphi 0, %s84
      %s102 = sphi 0, %s102
      %s104 = sphi 0, %s102
      %s105 = sphi 0, %s104
      %s119 = sphi 0, %s105
      %s123 = sphi 0, %s123
      %s125 = sphi 0, %s123
      %s126 = sphi 0, %s125
      %s140 = sphi 0, %s126
      %s144 = sphi 0, %s144
      %s146 = sphi 0, %s144
      %s147 = sphi 0, %s146
      %s161 = sphi 0, %s147
      %s165 = sphi 0, %s165
      %s167 = sphi 0, %s165
      %s168 = sphi 0, %s167
      %s182 = sphi 0, %s168
      %s186 = sphi 0, %s186
      %s188 = sphi 0, %s186
      %s189 = sphi 0, %s188
      %s203 = sphi 0, %s189
      %s207 = sphi 0, %s207
      %s209 = sphi 0, %s207
      %s210 = sphi 0, %s209
      %s224 = sphi 0, %s210
      %s228 = sphi 0, %s228
      %s230 = sphi 0, %s228
      %s231 = sphi 0, %s230
      %s245 = sphi 0, %s231
      %s249 = sphi 0, %s249
      %s251 = sphi 0, %s249
      %s252 = sphi 0, %s251
      %s266 = sphi 0, %s252
      %s272 = sphi 0, %s274
      %s275 = sphi 0, %s272
      %s276 = sphi 0, %s275
      %s292 = sphi 0, %s276
    $region4: #{tpu_custom_call.1} parent=1 // loop_header_branch
      %29 = sbr.rel (%p27) target = $region8
    $region5: #{tpu_custom_call.1} parent=1 // loop_body
      %s31 = ssub.s32 %s26, 1
      %s32 = ssub.s32 %s26, 2
      %s33 = sadd.s32 %s26, 1
      %s34 = ssub.s32 %s26, %s33
      %p35 = scmp.eq.s32.totalorder %s34, 0
      %s37 = sadd.s32 %s36, 1
      %s38 = scalar_select %p35, %s36, %s37
      %p41 = pneg %p35
      %p42 = scmp.eq.s32.totalorder %s26, 1
      %p43 = por %p41, %p42
      %p44 = scmp.ne.s32.totalorder %s36, %s39
      %p45 = scmp.eq.s32.totalorder %s26, 0
      %p46 = por %p44, %p45
      %p47 = scmp.ne.s32.totalorder %s36, %s39
      %p48 = scmp.eq.s32.totalorder %s31, 1
      %p49 = por %p47, %p48
      %p50 = scmp.ne.s32.totalorder %s39, %s40
      %p51 = scmp.eq.s32.totalorder %s31, 0
      %p52 = por %p50, %p51
      %p53 = scmp.ne.s32.totalorder %s39, %s40
      %p54 = scmp.eq.s32.totalorder %s32, 1
      %p55 = por %p53, %p54
      %p57 = scmp.ne.s32.totalorder %s40, %s56
      %p58 = scmp.eq.s32.totalorder %s32, 0
      %p59 = por %p57, %p58
      %s61 = sadd.s32 %s60, 1
      %p64 = scmp.eq.s32.totalorder %s26, 1
      %p65 = scmp.ne.s32.totalorder %s60, %s62
      %p66 = scmp.eq.s32.totalorder %s26, 0
      %p67 = por %p65, %p66
      %p68 = scmp.ne.s32.totalorder %s60, %s62
      %p69 = scmp.eq.s32.totalorder %s31, 1
      %p70 = por %p68, %p69
      %p71 = scmp.ne.s32.totalorder %s62, %s63
      %p72 = scmp.eq.s32.totalorder %s31, 0
      %p73 = por %p71, %p72
      %p74 = scmp.ne.s32.totalorder %s62, %s63
      %p75 = scmp.eq.s32.totalorder %s32, 1
      %p76 = por %p74, %p75
      %p78 = scmp.ne.s32.totalorder %s63, %s77
      %p79 = scmp.eq.s32.totalorder %s32, 0
      %p80 = por %p78, %p79
      %s82 = sadd.s32 %s81, 1
      %p85 = scmp.eq.s32.totalorder %s26, 1
      %p86 = scmp.ne.s32.totalorder %s81, %s83
      %p87 = scmp.eq.s32.totalorder %s26, 0
      %p88 = por %p86, %p87
      %p89 = scmp.ne.s32.totalorder %s81, %s83
      %p90 = scmp.eq.s32.totalorder %s31, 1
      %p91 = por %p89, %p90
      %p92 = scmp.ne.s32.totalorder %s83, %s84
      %p93 = scmp.eq.s32.totalorder %s31, 0
      %p94 = por %p92, %p93
      %p95 = scmp.ne.s32.totalorder %s83, %s84
      %p96 = scmp.eq.s32.totalorder %s32, 1
      %p97 = por %p95, %p96
      %p99 = scmp.ne.s32.totalorder %s84, %s98
      %p100 = scmp.eq.s32.totalorder %s32, 0
      %p101 = por %p99, %p100
      %s103 = sadd.s32 %s102, 1
      %p106 = scmp.eq.s32.totalorder %s26, 1
      %p107 = scmp.ne.s32.totalorder %s102, %s104
      %p108 = scmp.eq.s32.totalorder %s26, 0
      %p109 = por %p107, %p108
      %p110 = scmp.ne.s32.totalorder %s102, %s104
      %p111 = scmp.eq.s32.totalorder %s31, 1
      %p112 = por %p110, %p111
      %p113 = scmp.ne.s32.totalorder %s104, %s105
      %p114 = scmp.eq.s32.totalorder %s31, 0
      %p115 = por %p113, %p114
      %p116 = scmp.ne.s32.totalorder %s104, %s105
      %p117 = scmp.eq.s32.totalorder %s32, 1
      %p118 = por %p116, %p117
      %p120 = scmp.ne.s32.totalorder %s105, %s119
      %p121 = scmp.eq.s32.totalorder %s32, 0
      %p122 = por %p120, %p121
      %s124 = sadd.s32 %s123, 1
      %p127 = scmp.eq.s32.totalorder %s26, 1
      %p128 = scmp.ne.s32.totalorder %s123, %s125
      %p129 = scmp.eq.s32.totalorder %s26, 0
      %p130 = por %p128, %p129
      %p131 = scmp.ne.s32.totalorder %s123, %s125
      %p132 = scmp.eq.s32.totalorder %s31, 1
      %p133 = por %p131, %p132
      %p134 = scmp.ne.s32.totalorder %s125, %s126
      %p135 = scmp.eq.s32.totalorder %s31, 0
      %p136 = por %p134, %p135
      %p137 = scmp.ne.s32.totalorder %s125, %s126
      %p138 = scmp.eq.s32.totalorder %s32, 1
      %p139 = por %p137, %p138
      %p141 = scmp.ne.s32.totalorder %s126, %s140
      %p142 = scmp.eq.s32.totalorder %s32, 0
      %p143 = por %p141, %p142
      %s145 = sadd.s32 %s144, 1
      %p148 = scmp.eq.s32.totalorder %s26, 1
      %p149 = scmp.ne.s32.totalorder %s144, %s146
      %p150 = scmp.eq.s32.totalorder %s26, 0
      %p151 = por %p149, %p150
      %p152 = scmp.ne.s32.totalorder %s144, %s146
      %p153 = scmp.eq.s32.totalorder %s31, 1
      %p154 = por %p152, %p153
      %p155 = scmp.ne.s32.totalorder %s146, %s147
      %p156 = scmp.eq.s32.totalorder %s31, 0
      %p157 = por %p155, %p156
      %p158 = scmp.ne.s32.totalorder %s146, %s147
      %p159 = scmp.eq.s32.totalorder %s32, 1
      %p160 = por %p158, %p159
      %p162 = scmp.ne.s32.totalorder %s147, %s161
      %p163 = scmp.eq.s32.totalorder %s32, 0
      %p164 = por %p162, %p163
      %s166 = sadd.s32 %s165, 1
      %p169 = scmp.eq.s32.totalorder %s26, 1
      %p170 = scmp.ne.s32.totalorder %s165, %s167
      %p171 = scmp.eq.s32.totalorder %s26, 0
      %p172 = por %p170, %p171
      %p173 = scmp.ne.s32.totalorder %s165, %s167
      %p174 = scmp.eq.s32.totalorder %s31, 1
      %p175 = por %p173, %p174
      %p176 = scmp.ne.s32.totalorder %s167, %s168
      %p177 = scmp.eq.s32.totalorder %s31, 0
      %p178 = por %p176, %p177
      %p179 = scmp.ne.s32.totalorder %s167, %s168
      %p180 = scmp.eq.s32.totalorder %s32, 1
      %p181 = por %p179, %p180
      %p183 = scmp.ne.s32.totalorder %s168, %s182
      %p184 = scmp.eq.s32.totalorder %s32, 0
      %p185 = por %p183, %p184
      %s187 = sadd.s32 %s186, 1
      %p190 = scmp.eq.s32.totalorder %s26, 1
      %p191 = scmp.ne.s32.totalorder %s186, %s188
      %p192 = scmp.eq.s32.totalorder %s26, 0
      %p193 = por %p191, %p192
      %p194 = scmp.ne.s32.totalorder %s186, %s188
      %p195 = scmp.eq.s32.totalorder %s31, 1
      %p196 = por %p194, %p195
      %p197 = scmp.ne.s32.totalorder %s188, %s189
      %p198 = scmp.eq.s32.totalorder %s31, 0
      %p199 = por %p197, %p198
      %p200 = scmp.ne.s32.totalorder %s188, %s189
      %p201 = scmp.eq.s32.totalorder %s32, 1
      %p202 = por %p200, %p201
      %p204 = scmp.ne.s32.totalorder %s189, %s203
      %p205 = scmp.eq.s32.totalorder %s32, 0
      %p206 = por %p204, %p205
      %s208 = sadd.s32 %s207, 1
      %p211 = scmp.eq.s32.totalorder %s26, 1
      %p212 = scmp.ne.s32.totalorder %s207, %s209
      %p213 = scmp.eq.s32.totalorder %s26, 0
      %p214 = por %p212, %p213
      %p215 = scmp.ne.s32.totalorder %s207, %s209
      %p216 = scmp.eq.s32.totalorder %s31, 1
      %p217 = por %p215, %p216
      %p218 = scmp.ne.s32.totalorder %s209, %s210
      %p219 = scmp.eq.s32.totalorder %s31, 0
      %p220 = por %p218, %p219
      %p221 = scmp.ne.s32.totalorder %s209, %s210
      %p222 = scmp.eq.s32.totalorder %s32, 1
      %p223 = por %p221, %p222
      %p225 = scmp.ne.s32.totalorder %s210, %s224
      %p226 = scmp.eq.s32.totalorder %s32, 0
      %p227 = por %p225, %p226
      %s229 = sadd.s32 %s228, 1
      %p232 = scmp.eq.s32.totalorder %s26, 1
      %p233 = scmp.ne.s32.totalorder %s228, %s230
      %p234 = scmp.eq.s32.totalorder %s26, 0
      %p235 = por %p233, %p234
      %p236 = scmp.ne.s32.totalorder %s228, %s230
      %p237 = scmp.eq.s32.totalorder %s31, 1
      %p238 = por %p236, %p237
      %p239 = scmp.ne.s32.totalorder %s230, %s231
      %p240 = scmp.eq.s32.totalorder %s31, 0
      %p241 = por %p239, %p240
      %p242 = scmp.ne.s32.totalorder %s230, %s231
      %p243 = scmp.eq.s32.totalorder %s32, 1
      %p244 = por %p242, %p243
      %p246 = scmp.ne.s32.totalorder %s231, %s245
      %p247 = scmp.eq.s32.totalorder %s32, 0
      %p248 = por %p246, %p247
      %s250 = sadd.s32 %s249, 1
      %p253 = scmp.eq.s32.totalorder %s26, 1
      %p254 = scmp.ne.s32.totalorder %s249, %s251
      %p255 = scmp.eq.s32.totalorder %s26, 0
      %p256 = por %p254, %p255
      %p257 = scmp.ne.s32.totalorder %s249, %s251
      %p258 = scmp.eq.s32.totalorder %s31, 1
      %p259 = por %p257, %p258
      %p260 = scmp.ne.s32.totalorder %s251, %s252
      %p261 = scmp.eq.s32.totalorder %s31, 0
      %p262 = por %p260, %p261
      %p263 = scmp.ne.s32.totalorder %s251, %s252
      %p264 = scmp.eq.s32.totalorder %s32, 1
      %p265 = por %p263, %p264
      %p267 = scmp.ne.s32.totalorder %s252, %s266
      %p268 = scmp.eq.s32.totalorder %s32, 0
      %p269 = por %p267, %p268
      %s270 = ssub.s32 %s26, %s33
      %p271 = scmp.eq.s32.totalorder %s270, 0
      %s273 = sadd.s32 %s272, 1
      %s274 = scalar_select %p271, %s272, %s273
      %p277 = pneg %p271
      %p278 = scmp.eq.s32.totalorder %s26, 1
      %p279 = por %p277, %p278
      %p280 = scmp.ne.s32.totalorder %s272, %s275
      %p281 = scmp.eq.s32.totalorder %s26, 0
      %p282 = por %p280, %p281
      %p283 = scmp.ne.s32.totalorder %s272, %s275
      %p284 = scmp.eq.s32.totalorder %s31, 1
      %p285 = por %p283, %p284
      %p286 = scmp.ne.s32.totalorder %s275, %s276
      %p287 = scmp.eq.s32.totalorder %s31, 0
      %p288 = por %p286, %p287
      %p289 = scmp.ne.s32.totalorder %s275, %s276
      %p290 = scmp.eq.s32.totalorder %s32, 1
      %p291 = por %p289, %p290
      %p293 = scmp.ne.s32.totalorder %s276, %s292
      %p294 = scmp.eq.s32.totalorder %s32, 0
      %p295 = por %p293, %p294
      %p296 = scmp.le.s32.totalorder 1, %s26
      %p297 = scmp.lt.s32.totalorder %s26, 3
      %p298 = pnand %p296, %p297
      %p299 = pneg %p298
      // Predicated region
      $region9: #{tpu_custom_call.1} parent=5 // pred_check
        _
      $region10: #{tpu_custom_call.1} parent=5 // pred_check_branch
        %301 = sbr.rel (%p298) target = $region12
      $region11: #{tpu_custom_call.1} parent=5 // pred_region
        %s302 = ssub.s32 %s26, 1
        // Predicated region
        $region13: #{tpu_custom_call.1} parent=11 // pred_check
          %p303 = pneg %p73
        $region14: #{tpu_custom_call.1} parent=11 // pred_check_branch
          %305 = sbr.rel (%p303) target = $region16
        $region15: #{tpu_custom_call.1} parent=11 // pred_region
          %s307 = ssub.s32 256, 256
          %308 = vsyncadd [#allocation6], %s307
          %s309 = sshll.u32 [#allocation5], 4
          %s310 = int_to_ptr.vmem [resolvable:$true] %s309
          %315 = dma.hbm_to_vmem [thread:$0]  %s1, 256, %s310, [#allocation6], 128, 128, 8
        $region16: #{tpu_custom_call.1} parent=11 // pred_fallthru
          _
        // Predicated region
        $region17: #{tpu_custom_call.1} parent=11 // pred_check
          %p316 = pneg %p94
        $region18: #{tpu_custom_call.1} parent=11 // pred_check_branch
          %318 = sbr.rel (%p316) target = $region20
        $region19: #{tpu_custom_call.1} parent=11 // pred_region
          _
        $region20: #{tpu_custom_call.1} parent=11 // pred_fallthru
          _
        // Predicated region
        $region21: #{tpu_custom_call.1} parent=11 // pred_check
          %p319 = pneg %p115
        $region22: #{tpu_custom_call.1} parent=11 // pred_check_branch
          %321 = sbr.rel (%p319) target = $region24
        $region23: #{tpu_custom_call.1} parent=11 // pred_region
          %s323 = ssub.s32 256, 256
          %324 = vsyncadd [#allocation6], %s323
          %s325 = sshll.u32 [#allocation7], 4
          %s326 = int_to_ptr.vmem [resolvable:$true] %s325
          %331 = dma.hbm_to_vmem [thread:$0]  %s3, 256, %s326, [#allocation6], 64, 64, 4
        $region24: #{tpu_custom_call.1} parent=11 // pred_fallthru
          _
        // Predicated region
        $region25: #{tpu_custom_call.1} parent=11 // pred_check
          %p332 = pneg %p136
        $region26: #{tpu_custom_call.1} parent=11 // pred_check_branch
          %334 = sbr.rel (%p332) target = $region28
        $region27: #{tpu_custom_call.1} parent=11 // pred_region
          _
        $region28: #{tpu_custom_call.1} parent=11 // pred_fallthru
          _
        // Predicated region
        $region29: #{tpu_custom_call.1} parent=11 // pred_check
          %p335 = pneg %p157
        $region30: #{tpu_custom_call.1} parent=11 // pred_check_branch
          %337 = sbr.rel (%p335) target = $region32
        $region31: #{tpu_custom_call.1} parent=11 // pred_region
          _
        $region32: #{tpu_custom_call.1} parent=11 // pred_fallthru
          _
        // Predicated region
        $region33: #{tpu_custom_call.1} parent=11 // pred_check
          %p338 = pneg %p178
        $region34: #{tpu_custom_call.1} parent=11 // pred_check_branch
          %340 = sbr.rel (%p338) target = $region36
        $region35: #{tpu_custom_call.1} parent=11 // pred_region
          %s342 = ssub.s32 16, 16
          %343 = vsyncadd [#allocation9], %s342
          %s345 = sshll.u32 [#allocation8], 4
          %s346 = int_to_ptr.vmem [resolvable:$true] %s345
          %348 = dma.hbm_to_vmem [thread:$0]  %s6, 16, %s346, [#allocation9]
        $region36: #{tpu_custom_call.1} parent=11 // pred_fallthru
          _
        // Predicated region
        $region37: #{tpu_custom_call.1} parent=11 // pred_check
          %p349 = pneg %p199
        $region38: #{tpu_custom_call.1} parent=11 // pred_check_branch
          %351 = sbr.rel (%p349) target = $region40
        $region39: #{tpu_custom_call.1} parent=11 // pred_region
          %s353 = ssub.s32 256, 256
          %354 = vsyncadd [#allocation9], %s353
          %s355 = sshll.u32 [#allocation10], 4
          %s356 = int_to_ptr.vmem [resolvable:$true] %s355
          %361 = dma.hbm_to_vmem [thread:$0]  %s7, 256, %s356, [#allocation9], 128, 128, 8
        $region40: #{tpu_custom_call.1} parent=11 // pred_fallthru
          _
        // Predicated region
        $region41: #{tpu_custom_call.1} parent=11 // pred_check
          %p362 = pneg %p220
        $region42: #{tpu_custom_call.1} parent=11 // pred_check_branch
          %364 = sbr.rel (%p362) target = $region44
        $region43: #{tpu_custom_call.1} parent=11 // pred_region
          %s366 = ssub.s32 16, 16
          %367 = vsyncadd [#allocation12], %s366
          %s369 = sshll.u32 [#allocation11], 4
          %s370 = int_to_ptr.vmem [resolvable:$true] %s369
          %372 = dma.hbm_to_vmem [thread:$0]  %s8, 16, %s370, [#allocation12]
        $region44: #{tpu_custom_call.1} parent=11 // pred_fallthru
          _
        // Predicated region
        $region45: #{tpu_custom_call.1} parent=11 // pred_check
          %p373 = pneg %p241
        $region46: #{tpu_custom_call.1} parent=11 // pred_check_branch
          %375 = sbr.rel (%p373) target = $region48
        $region47: #{tpu_custom_call.1} parent=11 // pred_region
          _
        $region48: #{tpu_custom_call.1} parent=11 // pred_fallthru
          _
        // Predicated region
        $region49: #{tpu_custom_call.1} parent=11 // pred_check
          %p376 = pneg %p262
        $region50: #{tpu_custom_call.1} parent=11 // pred_check_branch
          %378 = sbr.rel (%p376) target = $region52
        $region51: #{tpu_custom_call.1} parent=11 // pred_region
          _
        $region52: #{tpu_custom_call.1} parent=11 // pred_fallthru
          _
      $region12: #{tpu_custom_call.1} parent=5 // pred_fallthru
        _
      %p379 = scmp.lt.s32.totalorder %s26, 2
      // Predicated region
      $region53: #{tpu_custom_call.1} parent=5 // pred_check
        %p380 = pneg %p379
      $region54: #{tpu_custom_call.1} parent=5 // pred_check_branch
        %382 = sbr.rel (%p380) target = $region56
      $region55: #{tpu_custom_call.1} parent=5 // pred_region
        // Predicated region
        $region57: #{tpu_custom_call.1} parent=55 // pred_check
          %p383 = pneg %p46
        $region58: #{tpu_custom_call.1} parent=55 // pred_check_branch
          %385 = sbr.rel (%p383) target = $region60
        $region59: #{tpu_custom_call.1} parent=55 // pred_region
          %s386 = sand.u32 %s36, 1
          %s387 = scalar_lea.sflag [#allocation3], %s386
          %s388 = sand.u32 %s36, 1
          %s389 = smul.addr %s388, 128
          %s390 = scalar_lea.vmem [#allocation2], %s389
          %s392 = ssub.s32 2048, 2048
          %393 = vsyncadd %s387, %s392
          %s394 = smul.addr %s26, 32
          %s395 = smul.addr %s394, 64
          %s396 = scalar_lea.hbm %s0, %s395
          %s397 = sshll.u32 %s390, 4
          %s398 = int_to_ptr.vmem [resolvable:$true] %s397
          %403 = dma.hbm_to_vmem [thread:$0]  %s396, 2048, %s398, %s387, 64, 64, 4
        $region60: #{tpu_custom_call.1} parent=55 // pred_fallthru
          _
      $region56: #{tpu_custom_call.1} parent=5 // pred_fallthru
        _
      %p404 = scmp.le.s32.totalorder 1, %s26
      %p405 = scmp.lt.s32.totalorder %s26, 3
      %p406 = pnand %p404, %p405
      %p407 = pneg %p406
      // Predicated region
      $region61: #{tpu_custom_call.1} parent=5 // pred_check
        _
      $region62: #{tpu_custom_call.1} parent=5 // pred_check_branch
        %409 = sbr.rel (%p406) target = $region64
      $region63: #{tpu_custom_call.1} parent=5 // pred_region
        %s410 = ssub.s32 %s26, 1
        %s411 = sand.u32 %s39, 1
        %s412 = scalar_lea.sflag [#allocation3], %s411
        %s413 = sand.u32 %s39, 1
        %s414 = smul.addr %s413, 128
        %s415 = scalar_lea.vmem [#allocation2], %s414
        // Predicated region
        $region65: #{tpu_custom_call.1} parent=63 // pred_check
          %p416 = pneg %p52
        $region66: #{tpu_custom_call.1} parent=63 // pred_check_branch
          %418 = sbr.rel (%p416) target = $region68
        $region67: #{tpu_custom_call.1} parent=63 // pred_region
          %419 = dma.done %s412, 2048
        $region68: #{tpu_custom_call.1} parent=63 // pred_fallthru
          _
        // Predicated region
        $region69: #{tpu_custom_call.1} parent=63 // pred_check
          %p420 = pneg %p73
        $region70: #{tpu_custom_call.1} parent=63 // pred_check_branch
          %422 = sbr.rel (%p420) target = $region72
        $region71: #{tpu_custom_call.1} parent=63 // pred_region
          %423 = dma.done [#allocation6], 256
        $region72: #{tpu_custom_call.1} parent=63 // pred_fallthru
          _
        // Predicated region
        $region73: #{tpu_custom_call.1} parent=63 // pred_check
          %p424 = pneg %p115
        $region74: #{tpu_custom_call.1} parent=63 // pred_check_branch
          %426 = sbr.rel (%p424) target = $region76
        $region75: #{tpu_custom_call.1} parent=63 // pred_region
          %427 = dma.done [#allocation6], 256
        $region76: #{tpu_custom_call.1} parent=63 // pred_fallthru
          _
        // Predicated region
        $region77: #{tpu_custom_call.1} parent=63 // pred_check
          %p428 = pneg %p178
        $region78: #{tpu_custom_call.1} parent=63 // pred_check_branch
          %430 = sbr.rel (%p428) target = $region80
        $region79: #{tpu_custom_call.1} parent=63 // pred_region
          %431 = dma.done [#allocation9], 16
        $region80: #{tpu_custom_call.1} parent=63 // pred_fallthru
          _
        // Predicated region
        $region81: #{tpu_custom_call.1} parent=63 // pred_check
          %p432 = pneg %p199
        $region82: #{tpu_custom_call.1} parent=63 // pred_check_branch
          %434 = sbr.rel (%p432) target = $region84
        $region83: #{tpu_custom_call.1} parent=63 // pred_region
          %435 = dma.done [#allocation9], 256
        $region84: #{tpu_custom_call.1} parent=63 // pred_fallthru
          _
        // Predicated region
        $region85: #{tpu_custom_call.1} parent=63 // pred_check
          %p436 = pneg %p220
        $region86: #{tpu_custom_call.1} parent=63 // pred_check_branch
          %438 = sbr.rel (%p436) target = $region88
        $region87: #{tpu_custom_call.1} parent=63 // pred_region
          %439 = dma.done [#allocation12], 16
        $region88: #{tpu_custom_call.1} parent=63 // pred_fallthru
          _
        %s440 = sand.u32 %s39, 1
        %s441 = scalar_lea.sflag [#allocation3], %s440
        %s442 = sand.u32 %s39, 1
        %s443 = smul.addr %s442, 128
        %s444 = scalar_lea.vmem [#allocation2], %s443
        %p445 = pneg %p52
        %p446 = pneg %p49
        %p447 = pneg %p73
        %p448 = pneg %p70
        %p449 = pneg %p94
        %p450 = pneg %p91
        %p451 = pneg %p115
        %p452 = pneg %p112
        %p453 = pneg %p136
        %p454 = pneg %p133
        %p455 = pneg %p157
        %p456 = pneg %p154
        %p457 = pneg %p178
        %p458 = pneg %p175
        %p459 = pneg %p199
        %p460 = pneg %p196
        %p461 = pneg %p220
        %p462 = pneg %p217
        %p463 = pneg %p241
        %p464 = pneg %p238
        %p465 = pneg %p262
        %p466 = pneg %p259
        %p467 = pneg %p288
        %p468 = pneg %p285
        %s469 = sand.u32 %s275, 1
        %s470 = scalar_lea.sflag [#allocation4], %s469
        %s471 = sand.u32 %s275, 1
        %s472 = smul.addr %s471, 64
        %s473 = scalar_lea.vmem [#allocation13], %s472
        %v475 = vld [vmem:[%s415] sm:$0xf]
        %v476 = vld [vmem:[%s415 + $0x4] sm:$0xf]
        %v477 = vld [vmem:[%s415 + $0x8] sm:$0xf]
        %v478 = vld [vmem:[%s415 + $0xc] sm:$0xf]
        %v479 = vld [vmem:[%s415 + $0x10] sm:$0xf]
        %v480 = vld [vmem:[%s415 + $0x14] sm:$0xf]
        %v481 = vld [vmem:[%s415 + $0x18] sm:$0xf]
        %v482 = vld [vmem:[%s415 + $0x1c] sm:$0xf]
        %v483 = vld [vmem:[%s415 + $0x20] sm:$0xf]
        %v484 = vld [vmem:[%s415 + $0x24] sm:$0xf]
        %v485 = vld [vmem:[%s415 + $0x28] sm:$0xf]
        %v486 = vld [vmem:[%s415 + $0x2c] sm:$0xf]
        %v487 = vld [vmem:[%s415 + $0x30] sm:$0xf]
        %v488 = vld [vmem:[%s415 + $0x34] sm:$0xf]
        %v489 = vld [vmem:[%s415 + $0x38] sm:$0xf]
        %v490 = vld [vmem:[%s415 + $0x3c] sm:$0xf]
        %v491 = vld [vmem:[%s415 + $0x40] sm:$0xf]
        %v492 = vld [vmem:[%s415 + $0x44] sm:$0xf]
        %v493 = vld [vmem:[%s415 + $0x48] sm:$0xf]
        %v494 = vld [vmem:[%s415 + $0x4c] sm:$0xf]
        %v495 = vld [vmem:[%s415 + $0x50] sm:$0xf]
        %v496 = vld [vmem:[%s415 + $0x54] sm:$0xf]
        %v497 = vld [vmem:[%s415 + $0x58] sm:$0xf]
        %v498 = vld [vmem:[%s415 + $0x5c] sm:$0xf]
        %v499 = vld [vmem:[%s415 + $0x60] sm:$0xf]
        %v500 = vld [vmem:[%s415 + $0x64] sm:$0xf]
        %v501 = vld [vmem:[%s415 + $0x68] sm:$0xf]
        %v502 = vld [vmem:[%s415 + $0x6c] sm:$0xf]
        %v503 = vld [vmem:[%s415 + $0x70] sm:$0xf]
        %v504 = vld [vmem:[%s415 + $0x74] sm:$0xf]
        %v505 = vld [vmem:[%s415 + $0x78] sm:$0xf]
        %v506 = vld [vmem:[%s415 + $0x7c] sm:$0xf]
        %v507 = vunpack.c.l.bf16 %v475
        %v508 = vunpack.c.l.bf16 %v476
        %v509 = vunpack.c.l.bf16 %v477
        %v510 = vunpack.c.l.bf16 %v478
        %v511 = vunpack.c.l.bf16 %v479
        %v512 = vunpack.c.l.bf16 %v480
        %v513 = vunpack.c.l.bf16 %v481
        %v514 = vunpack.c.l.bf16 %v482
        %v515 = vunpack.c.l.bf16 %v483
        %v516 = vunpack.c.l.bf16 %v484
        %v517 = vunpack.c.l.bf16 %v485
        %v518 = vunpack.c.l.bf16 %v486
        %v519 = vunpack.c.l.bf16 %v487
        %v520 = vunpack.c.l.bf16 %v488
        %v521 = vunpack.c.l.bf16 %v489
        %v522 = vunpack.c.l.bf16 %v490
        %v523 = vunpack.c.l.bf16 %v491
        %v524 = vunpack.c.l.bf16 %v492
        %v525 = vunpack.c.l.bf16 %v493
        %v526 = vunpack.c.l.bf16 %v494
        %v527 = vunpack.c.l.bf16 %v495
        %v528 = vunpack.c.l.bf16 %v496
        %v529 = vunpack.c.l.bf16 %v497
        %v530 = vunpack.c.l.bf16 %v498
        %v531 = vunpack.c.l.bf16 %v499
        %v532 = vunpack.c.l.bf16 %v500
        %v533 = vunpack.c.l.bf16 %v501
        %v534 = vunpack.c.l.bf16 %v502
        %v535 = vunpack.c.l.bf16 %v503
        %v536 = vunpack.c.l.bf16 %v504
        %v537 = vunpack.c.l.bf16 %v505
        %v538 = vunpack.c.l.bf16 %v506
        %v539 = vld [vmem:[#allocation5] sm:$0xff]
        %v540 = vld [vmem:[#allocation5 + $0x8] sm:$0x1]
        %v541 = vld [vmem:[%s2] sm:$0x1]
        %v558 = vcombine.high %v507, %v507
        %v560 = vunpack.c.l.s4 1983009808
        %v561 = vunpack.c.0.s8 %v560
        %v562 = vlaneseq
        %v563 = vshrl.u32 %v562, 7
        %v564 = vsub.s32 %v561, %v563
        %v565 = vrot.slane %v507, %v564
        %v567 = vunpack.c.l.s4 1983009808
        %v568 = vunpack.c.0.s8 %v567
        %v569 = vlaneseq
        %v570 = vshrl.u32 %v569, 7
        %v571 = vsub.s32 %v568, %v570
        %v572 = vrot.slane %v558, %v571
        %v573 = vcombine.high %v565, %v565
        %v574 = vcombine.high %v572, %v572
        %v575 = vcombine.high %v508, %v508
        %v577 = vunpack.c.l.s4 1983009808
        %v578 = vunpack.c.0.s8 %v577
        %v579 = vlaneseq
        %v580 = vshrl.u32 %v579, 7
        %v581 = vsub.s32 %v578, %v580
        %v582 = vrot.slane %v508, %v581
        %v584 = vunpack.c.l.s4 1983009808
        %v585 = vunpack.c.0.s8 %v584
        %v586 = vlaneseq
        %v587 = vshrl.u32 %v586, 7
        %v588 = vsub.s32 %v585, %v587
        %v589 = vrot.slane %v575, %v588
        %v590 = vcombine.high %v582, %v582
        %v591 = vcombine.high %v589, %v589
        %v592 = vcombine.high %v511, %v511
        %v594 = vunpack.c.l.s4 1983009808
        %v595 = vunpack.c.0.s8 %v594
        %v596 = vlaneseq
        %v597 = vshrl.u32 %v596, 7
        %v598 = vsub.s32 %v595, %v597
        %v599 = vrot.slane %v511, %v598
        %v601 = vunpack.c.l.s4 1983009808
        %v602 = vunpack.c.0.s8 %v601
        %v603 = vlaneseq
        %v604 = vshrl.u32 %v603, 7
        %v605 = vsub.s32 %v602, %v604
        %v606 = vrot.slane %v592, %v605
        %v607 = vcombine.high %v599, %v599
        %v608 = vcombine.high %v606, %v606
        %v609 = vcombine.high %v512, %v512
        %v611 = vunpack.c.l.s4 1983009808
        %v612 = vunpack.c.0.s8 %v611
        %v613 = vlaneseq
        %v614 = vshrl.u32 %v613, 7
        %v615 = vsub.s32 %v612, %v614
        %v616 = vrot.slane %v512, %v615
        %v618 = vunpack.c.l.s4 1983009808
        %v619 = vunpack.c.0.s8 %v618
        %v620 = vlaneseq
        %v621 = vshrl.u32 %v620, 7
        %v622 = vsub.s32 %v619, %v621
        %v623 = vrot.slane %v609, %v622
        %v624 = vcombine.high %v616, %v616
        %v625 = vcombine.high %v623, %v623
        %v626 = vcombine.high %v515, %v515
        %v628 = vunpack.c.l.s4 1983009808
        %v629 = vunpack.c.0.s8 %v628
        %v630 = vlaneseq
        %v631 = vshrl.u32 %v630, 7
        %v632 = vsub.s32 %v629, %v631
        %v633 = vrot.slane %v515, %v632
        %v635 = vunpack.c.l.s4 1983009808
        %v636 = vunpack.c.0.s8 %v635
        %v637 = vlaneseq
        %v638 = vshrl.u32 %v637, 7
        %v639 = vsub.s32 %v636, %v638
        %v640 = vrot.slane %v626, %v639
        %v641 = vcombine.high %v633, %v633
        %v642 = vcombine.high %v640, %v640
        %v643 = vcombine.high %v516, %v516
        %v645 = vunpack.c.l.s4 1983009808
        %v646 = vunpack.c.0.s8 %v645
        %v647 = vlaneseq
        %v648 = vshrl.u32 %v647, 7
        %v649 = vsub.s32 %v646, %v648
        %v650 = vrot.slane %v516, %v649
        %v652 = vunpack.c.l.s4 1983009808
        %v653 = vunpack.c.0.s8 %v652
        %v654 = vlaneseq
        %v655 = vshrl.u32 %v654, 7
        %v656 = vsub.s32 %v653, %v655
        %v657 = vrot.slane %v643, %v656
        %v658 = vcombine.high %v650, %v650
        %v659 = vcombine.high %v657, %v657
        %v660 = vcombine.high %v519, %v519
        %v662 = vunpack.c.l.s4 1983009808
        %v663 = vunpack.c.0.s8 %v662
        %v664 = vlaneseq
        %v665 = vshrl.u32 %v664, 7
        %v666 = vsub.s32 %v663, %v665
        %v667 = vrot.slane %v519, %v666
        %v669 = vunpack.c.l.s4 1983009808
        %v670 = vunpack.c.0.s8 %v669
        %v671 = vlaneseq
        %v672 = vshrl.u32 %v671, 7
        %v673 = vsub.s32 %v670, %v672
        %v674 = vrot.slane %v660, %v673
        %v675 = vcombine.high %v667, %v667
        %v676 = vcombine.high %v674, %v674
        %v677 = vcombine.high %v520, %v520
        %v679 = vunpack.c.l.s4 1983009808
        %v680 = vunpack.c.0.s8 %v679
        %v681 = vlaneseq
        %v682 = vshrl.u32 %v681, 7
        %v683 = vsub.s32 %v680, %v682
        %v684 = vrot.slane %v520, %v683
        %v686 = vunpack.c.l.s4 1983009808
        %v687 = vunpack.c.0.s8 %v686
        %v688 = vlaneseq
        %v689 = vshrl.u32 %v688, 7
        %v690 = vsub.s32 %v687, %v689
        %v691 = vrot.slane %v677, %v690
        %v692 = vcombine.high %v684, %v684
        %v693 = vcombine.high %v691, %v691
        %v694 = vcombine.high %v523, %v523
        %v696 = vunpack.c.l.s4 1983009808
        %v697 = vunpack.c.0.s8 %v696
        %v698 = vlaneseq
        %v699 = vshrl.u32 %v698, 7
        %v700 = vsub.s32 %v697, %v699
        %v701 = vrot.slane %v523, %v700
        %v703 = vunpack.c.l.s4 1983009808
        %v704 = vunpack.c.0.s8 %v703
        %v705 = vlaneseq
        %v706 = vshrl.u32 %v705, 7
        %v707 = vsub.s32 %v704, %v706
        %v708 = vrot.slane %v694, %v707
        %v709 = vcombine.high %v701, %v701
        %v710 = vcombine.high %v708, %v708
        %v711 = vcombine.high %v524, %v524
        %v713 = vunpack.c.l.s4 1983009808
        %v714 = vunpack.c.0.s8 %v713
        %v715 = vlaneseq
        %v716 = vshrl.u32 %v715, 7
        %v717 = vsub.s32 %v714, %v716
        %v718 = vrot.slane %v524, %v717
        %v720 = vunpack.c.l.s4 1983009808
        %v721 = vunpack.c.0.s8 %v720
        %v722 = vlaneseq
        %v723 = vshrl.u32 %v722, 7
        %v724 = vsub.s32 %v721, %v723
        %v725 = vrot.slane %v711, %v724
        %v726 = vcombine.high %v718, %v718
        %v727 = vcombine.high %v725, %v725
        %v728 = vcombine.high %v527, %v527
        %v730 = vunpack.c.l.s4 1983009808
        %v731 = vunpack.c.0.s8 %v730
        %v732 = vlaneseq
        %v733 = vshrl.u32 %v732, 7
        %v734 = vsub.s32 %v731, %v733
        %v735 = vrot.slane %v527, %v734
        %v737 = vunpack.c.l.s4 1983009808
        %v738 = vunpack.c.0.s8 %v737
        %v739 = vlaneseq
        %v740 = vshrl.u32 %v739, 7
        %v741 = vsub.s32 %v738, %v740
        %v742 = vrot.slane %v728, %v741
        %v743 = vcombine.high %v735, %v735
        %v744 = vcombine.high %v742, %v742
        %v745 = vcombine.high %v528, %v528
        %v747 = vunpack.c.l.s4 1983009808
        %v748 = vunpack.c.0.s8 %v747
        %v749 = vlaneseq
        %v750 = vshrl.u32 %v749, 7
        %v751 = vsub.s32 %v748, %v750
        %v752 = vrot.slane %v528, %v751
        %v754 = vunpack.c.l.s4 1983009808
        %v755 = vunpack.c.0.s8 %v754
        %v756 = vlaneseq
        %v757 = vshrl.u32 %v756, 7
        %v758 = vsub.s32 %v755, %v757
        %v759 = vrot.slane %v745, %v758
        %v760 = vcombine.high %v752, %v752
        %v761 = vcombine.high %v759, %v759
        %v762 = vcombine.high %v531, %v531
        %v764 = vunpack.c.l.s4 1983009808
        %v765 = vunpack.c.0.s8 %v764
        %v766 = vlaneseq
        %v767 = vshrl.u32 %v766, 7
        %v768 = vsub.s32 %v765, %v767
        %v769 = vrot.slane %v531, %v768
        %v771 = vunpack.c.l.s4 1983009808
        %v772 = vunpack.c.0.s8 %v771
        %v773 = vlaneseq
        %v774 = vshrl.u32 %v773, 7
        %v775 = vsub.s32 %v772, %v774
        %v776 = vrot.slane %v762, %v775
        %v777 = vcombine.high %v769, %v769
        %v778 = vcombine.high %v776, %v776
        %v779 = vcombine.high %v532, %v532
        %v781 = vunpack.c.l.s4 1983009808
        %v782 = vunpack.c.0.s8 %v781
        %v783 = vlaneseq
        %v784 = vshrl.u32 %v783, 7
        %v785 = vsub.s32 %v782, %v784
        %v786 = vrot.slane %v532, %v785
        %v788 = vunpack.c.l.s4 1983009808
        %v789 = vunpack.c.0.s8 %v788
        %v790 = vlaneseq
        %v791 = vshrl.u32 %v790, 7
        %v792 = vsub.s32 %v789, %v791
        %v793 = vrot.slane %v779, %v792
        %v794 = vcombine.high %v786, %v786
        %v795 = vcombine.high %v793, %v793
        %v796 = vcombine.high %v535, %v535
        %v798 = vunpack.c.l.s4 1983009808
        %v799 = vunpack.c.0.s8 %v798
        %v800 = vlaneseq
        %v801 = vshrl.u32 %v800, 7
        %v802 = vsub.s32 %v799, %v801
        %v803 = vrot.slane %v535, %v802
        %v805 = vunpack.c.l.s4 1983009808
        %v806 = vunpack.c.0.s8 %v805
        %v807 = vlaneseq
        %v808 = vshrl.u32 %v807, 7
        %v809 = vsub.s32 %v806, %v808
        %v810 = vrot.slane %v796, %v809
        %v811 = vcombine.high %v803, %v803
        %v812 = vcombine.high %v810, %v810
        %v813 = vcombine.high %v536, %v536
        %v815 = vunpack.c.l.s4 1983009808
        %v816 = vunpack.c.0.s8 %v815
        %v817 = vlaneseq
        %v818 = vshrl.u32 %v817, 7
        %v819 = vsub.s32 %v816, %v818
        %v820 = vrot.slane %v536, %v819
        %v822 = vunpack.c.l.s4 1983009808
        %v823 = vunpack.c.0.s8 %v822
        %v824 = vlaneseq
        %v825 = vshrl.u32 %v824, 7
        %v826 = vsub.s32 %v823, %v825
        %v827 = vrot.slane %v813, %v826
        %v828 = vcombine.high %v820, %v820
        %v829 = vcombine.high %v827, %v827
        %v910 = vcombine.high %v509, %v509
        %v912 = vunpack.c.l.s4 1983009808
        %v913 = vunpack.c.0.s8 %v912
        %v914 = vlaneseq
        %v915 = vshrl.u32 %v914, 7
        %v916 = vsub.s32 %v913, %v915
        %v917 = vrot.slane %v509, %v916
        %v919 = vunpack.c.l.s4 1983009808
        %v920 = vunpack.c.0.s8 %v919
        %v921 = vlaneseq
        %v922 = vshrl.u32 %v921, 7
        %v923 = vsub.s32 %v920, %v922
        %v924 = vrot.slane %v910, %v923
        %v925 = vcombine.high %v917, %v917
        %v926 = vcombine.high %v924, %v924
        %v927 = vcombine.high %v510, %v510
        %v929 = vunpack.c.l.s4 1983009808
        %v930 = vunpack.c.0.s8 %v929
        %v931 = vlaneseq
        %v932 = vshrl.u32 %v931, 7
        %v933 = vsub.s32 %v930, %v932
        %v934 = vrot.slane %v510, %v933
        %v936 = vunpack.c.l.s4 1983009808
        %v937 = vunpack.c.0.s8 %v936
        %v938 = vlaneseq
        %v939 = vshrl.u32 %v938, 7
        %v940 = vsub.s32 %v937, %v939
        %v941 = vrot.slane %v927, %v940
        %v942 = vcombine.high %v934, %v934
        %v943 = vcombine.high %v941, %v941
        %v944 = vcombine.high %v513, %v513
        %v946 = vunpack.c.l.s4 1983009808
        %v947 = vunpack.c.0.s8 %v946
        %v948 = vlaneseq
        %v949 = vshrl.u32 %v948, 7
        %v950 = vsub.s32 %v947, %v949
        %v951 = vrot.slane %v513, %v950
        %v953 = vunpack.c.l.s4 1983009808
        %v954 = vunpack.c.0.s8 %v953
        %v955 = vlaneseq
        %v956 = vshrl.u32 %v955, 7
        %v957 = vsub.s32 %v954, %v956
        %v958 = vrot.slane %v944, %v957
        %v959 = vcombine.high %v951, %v951
        %v960 = vcombine.high %v958, %v958
        %v961 = vcombine.high %v514, %v514
        %v963 = vunpack.c.l.s4 1983009808
        %v964 = vunpack.c.0.s8 %v963
        %v965 = vlaneseq
        %v966 = vshrl.u32 %v965, 7
        %v967 = vsub.s32 %v964, %v966
        %v968 = vrot.slane %v514, %v967
        %v970 = vunpack.c.l.s4 1983009808
        %v971 = vunpack.c.0.s8 %v970
        %v972 = vlaneseq
        %v973 = vshrl.u32 %v972, 7
        %v974 = vsub.s32 %v971, %v973
        %v975 = vrot.slane %v961, %v974
        %v976 = vcombine.high %v968, %v968
        %v977 = vcombine.high %v975, %v975
        %v978 = vcombine.high %v517, %v517
        %v980 = vunpack.c.l.s4 1983009808
        %v981 = vunpack.c.0.s8 %v980
        %v982 = vlaneseq
        %v983 = vshrl.u32 %v982, 7
        %v984 = vsub.s32 %v981, %v983
        %v985 = vrot.slane %v517, %v984
        %v987 = vunpack.c.l.s4 1983009808
        %v988 = vunpack.c.0.s8 %v987
        %v989 = vlaneseq
        %v990 = vshrl.u32 %v989, 7
        %v991 = vsub.s32 %v988, %v990
        %v992 = vrot.slane %v978, %v991
        %v993 = vcombine.high %v985, %v985
        %v994 = vcombine.high %v992, %v992
        %v995 = vcombine.high %v518, %v518
        %v997 = vunpack.c.l.s4 1983009808
        %v998 = vunpack.c.0.s8 %v997
        %v999 = vlaneseq
        %v1000 = vshrl.u32 %v999, 7
        %v1001 = vsub.s32 %v998, %v1000
        %v1002 = vrot.slane %v518, %v1001
        %v1004 = vunpack.c.l.s4 1983009808
        %v1005 = vunpack.c.0.s8 %v1004
        %v1006 = vlaneseq
        %v1007 = vshrl.u32 %v1006, 7
        %v1008 = vsub.s32 %v1005, %v1007
        %v1009 = vrot.slane %v995, %v1008
        %v1010 = vcombine.high %v1002, %v1002
        %v1011 = vcombine.high %v1009, %v1009
        %v1012 = vcombine.high %v521, %v521
        %v1014 = vunpack.c.l.s4 1983009808
        %v1015 = vunpack.c.0.s8 %v1014
        %v1016 = vlaneseq
        %v1017 = vshrl.u32 %v1016, 7
        %v1018 = vsub.s32 %v1015, %v1017
        %v1019 = vrot.slane %v521, %v1018
        %v1021 = vunpack.c.l.s4 1983009808
        %v1022 = vunpack.c.0.s8 %v1021
        %v1023 = vlaneseq
        %v1024 = vshrl.u32 %v1023, 7
        %v1025 = vsub.s32 %v1022, %v1024
        %v1026 = vrot.slane %v1012, %v1025
        %v1027 = vcombine.high %v1019, %v1019
        %v1028 = vcombine.high %v1026, %v1026
        %v1029 = vcombine.high %v522, %v522
        %v1031 = vunpack.c.l.s4 1983009808
        %v1032 = vunpack.c.0.s8 %v1031
        %v1033 = vlaneseq
        %v1034 = vshrl.u32 %v1033, 7
        %v1035 = vsub.s32 %v1032, %v1034
        %v1036 = vrot.slane %v522, %v1035
        %v1038 = vunpack.c.l.s4 1983009808
        %v1039 = vunpack.c.0.s8 %v1038
        %v1040 = vlaneseq
        %v1041 = vshrl.u32 %v1040, 7
        %v1042 = vsub.s32 %v1039, %v1041
        %v1043 = vrot.slane %v1029, %v1042
        %v1044 = vcombine.high %v1036, %v1036
        %v1045 = vcombine.high %v1043, %v1043
        %v1046 = vcombine.high %v525, %v525
        %v1048 = vunpack.c.l.s4 1983009808
        %v1049 = vunpack.c.0.s8 %v1048
        %v1050 = vlaneseq
        %v1051 = vshrl.u32 %v1050, 7
        %v1052 = vsub.s32 %v1049, %v1051
        %v1053 = vrot.slane %v525, %v1052
        %v1055 = vunpack.c.l.s4 1983009808
        %v1056 = vunpack.c.0.s8 %v1055
        %v1057 = vlaneseq
        %v1058 = vshrl.u32 %v1057, 7
        %v1059 = vsub.s32 %v1056, %v1058
        %v1060 = vrot.slane %v1046, %v1059
        %v1061 = vcombine.high %v1053, %v1053
        %v1062 = vcombine.high %v1060, %v1060
        %v1063 = vcombine.high %v526, %v526
        %v1065 = vunpack.c.l.s4 1983009808
        %v1066 = vunpack.c.0.s8 %v1065
        %v1067 = vlaneseq
        %v1068 = vshrl.u32 %v1067, 7
        %v1069 = vsub.s32 %v1066, %v1068
        %v1070 = vrot.slane %v526, %v1069
        %v1072 = vunpack.c.l.s4 1983009808
        %v1073 = vunpack.c.0.s8 %v1072
        %v1074 = vlaneseq
        %v1075 = vshrl.u32 %v1074, 7
        %v1076 = vsub.s32 %v1073, %v1075
        %v1077 = vrot.slane %v1063, %v1076
        %v1078 = vcombine.high %v1070, %v1070
        %v1079 = vcombine.high %v1077, %v1077
        %v1080 = vcombine.high %v529, %v529
        %v1082 = vunpack.c.l.s4 1983009808
        %v1083 = vunpack.c.0.s8 %v1082
        %v1084 = vlaneseq
        %v1085 = vshrl.u32 %v1084, 7
        %v1086 = vsub.s32 %v1083, %v1085
        %v1087 = vrot.slane %v529, %v1086
        %v1089 = vunpack.c.l.s4 1983009808
        %v1090 = vunpack.c.0.s8 %v1089
        %v1091 = vlaneseq
        %v1092 = vshrl.u32 %v1091, 7
        %v1093 = vsub.s32 %v1090, %v1092
        %v1094 = vrot.slane %v1080, %v1093
        %v1095 = vcombine.high %v1087, %v1087
        %v1096 = vcombine.high %v1094, %v1094
        %v1097 = vcombine.high %v530, %v530
        %v1099 = vunpack.c.l.s4 1983009808
        %v1100 = vunpack.c.0.s8 %v1099
        %v1101 = vlaneseq
        %v1102 = vshrl.u32 %v1101, 7
        %v1103 = vsub.s32 %v1100, %v1102
        %v1104 = vrot.slane %v530, %v1103
        %v1106 = vunpack.c.l.s4 1983009808
        %v1107 = vunpack.c.0.s8 %v1106
        %v1108 = vlaneseq
        %v1109 = vshrl.u32 %v1108, 7
        %v1110 = vsub.s32 %v1107, %v1109
        %v1111 = vrot.slane %v1097, %v1110
        %v1112 = vcombine.high %v1104, %v1104
        %v1113 = vcombine.high %v1111, %v1111
        %v1114 = vcombine.high %v533, %v533
        %v1116 = vunpack.c.l.s4 1983009808
        %v1117 = vunpack.c.0.s8 %v1116
        %v1118 = vlaneseq
        %v1119 = vshrl.u32 %v1118, 7
        %v1120 = vsub.s32 %v1117, %v1119
        %v1121 = vrot.slane %v533, %v1120
        %v1123 = vunpack.c.l.s4 1983009808
        %v1124 = vunpack.c.0.s8 %v1123
        %v1125 = vlaneseq
        %v1126 = vshrl.u32 %v1125, 7
        %v1127 = vsub.s32 %v1124, %v1126
        %v1128 = vrot.slane %v1114, %v1127
        %v1129 = vcombine.high %v1121, %v1121
        %v1130 = vcombine.high %v1128, %v1128
        %v1131 = vcombine.high %v534, %v534
        %v1133 = vunpack.c.l.s4 1983009808
        %v1134 = vunpack.c.0.s8 %v1133
        %v1135 = vlaneseq
        %v1136 = vshrl.u32 %v1135, 7
        %v1137 = vsub.s32 %v1134, %v1136
        %v1138 = vrot.slane %v534, %v1137
        %v1140 = vunpack.c.l.s4 1983009808
        %v1141 = vunpack.c.0.s8 %v1140
        %v1142 = vlaneseq
        %v1143 = vshrl.u32 %v1142, 7
        %v1144 = vsub.s32 %v1141, %v1143
        %v1145 = vrot.slane %v1131, %v1144
        %v1146 = vcombine.high %v1138, %v1138
        %v1147 = vcombine.high %v1145, %v1145
        %v1148 = vcombine.high %v537, %v537
        %v1150 = vunpack.c.l.s4 1983009808
        %v1151 = vunpack.c.0.s8 %v1150
        %v1152 = vlaneseq
        %v1153 = vshrl.u32 %v1152, 7
        %v1154 = vsub.s32 %v1151, %v1153
        %v1155 = vrot.slane %v537, %v1154
        %v1157 = vunpack.c.l.s4 1983009808
        %v1158 = vunpack.c.0.s8 %v1157
        %v1159 = vlaneseq
        %v1160 = vshrl.u32 %v1159, 7
        %v1161 = vsub.s32 %v1158, %v1160
        %v1162 = vrot.slane %v1148, %v1161
        %v1163 = vcombine.high %v1155, %v1155
        %v1164 = vcombine.high %v1162, %v1162
        %v1165 = vcombine.high %v538, %v538
        %v1167 = vunpack.c.l.s4 1983009808
        %v1168 = vunpack.c.0.s8 %v1167
        %v1169 = vlaneseq
        %v1170 = vshrl.u32 %v1169, 7
        %v1171 = vsub.s32 %v1168, %v1170
        %v1172 = vrot.slane %v538, %v1171
        %v1174 = vunpack.c.l.s4 1983009808
        %v1175 = vunpack.c.0.s8 %v1174
        %v1176 = vlaneseq
        %v1177 = vshrl.u32 %v1176, 7
        %v1178 = vsub.s32 %v1175, %v1177
        %v1179 = vrot.slane %v1165, %v1178
        %v1180 = vcombine.high %v1172, %v1172
        %v1181 = vcombine.high %v1179, %v1179
        %v1246 = vlaneseq
        %v1247 = vshrl.u32 %v1246, 7
        %v1248 = vsub.s32 1, %v1247
        %v1249 = vrot.slane %v565, %v1248
        %v1250 = vlaneseq
        %v1251 = vshrl.u32 %v1250, 7
        %v1252 = vsub.s32 1, %v1251
        %v1253 = vrot.slane %v573, %v1252
        %v1254 = vlaneseq
        %v1255 = vshrl.u32 %v1254, 7
        %v1256 = vsub.s32 1, %v1255
        %v1257 = vrot.slane %v572, %v1256
        %v1258 = vlaneseq
        %v1259 = vshrl.u32 %v1258, 7
        %v1260 = vsub.s32 1, %v1259
        %v1261 = vrot.slane %v574, %v1260
        %v1262 = vlaneseq
        %v1263 = vshrl.u32 %v1262, 7
        %v1264 = vsub.s32 1, %v1263
        %v1265 = vrot.slane %v582, %v1264
        %v1266 = vlaneseq
        %v1267 = vshrl.u32 %v1266, 7
        %v1268 = vsub.s32 1, %v1267
        %v1269 = vrot.slane %v590, %v1268
        %v1270 = vlaneseq
        %v1271 = vshrl.u32 %v1270, 7
        %v1272 = vsub.s32 1, %v1271
        %v1273 = vrot.slane %v589, %v1272
        %v1274 = vlaneseq
        %v1275 = vshrl.u32 %v1274, 7
        %v1276 = vsub.s32 1, %v1275
        %v1277 = vrot.slane %v599, %v1276
        %v1278 = vlaneseq
        %v1279 = vshrl.u32 %v1278, 7
        %v1280 = vsub.s32 1, %v1279
        %v1281 = vrot.slane %v607, %v1280
        %v1282 = vlaneseq
        %v1283 = vshrl.u32 %v1282, 7
        %v1284 = vsub.s32 1, %v1283
        %v1285 = vrot.slane %v606, %v1284
        %v1286 = vlaneseq
        %v1287 = vshrl.u32 %v1286, 7
        %v1288 = vsub.s32 1, %v1287
        %v1289 = vrot.slane %v608, %v1288
        %v1290 = vlaneseq
        %v1291 = vshrl.u32 %v1290, 7
        %v1292 = vsub.s32 1, %v1291
        %v1293 = vrot.slane %v616, %v1292
        %v1294 = vlaneseq
        %v1295 = vshrl.u32 %v1294, 7
        %v1296 = vsub.s32 1, %v1295
        %v1297 = vrot.slane %v624, %v1296
        %v1298 = vlaneseq
        %v1299 = vshrl.u32 %v1298, 7
        %v1300 = vsub.s32 1, %v1299
        %v1301 = vrot.slane %v623, %v1300
        %v1302 = vlaneseq
        %v1303 = vshrl.u32 %v1302, 7
        %v1304 = vsub.s32 1, %v1303
        %v1305 = vrot.slane %v633, %v1304
        %v1306 = vlaneseq
        %v1307 = vshrl.u32 %v1306, 7
        %v1308 = vsub.s32 1, %v1307
        %v1309 = vrot.slane %v641, %v1308
        %v1310 = vlaneseq
        %v1311 = vshrl.u32 %v1310, 7
        %v1312 = vsub.s32 1, %v1311
        %v1313 = vrot.slane %v640, %v1312
        %v1314 = vlaneseq
        %v1315 = vshrl.u32 %v1314, 7
        %v1316 = vsub.s32 1, %v1315
        %v1317 = vrot.slane %v642, %v1316
        %v1318 = vlaneseq
        %v1319 = vshrl.u32 %v1318, 7
        %v1320 = vsub.s32 1, %v1319
        %v1321 = vrot.slane %v650, %v1320
        %v1322 = vlaneseq
        %v1323 = vshrl.u32 %v1322, 7
        %v1324 = vsub.s32 1, %v1323
        %v1325 = vrot.slane %v658, %v1324
        %v1326 = vlaneseq
        %v1327 = vshrl.u32 %v1326, 7
        %v1328 = vsub.s32 1, %v1327
        %v1329 = vrot.slane %v657, %v1328
        %v1330 = vlaneseq
        %v1331 = vshrl.u32 %v1330, 7
        %v1332 = vsub.s32 1, %v1331
        %v1333 = vrot.slane %v667, %v1332
        %v1334 = vlaneseq
        %v1335 = vshrl.u32 %v1334, 7
        %v1336 = vsub.s32 1, %v1335
        %v1337 = vrot.slane %v675, %v1336
        %v1338 = vlaneseq
        %v1339 = vshrl.u32 %v1338, 7
        %v1340 = vsub.s32 1, %v1339
        %v1341 = vrot.slane %v674, %v1340
        %v1342 = vlaneseq
        %v1343 = vshrl.u32 %v1342, 7
        %v1344 = vsub.s32 1, %v1343
        %v1345 = vrot.slane %v676, %v1344
        %v1346 = vlaneseq
        %v1347 = vshrl.u32 %v1346, 7
        %v1348 = vsub.s32 1, %v1347
        %v1349 = vrot.slane %v684, %v1348
        %v1350 = vlaneseq
        %v1351 = vshrl.u32 %v1350, 7
        %v1352 = vsub.s32 1, %v1351
        %v1353 = vrot.slane %v692, %v1352
        %v1354 = vlaneseq
        %v1355 = vshrl.u32 %v1354, 7
        %v1356 = vsub.s32 1, %v1355
        %v1357 = vrot.slane %v691, %v1356
        %v1358 = vlaneseq
        %v1359 = vshrl.u32 %v1358, 7
        %v1360 = vsub.s32 1, %v1359
        %v1361 = vrot.slane %v701, %v1360
        %v1362 = vlaneseq
        %v1363 = vshrl.u32 %v1362, 7
        %v1364 = vsub.s32 1, %v1363
        %v1365 = vrot.slane %v709, %v1364
        %v1366 = vlaneseq
        %v1367 = vshrl.u32 %v1366, 7
        %v1368 = vsub.s32 1, %v1367
        %v1369 = vrot.slane %v708, %v1368
        %v1370 = vlaneseq
        %v1371 = vshrl.u32 %v1370, 7
        %v1372 = vsub.s32 1, %v1371
        %v1373 = vrot.slane %v710, %v1372
        %v1374 = vlaneseq
        %v1375 = vshrl.u32 %v1374, 7
        %v1376 = vsub.s32 1, %v1375
        %v1377 = vrot.slane %v718, %v1376
        %v1378 = vlaneseq
        %v1379 = vshrl.u32 %v1378, 7
        %v1380 = vsub.s32 1, %v1379
        %v1381 = vrot.slane %v726, %v1380
        %v1382 = vlaneseq
        %v1383 = vshrl.u32 %v1382, 7
        %v1384 = vsub.s32 1, %v1383
        %v1385 = vrot.slane %v725, %v1384
        %v1386 = vlaneseq
        %v1387 = vshrl.u32 %v1386, 7
        %v1388 = vsub.s32 1, %v1387
        %v1389 = vrot.slane %v735, %v1388
        %v1390 = vlaneseq
        %v1391 = vshrl.u32 %v1390, 7
        %v1392 = vsub.s32 1, %v1391
        %v1393 = vrot.slane %v743, %v1392
        %v1394 = vlaneseq
        %v1395 = vshrl.u32 %v1394, 7
        %v1396 = vsub.s32 1, %v1395
        %v1397 = vrot.slane %v742, %v1396
        %v1398 = vlaneseq
        %v1399 = vshrl.u32 %v1398, 7
        %v1400 = vsub.s32 1, %v1399
        %v1401 = vrot.slane %v744, %v1400
        %v1402 = vlaneseq
        %v1403 = vshrl.u32 %v1402, 7
        %v1404 = vsub.s32 1, %v1403
        %v1405 = vrot.slane %v752, %v1404
        %v1406 = vlaneseq
        %v1407 = vshrl.u32 %v1406, 7
        %v1408 = vsub.s32 1, %v1407
        %v1409 = vrot.slane %v760, %v1408
        %v1410 = vlaneseq
        %v1411 = vshrl.u32 %v1410, 7
        %v1412 = vsub.s32 1, %v1411
        %v1413 = vrot.slane %v759, %v1412
        %v1414 = vlaneseq
        %v1415 = vshrl.u32 %v1414, 7
        %v1416 = vsub.s32 1, %v1415
        %v1417 = vrot.slane %v769, %v1416
        %v1418 = vlaneseq
        %v1419 = vshrl.u32 %v1418, 7
        %v1420 = vsub.s32 1, %v1419
        %v1421 = vrot.slane %v777, %v1420
        %v1422 = vlaneseq
        %v1423 = vshrl.u32 %v1422, 7
        %v1424 = vsub.s32 1, %v1423
        %v1425 = vrot.slane %v776, %v1424
        %v1426 = vlaneseq
        %v1427 = vshrl.u32 %v1426, 7
        %v1428 = vsub.s32 1, %v1427
        %v1429 = vrot.slane %v778, %v1428
        %v1430 = vlaneseq
        %v1431 = vshrl.u32 %v1430, 7
        %v1432 = vsub.s32 1, %v1431
        %v1433 = vrot.slane %v786, %v1432
        %v1434 = vlaneseq
        %v1435 = vshrl.u32 %v1434, 7
        %v1436 = vsub.s32 1, %v1435
        %v1437 = vrot.slane %v794, %v1436
        %v1438 = vlaneseq
        %v1439 = vshrl.u32 %v1438, 7
        %v1440 = vsub.s32 1, %v1439
        %v1441 = vrot.slane %v793, %v1440
        %v1442 = vlaneseq
        %v1443 = vshrl.u32 %v1442, 7
        %v1444 = vsub.s32 1, %v1443
        %v1445 = vrot.slane %v803, %v1444
        %v1446 = vlaneseq
        %v1447 = vshrl.u32 %v1446, 7
        %v1448 = vsub.s32 1, %v1447
        %v1449 = vrot.slane %v811, %v1448
        %v1450 = vlaneseq
        %v1451 = vshrl.u32 %v1450, 7
        %v1452 = vsub.s32 1, %v1451
        %v1453 = vrot.slane %v810, %v1452
        %v1454 = vlaneseq
        %v1455 = vshrl.u32 %v1454, 7
        %v1456 = vsub.s32 1, %v1455
        %v1457 = vrot.slane %v812, %v1456
        %v1458 = vlaneseq
        %v1459 = vshrl.u32 %v1458, 7
        %v1460 = vsub.s32 1, %v1459
        %v1461 = vrot.slane %v820, %v1460
        %v1462 = vlaneseq
        %v1463 = vshrl.u32 %v1462, 7
        %v1464 = vsub.s32 1, %v1463
        %v1465 = vrot.slane %v828, %v1464
        %v1466 = vlaneseq
        %v1467 = vshrl.u32 %v1466, 7
        %v1468 = vsub.s32 1, %v1467
        %v1469 = vrot.slane %v827, %v1468
        %vm1470 = vcmask 1042434
        %v1471 = vsel %vm1470, %v1253, %v1249
        %vm1472 = vcmask 1043459
        %v1473 = vsel %vm1472, %v1257, %v1471
        %vm1474 = vcmask 1044484
        %v1475 = vsel %vm1474, %v1261, %v1473
        %vm1476 = vcmask 1045509
        %v1477 = vsel %vm1476, %v1265, %v1475
        %vm1478 = vcmask 1046534
        %v1479 = vsel %vm1478, %v1269, %v1477
        %vm1480 = vcmask 1047559
        %v1481 = vsel %vm1480, %v1273, %v1479
        %v1482 = vsel %vm1470, %v1281, %v1277
        %v1483 = vsel %vm1472, %v1285, %v1482
        %v1484 = vsel %vm1474, %v1289, %v1483
        %v1485 = vsel %vm1476, %v1293, %v1484
        %v1486 = vsel %vm1478, %v1297, %v1485
        %v1487 = vsel %vm1480, %v1301, %v1486
        %v1488 = vsel %vm1470, %v1309, %v1305
        %v1489 = vsel %vm1472, %v1313, %v1488
        %v1490 = vsel %vm1474, %v1317, %v1489
        %v1491 = vsel %vm1476, %v1321, %v1490
        %v1492 = vsel %vm1478, %v1325, %v1491
        %v1493 = vsel %vm1480, %v1329, %v1492
        %v1494 = vsel %vm1470, %v1337, %v1333
        %v1495 = vsel %vm1472, %v1341, %v1494
        %v1496 = vsel %vm1474, %v1345, %v1495
        %v1497 = vsel %vm1476, %v1349, %v1496
        %v1498 = vsel %vm1478, %v1353, %v1497
        %v1499 = vsel %vm1480, %v1357, %v1498
        %v1500 = vsel %vm1470, %v1365, %v1361
        %v1501 = vsel %vm1472, %v1369, %v1500
        %v1502 = vsel %vm1474, %v1373, %v1501
        %v1503 = vsel %vm1476, %v1377, %v1502
        %v1504 = vsel %vm1478, %v1381, %v1503
        %v1505 = vsel %vm1480, %v1385, %v1504
        %v1506 = vsel %vm1470, %v1393, %v1389
        %v1507 = vsel %vm1472, %v1397, %v1506
        %v1508 = vsel %vm1474, %v1401, %v1507
        %v1509 = vsel %vm1476, %v1405, %v1508
        %v1510 = vsel %vm1478, %v1409, %v1509
        %v1511 = vsel %vm1480, %v1413, %v1510
        %v1512 = vsel %vm1470, %v1421, %v1417
        %v1513 = vsel %vm1472, %v1425, %v1512
        %v1514 = vsel %vm1474, %v1429, %v1513
        %v1515 = vsel %vm1476, %v1433, %v1514
        %v1516 = vsel %vm1478, %v1437, %v1515
        %v1517 = vsel %vm1480, %v1441, %v1516
        %v1518 = vsel %vm1470, %v1449, %v1445
        %v1519 = vsel %vm1472, %v1453, %v1518
        %v1520 = vsel %vm1474, %v1457, %v1519
        %v1521 = vsel %vm1476, %v1461, %v1520
        %v1522 = vsel %vm1478, %v1465, %v1521
        %v1523 = vsel %vm1480, %v1469, %v1522
        %vm1532 = vcmask 1040384
        %v1533 = vsel %vm1532, 0.0, %v1481
        %v1534 = vsel %vm1532, 0.0, %v1487
        %v1535 = vsel %vm1532, 0.0, %v1493
        %v1536 = vsel %vm1532, 0.0, %v1499
        %v1537 = vsel %vm1532, 0.0, %v1505
        %v1538 = vsel %vm1532, 0.0, %v1511
        %v1539 = vsel %vm1532, 0.0, %v1517
        %v1540 = vsel %vm1532, 0.0, %v1523
        %v1541 = vlaneseq
        %v1542 = vshrl.u32 %v1541, 7
        %v1543 = vsub.s32 1, %v1542
        %v1544 = vrot.slane %v917, %v1543
        %v1545 = vlaneseq
        %v1546 = vshrl.u32 %v1545, 7
        %v1547 = vsub.s32 1, %v1546
        %v1548 = vrot.slane %v925, %v1547
        %v1549 = vlaneseq
        %v1550 = vshrl.u32 %v1549, 7
        %v1551 = vsub.s32 1, %v1550
        %v1552 = vrot.slane %v924, %v1551
        %v1553 = vlaneseq
        %v1554 = vshrl.u32 %v1553, 7
        %v1555 = vsub.s32 1, %v1554
        %v1556 = vrot.slane %v926, %v1555
        %v1557 = vlaneseq
        %v1558 = vshrl.u32 %v1557, 7
        %v1559 = vsub.s32 1, %v1558
        %v1560 = vrot.slane %v934, %v1559
        %v1561 = vlaneseq
        %v1562 = vshrl.u32 %v1561, 7
        %v1563 = vsub.s32 1, %v1562
        %v1564 = vrot.slane %v942, %v1563
        %v1565 = vlaneseq
        %v1566 = vshrl.u32 %v1565, 7
        %v1567 = vsub.s32 1, %v1566
        %v1568 = vrot.slane %v941, %v1567
        %v1569 = vlaneseq
        %v1570 = vshrl.u32 %v1569, 7
        %v1571 = vsub.s32 1, %v1570
        %v1572 = vrot.slane %v951, %v1571
        %v1573 = vlaneseq
        %v1574 = vshrl.u32 %v1573, 7
        %v1575 = vsub.s32 1, %v1574
        %v1576 = vrot.slane %v959, %v1575
        %v1577 = vlaneseq
        %v1578 = vshrl.u32 %v1577, 7
        %v1579 = vsub.s32 1, %v1578
        %v1580 = vrot.slane %v958, %v1579
        %v1581 = vlaneseq
        %v1582 = vshrl.u32 %v1581, 7
        %v1583 = vsub.s32 1, %v1582
        %v1584 = vrot.slane %v960, %v1583
        %v1585 = vlaneseq
        %v1586 = vshrl.u32 %v1585, 7
        %v1587 = vsub.s32 1, %v1586
        %v1588 = vrot.slane %v968, %v1587
        %v1589 = vlaneseq
        %v1590 = vshrl.u32 %v1589, 7
        %v1591 = vsub.s32 1, %v1590
        %v1592 = vrot.slane %v976, %v1591
        %v1593 = vlaneseq
        %v1594 = vshrl.u32 %v1593, 7
        %v1595 = vsub.s32 1, %v1594
        %v1596 = vrot.slane %v975, %v1595
        %v1597 = vlaneseq
        %v1598 = vshrl.u32 %v1597, 7
        %v1599 = vsub.s32 1, %v1598
        %v1600 = vrot.slane %v985, %v1599
        %v1601 = vlaneseq
        %v1602 = vshrl.u32 %v1601, 7
        %v1603 = vsub.s32 1, %v1602
        %v1604 = vrot.slane %v993, %v1603
        %v1605 = vlaneseq
        %v1606 = vshrl.u32 %v1605, 7
        %v1607 = vsub.s32 1, %v1606
        %v1608 = vrot.slane %v992, %v1607
        %v1609 = vlaneseq
        %v1610 = vshrl.u32 %v1609, 7
        %v1611 = vsub.s32 1, %v1610
        %v1612 = vrot.slane %v994, %v1611
        %v1613 = vlaneseq
        %v1614 = vshrl.u32 %v1613, 7
        %v1615 = vsub.s32 1, %v1614
        %v1616 = vrot.slane %v1002, %v1615
        %v1617 = vlaneseq
        %v1618 = vshrl.u32 %v1617, 7
        %v1619 = vsub.s32 1, %v1618
        %v1620 = vrot.slane %v1010, %v1619
        %v1621 = vlaneseq
        %v1622 = vshrl.u32 %v1621, 7
        %v1623 = vsub.s32 1, %v1622
        %v1624 = vrot.slane %v1009, %v1623
        %v1625 = vlaneseq
        %v1626 = vshrl.u32 %v1625, 7
        %v1627 = vsub.s32 1, %v1626
        %v1628 = vrot.slane %v1019, %v1627
        %v1629 = vlaneseq
        %v1630 = vshrl.u32 %v1629, 7
        %v1631 = vsub.s32 1, %v1630
        %v1632 = vrot.slane %v1027, %v1631
        %v1633 = vlaneseq
        %v1634 = vshrl.u32 %v1633, 7
        %v1635 = vsub.s32 1, %v1634
        %v1636 = vrot.slane %v1026, %v1635
        %v1637 = vlaneseq
        %v1638 = vshrl.u32 %v1637, 7
        %v1639 = vsub.s32 1, %v1638
        %v1640 = vrot.slane %v1028, %v1639
        %v1641 = vlaneseq
        %v1642 = vshrl.u32 %v1641, 7
        %v1643 = vsub.s32 1, %v1642
        %v1644 = vrot.slane %v1036, %v1643
        %v1645 = vlaneseq
        %v1646 = vshrl.u32 %v1645, 7
        %v1647 = vsub.s32 1, %v1646
        %v1648 = vrot.slane %v1044, %v1647
        %v1649 = vlaneseq
        %v1650 = vshrl.u32 %v1649, 7
        %v1651 = vsub.s32 1, %v1650
        %v1652 = vrot.slane %v1043, %v1651
        %v1653 = vlaneseq
        %v1654 = vshrl.u32 %v1653, 7
        %v1655 = vsub.s32 1, %v1654
        %v1656 = vrot.slane %v1053, %v1655
        %v1657 = vlaneseq
        %v1658 = vshrl.u32 %v1657, 7
        %v1659 = vsub.s32 1, %v1658
        %v1660 = vrot.slane %v1061, %v1659
        %v1661 = vlaneseq
        %v1662 = vshrl.u32 %v1661, 7
        %v1663 = vsub.s32 1, %v1662
        %v1664 = vrot.slane %v1060, %v1663
        %v1665 = vlaneseq
        %v1666 = vshrl.u32 %v1665, 7
        %v1667 = vsub.s32 1, %v1666
        %v1668 = vrot.slane %v1062, %v1667
        %v1669 = vlaneseq
        %v1670 = vshrl.u32 %v1669, 7
        %v1671 = vsub.s32 1, %v1670
        %v1672 = vrot.slane %v1070, %v1671
        %v1673 = vlaneseq
        %v1674 = vshrl.u32 %v1673, 7
        %v1675 = vsub.s32 1, %v1674
        %v1676 = vrot.slane %v1078, %v1675
        %v1677 = vlaneseq
        %v1678 = vshrl.u32 %v1677, 7
        %v1679 = vsub.s32 1, %v1678
        %v1680 = vrot.slane %v1077, %v1679
        %v1681 = vlaneseq
        %v1682 = vshrl.u32 %v1681, 7
        %v1683 = vsub.s32 1, %v1682
        %v1684 = vrot.slane %v1087, %v1683
        %v1685 = vlaneseq
        %v1686 = vshrl.u32 %v1685, 7
        %v1687 = vsub.s32 1, %v1686
        %v1688 = vrot.slane %v1095, %v1687
        %v1689 = vlaneseq
        %v1690 = vshrl.u32 %v1689, 7
        %v1691 = vsub.s32 1, %v1690
        %v1692 = vrot.slane %v1094, %v1691
        %v1693 = vlaneseq
        %v1694 = vshrl.u32 %v1693, 7
        %v1695 = vsub.s32 1, %v1694
        %v1696 = vrot.slane %v1096, %v1695
        %v1697 = vlaneseq
        %v1698 = vshrl.u32 %v1697, 7
        %v1699 = vsub.s32 1, %v1698
        %v1700 = vrot.slane %v1104, %v1699
        %v1701 = vlaneseq
        %v1702 = vshrl.u32 %v1701, 7
        %v1703 = vsub.s32 1, %v1702
        %v1704 = vrot.slane %v1112, %v1703
        %v1705 = vlaneseq
        %v1706 = vshrl.u32 %v1705, 7
        %v1707 = vsub.s32 1, %v1706
        %v1708 = vrot.slane %v1111, %v1707
        %v1709 = vlaneseq
        %v1710 = vshrl.u32 %v1709, 7
        %v1711 = vsub.s32 1, %v1710
        %v1712 = vrot.slane %v1121, %v1711
        %v1713 = vlaneseq
        %v1714 = vshrl.u32 %v1713, 7
        %v1715 = vsub.s32 1, %v1714
        %v1716 = vrot.slane %v1129, %v1715
        %v1717 = vlaneseq
        %v1718 = vshrl.u32 %v1717, 7
        %v1719 = vsub.s32 1, %v1718
        %v1720 = vrot.slane %v1128, %v1719
        %v1721 = vlaneseq
        %v1722 = vshrl.u32 %v1721, 7
        %v1723 = vsub.s32 1, %v1722
        %v1724 = vrot.slane %v1130, %v1723
        %v1725 = vlaneseq
        %v1726 = vshrl.u32 %v1725, 7
        %v1727 = vsub.s32 1, %v1726
        %v1728 = vrot.slane %v1138, %v1727
        %v1729 = vlaneseq
        %v1730 = vshrl.u32 %v1729, 7
        %v1731 = vsub.s32 1, %v1730
        %v1732 = vrot.slane %v1146, %v1731
        %v1733 = vlaneseq
        %v1734 = vshrl.u32 %v1733, 7
        %v1735 = vsub.s32 1, %v1734
        %v1736 = vrot.slane %v1145, %v1735
        %v1737 = vlaneseq
        %v1738 = vshrl.u32 %v1737, 7
        %v1739 = vsub.s32 1, %v1738
        %v1740 = vrot.slane %v1155, %v1739
        %v1741 = vlaneseq
        %v1742 = vshrl.u32 %v1741, 7
        %v1743 = vsub.s32 1, %v1742
        %v1744 = vrot.slane %v1163, %v1743
        %v1745 = vlaneseq
        %v1746 = vshrl.u32 %v1745, 7
        %v1747 = vsub.s32 1, %v1746
        %v1748 = vrot.slane %v1162, %v1747
        %v1749 = vlaneseq
        %v1750 = vshrl.u32 %v1749, 7
        %v1751 = vsub.s32 1, %v1750
        %v1752 = vrot.slane %v1164, %v1751
        %v1753 = vlaneseq
        %v1754 = vshrl.u32 %v1753, 7
        %v1755 = vsub.s32 1, %v1754
        %v1756 = vrot.slane %v1172, %v1755
        %v1757 = vlaneseq
        %v1758 = vshrl.u32 %v1757, 7
        %v1759 = vsub.s32 1, %v1758
        %v1760 = vrot.slane %v1180, %v1759
        %v1761 = vlaneseq
        %v1762 = vshrl.u32 %v1761, 7
        %v1763 = vsub.s32 1, %v1762
        %v1764 = vrot.slane %v1179, %v1763
        %v1765 = vsel %vm1470, %v1548, %v1544
        %v1766 = vsel %vm1472, %v1552, %v1765
        %v1767 = vsel %vm1474, %v1556, %v1766
        %v1768 = vsel %vm1476, %v1560, %v1767
        %v1769 = vsel %vm1478, %v1564, %v1768
        %v1770 = vsel %vm1480, %v1568, %v1769
        %v1771 = vsel %vm1470, %v1576, %v1572
        %v1772 = vsel %vm1472, %v1580, %v1771
        %v1773 = vsel %vm1474, %v1584, %v1772
        %v1774 = vsel %vm1476, %v1588, %v1773
        %v1775 = vsel %vm1478, %v1592, %v1774
        %v1776 = vsel %vm1480, %v1596, %v1775
        %v1777 = vsel %vm1470, %v1604, %v1600
        %v1778 = vsel %vm1472, %v1608, %v1777
        %v1779 = vsel %vm1474, %v1612, %v1778
        %v1780 = vsel %vm1476, %v1616, %v1779
        %v1781 = vsel %vm1478, %v1620, %v1780
        %v1782 = vsel %vm1480, %v1624, %v1781
        %v1783 = vsel %vm1470, %v1632, %v1628
        %v1784 = vsel %vm1472, %v1636, %v1783
        %v1785 = vsel %vm1474, %v1640, %v1784
        %v1786 = vsel %vm1476, %v1644, %v1785
        %v1787 = vsel %vm1478, %v1648, %v1786
        %v1788 = vsel %vm1480, %v1652, %v1787
        %v1789 = vsel %vm1470, %v1660, %v1656
        %v1790 = vsel %vm1472, %v1664, %v1789
        %v1791 = vsel %vm1474, %v1668, %v1790
        %v1792 = vsel %vm1476, %v1672, %v1791
        %v1793 = vsel %vm1478, %v1676, %v1792
        %v1794 = vsel %vm1480, %v1680, %v1793
        %v1795 = vsel %vm1470, %v1688, %v1684
        %v1796 = vsel %vm1472, %v1692, %v1795
        %v1797 = vsel %vm1474, %v1696, %v1796
        %v1798 = vsel %vm1476, %v1700, %v1797
        %v1799 = vsel %vm1478, %v1704, %v1798
        %v1800 = vsel %vm1480, %v1708, %v1799
        %v1801 = vsel %vm1470, %v1716, %v1712
        %v1802 = vsel %vm1472, %v1720, %v1801
        %v1803 = vsel %vm1474, %v1724, %v1802
        %v1804 = vsel %vm1476, %v1728, %v1803
        %v1805 = vsel %vm1478, %v1732, %v1804
        %v1806 = vsel %vm1480, %v1736, %v1805
        %v1807 = vsel %vm1470, %v1744, %v1740
        %v1808 = vsel %vm1472, %v1748, %v1807
        %v1809 = vsel %vm1474, %v1752, %v1808
        %v1810 = vsel %vm1476, %v1756, %v1809
        %v1811 = vsel %vm1478, %v1760, %v1810
        %v1812 = vsel %vm1480, %v1764, %v1811
        %v1821 = vsel %vm1532, 0.0, %v1770
        %v1822 = vsel %vm1532, 0.0, %v1776
        %v1823 = vsel %vm1532, 0.0, %v1782
        %v1824 = vsel %vm1532, 0.0, %v1788
        %v1825 = vsel %vm1532, 0.0, %v1794
        %v1826 = vsel %vm1532, 0.0, %v1800
        %v1827 = vsel %vm1532, 0.0, %v1806
        %v1828 = vsel %vm1532, 0.0, %v1812
        %v1829 = vlaneseq
        %v1830 = vshrl.u32 %v1829, 7
        %v1831 = vsub.s32 0, %v1830
        %v1832 = vrot.slane %v917, %v1831
        %v1833 = vlaneseq
        %v1834 = vshrl.u32 %v1833, 7
        %v1835 = vsub.s32 0, %v1834
        %v1836 = vrot.slane %v925, %v1835
        %v1837 = vlaneseq
        %v1838 = vshrl.u32 %v1837, 7
        %v1839 = vsub.s32 0, %v1838
        %v1840 = vrot.slane %v924, %v1839
        %v1841 = vlaneseq
        %v1842 = vshrl.u32 %v1841, 7
        %v1843 = vsub.s32 0, %v1842
        %v1844 = vrot.slane %v926, %v1843
        %v1845 = vlaneseq
        %v1846 = vshrl.u32 %v1845, 7
        %v1847 = vsub.s32 0, %v1846
        %v1848 = vrot.slane %v934, %v1847
        %v1849 = vlaneseq
        %v1850 = vshrl.u32 %v1849, 7
        %v1851 = vsub.s32 0, %v1850
        %v1852 = vrot.slane %v942, %v1851
        %v1853 = vlaneseq
        %v1854 = vshrl.u32 %v1853, 7
        %v1855 = vsub.s32 0, %v1854
        %v1856 = vrot.slane %v941, %v1855
        %v1857 = vlaneseq
        %v1858 = vshrl.u32 %v1857, 7
        %v1859 = vsub.s32 0, %v1858
        %v1860 = vrot.slane %v943, %v1859
        %v1861 = vlaneseq
        %v1862 = vshrl.u32 %v1861, 7
        %v1863 = vsub.s32 0, %v1862
        %v1864 = vrot.slane %v951, %v1863
        %v1865 = vlaneseq
        %v1866 = vshrl.u32 %v1865, 7
        %v1867 = vsub.s32 0, %v1866
        %v1868 = vrot.slane %v959, %v1867
        %v1869 = vlaneseq
        %v1870 = vshrl.u32 %v1869, 7
        %v1871 = vsub.s32 0, %v1870
        %v1872 = vrot.slane %v958, %v1871
        %v1873 = vlaneseq
        %v1874 = vshrl.u32 %v1873, 7
        %v1875 = vsub.s32 0, %v1874
        %v1876 = vrot.slane %v960, %v1875
        %v1877 = vlaneseq
        %v1878 = vshrl.u32 %v1877, 7
        %v1879 = vsub.s32 0, %v1878
        %v1880 = vrot.slane %v968, %v1879
        %v1881 = vlaneseq
        %v1882 = vshrl.u32 %v1881, 7
        %v1883 = vsub.s32 0, %v1882
        %v1884 = vrot.slane %v976, %v1883
        %v1885 = vlaneseq
        %v1886 = vshrl.u32 %v1885, 7
        %v1887 = vsub.s32 0, %v1886
        %v1888 = vrot.slane %v975, %v1887
        %v1889 = vlaneseq
        %v1890 = vshrl.u32 %v1889, 7
        %v1891 = vsub.s32 0, %v1890
        %v1892 = vrot.slane %v977, %v1891
        %v1893 = vlaneseq
        %v1894 = vshrl.u32 %v1893, 7
        %v1895 = vsub.s32 0, %v1894
        %v1896 = vrot.slane %v985, %v1895
        %v1897 = vlaneseq
        %v1898 = vshrl.u32 %v1897, 7
        %v1899 = vsub.s32 0, %v1898
        %v1900 = vrot.slane %v993, %v1899
        %v1901 = vlaneseq
        %v1902 = vshrl.u32 %v1901, 7
        %v1903 = vsub.s32 0, %v1902
        %v1904 = vrot.slane %v992, %v1903
        %v1905 = vlaneseq
        %v1906 = vshrl.u32 %v1905, 7
        %v1907 = vsub.s32 0, %v1906
        %v1908 = vrot.slane %v994, %v1907
        %v1909 = vlaneseq
        %v1910 = vshrl.u32 %v1909, 7
        %v1911 = vsub.s32 0, %v1910
        %v1912 = vrot.slane %v1002, %v1911
        %v1913 = vlaneseq
        %v1914 = vshrl.u32 %v1913, 7
        %v1915 = vsub.s32 0, %v1914
        %v1916 = vrot.slane %v1010, %v1915
        %v1917 = vlaneseq
        %v1918 = vshrl.u32 %v1917, 7
        %v1919 = vsub.s32 0, %v1918
        %v1920 = vrot.slane %v1009, %v1919
        %v1921 = vlaneseq
        %v1922 = vshrl.u32 %v1921, 7
        %v1923 = vsub.s32 0, %v1922
        %v1924 = vrot.slane %v1011, %v1923
        %v1925 = vlaneseq
        %v1926 = vshrl.u32 %v1925, 7
        %v1927 = vsub.s32 0, %v1926
        %v1928 = vrot.slane %v1019, %v1927
        %v1929 = vlaneseq
        %v1930 = vshrl.u32 %v1929, 7
        %v1931 = vsub.s32 0, %v1930
        %v1932 = vrot.slane %v1027, %v1931
        %v1933 = vlaneseq
        %v1934 = vshrl.u32 %v1933, 7
        %v1935 = vsub.s32 0, %v1934
        %v1936 = vrot.slane %v1026, %v1935
        %v1937 = vlaneseq
        %v1938 = vshrl.u32 %v1937, 7
        %v1939 = vsub.s32 0, %v1938
        %v1940 = vrot.slane %v1028, %v1939
        %v1941 = vlaneseq
        %v1942 = vshrl.u32 %v1941, 7
        %v1943 = vsub.s32 0, %v1942
        %v1944 = vrot.slane %v1036, %v1943
        %v1945 = vlaneseq
        %v1946 = vshrl.u32 %v1945, 7
        %v1947 = vsub.s32 0, %v1946
        %v1948 = vrot.slane %v1044, %v1947
        %v1949 = vlaneseq
        %v1950 = vshrl.u32 %v1949, 7
        %v1951 = vsub.s32 0, %v1950
        %v1952 = vrot.slane %v1043, %v1951
        %v1953 = vlaneseq
        %v1954 = vshrl.u32 %v1953, 7
        %v1955 = vsub.s32 0, %v1954
        %v1956 = vrot.slane %v1045, %v1955
        %v1957 = vlaneseq
        %v1958 = vshrl.u32 %v1957, 7
        %v1959 = vsub.s32 0, %v1958
        %v1960 = vrot.slane %v1053, %v1959
        %v1961 = vlaneseq
        %v1962 = vshrl.u32 %v1961, 7
        %v1963 = vsub.s32 0, %v1962
        %v1964 = vrot.slane %v1061, %v1963
        %v1965 = vlaneseq
        %v1966 = vshrl.u32 %v1965, 7
        %v1967 = vsub.s32 0, %v1966
        %v1968 = vrot.slane %v1060, %v1967
        %v1969 = vlaneseq
        %v1970 = vshrl.u32 %v1969, 7
        %v1971 = vsub.s32 0, %v1970
        %v1972 = vrot.slane %v1062, %v1971
        %v1973 = vlaneseq
        %v1974 = vshrl.u32 %v1973, 7
        %v1975 = vsub.s32 0, %v1974
        %v1976 = vrot.slane %v1070, %v1975
        %v1977 = vlaneseq
        %v1978 = vshrl.u32 %v1977, 7
        %v1979 = vsub.s32 0, %v1978
        %v1980 = vrot.slane %v1078, %v1979
        %v1981 = vlaneseq
        %v1982 = vshrl.u32 %v1981, 7
        %v1983 = vsub.s32 0, %v1982
        %v1984 = vrot.slane %v1077, %v1983
        %v1985 = vlaneseq
        %v1986 = vshrl.u32 %v1985, 7
        %v1987 = vsub.s32 0, %v1986
        %v1988 = vrot.slane %v1079, %v1987
        %v1989 = vlaneseq
        %v1990 = vshrl.u32 %v1989, 7
        %v1991 = vsub.s32 0, %v1990
        %v1992 = vrot.slane %v1087, %v1991
        %v1993 = vlaneseq
        %v1994 = vshrl.u32 %v1993, 7
        %v1995 = vsub.s32 0, %v1994
        %v1996 = vrot.slane %v1095, %v1995
        %v1997 = vlaneseq
        %v1998 = vshrl.u32 %v1997, 7
        %v1999 = vsub.s32 0, %v1998
        %v2000 = vrot.slane %v1094, %v1999
        %v2001 = vlaneseq
        %v2002 = vshrl.u32 %v2001, 7
        %v2003 = vsub.s32 0, %v2002
        %v2004 = vrot.slane %v1096, %v2003
        %v2005 = vlaneseq
        %v2006 = vshrl.u32 %v2005, 7
        %v2007 = vsub.s32 0, %v2006
        %v2008 = vrot.slane %v1104, %v2007
        %v2009 = vlaneseq
        %v2010 = vshrl.u32 %v2009, 7
        %v2011 = vsub.s32 0, %v2010
        %v2012 = vrot.slane %v1112, %v2011
        %v2013 = vlaneseq
        %v2014 = vshrl.u32 %v2013, 7
        %v2015 = vsub.s32 0, %v2014
        %v2016 = vrot.slane %v1111, %v2015
        %v2017 = vlaneseq
        %v2018 = vshrl.u32 %v2017, 7
        %v2019 = vsub.s32 0, %v2018
        %v2020 = vrot.slane %v1113, %v2019
        %v2021 = vlaneseq
        %v2022 = vshrl.u32 %v2021, 7
        %v2023 = vsub.s32 0, %v2022
        %v2024 = vrot.slane %v1121, %v2023
        %v2025 = vlaneseq
        %v2026 = vshrl.u32 %v2025, 7
        %v2027 = vsub.s32 0, %v2026
        %v2028 = vrot.slane %v1129, %v2027
        %v2029 = vlaneseq
        %v2030 = vshrl.u32 %v2029, 7
        %v2031 = vsub.s32 0, %v2030
        %v2032 = vrot.slane %v1128, %v2031
        %v2033 = vlaneseq
        %v2034 = vshrl.u32 %v2033, 7
        %v2035 = vsub.s32 0, %v2034
        %v2036 = vrot.slane %v1130, %v2035
        %v2037 = vlaneseq
        %v2038 = vshrl.u32 %v2037, 7
        %v2039 = vsub.s32 0, %v2038
        %v2040 = vrot.slane %v1138, %v2039
        %v2041 = vlaneseq
        %v2042 = vshrl.u32 %v2041, 7
        %v2043 = vsub.s32 0, %v2042
        %v2044 = vrot.slane %v1146, %v2043
        %v2045 = vlaneseq
        %v2046 = vshrl.u32 %v2045, 7
        %v2047 = vsub.s32 0, %v2046
        %v2048 = vrot.slane %v1145, %v2047
        %v2049 = vlaneseq
        %v2050 = vshrl.u32 %v2049, 7
        %v2051 = vsub.s32 0, %v2050
        %v2052 = vrot.slane %v1147, %v2051
        %vm2053 = vcmask 1041409
        %v2054 = vsel %vm2053, %v1836, %v1832
        %v2055 = vsel %vm1470, %v1840, %v2054
        %v2056 = vsel %vm1472, %v1844, %v2055
        %v2057 = vsel %vm1474, %v1848, %v2056
        %v2058 = vsel %vm1476, %v1852, %v2057
        %v2059 = vsel %vm1478, %v1856, %v2058
        %v2060 = vsel %vm1480, %v1860, %v2059
        %v2061 = vsel %vm2053, %v1868, %v1864
        %v2062 = vsel %vm1470, %v1872, %v2061
        %v2063 = vsel %vm1472, %v1876, %v2062
        %v2064 = vsel %vm1474, %v1880, %v2063
        %v2065 = vsel %vm1476, %v1884, %v2064
        %v2066 = vsel %vm1478, %v1888, %v2065
        %v2067 = vsel %vm1480, %v1892, %v2066
        %v2068 = vsel %vm2053, %v1900, %v1896
        %v2069 = vsel %vm1470, %v1904, %v2068
        %v2070 = vsel %vm1472, %v1908, %v2069
        %v2071 = vsel %vm1474, %v1912, %v2070
        %v2072 = vsel %vm1476, %v1916, %v2071
        %v2073 = vsel %vm1478, %v1920, %v2072
        %v2074 = vsel %vm1480, %v1924, %v2073
        %v2075 = vsel %vm2053, %v1932, %v1928
        %v2076 = vsel %vm1470, %v1936, %v2075
        %v2077 = vsel %vm1472, %v1940, %v2076
        %v2078 = vsel %vm1474, %v1944, %v2077
        %v2079 = vsel %vm1476, %v1948, %v2078
        %v2080 = vsel %vm1478, %v1952, %v2079
        %v2081 = vsel %vm1480, %v1956, %v2080
        %v2082 = vsel %vm2053, %v1964, %v1960
        %v2083 = vsel %vm1470, %v1968, %v2082
        %v2084 = vsel %vm1472, %v1972, %v2083
        %v2085 = vsel %vm1474, %v1976, %v2084
        %v2086 = vsel %vm1476, %v1980, %v2085
        %v2087 = vsel %vm1478, %v1984, %v2086
        %v2088 = vsel %vm1480, %v1988, %v2087
        %v2089 = vsel %vm2053, %v1996, %v1992
        %v2090 = vsel %vm1470, %v2000, %v2089
        %v2091 = vsel %vm1472, %v2004, %v2090
        %v2092 = vsel %vm1474, %v2008, %v2091
        %v2093 = vsel %vm1476, %v2012, %v2092
        %v2094 = vsel %vm1478, %v2016, %v2093
        %v2095 = vsel %vm1480, %v2020, %v2094
        %v2096 = vsel %vm2053, %v2028, %v2024
        %v2097 = vsel %vm1470, %v2032, %v2096
        %v2098 = vsel %vm1472, %v2036, %v2097
        %v2099 = vsel %vm1474, %v2040, %v2098
        %v2100 = vsel %vm1476, %v2044, %v2099
        %v2101 = vsel %vm1478, %v2048, %v2100
        %v2102 = vsel %vm1480, %v2052, %v2101
        %v2110 = vlaneseq
        %v2111 = vshrl.u32 %v2110, 7
        %v2112 = vsub.s32 1, %v2111
        %v2113 = vrot.slane %v943, %v2112
        %v2114 = vlaneseq
        %v2115 = vshrl.u32 %v2114, 7
        %v2116 = vsub.s32 1, %v2115
        %v2117 = vrot.slane %v977, %v2116
        %v2118 = vlaneseq
        %v2119 = vshrl.u32 %v2118, 7
        %v2120 = vsub.s32 1, %v2119
        %v2121 = vrot.slane %v1011, %v2120
        %v2122 = vlaneseq
        %v2123 = vshrl.u32 %v2122, 7
        %v2124 = vsub.s32 1, %v2123
        %v2125 = vrot.slane %v1045, %v2124
        %v2126 = vlaneseq
        %v2127 = vshrl.u32 %v2126, 7
        %v2128 = vsub.s32 1, %v2127
        %v2129 = vrot.slane %v1079, %v2128
        %v2130 = vlaneseq
        %v2131 = vshrl.u32 %v2130, 7
        %v2132 = vsub.s32 1, %v2131
        %v2133 = vrot.slane %v1113, %v2132
        %v2134 = vlaneseq
        %v2135 = vshrl.u32 %v2134, 7
        %v2136 = vsub.s32 1, %v2135
        %v2137 = vrot.slane %v1147, %v2136
        %v2138 = vsel %vm2053, %v1548, %v1544
        %v2139 = vsel %vm1470, %v1552, %v2138
        %v2140 = vsel %vm1472, %v1556, %v2139
        %v2141 = vsel %vm1474, %v1560, %v2140
        %v2142 = vsel %vm1476, %v1564, %v2141
        %v2143 = vsel %vm1478, %v1568, %v2142
        %v2144 = vsel %vm1480, %v2113, %v2143
        %v2145 = vsel %vm2053, %v1576, %v1572
        %v2146 = vsel %vm1470, %v1580, %v2145
        %v2147 = vsel %vm1472, %v1584, %v2146
        %v2148 = vsel %vm1474, %v1588, %v2147
        %v2149 = vsel %vm1476, %v1592, %v2148
        %v2150 = vsel %vm1478, %v1596, %v2149
        %v2151 = vsel %vm1480, %v2117, %v2150
        %v2152 = vsel %vm2053, %v1604, %v1600
        %v2153 = vsel %vm1470, %v1608, %v2152
        %v2154 = vsel %vm1472, %v1612, %v2153
        %v2155 = vsel %vm1474, %v1616, %v2154
        %v2156 = vsel %vm1476, %v1620, %v2155
        %v2157 = vsel %vm1478, %v1624, %v2156
        %v2158 = vsel %vm1480, %v2121, %v2157
        %v2159 = vsel %vm2053, %v1632, %v1628
        %v2160 = vsel %vm1470, %v1636, %v2159
        %v2161 = vsel %vm1472, %v1640, %v2160
        %v2162 = vsel %vm1474, %v1644, %v2161
        %v2163 = vsel %vm1476, %v1648, %v2162
        %v2164 = vsel %vm1478, %v1652, %v2163
        %v2165 = vsel %vm1480, %v2125, %v2164
        %v2166 = vsel %vm2053, %v1660, %v1656
        %v2167 = vsel %vm1470, %v1664, %v2166
        %v2168 = vsel %vm1472, %v1668, %v2167
        %v2169 = vsel %vm1474, %v1672, %v2168
        %v2170 = vsel %vm1476, %v1676, %v2169
        %v2171 = vsel %vm1478, %v1680, %v2170
        %v2172 = vsel %vm1480, %v2129, %v2171
        %v2173 = vsel %vm2053, %v1688, %v1684
        %v2174 = vsel %vm1470, %v1692, %v2173
        %v2175 = vsel %vm1472, %v1696, %v2174
        %v2176 = vsel %vm1474, %v1700, %v2175
        %v2177 = vsel %vm1476, %v1704, %v2176
        %v2178 = vsel %vm1478, %v1708, %v2177
        %v2179 = vsel %vm1480, %v2133, %v2178
        %v2180 = vsel %vm2053, %v1716, %v1712
        %v2181 = vsel %vm1470, %v1720, %v2180
        %v2182 = vsel %vm1472, %v1724, %v2181
        %v2183 = vsel %vm1474, %v1728, %v2182
        %v2184 = vsel %vm1476, %v1732, %v2183
        %v2185 = vsel %vm1478, %v1736, %v2184
        %v2186 = vsel %vm1480, %v2137, %v2185
        %v2194 = vlaneseq
        %v2195 = vshrl.u32 %v2194, 7
        %v2196 = vsub.s32 0, %v2195
        %v2197 = vrot.slane %v539, %v2196
        %v2198 = vmul.f32 %v2197, 0.0
        %v2199 = vmul.f32 %v1821, %v2197
        %v2200 = vmul.f32 %v1822, %v2197
        %v2201 = vmul.f32 %v1823, %v2197
        %v2202 = vmul.f32 %v1824, %v2197
        %v2203 = vmul.f32 %v1825, %v2197
        %v2204 = vmul.f32 %v1826, %v2197
        %v2205 = vmul.f32 %v1827, %v2197
        %v2206 = vadd.f32 %v2198, 0.0
        %v2207 = vadd.f32 %v2199, 0.0
        %v2208 = vadd.f32 %v2200, 0.0
        %v2209 = vadd.f32 %v2201, 0.0
        %v2210 = vadd.f32 %v2202, 0.0
        %v2211 = vadd.f32 %v2203, 0.0
        %v2212 = vadd.f32 %v2204, 0.0
        %v2213 = vadd.f32 %v2205, 0.0
        %v2214 = vlaneseq
        %v2215 = vshrl.u32 %v2214, 7
        %v2216 = vsub.s32 1, %v2215
        %v2217 = vrot.slane %v539, %v2216
        %v2218 = vmul.f32 %v2217, 0.0
        %v2219 = vmul.f32 %v2060, %v2217
        %v2220 = vmul.f32 %v2067, %v2217
        %v2221 = vmul.f32 %v2074, %v2217
        %v2222 = vmul.f32 %v2081, %v2217
        %v2223 = vmul.f32 %v2088, %v2217
        %v2224 = vmul.f32 %v2095, %v2217
        %v2225 = vmul.f32 %v2102, %v2217
        %v2226 = vadd.f32 %v2206, %v2218
        %v2227 = vadd.f32 %v2207, %v2219
        %v2228 = vadd.f32 %v2208, %v2220
        %v2229 = vadd.f32 %v2209, %v2221
        %v2230 = vadd.f32 %v2210, %v2222
        %v2231 = vadd.f32 %v2211, %v2223
        %v2232 = vadd.f32 %v2212, %v2224
        %v2233 = vadd.f32 %v2213, %v2225
        %v2234 = vlaneseq
        %v2235 = vshrl.u32 %v2234, 7
        %v2236 = vsub.s32 2, %v2235
        %v2237 = vrot.slane %v539, %v2236
        %v2238 = vmul.f32 %v2237, 0.0
        %v2239 = vmul.f32 %v2144, %v2237
        %v2240 = vmul.f32 %v2151, %v2237
        %v2241 = vmul.f32 %v2158, %v2237
        %v2242 = vmul.f32 %v2165, %v2237
        %v2243 = vmul.f32 %v2172, %v2237
        %v2244 = vmul.f32 %v2179, %v2237
        %v2245 = vmul.f32 %v2186, %v2237
        %v2246 = vadd.f32 %v2226, %v2238
        %v2247 = vadd.f32 %v2227, %v2239
        %v2248 = vadd.f32 %v2228, %v2240
        %v2249 = vadd.f32 %v2229, %v2241
        %v2250 = vadd.f32 %v2230, %v2242
        %v2251 = vadd.f32 %v2231, %v2243
        %v2252 = vadd.f32 %v2232, %v2244
        %v2253 = vadd.f32 %v2233, %v2245
        %v2254 = vlaneseq
        %v2255 = vshrl.u32 %v2254, 7
        %v2256 = vsub.s32 3, %v2255
        %v2257 = vrot.slane %v539, %v2256
        %v2258 = vmul.f32 %v1533, %v2257
        %v2259 = vmul.f32 %v1534, %v2257
        %v2260 = vmul.f32 %v1535, %v2257
        %v2261 = vmul.f32 %v1536, %v2257
        %v2262 = vmul.f32 %v1537, %v2257
        %v2263 = vmul.f32 %v1538, %v2257
        %v2264 = vmul.f32 %v1539, %v2257
        %v2265 = vmul.f32 %v1540, %v2257
        %v2266 = vadd.f32 %v2246, %v2258
        %v2267 = vadd.f32 %v2247, %v2259
        %v2268 = vadd.f32 %v2248, %v2260
        %v2269 = vadd.f32 %v2249, %v2261
        %v2270 = vadd.f32 %v2250, %v2262
        %v2271 = vadd.f32 %v2251, %v2263
        %v2272 = vadd.f32 %v2252, %v2264
        %v2273 = vadd.f32 %v2253, %v2265
        %v2274 = vlaneseq
        %v2275 = vshrl.u32 %v2274, 7
        %v2276 = vsub.s32 4, %v2275
        %v2277 = vrot.slane %v539, %v2276
        %v2279 = vcombine.high %v2277, %v2277
        %v2281 = vunpack.c.l.s4 1983009808
        %v2282 = vunpack.c.0.s8 %v2281
        %v2283 = vlaneseq
        %v2284 = vshrl.u32 %v2283, 7
        %v2285 = vsub.s32 %v2282, %v2284
        %v2286 = vrot.slane %v2277, %v2285
        %v2288 = vunpack.c.l.s4 1983009808
        %v2289 = vunpack.c.0.s8 %v2288
        %v2290 = vlaneseq
        %v2291 = vshrl.u32 %v2290, 7
        %v2292 = vsub.s32 %v2289, %v2291
        %v2293 = vrot.slane %v2279, %v2292
        %v2294 = vcombine.high %v2286, %v2286
        %v2295 = vcombine.high %v2293, %v2293
        %v2296 = vrot.slane %v2286, 1
        %v2297 = vrot.slane %v2294, 1
        %v2298 = vrot.slane %v2293, 1
        %v2299 = vrot.slane %v2295, 1
        %v2308 = vmul.f32 %v565, %v2286
        %v2309 = vmul.f32 %v573, %v2296
        %v2310 = vmul.f32 %v572, %v2294
        %v2311 = vmul.f32 %v574, %v2297
        %v2312 = vmul.f32 %v582, %v2293
        %v2313 = vmul.f32 %v590, %v2298
        %v2314 = vmul.f32 %v589, %v2295
        %v2315 = vmul.f32 %v591, %v2299
        %v2316 = vmul.f32 %v599, %v2286
        %v2317 = vmul.f32 %v607, %v2296
        %v2318 = vmul.f32 %v606, %v2294
        %v2319 = vmul.f32 %v608, %v2297
        %v2320 = vmul.f32 %v616, %v2293
        %v2321 = vmul.f32 %v624, %v2298
        %v2322 = vmul.f32 %v623, %v2295
        %v2323 = vmul.f32 %v625, %v2299
        %v2324 = vmul.f32 %v633, %v2286
        %v2325 = vmul.f32 %v641, %v2296
        %v2326 = vmul.f32 %v640, %v2294
        %v2327 = vmul.f32 %v642, %v2297
        %v2328 = vmul.f32 %v650, %v2293
        %v2329 = vmul.f32 %v658, %v2298
        %v2330 = vmul.f32 %v657, %v2295
        %v2331 = vmul.f32 %v659, %v2299
        %v2332 = vmul.f32 %v667, %v2286
        %v2333 = vmul.f32 %v675, %v2296
        %v2334 = vmul.f32 %v674, %v2294
        %v2335 = vmul.f32 %v676, %v2297
        %v2336 = vmul.f32 %v684, %v2293
        %v2337 = vmul.f32 %v692, %v2298
        %v2338 = vmul.f32 %v691, %v2295
        %v2339 = vmul.f32 %v693, %v2299
        %v2340 = vmul.f32 %v701, %v2286
        %v2341 = vmul.f32 %v709, %v2296
        %v2342 = vmul.f32 %v708, %v2294
        %v2343 = vmul.f32 %v710, %v2297
        %v2344 = vmul.f32 %v718, %v2293
        %v2345 = vmul.f32 %v726, %v2298
        %v2346 = vmul.f32 %v725, %v2295
        %v2347 = vmul.f32 %v727, %v2299
        %v2348 = vmul.f32 %v735, %v2286
        %v2349 = vmul.f32 %v743, %v2296
        %v2350 = vmul.f32 %v742, %v2294
        %v2351 = vmul.f32 %v744, %v2297
        %v2352 = vmul.f32 %v752, %v2293
        %v2353 = vmul.f32 %v760, %v2298
        %v2354 = vmul.f32 %v759, %v2295
        %v2355 = vmul.f32 %v761, %v2299
        %v2356 = vmul.f32 %v769, %v2286
        %v2357 = vmul.f32 %v777, %v2296
        %v2358 = vmul.f32 %v776, %v2294
        %v2359 = vmul.f32 %v778, %v2297
        %v2360 = vmul.f32 %v786, %v2293
        %v2361 = vmul.f32 %v794, %v2298
        %v2362 = vmul.f32 %v793, %v2295
        %v2363 = vmul.f32 %v795, %v2299
        %v2364 = vmul.f32 %v803, %v2286
        %v2365 = vmul.f32 %v811, %v2296
        %v2366 = vmul.f32 %v810, %v2294
        %v2367 = vmul.f32 %v812, %v2297
        %v2368 = vmul.f32 %v820, %v2293
        %v2369 = vmul.f32 %v828, %v2298
        %v2370 = vmul.f32 %v827, %v2295
        %v2371 = vmul.f32 %v829, %v2299
        %v2436 = vlaneseq
        %v2437 = vshrl.u32 %v2436, 7
        %v2438 = vsub.s32 0, %v2437
        %v2439 = vrot.slane %v2308, %v2438
        %v2440 = vlaneseq
        %v2441 = vshrl.u32 %v2440, 7
        %v2442 = vsub.s32 0, %v2441
        %v2443 = vrot.slane %v2309, %v2442
        %v2444 = vlaneseq
        %v2445 = vshrl.u32 %v2444, 7
        %v2446 = vsub.s32 0, %v2445
        %v2447 = vrot.slane %v2310, %v2446
        %v2448 = vlaneseq
        %v2449 = vshrl.u32 %v2448, 7
        %v2450 = vsub.s32 0, %v2449
        %v2451 = vrot.slane %v2311, %v2450
        %v2452 = vlaneseq
        %v2453 = vshrl.u32 %v2452, 7
        %v2454 = vsub.s32 0, %v2453
        %v2455 = vrot.slane %v2312, %v2454
        %v2456 = vlaneseq
        %v2457 = vshrl.u32 %v2456, 7
        %v2458 = vsub.s32 0, %v2457
        %v2459 = vrot.slane %v2313, %v2458
        %v2460 = vlaneseq
        %v2461 = vshrl.u32 %v2460, 7
        %v2462 = vsub.s32 0, %v2461
        %v2463 = vrot.slane %v2314, %v2462
        %v2464 = vlaneseq
        %v2465 = vshrl.u32 %v2464, 7
        %v2466 = vsub.s32 0, %v2465
        %v2467 = vrot.slane %v2315, %v2466
        %v2468 = vlaneseq
        %v2469 = vshrl.u32 %v2468, 7
        %v2470 = vsub.s32 0, %v2469
        %v2471 = vrot.slane %v2316, %v2470
        %v2472 = vlaneseq
        %v2473 = vshrl.u32 %v2472, 7
        %v2474 = vsub.s32 0, %v2473
        %v2475 = vrot.slane %v2317, %v2474
        %v2476 = vlaneseq
        %v2477 = vshrl.u32 %v2476, 7
        %v2478 = vsub.s32 0, %v2477
        %v2479 = vrot.slane %v2318, %v2478
        %v2480 = vlaneseq
        %v2481 = vshrl.u32 %v2480, 7
        %v2482 = vsub.s32 0, %v2481
        %v2483 = vrot.slane %v2319, %v2482
        %v2484 = vlaneseq
        %v2485 = vshrl.u32 %v2484, 7
        %v2486 = vsub.s32 0, %v2485
        %v2487 = vrot.slane %v2320, %v2486
        %v2488 = vlaneseq
        %v2489 = vshrl.u32 %v2488, 7
        %v2490 = vsub.s32 0, %v2489
        %v2491 = vrot.slane %v2321, %v2490
        %v2492 = vlaneseq
        %v2493 = vshrl.u32 %v2492, 7
        %v2494 = vsub.s32 0, %v2493
        %v2495 = vrot.slane %v2322, %v2494
        %v2496 = vlaneseq
        %v2497 = vshrl.u32 %v2496, 7
        %v2498 = vsub.s32 0, %v2497
        %v2499 = vrot.slane %v2323, %v2498
        %v2500 = vlaneseq
        %v2501 = vshrl.u32 %v2500, 7
        %v2502 = vsub.s32 0, %v2501
        %v2503 = vrot.slane %v2324, %v2502
        %v2504 = vlaneseq
        %v2505 = vshrl.u32 %v2504, 7
        %v2506 = vsub.s32 0, %v2505
        %v2507 = vrot.slane %v2325, %v2506
        %v2508 = vlaneseq
        %v2509 = vshrl.u32 %v2508, 7
        %v2510 = vsub.s32 0, %v2509
        %v2511 = vrot.slane %v2326, %v2510
        %v2512 = vlaneseq
        %v2513 = vshrl.u32 %v2512, 7
        %v2514 = vsub.s32 0, %v2513
        %v2515 = vrot.slane %v2327, %v2514
        %v2516 = vlaneseq
        %v2517 = vshrl.u32 %v2516, 7
        %v2518 = vsub.s32 0, %v2517
        %v2519 = vrot.slane %v2328, %v2518
        %v2520 = vlaneseq
        %v2521 = vshrl.u32 %v2520, 7
        %v2522 = vsub.s32 0, %v2521
        %v2523 = vrot.slane %v2329, %v2522
        %v2524 = vlaneseq
        %v2525 = vshrl.u32 %v2524, 7
        %v2526 = vsub.s32 0, %v2525
        %v2527 = vrot.slane %v2330, %v2526
        %v2528 = vlaneseq
        %v2529 = vshrl.u32 %v2528, 7
        %v2530 = vsub.s32 0, %v2529
        %v2531 = vrot.slane %v2331, %v2530
        %v2532 = vlaneseq
        %v2533 = vshrl.u32 %v2532, 7
        %v2534 = vsub.s32 0, %v2533
        %v2535 = vrot.slane %v2332, %v2534
        %v2536 = vlaneseq
        %v2537 = vshrl.u32 %v2536, 7
        %v2538 = vsub.s32 0, %v2537
        %v2539 = vrot.slane %v2333, %v2538
        %v2540 = vlaneseq
        %v2541 = vshrl.u32 %v2540, 7
        %v2542 = vsub.s32 0, %v2541
        %v2543 = vrot.slane %v2334, %v2542
        %v2544 = vlaneseq
        %v2545 = vshrl.u32 %v2544, 7
        %v2546 = vsub.s32 0, %v2545
        %v2547 = vrot.slane %v2335, %v2546
        %v2548 = vlaneseq
        %v2549 = vshrl.u32 %v2548, 7
        %v2550 = vsub.s32 0, %v2549
        %v2551 = vrot.slane %v2336, %v2550
        %v2552 = vlaneseq
        %v2553 = vshrl.u32 %v2552, 7
        %v2554 = vsub.s32 0, %v2553
        %v2555 = vrot.slane %v2337, %v2554
        %v2556 = vlaneseq
        %v2557 = vshrl.u32 %v2556, 7
        %v2558 = vsub.s32 0, %v2557
        %v2559 = vrot.slane %v2338, %v2558
        %v2560 = vlaneseq
        %v2561 = vshrl.u32 %v2560, 7
        %v2562 = vsub.s32 0, %v2561
        %v2563 = vrot.slane %v2339, %v2562
        %v2564 = vlaneseq
        %v2565 = vshrl.u32 %v2564, 7
        %v2566 = vsub.s32 0, %v2565
        %v2567 = vrot.slane %v2340, %v2566
        %v2568 = vlaneseq
        %v2569 = vshrl.u32 %v2568, 7
        %v2570 = vsub.s32 0, %v2569
        %v2571 = vrot.slane %v2341, %v2570
        %v2572 = vlaneseq
        %v2573 = vshrl.u32 %v2572, 7
        %v2574 = vsub.s32 0, %v2573
        %v2575 = vrot.slane %v2342, %v2574
        %v2576 = vlaneseq
        %v2577 = vshrl.u32 %v2576, 7
        %v2578 = vsub.s32 0, %v2577
        %v2579 = vrot.slane %v2343, %v2578
        %v2580 = vlaneseq
        %v2581 = vshrl.u32 %v2580, 7
        %v2582 = vsub.s32 0, %v2581
        %v2583 = vrot.slane %v2344, %v2582
        %v2584 = vlaneseq
        %v2585 = vshrl.u32 %v2584, 7
        %v2586 = vsub.s32 0, %v2585
        %v2587 = vrot.slane %v2345, %v2586
        %v2588 = vlaneseq
        %v2589 = vshrl.u32 %v2588, 7
        %v2590 = vsub.s32 0, %v2589
        %v2591 = vrot.slane %v2346, %v2590
        %v2592 = vlaneseq
        %v2593 = vshrl.u32 %v2592, 7
        %v2594 = vsub.s32 0, %v2593
        %v2595 = vrot.slane %v2347, %v2594
        %v2596 = vlaneseq
        %v2597 = vshrl.u32 %v2596, 7
        %v2598 = vsub.s32 0, %v2597
        %v2599 = vrot.slane %v2348, %v2598
        %v2600 = vlaneseq
        %v2601 = vshrl.u32 %v2600, 7
        %v2602 = vsub.s32 0, %v2601
        %v2603 = vrot.slane %v2349, %v2602
        %v2604 = vlaneseq
        %v2605 = vshrl.u32 %v2604, 7
        %v2606 = vsub.s32 0, %v2605
        %v2607 = vrot.slane %v2350, %v2606
        %v2608 = vlaneseq
        %v2609 = vshrl.u32 %v2608, 7
        %v2610 = vsub.s32 0, %v2609
        %v2611 = vrot.slane %v2351, %v2610
        %v2612 = vlaneseq
        %v2613 = vshrl.u32 %v2612, 7
        %v2614 = vsub.s32 0, %v2613
        %v2615 = vrot.slane %v2352, %v2614
        %v2616 = vlaneseq
        %v2617 = vshrl.u32 %v2616, 7
        %v2618 = vsub.s32 0, %v2617
        %v2619 = vrot.slane %v2353, %v2618
        %v2620 = vlaneseq
        %v2621 = vshrl.u32 %v2620, 7
        %v2622 = vsub.s32 0, %v2621
        %v2623 = vrot.slane %v2354, %v2622
        %v2624 = vlaneseq
        %v2625 = vshrl.u32 %v2624, 7
        %v2626 = vsub.s32 0, %v2625
        %v2627 = vrot.slane %v2355, %v2626
        %v2628 = vlaneseq
        %v2629 = vshrl.u32 %v2628, 7
        %v2630 = vsub.s32 0, %v2629
        %v2631 = vrot.slane %v2356, %v2630
        %v2632 = vlaneseq
        %v2633 = vshrl.u32 %v2632, 7
        %v2634 = vsub.s32 0, %v2633
        %v2635 = vrot.slane %v2357, %v2634
        %v2636 = vlaneseq
        %v2637 = vshrl.u32 %v2636, 7
        %v2638 = vsub.s32 0, %v2637
        %v2639 = vrot.slane %v2358, %v2638
        %v2640 = vlaneseq
        %v2641 = vshrl.u32 %v2640, 7
        %v2642 = vsub.s32 0, %v2641
        %v2643 = vrot.slane %v2359, %v2642
        %v2644 = vlaneseq
        %v2645 = vshrl.u32 %v2644, 7
        %v2646 = vsub.s32 0, %v2645
        %v2647 = vrot.slane %v2360, %v2646
        %v2648 = vlaneseq
        %v2649 = vshrl.u32 %v2648, 7
        %v2650 = vsub.s32 0, %v2649
        %v2651 = vrot.slane %v2361, %v2650
        %v2652 = vlaneseq
        %v2653 = vshrl.u32 %v2652, 7
        %v2654 = vsub.s32 0, %v2653
        %v2655 = vrot.slane %v2362, %v2654
        %v2656 = vlaneseq
        %v2657 = vshrl.u32 %v2656, 7
        %v2658 = vsub.s32 0, %v2657
        %v2659 = vrot.slane %v2363, %v2658
        %v2660 = vlaneseq
        %v2661 = vshrl.u32 %v2660, 7
        %v2662 = vsub.s32 0, %v2661
        %v2663 = vrot.slane %v2364, %v2662
        %v2664 = vlaneseq
        %v2665 = vshrl.u32 %v2664, 7
        %v2666 = vsub.s32 0, %v2665
        %v2667 = vrot.slane %v2365, %v2666
        %v2668 = vlaneseq
        %v2669 = vshrl.u32 %v2668, 7
        %v2670 = vsub.s32 0, %v2669
        %v2671 = vrot.slane %v2366, %v2670
        %v2672 = vlaneseq
        %v2673 = vshrl.u32 %v2672, 7
        %v2674 = vsub.s32 0, %v2673
        %v2675 = vrot.slane %v2367, %v2674
        %v2676 = vlaneseq
        %v2677 = vshrl.u32 %v2676, 7
        %v2678 = vsub.s32 0, %v2677
        %v2679 = vrot.slane %v2368, %v2678
        %v2680 = vlaneseq
        %v2681 = vshrl.u32 %v2680, 7
        %v2682 = vsub.s32 0, %v2681
        %v2683 = vrot.slane %v2369, %v2682
        %v2684 = vlaneseq
        %v2685 = vshrl.u32 %v2684, 7
        %v2686 = vsub.s32 0, %v2685
        %v2687 = vrot.slane %v2370, %v2686
        %v2688 = vlaneseq
        %v2689 = vshrl.u32 %v2688, 7
        %v2690 = vsub.s32 0, %v2689
        %v2691 = vrot.slane %v2371, %v2690
        %v2692 = vsel %vm2053, %v2443, %v2439
        %v2693 = vsel %vm1470, %v2447, %v2692
        %v2694 = vsel %vm1472, %v2451, %v2693
        %v2695 = vsel %vm1474, %v2455, %v2694
        %v2696 = vsel %vm1476, %v2459, %v2695
        %v2697 = vsel %vm1478, %v2463, %v2696
        %v2698 = vsel %vm1480, %v2467, %v2697
        %v2699 = vsel %vm2053, %v2475, %v2471
        %v2700 = vsel %vm1470, %v2479, %v2699
        %v2701 = vsel %vm1472, %v2483, %v2700
        %v2702 = vsel %vm1474, %v2487, %v2701
        %v2703 = vsel %vm1476, %v2491, %v2702
        %v2704 = vsel %vm1478, %v2495, %v2703
        %v2705 = vsel %vm1480, %v2499, %v2704
        %v2706 = vsel %vm2053, %v2507, %v2503
        %v2707 = vsel %vm1470, %v2511, %v2706
        %v2708 = vsel %vm1472, %v2515, %v2707
        %v2709 = vsel %vm1474, %v2519, %v2708
        %v2710 = vsel %vm1476, %v2523, %v2709
        %v2711 = vsel %vm1478, %v2527, %v2710
        %v2712 = vsel %vm1480, %v2531, %v2711
        %v2713 = vsel %vm2053, %v2539, %v2535
        %v2714 = vsel %vm1470, %v2543, %v2713
        %v2715 = vsel %vm1472, %v2547, %v2714
        %v2716 = vsel %vm1474, %v2551, %v2715
        %v2717 = vsel %vm1476, %v2555, %v2716
        %v2718 = vsel %vm1478, %v2559, %v2717
        %v2719 = vsel %vm1480, %v2563, %v2718
        %v2720 = vsel %vm2053, %v2571, %v2567
        %v2721 = vsel %vm1470, %v2575, %v2720
        %v2722 = vsel %vm1472, %v2579, %v2721
        %v2723 = vsel %vm1474, %v2583, %v2722
        %v2724 = vsel %vm1476, %v2587, %v2723
        %v2725 = vsel %vm1478, %v2591, %v2724
        %v2726 = vsel %vm1480, %v2595, %v2725
        %v2727 = vsel %vm2053, %v2603, %v2599
        %v2728 = vsel %vm1470, %v2607, %v2727
        %v2729 = vsel %vm1472, %v2611, %v2728
        %v2730 = vsel %vm1474, %v2615, %v2729
        %v2731 = vsel %vm1476, %v2619, %v2730
        %v2732 = vsel %vm1478, %v2623, %v2731
        %v2733 = vsel %vm1480, %v2627, %v2732
        %v2734 = vsel %vm2053, %v2635, %v2631
        %v2735 = vsel %vm1470, %v2639, %v2734
        %v2736 = vsel %vm1472, %v2643, %v2735
        %v2737 = vsel %vm1474, %v2647, %v2736
        %v2738 = vsel %vm1476, %v2651, %v2737
        %v2739 = vsel %vm1478, %v2655, %v2738
        %v2740 = vsel %vm1480, %v2659, %v2739
        %v2741 = vsel %vm2053, %v2667, %v2663
        %v2742 = vsel %vm1470, %v2671, %v2741
        %v2743 = vsel %vm1472, %v2675, %v2742
        %v2744 = vsel %vm1474, %v2679, %v2743
        %v2745 = vsel %vm1476, %v2683, %v2744
        %v2746 = vsel %vm1478, %v2687, %v2745
        %v2747 = vsel %vm1480, %v2691, %v2746
        %v2756 = vadd.f32 %v2266, %v2698
        %v2757 = vadd.f32 %v2267, %v2705
        %v2758 = vadd.f32 %v2268, %v2712
        %v2759 = vadd.f32 %v2269, %v2719
        %v2760 = vadd.f32 %v2270, %v2726
        %v2761 = vadd.f32 %v2271, %v2733
        %v2762 = vadd.f32 %v2272, %v2740
        %v2763 = vadd.f32 %v2273, %v2747
        %v2764 = vlaneseq
        %v2765 = vshrl.u32 %v2764, 7
        %v2766 = vsub.s32 5, %v2765
        %v2767 = vrot.slane %v539, %v2766
        %v2769 = vcombine.high %v2767, %v2767
        %v2771 = vunpack.c.l.s4 1983009808
        %v2772 = vunpack.c.0.s8 %v2771
        %v2773 = vlaneseq
        %v2774 = vshrl.u32 %v2773, 7
        %v2775 = vsub.s32 %v2772, %v2774
        %v2776 = vrot.slane %v2767, %v2775
        %v2778 = vunpack.c.l.s4 1983009808
        %v2779 = vunpack.c.0.s8 %v2778
        %v2780 = vlaneseq
        %v2781 = vshrl.u32 %v2780, 7
        %v2782 = vsub.s32 %v2779, %v2781
        %v2783 = vrot.slane %v2769, %v2782
        %v2784 = vcombine.high %v2776, %v2776
        %v2785 = vcombine.high %v2783, %v2783
        %v2786 = vrot.slane %v2776, 7
        %v2787 = vrot.slane %v2784, 7
        %v2788 = vrot.slane %v2783, 7
        %v2789 = vrot.slane %v2785, 7
        %v2798 = vmul.f32 %v565, %v2786
        %v2799 = vmul.f32 %v573, %v2776
        %v2800 = vmul.f32 %v572, %v2787
        %v2801 = vmul.f32 %v574, %v2784
        %v2802 = vmul.f32 %v582, %v2788
        %v2803 = vmul.f32 %v590, %v2783
        %v2804 = vmul.f32 %v589, %v2789
        %v2805 = vmul.f32 %v591, %v2785
        %v2806 = vmul.f32 %v599, %v2786
        %v2807 = vmul.f32 %v607, %v2776
        %v2808 = vmul.f32 %v606, %v2787
        %v2809 = vmul.f32 %v608, %v2784
        %v2810 = vmul.f32 %v616, %v2788
        %v2811 = vmul.f32 %v624, %v2783
        %v2812 = vmul.f32 %v623, %v2789
        %v2813 = vmul.f32 %v625, %v2785
        %v2814 = vmul.f32 %v633, %v2786
        %v2815 = vmul.f32 %v641, %v2776
        %v2816 = vmul.f32 %v640, %v2787
        %v2817 = vmul.f32 %v642, %v2784
        %v2818 = vmul.f32 %v650, %v2788
        %v2819 = vmul.f32 %v658, %v2783
        %v2820 = vmul.f32 %v657, %v2789
        %v2821 = vmul.f32 %v659, %v2785
        %v2822 = vmul.f32 %v667, %v2786
        %v2823 = vmul.f32 %v675, %v2776
        %v2824 = vmul.f32 %v674, %v2787
        %v2825 = vmul.f32 %v676, %v2784
        %v2826 = vmul.f32 %v684, %v2788
        %v2827 = vmul.f32 %v692, %v2783
        %v2828 = vmul.f32 %v691, %v2789
        %v2829 = vmul.f32 %v693, %v2785
        %v2830 = vmul.f32 %v701, %v2786
        %v2831 = vmul.f32 %v709, %v2776
        %v2832 = vmul.f32 %v708, %v2787
        %v2833 = vmul.f32 %v710, %v2784
        %v2834 = vmul.f32 %v718, %v2788
        %v2835 = vmul.f32 %v726, %v2783
        %v2836 = vmul.f32 %v725, %v2789
        %v2837 = vmul.f32 %v727, %v2785
        %v2838 = vmul.f32 %v735, %v2786
        %v2839 = vmul.f32 %v743, %v2776
        %v2840 = vmul.f32 %v742, %v2787
        %v2841 = vmul.f32 %v744, %v2784
        %v2842 = vmul.f32 %v752, %v2788
        %v2843 = vmul.f32 %v760, %v2783
        %v2844 = vmul.f32 %v759, %v2789
        %v2845 = vmul.f32 %v761, %v2785
        %v2846 = vmul.f32 %v769, %v2786
        %v2847 = vmul.f32 %v777, %v2776
        %v2848 = vmul.f32 %v776, %v2787
        %v2849 = vmul.f32 %v778, %v2784
        %v2850 = vmul.f32 %v786, %v2788
        %v2851 = vmul.f32 %v794, %v2783
        %v2852 = vmul.f32 %v793, %v2789
        %v2853 = vmul.f32 %v795, %v2785
        %v2854 = vmul.f32 %v803, %v2786
        %v2855 = vmul.f32 %v811, %v2776
        %v2856 = vmul.f32 %v810, %v2787
        %v2857 = vmul.f32 %v812, %v2784
        %v2858 = vmul.f32 %v820, %v2788
        %v2859 = vmul.f32 %v828, %v2783
        %v2860 = vmul.f32 %v827, %v2789
        %v2861 = vmul.f32 %v829, %v2785
        %v2926 = vlaneseq
        %v2927 = vshrl.u32 %v2926, 7
        %v2928 = vsub.s32 1, %v2927
        %v2929 = vrot.slane %v2798, %v2928
        %v2930 = vlaneseq
        %v2931 = vshrl.u32 %v2930, 7
        %v2932 = vsub.s32 1, %v2931
        %v2933 = vrot.slane %v2799, %v2932
        %v2934 = vlaneseq
        %v2935 = vshrl.u32 %v2934, 7
        %v2936 = vsub.s32 1, %v2935
        %v2937 = vrot.slane %v2800, %v2936
        %v2938 = vlaneseq
        %v2939 = vshrl.u32 %v2938, 7
        %v2940 = vsub.s32 1, %v2939
        %v2941 = vrot.slane %v2801, %v2940
        %v2942 = vlaneseq
        %v2943 = vshrl.u32 %v2942, 7
        %v2944 = vsub.s32 1, %v2943
        %v2945 = vrot.slane %v2802, %v2944
        %v2946 = vlaneseq
        %v2947 = vshrl.u32 %v2946, 7
        %v2948 = vsub.s32 1, %v2947
        %v2949 = vrot.slane %v2803, %v2948
        %v2950 = vlaneseq
        %v2951 = vshrl.u32 %v2950, 7
        %v2952 = vsub.s32 1, %v2951
        %v2953 = vrot.slane %v2804, %v2952
        %v2954 = vlaneseq
        %v2955 = vshrl.u32 %v2954, 7
        %v2956 = vsub.s32 1, %v2955
        %v2957 = vrot.slane %v2805, %v2956
        %v2958 = vlaneseq
        %v2959 = vshrl.u32 %v2958, 7
        %v2960 = vsub.s32 1, %v2959
        %v2961 = vrot.slane %v2806, %v2960
        %v2962 = vlaneseq
        %v2963 = vshrl.u32 %v2962, 7
        %v2964 = vsub.s32 1, %v2963
        %v2965 = vrot.slane %v2807, %v2964
        %v2966 = vlaneseq
        %v2967 = vshrl.u32 %v2966, 7
        %v2968 = vsub.s32 1, %v2967
        %v2969 = vrot.slane %v2808, %v2968
        %v2970 = vlaneseq
        %v2971 = vshrl.u32 %v2970, 7
        %v2972 = vsub.s32 1, %v2971
        %v2973 = vrot.slane %v2809, %v2972
        %v2974 = vlaneseq
        %v2975 = vshrl.u32 %v2974, 7
        %v2976 = vsub.s32 1, %v2975
        %v2977 = vrot.slane %v2810, %v2976
        %v2978 = vlaneseq
        %v2979 = vshrl.u32 %v2978, 7
        %v2980 = vsub.s32 1, %v2979
        %v2981 = vrot.slane %v2811, %v2980
        %v2982 = vlaneseq
        %v2983 = vshrl.u32 %v2982, 7
        %v2984 = vsub.s32 1, %v2983
        %v2985 = vrot.slane %v2812, %v2984
        %v2986 = vlaneseq
        %v2987 = vshrl.u32 %v2986, 7
        %v2988 = vsub.s32 1, %v2987
        %v2989 = vrot.slane %v2813, %v2988
        %v2990 = vlaneseq
        %v2991 = vshrl.u32 %v2990, 7
        %v2992 = vsub.s32 1, %v2991
        %v2993 = vrot.slane %v2814, %v2992
        %v2994 = vlaneseq
        %v2995 = vshrl.u32 %v2994, 7
        %v2996 = vsub.s32 1, %v2995
        %v2997 = vrot.slane %v2815, %v2996
        %v2998 = vlaneseq
        %v2999 = vshrl.u32 %v2998, 7
        %v3000 = vsub.s32 1, %v2999
        %v3001 = vrot.slane %v2816, %v3000
        %v3002 = vlaneseq
        %v3003 = vshrl.u32 %v3002, 7
        %v3004 = vsub.s32 1, %v3003
        %v3005 = vrot.slane %v2817, %v3004
        %v3006 = vlaneseq
        %v3007 = vshrl.u32 %v3006, 7
        %v3008 = vsub.s32 1, %v3007
        %v3009 = vrot.slane %v2818, %v3008
        %v3010 = vlaneseq
        %v3011 = vshrl.u32 %v3010, 7
        %v3012 = vsub.s32 1, %v3011
        %v3013 = vrot.slane %v2819, %v3012
        %v3014 = vlaneseq
        %v3015 = vshrl.u32 %v3014, 7
        %v3016 = vsub.s32 1, %v3015
        %v3017 = vrot.slane %v2820, %v3016
        %v3018 = vlaneseq
        %v3019 = vshrl.u32 %v3018, 7
        %v3020 = vsub.s32 1, %v3019
        %v3021 = vrot.slane %v2821, %v3020
        %v3022 = vlaneseq
        %v3023 = vshrl.u32 %v3022, 7
        %v3024 = vsub.s32 1, %v3023
        %v3025 = vrot.slane %v2822, %v3024
        %v3026 = vlaneseq
        %v3027 = vshrl.u32 %v3026, 7
        %v3028 = vsub.s32 1, %v3027
        %v3029 = vrot.slane %v2823, %v3028
        %v3030 = vlaneseq
        %v3031 = vshrl.u32 %v3030, 7
        %v3032 = vsub.s32 1, %v3031
        %v3033 = vrot.slane %v2824, %v3032
        %v3034 = vlaneseq
        %v3035 = vshrl.u32 %v3034, 7
        %v3036 = vsub.s32 1, %v3035
        %v3037 = vrot.slane %v2825, %v3036
        %v3038 = vlaneseq
        %v3039 = vshrl.u32 %v3038, 7
        %v3040 = vsub.s32 1, %v3039
        %v3041 = vrot.slane %v2826, %v3040
        %v3042 = vlaneseq
        %v3043 = vshrl.u32 %v3042, 7
        %v3044 = vsub.s32 1, %v3043
        %v3045 = vrot.slane %v2827, %v3044
        %v3046 = vlaneseq
        %v3047 = vshrl.u32 %v3046, 7
        %v3048 = vsub.s32 1, %v3047
        %v3049 = vrot.slane %v2828, %v3048
        %v3050 = vlaneseq
        %v3051 = vshrl.u32 %v3050, 7
        %v3052 = vsub.s32 1, %v3051
        %v3053 = vrot.slane %v2829, %v3052
        %v3054 = vlaneseq
        %v3055 = vshrl.u32 %v3054, 7
        %v3056 = vsub.s32 1, %v3055
        %v3057 = vrot.slane %v2830, %v3056
        %v3058 = vlaneseq
        %v3059 = vshrl.u32 %v3058, 7
        %v3060 = vsub.s32 1, %v3059
        %v3061 = vrot.slane %v2831, %v3060
        %v3062 = vlaneseq
        %v3063 = vshrl.u32 %v3062, 7
        %v3064 = vsub.s32 1, %v3063
        %v3065 = vrot.slane %v2832, %v3064
        %v3066 = vlaneseq
        %v3067 = vshrl.u32 %v3066, 7
        %v3068 = vsub.s32 1, %v3067
        %v3069 = vrot.slane %v2833, %v3068
        %v3070 = vlaneseq
        %v3071 = vshrl.u32 %v3070, 7
        %v3072 = vsub.s32 1, %v3071
        %v3073 = vrot.slane %v2834, %v3072
        %v3074 = vlaneseq
        %v3075 = vshrl.u32 %v3074, 7
        %v3076 = vsub.s32 1, %v3075
        %v3077 = vrot.slane %v2835, %v3076
        %v3078 = vlaneseq
        %v3079 = vshrl.u32 %v3078, 7
        %v3080 = vsub.s32 1, %v3079
        %v3081 = vrot.slane %v2836, %v3080
        %v3082 = vlaneseq
        %v3083 = vshrl.u32 %v3082, 7
        %v3084 = vsub.s32 1, %v3083
        %v3085 = vrot.slane %v2837, %v3084
        %v3086 = vlaneseq
        %v3087 = vshrl.u32 %v3086, 7
        %v3088 = vsub.s32 1, %v3087
        %v3089 = vrot.slane %v2838, %v3088
        %v3090 = vlaneseq
        %v3091 = vshrl.u32 %v3090, 7
        %v3092 = vsub.s32 1, %v3091
        %v3093 = vrot.slane %v2839, %v3092
        %v3094 = vlaneseq
        %v3095 = vshrl.u32 %v3094, 7
        %v3096 = vsub.s32 1, %v3095
        %v3097 = vrot.slane %v2840, %v3096
        %v3098 = vlaneseq
        %v3099 = vshrl.u32 %v3098, 7
        %v3100 = vsub.s32 1, %v3099
        %v3101 = vrot.slane %v2841, %v3100
        %v3102 = vlaneseq
        %v3103 = vshrl.u32 %v3102, 7
        %v3104 = vsub.s32 1, %v3103
        %v3105 = vrot.slane %v2842, %v3104
        %v3106 = vlaneseq
        %v3107 = vshrl.u32 %v3106, 7
        %v3108 = vsub.s32 1, %v3107
        %v3109 = vrot.slane %v2843, %v3108
        %v3110 = vlaneseq
        %v3111 = vshrl.u32 %v3110, 7
        %v3112 = vsub.s32 1, %v3111
        %v3113 = vrot.slane %v2844, %v3112
        %v3114 = vlaneseq
        %v3115 = vshrl.u32 %v3114, 7
        %v3116 = vsub.s32 1, %v3115
        %v3117 = vrot.slane %v2845, %v3116
        %v3118 = vlaneseq
        %v3119 = vshrl.u32 %v3118, 7
        %v3120 = vsub.s32 1, %v3119
        %v3121 = vrot.slane %v2846, %v3120
        %v3122 = vlaneseq
        %v3123 = vshrl.u32 %v3122, 7
        %v3124 = vsub.s32 1, %v3123
        %v3125 = vrot.slane %v2847, %v3124
        %v3126 = vlaneseq
        %v3127 = vshrl.u32 %v3126, 7
        %v3128 = vsub.s32 1, %v3127
        %v3129 = vrot.slane %v2848, %v3128
        %v3130 = vlaneseq
        %v3131 = vshrl.u32 %v3130, 7
        %v3132 = vsub.s32 1, %v3131
        %v3133 = vrot.slane %v2849, %v3132
        %v3134 = vlaneseq
        %v3135 = vshrl.u32 %v3134, 7
        %v3136 = vsub.s32 1, %v3135
        %v3137 = vrot.slane %v2850, %v3136
        %v3138 = vlaneseq
        %v3139 = vshrl.u32 %v3138, 7
        %v3140 = vsub.s32 1, %v3139
        %v3141 = vrot.slane %v2851, %v3140
        %v3142 = vlaneseq
        %v3143 = vshrl.u32 %v3142, 7
        %v3144 = vsub.s32 1, %v3143
        %v3145 = vrot.slane %v2852, %v3144
        %v3146 = vlaneseq
        %v3147 = vshrl.u32 %v3146, 7
        %v3148 = vsub.s32 1, %v3147
        %v3149 = vrot.slane %v2853, %v3148
        %v3150 = vlaneseq
        %v3151 = vshrl.u32 %v3150, 7
        %v3152 = vsub.s32 1, %v3151
        %v3153 = vrot.slane %v2854, %v3152
        %v3154 = vlaneseq
        %v3155 = vshrl.u32 %v3154, 7
        %v3156 = vsub.s32 1, %v3155
        %v3157 = vrot.slane %v2855, %v3156
        %v3158 = vlaneseq
        %v3159 = vshrl.u32 %v3158, 7
        %v3160 = vsub.s32 1, %v3159
        %v3161 = vrot.slane %v2856, %v3160
        %v3162 = vlaneseq
        %v3163 = vshrl.u32 %v3162, 7
        %v3164 = vsub.s32 1, %v3163
        %v3165 = vrot.slane %v2857, %v3164
        %v3166 = vlaneseq
        %v3167 = vshrl.u32 %v3166, 7
        %v3168 = vsub.s32 1, %v3167
        %v3169 = vrot.slane %v2858, %v3168
        %v3170 = vlaneseq
        %v3171 = vshrl.u32 %v3170, 7
        %v3172 = vsub.s32 1, %v3171
        %v3173 = vrot.slane %v2859, %v3172
        %v3174 = vlaneseq
        %v3175 = vshrl.u32 %v3174, 7
        %v3176 = vsub.s32 1, %v3175
        %v3177 = vrot.slane %v2860, %v3176
        %v3178 = vlaneseq
        %v3179 = vshrl.u32 %v3178, 7
        %v3180 = vsub.s32 1, %v3179
        %v3181 = vrot.slane %v2861, %v3180
        %v3182 = vsel %vm2053, %v2933, %v2929
        %v3183 = vsel %vm1470, %v2937, %v3182
        %v3184 = vsel %vm1472, %v2941, %v3183
        %v3185 = vsel %vm1474, %v2945, %v3184
        %v3186 = vsel %vm1476, %v2949, %v3185
        %v3187 = vsel %vm1478, %v2953, %v3186
        %v3188 = vsel %vm1480, %v2957, %v3187
        %v3189 = vsel %vm2053, %v2965, %v2961
        %v3190 = vsel %vm1470, %v2969, %v3189
        %v3191 = vsel %vm1472, %v2973, %v3190
        %v3192 = vsel %vm1474, %v2977, %v3191
        %v3193 = vsel %vm1476, %v2981, %v3192
        %v3194 = vsel %vm1478, %v2985, %v3193
        %v3195 = vsel %vm1480, %v2989, %v3194
        %v3196 = vsel %vm2053, %v2997, %v2993
        %v3197 = vsel %vm1470, %v3001, %v3196
        %v3198 = vsel %vm1472, %v3005, %v3197
        %v3199 = vsel %vm1474, %v3009, %v3198
        %v3200 = vsel %vm1476, %v3013, %v3199
        %v3201 = vsel %vm1478, %v3017, %v3200
        %v3202 = vsel %vm1480, %v3021, %v3201
        %v3203 = vsel %vm2053, %v3029, %v3025
        %v3204 = vsel %vm1470, %v3033, %v3203
        %v3205 = vsel %vm1472, %v3037, %v3204
        %v3206 = vsel %vm1474, %v3041, %v3205
        %v3207 = vsel %vm1476, %v3045, %v3206
        %v3208 = vsel %vm1478, %v3049, %v3207
        %v3209 = vsel %vm1480, %v3053, %v3208
        %v3210 = vsel %vm2053, %v3061, %v3057
        %v3211 = vsel %vm1470, %v3065, %v3210
        %v3212 = vsel %vm1472, %v3069, %v3211
        %v3213 = vsel %vm1474, %v3073, %v3212
        %v3214 = vsel %vm1476, %v3077, %v3213
        %v3215 = vsel %vm1478, %v3081, %v3214
        %v3216 = vsel %vm1480, %v3085, %v3215
        %v3217 = vsel %vm2053, %v3093, %v3089
        %v3218 = vsel %vm1470, %v3097, %v3217
        %v3219 = vsel %vm1472, %v3101, %v3218
        %v3220 = vsel %vm1474, %v3105, %v3219
        %v3221 = vsel %vm1476, %v3109, %v3220
        %v3222 = vsel %vm1478, %v3113, %v3221
        %v3223 = vsel %vm1480, %v3117, %v3222
        %v3224 = vsel %vm2053, %v3125, %v3121
        %v3225 = vsel %vm1470, %v3129, %v3224
        %v3226 = vsel %vm1472, %v3133, %v3225
        %v3227 = vsel %vm1474, %v3137, %v3226
        %v3228 = vsel %vm1476, %v3141, %v3227
        %v3229 = vsel %vm1478, %v3145, %v3228
        %v3230 = vsel %vm1480, %v3149, %v3229
        %v3231 = vsel %vm2053, %v3157, %v3153
        %v3232 = vsel %vm1470, %v3161, %v3231
        %v3233 = vsel %vm1472, %v3165, %v3232
        %v3234 = vsel %vm1474, %v3169, %v3233
        %v3235 = vsel %vm1476, %v3173, %v3234
        %v3236 = vsel %vm1478, %v3177, %v3235
        %v3237 = vsel %vm1480, %v3181, %v3236
        %v3246 = vadd.f32 %v2756, %v3188
        %v3247 = vadd.f32 %v2757, %v3195
        %v3248 = vadd.f32 %v2758, %v3202
        %v3249 = vadd.f32 %v2759, %v3209
        %v3250 = vadd.f32 %v2760, %v3216
        %v3251 = vadd.f32 %v2761, %v3223
        %v3252 = vadd.f32 %v2762, %v3230
        %v3253 = vadd.f32 %v2763, %v3237
        %v3254 = vlaneseq
        %v3255 = vshrl.u32 %v3254, 7
        %v3256 = vsub.s32 6, %v3255
        %v3257 = vrot.slane %v539, %v3256
        %v3258 = vmul.f32 %v1821, %v3257
        %v3259 = vmul.f32 %v1822, %v3257
        %v3260 = vmul.f32 %v1823, %v3257
        %v3261 = vmul.f32 %v1824, %v3257
        %v3262 = vmul.f32 %v1825, %v3257
        %v3263 = vmul.f32 %v1826, %v3257
        %v3264 = vmul.f32 %v1827, %v3257
        %v3265 = vmul.f32 %v1828, %v3257
        %v3266 = vadd.f32 %v3246, %v3258
        %v3267 = vadd.f32 %v3247, %v3259
        %v3268 = vadd.f32 %v3248, %v3260
        %v3269 = vadd.f32 %v3249, %v3261
        %v3270 = vadd.f32 %v3250, %v3262
        %v3271 = vadd.f32 %v3251, %v3263
        %v3272 = vadd.f32 %v3252, %v3264
        %v3273 = vadd.f32 %v3253, %v3265
        %v3274 = vlaneseq
        %v3275 = vshrl.u32 %v3274, 7
        %v3276 = vsub.s32 7, %v3275
        %v3277 = vrot.slane %v539, %v3276
        %v3279 = vcombine.high %v3277, %v3277
        %v3281 = vunpack.c.l.s4 1983009808
        %v3282 = vunpack.c.0.s8 %v3281
        %v3283 = vlaneseq
        %v3284 = vshrl.u32 %v3283, 7
        %v3285 = vsub.s32 %v3282, %v3284
        %v3286 = vrot.slane %v3277, %v3285
        %v3288 = vunpack.c.l.s4 1983009808
        %v3289 = vunpack.c.0.s8 %v3288
        %v3290 = vlaneseq
        %v3291 = vshrl.u32 %v3290, 7
        %v3292 = vsub.s32 %v3289, %v3291
        %v3293 = vrot.slane %v3279, %v3292
        %v3294 = vcombine.high %v3286, %v3286
        %v3295 = vcombine.high %v3293, %v3293
        %v3296 = vrot.slane %v3286, 1
        %v3297 = vrot.slane %v3294, 1
        %v3298 = vrot.slane %v3293, 1
        %v3299 = vrot.slane %v3295, 1
        %v3308 = vmul.f32 %v917, %v3286
        %v3309 = vmul.f32 %v925, %v3296
        %v3310 = vmul.f32 %v924, %v3294
        %v3311 = vmul.f32 %v926, %v3297
        %v3312 = vmul.f32 %v934, %v3293
        %v3313 = vmul.f32 %v942, %v3298
        %v3314 = vmul.f32 %v941, %v3295
        %v3315 = vmul.f32 %v943, %v3299
        %v3316 = vmul.f32 %v951, %v3286
        %v3317 = vmul.f32 %v959, %v3296
        %v3318 = vmul.f32 %v958, %v3294
        %v3319 = vmul.f32 %v960, %v3297
        %v3320 = vmul.f32 %v968, %v3293
        %v3321 = vmul.f32 %v976, %v3298
        %v3322 = vmul.f32 %v975, %v3295
        %v3323 = vmul.f32 %v977, %v3299
        %v3324 = vmul.f32 %v985, %v3286
        %v3325 = vmul.f32 %v993, %v3296
        %v3326 = vmul.f32 %v992, %v3294
        %v3327 = vmul.f32 %v994, %v3297
        %v3328 = vmul.f32 %v1002, %v3293
        %v3329 = vmul.f32 %v1010, %v3298
        %v3330 = vmul.f32 %v1009, %v3295
        %v3331 = vmul.f32 %v1011, %v3299
        %v3332 = vmul.f32 %v1019, %v3286
        %v3333 = vmul.f32 %v1027, %v3296
        %v3334 = vmul.f32 %v1026, %v3294
        %v3335 = vmul.f32 %v1028, %v3297
        %v3336 = vmul.f32 %v1036, %v3293
        %v3337 = vmul.f32 %v1044, %v3298
        %v3338 = vmul.f32 %v1043, %v3295
        %v3339 = vmul.f32 %v1045, %v3299
        %v3340 = vmul.f32 %v1053, %v3286
        %v3341 = vmul.f32 %v1061, %v3296
        %v3342 = vmul.f32 %v1060, %v3294
        %v3343 = vmul.f32 %v1062, %v3297
        %v3344 = vmul.f32 %v1070, %v3293
        %v3345 = vmul.f32 %v1078, %v3298
        %v3346 = vmul.f32 %v1077, %v3295
        %v3347 = vmul.f32 %v1079, %v3299
        %v3348 = vmul.f32 %v1087, %v3286
        %v3349 = vmul.f32 %v1095, %v3296
        %v3350 = vmul.f32 %v1094, %v3294
        %v3351 = vmul.f32 %v1096, %v3297
        %v3352 = vmul.f32 %v1104, %v3293
        %v3353 = vmul.f32 %v1112, %v3298
        %v3354 = vmul.f32 %v1111, %v3295
        %v3355 = vmul.f32 %v1113, %v3299
        %v3356 = vmul.f32 %v1121, %v3286
        %v3357 = vmul.f32 %v1129, %v3296
        %v3358 = vmul.f32 %v1128, %v3294
        %v3359 = vmul.f32 %v1130, %v3297
        %v3360 = vmul.f32 %v1138, %v3293
        %v3361 = vmul.f32 %v1146, %v3298
        %v3362 = vmul.f32 %v1145, %v3295
        %v3363 = vmul.f32 %v1147, %v3299
        %v3364 = vmul.f32 %v1155, %v3286
        %v3365 = vmul.f32 %v1163, %v3296
        %v3366 = vmul.f32 %v1162, %v3294
        %v3367 = vmul.f32 %v1164, %v3297
        %v3368 = vmul.f32 %v1172, %v3293
        %v3369 = vmul.f32 %v1180, %v3298
        %v3370 = vmul.f32 %v1179, %v3295
        %v3371 = vmul.f32 %v1181, %v3299
        %v3436 = vlaneseq
        %v3437 = vshrl.u32 %v3436, 7
        %v3438 = vsub.s32 0, %v3437
        %v3439 = vrot.slane %v3308, %v3438
        %v3440 = vlaneseq
        %v3441 = vshrl.u32 %v3440, 7
        %v3442 = vsub.s32 0, %v3441
        %v3443 = vrot.slane %v3309, %v3442
        %v3444 = vlaneseq
        %v3445 = vshrl.u32 %v3444, 7
        %v3446 = vsub.s32 0, %v3445
        %v3447 = vrot.slane %v3310, %v3446
        %v3448 = vlaneseq
        %v3449 = vshrl.u32 %v3448, 7
        %v3450 = vsub.s32 0, %v3449
        %v3451 = vrot.slane %v3311, %v3450
        %v3452 = vlaneseq
        %v3453 = vshrl.u32 %v3452, 7
        %v3454 = vsub.s32 0, %v3453
        %v3455 = vrot.slane %v3312, %v3454
        %v3456 = vlaneseq
        %v3457 = vshrl.u32 %v3456, 7
        %v3458 = vsub.s32 0, %v3457
        %v3459 = vrot.slane %v3313, %v3458
        %v3460 = vlaneseq
        %v3461 = vshrl.u32 %v3460, 7
        %v3462 = vsub.s32 0, %v3461
        %v3463 = vrot.slane %v3314, %v3462
        %v3464 = vlaneseq
        %v3465 = vshrl.u32 %v3464, 7
        %v3466 = vsub.s32 0, %v3465
        %v3467 = vrot.slane %v3315, %v3466
        %v3468 = vlaneseq
        %v3469 = vshrl.u32 %v3468, 7
        %v3470 = vsub.s32 0, %v3469
        %v3471 = vrot.slane %v3316, %v3470
        %v3472 = vlaneseq
        %v3473 = vshrl.u32 %v3472, 7
        %v3474 = vsub.s32 0, %v3473
        %v3475 = vrot.slane %v3317, %v3474
        %v3476 = vlaneseq
        %v3477 = vshrl.u32 %v3476, 7
        %v3478 = vsub.s32 0, %v3477
        %v3479 = vrot.slane %v3318, %v3478
        %v3480 = vlaneseq
        %v3481 = vshrl.u32 %v3480, 7
        %v3482 = vsub.s32 0, %v3481
        %v3483 = vrot.slane %v3319, %v3482
        %v3484 = vlaneseq
        %v3485 = vshrl.u32 %v3484, 7
        %v3486 = vsub.s32 0, %v3485
        %v3487 = vrot.slane %v3320, %v3486
        %v3488 = vlaneseq
        %v3489 = vshrl.u32 %v3488, 7
        %v3490 = vsub.s32 0, %v3489
        %v3491 = vrot.slane %v3321, %v3490
        %v3492 = vlaneseq
        %v3493 = vshrl.u32 %v3492, 7
        %v3494 = vsub.s32 0, %v3493
        %v3495 = vrot.slane %v3322, %v3494
        %v3496 = vlaneseq
        %v3497 = vshrl.u32 %v3496, 7
        %v3498 = vsub.s32 0, %v3497
        %v3499 = vrot.slane %v3323, %v3498
        %v3500 = vlaneseq
        %v3501 = vshrl.u32 %v3500, 7
        %v3502 = vsub.s32 0, %v3501
        %v3503 = vrot.slane %v3324, %v3502
        %v3504 = vlaneseq
        %v3505 = vshrl.u32 %v3504, 7
        %v3506 = vsub.s32 0, %v3505
        %v3507 = vrot.slane %v3325, %v3506
        %v3508 = vlaneseq
        %v3509 = vshrl.u32 %v3508, 7
        %v3510 = vsub.s32 0, %v3509
        %v3511 = vrot.slane %v3326, %v3510
        %v3512 = vlaneseq
        %v3513 = vshrl.u32 %v3512, 7
        %v3514 = vsub.s32 0, %v3513
        %v3515 = vrot.slane %v3327, %v3514
        %v3516 = vlaneseq
        %v3517 = vshrl.u32 %v3516, 7
        %v3518 = vsub.s32 0, %v3517
        %v3519 = vrot.slane %v3328, %v3518
        %v3520 = vlaneseq
        %v3521 = vshrl.u32 %v3520, 7
        %v3522 = vsub.s32 0, %v3521
        %v3523 = vrot.slane %v3329, %v3522
        %v3524 = vlaneseq
        %v3525 = vshrl.u32 %v3524, 7
        %v3526 = vsub.s32 0, %v3525
        %v3527 = vrot.slane %v3330, %v3526
        %v3528 = vlaneseq
        %v3529 = vshrl.u32 %v3528, 7
        %v3530 = vsub.s32 0, %v3529
        %v3531 = vrot.slane %v3331, %v3530
        %v3532 = vlaneseq
        %v3533 = vshrl.u32 %v3532, 7
        %v3534 = vsub.s32 0, %v3533
        %v3535 = vrot.slane %v3332, %v3534
        %v3536 = vlaneseq
        %v3537 = vshrl.u32 %v3536, 7
        %v3538 = vsub.s32 0, %v3537
        %v3539 = vrot.slane %v3333, %v3538
        %v3540 = vlaneseq
        %v3541 = vshrl.u32 %v3540, 7
        %v3542 = vsub.s32 0, %v3541
        %v3543 = vrot.slane %v3334, %v3542
        %v3544 = vlaneseq
        %v3545 = vshrl.u32 %v3544, 7
        %v3546 = vsub.s32 0, %v3545
        %v3547 = vrot.slane %v3335, %v3546
        %v3548 = vlaneseq
        %v3549 = vshrl.u32 %v3548, 7
        %v3550 = vsub.s32 0, %v3549
        %v3551 = vrot.slane %v3336, %v3550
        %v3552 = vlaneseq
        %v3553 = vshrl.u32 %v3552, 7
        %v3554 = vsub.s32 0, %v3553
        %v3555 = vrot.slane %v3337, %v3554
        %v3556 = vlaneseq
        %v3557 = vshrl.u32 %v3556, 7
        %v3558 = vsub.s32 0, %v3557
        %v3559 = vrot.slane %v3338, %v3558
        %v3560 = vlaneseq
        %v3561 = vshrl.u32 %v3560, 7
        %v3562 = vsub.s32 0, %v3561
        %v3563 = vrot.slane %v3339, %v3562
        %v3564 = vlaneseq
        %v3565 = vshrl.u32 %v3564, 7
        %v3566 = vsub.s32 0, %v3565
        %v3567 = vrot.slane %v3340, %v3566
        %v3568 = vlaneseq
        %v3569 = vshrl.u32 %v3568, 7
        %v3570 = vsub.s32 0, %v3569
        %v3571 = vrot.slane %v3341, %v3570
        %v3572 = vlaneseq
        %v3573 = vshrl.u32 %v3572, 7
        %v3574 = vsub.s32 0, %v3573
        %v3575 = vrot.slane %v3342, %v3574
        %v3576 = vlaneseq
        %v3577 = vshrl.u32 %v3576, 7
        %v3578 = vsub.s32 0, %v3577
        %v3579 = vrot.slane %v3343, %v3578
        %v3580 = vlaneseq
        %v3581 = vshrl.u32 %v3580, 7
        %v3582 = vsub.s32 0, %v3581
        %v3583 = vrot.slane %v3344, %v3582
        %v3584 = vlaneseq
        %v3585 = vshrl.u32 %v3584, 7
        %v3586 = vsub.s32 0, %v3585
        %v3587 = vrot.slane %v3345, %v3586
        %v3588 = vlaneseq
        %v3589 = vshrl.u32 %v3588, 7
        %v3590 = vsub.s32 0, %v3589
        %v3591 = vrot.slane %v3346, %v3590
        %v3592 = vlaneseq
        %v3593 = vshrl.u32 %v3592, 7
        %v3594 = vsub.s32 0, %v3593
        %v3595 = vrot.slane %v3347, %v3594
        %v3596 = vlaneseq
        %v3597 = vshrl.u32 %v3596, 7
        %v3598 = vsub.s32 0, %v3597
        %v3599 = vrot.slane %v3348, %v3598
        %v3600 = vlaneseq
        %v3601 = vshrl.u32 %v3600, 7
        %v3602 = vsub.s32 0, %v3601
        %v3603 = vrot.slane %v3349, %v3602
        %v3604 = vlaneseq
        %v3605 = vshrl.u32 %v3604, 7
        %v3606 = vsub.s32 0, %v3605
        %v3607 = vrot.slane %v3350, %v3606
        %v3608 = vlaneseq
        %v3609 = vshrl.u32 %v3608, 7
        %v3610 = vsub.s32 0, %v3609
        %v3611 = vrot.slane %v3351, %v3610
        %v3612 = vlaneseq
        %v3613 = vshrl.u32 %v3612, 7
        %v3614 = vsub.s32 0, %v3613
        %v3615 = vrot.slane %v3352, %v3614
        %v3616 = vlaneseq
        %v3617 = vshrl.u32 %v3616, 7
        %v3618 = vsub.s32 0, %v3617
        %v3619 = vrot.slane %v3353, %v3618
        %v3620 = vlaneseq
        %v3621 = vshrl.u32 %v3620, 7
        %v3622 = vsub.s32 0, %v3621
        %v3623 = vrot.slane %v3354, %v3622
        %v3624 = vlaneseq
        %v3625 = vshrl.u32 %v3624, 7
        %v3626 = vsub.s32 0, %v3625
        %v3627 = vrot.slane %v3355, %v3626
        %v3628 = vlaneseq
        %v3629 = vshrl.u32 %v3628, 7
        %v3630 = vsub.s32 0, %v3629
        %v3631 = vrot.slane %v3356, %v3630
        %v3632 = vlaneseq
        %v3633 = vshrl.u32 %v3632, 7
        %v3634 = vsub.s32 0, %v3633
        %v3635 = vrot.slane %v3357, %v3634
        %v3636 = vlaneseq
        %v3637 = vshrl.u32 %v3636, 7
        %v3638 = vsub.s32 0, %v3637
        %v3639 = vrot.slane %v3358, %v3638
        %v3640 = vlaneseq
        %v3641 = vshrl.u32 %v3640, 7
        %v3642 = vsub.s32 0, %v3641
        %v3643 = vrot.slane %v3359, %v3642
        %v3644 = vlaneseq
        %v3645 = vshrl.u32 %v3644, 7
        %v3646 = vsub.s32 0, %v3645
        %v3647 = vrot.slane %v3360, %v3646
        %v3648 = vlaneseq
        %v3649 = vshrl.u32 %v3648, 7
        %v3650 = vsub.s32 0, %v3649
        %v3651 = vrot.slane %v3361, %v3650
        %v3652 = vlaneseq
        %v3653 = vshrl.u32 %v3652, 7
        %v3654 = vsub.s32 0, %v3653
        %v3655 = vrot.slane %v3362, %v3654
        %v3656 = vlaneseq
        %v3657 = vshrl.u32 %v3656, 7
        %v3658 = vsub.s32 0, %v3657
        %v3659 = vrot.slane %v3363, %v3658
        %v3660 = vlaneseq
        %v3661 = vshrl.u32 %v3660, 7
        %v3662 = vsub.s32 0, %v3661
        %v3663 = vrot.slane %v3364, %v3662
        %v3664 = vlaneseq
        %v3665 = vshrl.u32 %v3664, 7
        %v3666 = vsub.s32 0, %v3665
        %v3667 = vrot.slane %v3365, %v3666
        %v3668 = vlaneseq
        %v3669 = vshrl.u32 %v3668, 7
        %v3670 = vsub.s32 0, %v3669
        %v3671 = vrot.slane %v3366, %v3670
        %v3672 = vlaneseq
        %v3673 = vshrl.u32 %v3672, 7
        %v3674 = vsub.s32 0, %v3673
        %v3675 = vrot.slane %v3367, %v3674
        %v3676 = vlaneseq
        %v3677 = vshrl.u32 %v3676, 7
        %v3678 = vsub.s32 0, %v3677
        %v3679 = vrot.slane %v3368, %v3678
        %v3680 = vlaneseq
        %v3681 = vshrl.u32 %v3680, 7
        %v3682 = vsub.s32 0, %v3681
        %v3683 = vrot.slane %v3369, %v3682
        %v3684 = vlaneseq
        %v3685 = vshrl.u32 %v3684, 7
        %v3686 = vsub.s32 0, %v3685
        %v3687 = vrot.slane %v3370, %v3686
        %v3688 = vlaneseq
        %v3689 = vshrl.u32 %v3688, 7
        %v3690 = vsub.s32 0, %v3689
        %v3691 = vrot.slane %v3371, %v3690
        %v3692 = vsel %vm2053, %v3443, %v3439
        %v3693 = vsel %vm1470, %v3447, %v3692
        %v3694 = vsel %vm1472, %v3451, %v3693
        %v3695 = vsel %vm1474, %v3455, %v3694
        %v3696 = vsel %vm1476, %v3459, %v3695
        %v3697 = vsel %vm1478, %v3463, %v3696
        %v3698 = vsel %vm1480, %v3467, %v3697
        %v3699 = vsel %vm2053, %v3475, %v3471
        %v3700 = vsel %vm1470, %v3479, %v3699
        %v3701 = vsel %vm1472, %v3483, %v3700
        %v3702 = vsel %vm1474, %v3487, %v3701
        %v3703 = vsel %vm1476, %v3491, %v3702
        %v3704 = vsel %vm1478, %v3495, %v3703
        %v3705 = vsel %vm1480, %v3499, %v3704
        %v3706 = vsel %vm2053, %v3507, %v3503
        %v3707 = vsel %vm1470, %v3511, %v3706
        %v3708 = vsel %vm1472, %v3515, %v3707
        %v3709 = vsel %vm1474, %v3519, %v3708
        %v3710 = vsel %vm1476, %v3523, %v3709
        %v3711 = vsel %vm1478, %v3527, %v3710
        %v3712 = vsel %vm1480, %v3531, %v3711
        %v3713 = vsel %vm2053, %v3539, %v3535
        %v3714 = vsel %vm1470, %v3543, %v3713
        %v3715 = vsel %vm1472, %v3547, %v3714
        %v3716 = vsel %vm1474, %v3551, %v3715
        %v3717 = vsel %vm1476, %v3555, %v3716
        %v3718 = vsel %vm1478, %v3559, %v3717
        %v3719 = vsel %vm1480, %v3563, %v3718
        %v3720 = vsel %vm2053, %v3571, %v3567
        %v3721 = vsel %vm1470, %v3575, %v3720
        %v3722 = vsel %vm1472, %v3579, %v3721
        %v3723 = vsel %vm1474, %v3583, %v3722
        %v3724 = vsel %vm1476, %v3587, %v3723
        %v3725 = vsel %vm1478, %v3591, %v3724
        %v3726 = vsel %vm1480, %v3595, %v3725
        %v3727 = vsel %vm2053, %v3603, %v3599
        %v3728 = vsel %vm1470, %v3607, %v3727
        %v3729 = vsel %vm1472, %v3611, %v3728
        %v3730 = vsel %vm1474, %v3615, %v3729
        %v3731 = vsel %vm1476, %v3619, %v3730
        %v3732 = vsel %vm1478, %v3623, %v3731
        %v3733 = vsel %vm1480, %v3627, %v3732
        %v3734 = vsel %vm2053, %v3635, %v3631
        %v3735 = vsel %vm1470, %v3639, %v3734
        %v3736 = vsel %vm1472, %v3643, %v3735
        %v3737 = vsel %vm1474, %v3647, %v3736
        %v3738 = vsel %vm1476, %v3651, %v3737
        %v3739 = vsel %vm1478, %v3655, %v3738
        %v3740 = vsel %vm1480, %v3659, %v3739
        %v3741 = vsel %vm2053, %v3667, %v3663
        %v3742 = vsel %vm1470, %v3671, %v3741
        %v3743 = vsel %vm1472, %v3675, %v3742
        %v3744 = vsel %vm1474, %v3679, %v3743
        %v3745 = vsel %vm1476, %v3683, %v3744
        %v3746 = vsel %vm1478, %v3687, %v3745
        %v3747 = vsel %vm1480, %v3691, %v3746
        %v3756 = vadd.f32 %v3266, %v3698
        %v3757 = vadd.f32 %v3267, %v3705
        %v3758 = vadd.f32 %v3268, %v3712
        %v3759 = vadd.f32 %v3269, %v3719
        %v3760 = vadd.f32 %v3270, %v3726
        %v3761 = vadd.f32 %v3271, %v3733
        %v3762 = vadd.f32 %v3272, %v3740
        %v3763 = vadd.f32 %v3273, %v3747
        %v3764 = vlaneseq
        %v3765 = vshrl.u32 %v3764, 7
        %v3766 = vsub.s32 0, %v3765
        %v3767 = vrot.slane %v540, %v3766
        %v3769 = vcombine.high %v3767, %v3767
        %v3771 = vunpack.c.l.s4 1983009808
        %v3772 = vunpack.c.0.s8 %v3771
        %v3773 = vlaneseq
        %v3774 = vshrl.u32 %v3773, 7
        %v3775 = vsub.s32 %v3772, %v3774
        %v3776 = vrot.slane %v3767, %v3775
        %v3778 = vunpack.c.l.s4 1983009808
        %v3779 = vunpack.c.0.s8 %v3778
        %v3780 = vlaneseq
        %v3781 = vshrl.u32 %v3780, 7
        %v3782 = vsub.s32 %v3779, %v3781
        %v3783 = vrot.slane %v3769, %v3782
        %v3784 = vcombine.high %v3776, %v3776
        %v3785 = vcombine.high %v3783, %v3783
        %v3786 = vrot.slane %v3776, 7
        %v3787 = vrot.slane %v3784, 7
        %v3788 = vrot.slane %v3783, 7
        %v3789 = vrot.slane %v3785, 7
        %v3798 = vmul.f32 %v917, %v3786
        %v3799 = vmul.f32 %v925, %v3776
        %v3800 = vmul.f32 %v924, %v3787
        %v3801 = vmul.f32 %v926, %v3784
        %v3802 = vmul.f32 %v934, %v3788
        %v3803 = vmul.f32 %v942, %v3783
        %v3804 = vmul.f32 %v941, %v3789
        %v3805 = vmul.f32 %v943, %v3785
        %v3806 = vmul.f32 %v951, %v3786
        %v3807 = vmul.f32 %v959, %v3776
        %v3808 = vmul.f32 %v958, %v3787
        %v3809 = vmul.f32 %v960, %v3784
        %v3810 = vmul.f32 %v968, %v3788
        %v3811 = vmul.f32 %v976, %v3783
        %v3812 = vmul.f32 %v975, %v3789
        %v3813 = vmul.f32 %v977, %v3785
        %v3814 = vmul.f32 %v985, %v3786
        %v3815 = vmul.f32 %v993, %v3776
        %v3816 = vmul.f32 %v992, %v3787
        %v3817 = vmul.f32 %v994, %v3784
        %v3818 = vmul.f32 %v1002, %v3788
        %v3819 = vmul.f32 %v1010, %v3783
        %v3820 = vmul.f32 %v1009, %v3789
        %v3821 = vmul.f32 %v1011, %v3785
        %v3822 = vmul.f32 %v1019, %v3786
        %v3823 = vmul.f32 %v1027, %v3776
        %v3824 = vmul.f32 %v1026, %v3787
        %v3825 = vmul.f32 %v1028, %v3784
        %v3826 = vmul.f32 %v1036, %v3788
        %v3827 = vmul.f32 %v1044, %v3783
        %v3828 = vmul.f32 %v1043, %v3789
        %v3829 = vmul.f32 %v1045, %v3785
        %v3830 = vmul.f32 %v1053, %v3786
        %v3831 = vmul.f32 %v1061, %v3776
        %v3832 = vmul.f32 %v1060, %v3787
        %v3833 = vmul.f32 %v1062, %v3784
        %v3834 = vmul.f32 %v1070, %v3788
        %v3835 = vmul.f32 %v1078, %v3783
        %v3836 = vmul.f32 %v1077, %v3789
        %v3837 = vmul.f32 %v1079, %v3785
        %v3838 = vmul.f32 %v1087, %v3786
        %v3839 = vmul.f32 %v1095, %v3776
        %v3840 = vmul.f32 %v1094, %v3787
        %v3841 = vmul.f32 %v1096, %v3784
        %v3842 = vmul.f32 %v1104, %v3788
        %v3843 = vmul.f32 %v1112, %v3783
        %v3844 = vmul.f32 %v1111, %v3789
        %v3845 = vmul.f32 %v1113, %v3785
        %v3846 = vmul.f32 %v1121, %v3786
        %v3847 = vmul.f32 %v1129, %v3776
        %v3848 = vmul.f32 %v1128, %v3787
        %v3849 = vmul.f32 %v1130, %v3784
        %v3850 = vmul.f32 %v1138, %v3788
        %v3851 = vmul.f32 %v1146, %v3783
        %v3852 = vmul.f32 %v1145, %v3789
        %v3853 = vmul.f32 %v1147, %v3785
        %v3854 = vmul.f32 %v1155, %v3786
        %v3855 = vmul.f32 %v1163, %v3776
        %v3856 = vmul.f32 %v1162, %v3787
        %v3857 = vmul.f32 %v1164, %v3784
        %v3858 = vmul.f32 %v1172, %v3788
        %v3859 = vmul.f32 %v1180, %v3783
        %v3860 = vmul.f32 %v1179, %v3789
        %v3861 = vmul.f32 %v1181, %v3785
        %v3926 = vlaneseq
        %v3927 = vshrl.u32 %v3926, 7
        %v3928 = vsub.s32 1, %v3927
        %v3929 = vrot.slane %v3798, %v3928
        %v3930 = vlaneseq
        %v3931 = vshrl.u32 %v3930, 7
        %v3932 = vsub.s32 1, %v3931
        %v3933 = vrot.slane %v3799, %v3932
        %v3934 = vlaneseq
        %v3935 = vshrl.u32 %v3934, 7
        %v3936 = vsub.s32 1, %v3935
        %v3937 = vrot.slane %v3800, %v3936
        %v3938 = vlaneseq
        %v3939 = vshrl.u32 %v3938, 7
        %v3940 = vsub.s32 1, %v3939
        %v3941 = vrot.slane %v3801, %v3940
        %v3942 = vlaneseq
        %v3943 = vshrl.u32 %v3942, 7
        %v3944 = vsub.s32 1, %v3943
        %v3945 = vrot.slane %v3802, %v3944
        %v3946 = vlaneseq
        %v3947 = vshrl.u32 %v3946, 7
        %v3948 = vsub.s32 1, %v3947
        %v3949 = vrot.slane %v3803, %v3948
        %v3950 = vlaneseq
        %v3951 = vshrl.u32 %v3950, 7
        %v3952 = vsub.s32 1, %v3951
        %v3953 = vrot.slane %v3804, %v3952
        %v3954 = vlaneseq
        %v3955 = vshrl.u32 %v3954, 7
        %v3956 = vsub.s32 1, %v3955
        %v3957 = vrot.slane %v3805, %v3956
        %v3958 = vlaneseq
        %v3959 = vshrl.u32 %v3958, 7
        %v3960 = vsub.s32 1, %v3959
        %v3961 = vrot.slane %v3806, %v3960
        %v3962 = vlaneseq
        %v3963 = vshrl.u32 %v3962, 7
        %v3964 = vsub.s32 1, %v3963
        %v3965 = vrot.slane %v3807, %v3964
        %v3966 = vlaneseq
        %v3967 = vshrl.u32 %v3966, 7
        %v3968 = vsub.s32 1, %v3967
        %v3969 = vrot.slane %v3808, %v3968
        %v3970 = vlaneseq
        %v3971 = vshrl.u32 %v3970, 7
        %v3972 = vsub.s32 1, %v3971
        %v3973 = vrot.slane %v3809, %v3972
        %v3974 = vlaneseq
        %v3975 = vshrl.u32 %v3974, 7
        %v3976 = vsub.s32 1, %v3975
        %v3977 = vrot.slane %v3810, %v3976
        %v3978 = vlaneseq
        %v3979 = vshrl.u32 %v3978, 7
        %v3980 = vsub.s32 1, %v3979
        %v3981 = vrot.slane %v3811, %v3980
        %v3982 = vlaneseq
        %v3983 = vshrl.u32 %v3982, 7
        %v3984 = vsub.s32 1, %v3983
        %v3985 = vrot.slane %v3812, %v3984
        %v3986 = vlaneseq
        %v3987 = vshrl.u32 %v3986, 7
        %v3988 = vsub.s32 1, %v3987
        %v3989 = vrot.slane %v3813, %v3988
        %v3990 = vlaneseq
        %v3991 = vshrl.u32 %v3990, 7
        %v3992 = vsub.s32 1, %v3991
        %v3993 = vrot.slane %v3814, %v3992
        %v3994 = vlaneseq
        %v3995 = vshrl.u32 %v3994, 7
        %v3996 = vsub.s32 1, %v3995
        %v3997 = vrot.slane %v3815, %v3996
        %v3998 = vlaneseq
        %v3999 = vshrl.u32 %v3998, 7
        %v4000 = vsub.s32 1, %v3999
        %v4001 = vrot.slane %v3816, %v4000
        %v4002 = vlaneseq
        %v4003 = vshrl.u32 %v4002, 7
        %v4004 = vsub.s32 1, %v4003
        %v4005 = vrot.slane %v3817, %v4004
        %v4006 = vlaneseq
        %v4007 = vshrl.u32 %v4006, 7
        %v4008 = vsub.s32 1, %v4007
        %v4009 = vrot.slane %v3818, %v4008
        %v4010 = vlaneseq
        %v4011 = vshrl.u32 %v4010, 7
        %v4012 = vsub.s32 1, %v4011
        %v4013 = vrot.slane %v3819, %v4012
        %v4014 = vlaneseq
        %v4015 = vshrl.u32 %v4014, 7
        %v4016 = vsub.s32 1, %v4015
        %v4017 = vrot.slane %v3820, %v4016
        %v4018 = vlaneseq
        %v4019 = vshrl.u32 %v4018, 7
        %v4020 = vsub.s32 1, %v4019
        %v4021 = vrot.slane %v3821, %v4020
        %v4022 = vlaneseq
        %v4023 = vshrl.u32 %v4022, 7
        %v4024 = vsub.s32 1, %v4023
        %v4025 = vrot.slane %v3822, %v4024
        %v4026 = vlaneseq
        %v4027 = vshrl.u32 %v4026, 7
        %v4028 = vsub.s32 1, %v4027
        %v4029 = vrot.slane %v3823, %v4028
        %v4030 = vlaneseq
        %v4031 = vshrl.u32 %v4030, 7
        %v4032 = vsub.s32 1, %v4031
        %v4033 = vrot.slane %v3824, %v4032
        %v4034 = vlaneseq
        %v4035 = vshrl.u32 %v4034, 7
        %v4036 = vsub.s32 1, %v4035
        %v4037 = vrot.slane %v3825, %v4036
        %v4038 = vlaneseq
        %v4039 = vshrl.u32 %v4038, 7
        %v4040 = vsub.s32 1, %v4039
        %v4041 = vrot.slane %v3826, %v4040
        %v4042 = vlaneseq
        %v4043 = vshrl.u32 %v4042, 7
        %v4044 = vsub.s32 1, %v4043
        %v4045 = vrot.slane %v3827, %v4044
        %v4046 = vlaneseq
        %v4047 = vshrl.u32 %v4046, 7
        %v4048 = vsub.s32 1, %v4047
        %v4049 = vrot.slane %v3828, %v4048
        %v4050 = vlaneseq
        %v4051 = vshrl.u32 %v4050, 7
        %v4052 = vsub.s32 1, %v4051
        %v4053 = vrot.slane %v3829, %v4052
        %v4054 = vlaneseq
        %v4055 = vshrl.u32 %v4054, 7
        %v4056 = vsub.s32 1, %v4055
        %v4057 = vrot.slane %v3830, %v4056
        %v4058 = vlaneseq
        %v4059 = vshrl.u32 %v4058, 7
        %v4060 = vsub.s32 1, %v4059
        %v4061 = vrot.slane %v3831, %v4060
        %v4062 = vlaneseq
        %v4063 = vshrl.u32 %v4062, 7
        %v4064 = vsub.s32 1, %v4063
        %v4065 = vrot.slane %v3832, %v4064
        %v4066 = vlaneseq
        %v4067 = vshrl.u32 %v4066, 7
        %v4068 = vsub.s32 1, %v4067
        %v4069 = vrot.slane %v3833, %v4068
        %v4070 = vlaneseq
        %v4071 = vshrl.u32 %v4070, 7
        %v4072 = vsub.s32 1, %v4071
        %v4073 = vrot.slane %v3834, %v4072
        %v4074 = vlaneseq
        %v4075 = vshrl.u32 %v4074, 7
        %v4076 = vsub.s32 1, %v4075
        %v4077 = vrot.slane %v3835, %v4076
        %v4078 = vlaneseq
        %v4079 = vshrl.u32 %v4078, 7
        %v4080 = vsub.s32 1, %v4079
        %v4081 = vrot.slane %v3836, %v4080
        %v4082 = vlaneseq
        %v4083 = vshrl.u32 %v4082, 7
        %v4084 = vsub.s32 1, %v4083
        %v4085 = vrot.slane %v3837, %v4084
        %v4086 = vlaneseq
        %v4087 = vshrl.u32 %v4086, 7
        %v4088 = vsub.s32 1, %v4087
        %v4089 = vrot.slane %v3838, %v4088
        %v4090 = vlaneseq
        %v4091 = vshrl.u32 %v4090, 7
        %v4092 = vsub.s32 1, %v4091
        %v4093 = vrot.slane %v3839, %v4092
        %v4094 = vlaneseq
        %v4095 = vshrl.u32 %v4094, 7
        %v4096 = vsub.s32 1, %v4095
        %v4097 = vrot.slane %v3840, %v4096
        %v4098 = vlaneseq
        %v4099 = vshrl.u32 %v4098, 7
        %v4100 = vsub.s32 1, %v4099
        %v4101 = vrot.slane %v3841, %v4100
        %v4102 = vlaneseq
        %v4103 = vshrl.u32 %v4102, 7
        %v4104 = vsub.s32 1, %v4103
        %v4105 = vrot.slane %v3842, %v4104
        %v4106 = vlaneseq
        %v4107 = vshrl.u32 %v4106, 7
        %v4108 = vsub.s32 1, %v4107
        %v4109 = vrot.slane %v3843, %v4108
        %v4110 = vlaneseq
        %v4111 = vshrl.u32 %v4110, 7
        %v4112 = vsub.s32 1, %v4111
        %v4113 = vrot.slane %v3844, %v4112
        %v4114 = vlaneseq
        %v4115 = vshrl.u32 %v4114, 7
        %v4116 = vsub.s32 1, %v4115
        %v4117 = vrot.slane %v3845, %v4116
        %v4118 = vlaneseq
        %v4119 = vshrl.u32 %v4118, 7
        %v4120 = vsub.s32 1, %v4119
        %v4121 = vrot.slane %v3846, %v4120
        %v4122 = vlaneseq
        %v4123 = vshrl.u32 %v4122, 7
        %v4124 = vsub.s32 1, %v4123
        %v4125 = vrot.slane %v3847, %v4124
        %v4126 = vlaneseq
        %v4127 = vshrl.u32 %v4126, 7
        %v4128 = vsub.s32 1, %v4127
        %v4129 = vrot.slane %v3848, %v4128
        %v4130 = vlaneseq
        %v4131 = vshrl.u32 %v4130, 7
        %v4132 = vsub.s32 1, %v4131
        %v4133 = vrot.slane %v3849, %v4132
        %v4134 = vlaneseq
        %v4135 = vshrl.u32 %v4134, 7
        %v4136 = vsub.s32 1, %v4135
        %v4137 = vrot.slane %v3850, %v4136
        %v4138 = vlaneseq
        %v4139 = vshrl.u32 %v4138, 7
        %v4140 = vsub.s32 1, %v4139
        %v4141 = vrot.slane %v3851, %v4140
        %v4142 = vlaneseq
        %v4143 = vshrl.u32 %v4142, 7
        %v4144 = vsub.s32 1, %v4143
        %v4145 = vrot.slane %v3852, %v4144
        %v4146 = vlaneseq
        %v4147 = vshrl.u32 %v4146, 7
        %v4148 = vsub.s32 1, %v4147
        %v4149 = vrot.slane %v3853, %v4148
        %v4150 = vlaneseq
        %v4151 = vshrl.u32 %v4150, 7
        %v4152 = vsub.s32 1, %v4151
        %v4153 = vrot.slane %v3854, %v4152
        %v4154 = vlaneseq
        %v4155 = vshrl.u32 %v4154, 7
        %v4156 = vsub.s32 1, %v4155
        %v4157 = vrot.slane %v3855, %v4156
        %v4158 = vlaneseq
        %v4159 = vshrl.u32 %v4158, 7
        %v4160 = vsub.s32 1, %v4159
        %v4161 = vrot.slane %v3856, %v4160
        %v4162 = vlaneseq
        %v4163 = vshrl.u32 %v4162, 7
        %v4164 = vsub.s32 1, %v4163
        %v4165 = vrot.slane %v3857, %v4164
        %v4166 = vlaneseq
        %v4167 = vshrl.u32 %v4166, 7
        %v4168 = vsub.s32 1, %v4167
        %v4169 = vrot.slane %v3858, %v4168
        %v4170 = vlaneseq
        %v4171 = vshrl.u32 %v4170, 7
        %v4172 = vsub.s32 1, %v4171
        %v4173 = vrot.slane %v3859, %v4172
        %v4174 = vlaneseq
        %v4175 = vshrl.u32 %v4174, 7
        %v4176 = vsub.s32 1, %v4175
        %v4177 = vrot.slane %v3860, %v4176
        %v4178 = vlaneseq
        %v4179 = vshrl.u32 %v4178, 7
        %v4180 = vsub.s32 1, %v4179
        %v4181 = vrot.slane %v3861, %v4180
        %v4182 = vsel %vm2053, %v3933, %v3929
        %v4183 = vsel %vm1470, %v3937, %v4182
        %v4184 = vsel %vm1472, %v3941, %v4183
        %v4185 = vsel %vm1474, %v3945, %v4184
        %v4186 = vsel %vm1476, %v3949, %v4185
        %v4187 = vsel %vm1478, %v3953, %v4186
        %v4188 = vsel %vm1480, %v3957, %v4187
        %v4189 = vsel %vm2053, %v3965, %v3961
        %v4190 = vsel %vm1470, %v3969, %v4189
        %v4191 = vsel %vm1472, %v3973, %v4190
        %v4192 = vsel %vm1474, %v3977, %v4191
        %v4193 = vsel %vm1476, %v3981, %v4192
        %v4194 = vsel %vm1478, %v3985, %v4193
        %v4195 = vsel %vm1480, %v3989, %v4194
        %v4196 = vsel %vm2053, %v3997, %v3993
        %v4197 = vsel %vm1470, %v4001, %v4196
        %v4198 = vsel %vm1472, %v4005, %v4197
        %v4199 = vsel %vm1474, %v4009, %v4198
        %v4200 = vsel %vm1476, %v4013, %v4199
        %v4201 = vsel %vm1478, %v4017, %v4200
        %v4202 = vsel %vm1480, %v4021, %v4201
        %v4203 = vsel %vm2053, %v4029, %v4025
        %v4204 = vsel %vm1470, %v4033, %v4203
        %v4205 = vsel %vm1472, %v4037, %v4204
        %v4206 = vsel %vm1474, %v4041, %v4205
        %v4207 = vsel %vm1476, %v4045, %v4206
        %v4208 = vsel %vm1478, %v4049, %v4207
        %v4209 = vsel %vm1480, %v4053, %v4208
        %v4210 = vsel %vm2053, %v4061, %v4057
        %v4211 = vsel %vm1470, %v4065, %v4210
        %v4212 = vsel %vm1472, %v4069, %v4211
        %v4213 = vsel %vm1474, %v4073, %v4212
        %v4214 = vsel %vm1476, %v4077, %v4213
        %v4215 = vsel %vm1478, %v4081, %v4214
        %v4216 = vsel %vm1480, %v4085, %v4215
        %v4217 = vsel %vm2053, %v4093, %v4089
        %v4218 = vsel %vm1470, %v4097, %v4217
        %v4219 = vsel %vm1472, %v4101, %v4218
        %v4220 = vsel %vm1474, %v4105, %v4219
        %v4221 = vsel %vm1476, %v4109, %v4220
        %v4222 = vsel %vm1478, %v4113, %v4221
        %v4223 = vsel %vm1480, %v4117, %v4222
        %v4224 = vsel %vm2053, %v4125, %v4121
        %v4225 = vsel %vm1470, %v4129, %v4224
        %v4226 = vsel %vm1472, %v4133, %v4225
        %v4227 = vsel %vm1474, %v4137, %v4226
        %v4228 = vsel %vm1476, %v4141, %v4227
        %v4229 = vsel %vm1478, %v4145, %v4228
        %v4230 = vsel %vm1480, %v4149, %v4229
        %v4231 = vsel %vm2053, %v4157, %v4153
        %v4232 = vsel %vm1470, %v4161, %v4231
        %v4233 = vsel %vm1472, %v4165, %v4232
        %v4234 = vsel %vm1474, %v4169, %v4233
        %v4235 = vsel %vm1476, %v4173, %v4234
        %v4236 = vsel %vm1478, %v4177, %v4235
        %v4237 = vsel %vm1480, %v4181, %v4236
        %v4246 = vadd.f32 %v3756, %v4188
        %v4247 = vadd.f32 %v3757, %v4195
        %v4248 = vadd.f32 %v3758, %v4202
        %v4249 = vadd.f32 %v3759, %v4209
        %v4250 = vadd.f32 %v3760, %v4216
        %v4251 = vadd.f32 %v3761, %v4223
        %v4252 = vadd.f32 %v3762, %v4230
        %v4253 = vadd.f32 %v3763, %v4237
        %v4255 = vlaneseq
        %v4256 = vshrl.u32 %v4255, 7
        %v4257 = vsub.s32 0, %v4256
        %v4258 = vrot.slane %v541, %v4257
        %v4260 = vadd.f32 %v4246, %v4258
        %v4261 = vadd.f32 %v4247, %v4258
        %v4262 = vadd.f32 %v4248, %v4258
        %v4263 = vadd.f32 %v4249, %v4258
        %v4264 = vadd.f32 %v4250, %v4258
        %v4265 = vadd.f32 %v4251, %v4258
        %v4266 = vadd.f32 %v4252, %v4258
        %v4267 = vadd.f32 %v4253, %v4258
        %v4268 = vpack.c.bf16 %v4261, %v4260
        %v4269 = vpack.c.bf16 %v4263, %v4262
        %v4270 = vpack.c.bf16 %v4265, %v4264
        %v4271 = vpack.c.bf16 %v4267, %v4266
        %v4272 = vld [vmem:[#allocation7] sm:$0xf]
        %v4273 = vld [vmem:[#allocation7 + $0x4] sm:$0xf]
        %v4274 = vld [vmem:[#allocation7 + $0x8] sm:$0xf]
        %v4275 = vld [vmem:[#allocation7 + $0xc] sm:$0xf]
        %v4276 = vld [vmem:[%s4] sm:$0x1]
        %v4278 = vlaneseq
        %v4279 = vshrl.u32 %v4278, 7
        %v4280 = vsub.s32 0, %v4279
        %v4281 = vrot.slane %v4276, %v4280
        %v4287 = vunpack.c.l.b16 %v4272
        %v4288 = vunpack.c.l.b16 %v4273
        %v4289 = vunpack.c.l.b16 %v4274
        %v4290 = vunpack.c.l.b16 %v4275
        %v4291 = vpack.c.b16 %v4288, %v4287
        %v4292 = vpack.c.b16 %v4290, %v4289
        %vm4295 = vcmask 261120
        %v4297 = vsel %vm4295, %v4268, 0
        %v4300 = vsel %vm4295, %v4269, 0
        %v4303 = vsel %vm4295, %v4270, 0
        %v4306 = vsel %vm4295, %v4271, 0
        %4308 = vmatprep.subr.bf16.mxu0 0
        %4309 = vmatpush1.bf16.msra.mxu0 %v4291
        %4310 = vmatprep.subr.bf16.mxu0 0
        %4311 = vmatpush1.bf16.msra.mxu0 %v4292
        %4312 = vmatprep.subr.bf16.mxu0 0
        %4313 = vmatpush1.bf16.msra.mxu0 0
        %4314 = vmatprep.subr.bf16.mxu0 0
        %4315 = vmatpush1.bf16.msra.mxu0 0
        %4316 = vmatprep.subr.bf16.mxu0 0
        %4317 = vmatpush1.bf16.msra.mxu0 0
        %4318 = vmatprep.subr.bf16.mxu0 0
        %4319 = vmatpush1.bf16.msra.mxu0 0
        %4320 = vmatprep.subr.bf16.mxu0 0
        %4321 = vmatpush1.bf16.msra.mxu0 0
        %4322 = vmatprep.subr.bf16.mxu0 0
        %4323 = vmatpush1.bf16.msra.mxu0 0
        %4324 = vmatprep.subr.bf16.mxu0 0
        %4325 = vmatpush1.bf16.msra.mxu0 0
        %4326 = vmatprep.subr.bf16.mxu0 0
        %4327 = vmatpush1.bf16.msra.mxu0 0
        %4328 = vmatprep.subr.bf16.mxu0 0
        %4329 = vmatpush1.bf16.msra.mxu0 0
        %4330 = vmatprep.subr.bf16.mxu0 0
        %4331 = vmatpush1.bf16.msra.mxu0 0
        %4332 = vmatprep.subr.bf16.mxu0 0
        %4333 = vmatpush1.bf16.msra.mxu0 0
        %4334 = vmatprep.subr.bf16.mxu0 0
        %4335 = vmatpush1.bf16.msra.mxu0 0
        %4336 = vmatprep.subr.bf16.mxu0 0
        %4337 = vmatpush1.bf16.msra.mxu0 0
        %4338 = vmatprep.subr.bf16.mxu0 0
        %4339 = vmatpush1.bf16.msra.mxu0 0
        %4340 = vmatprep.mubr.bf16.mxu0 0
        %4341 = vmatmul.mubr.bf16.gmra.mrb[0].mxu0 %v4297
        %v4342 = vpop.f32.mrb[0].mxu0
        %v4343 = vadd.f32 %v4281, %v4342
        %v4344 = vpop.f32.mrb[0].mxu0
        %v4345 = vpop.f32.mrb[0].mxu0
        %v4346 = vadd.f32 %v4281, %v4345
        %v4347 = vpop.f32.mrb[0].mxu0
        %4348 = vmatprep.mubr.bf16.mxu0 0
        %4349 = vmatmul.mubr.bf16.gmra.mrb[0].mxu0 %v4300
        %v4350 = vpop.f32.mrb[0].mxu0
        %v4351 = vadd.f32 %v4281, %v4350
        %v4352 = vpop.f32.mrb[0].mxu0
        %v4353 = vpop.f32.mrb[0].mxu0
        %v4354 = vadd.f32 %v4281, %v4353
        %v4355 = vpop.f32.mrb[0].mxu0
        %4356 = vmatprep.mubr.bf16.mxu0 0
        %4357 = vmatmul.mubr.bf16.gmra.mrb[0].mxu0 %v4303
        %v4358 = vpop.f32.mrb[0].mxu0
        %v4359 = vadd.f32 %v4281, %v4358
        %v4360 = vpop.f32.mrb[0].mxu0
        %v4361 = vpop.f32.mrb[0].mxu0
        %v4362 = vadd.f32 %v4281, %v4361
        %v4363 = vpop.f32.mrb[0].mxu0
        %4364 = vmatprep.mubr.bf16.mxu0 0
        %4365 = vmatmul.mubr.bf16.gmra.mrb[0].mxu0 %v4306
        %v4366 = vpop.f32.mrb[0].mxu0
        %v4367 = vadd.f32 %v4281, %v4366
        %v4368 = vpop.f32.mrb[0].mxu0
        %v4369 = vpop.f32.mrb[0].mxu0
        %v4370 = vadd.f32 %v4281, %v4369
        %v4371 = vpop.f32.mrb[0].mxu0
        %4372 = vdwg.mxu0
        %v4373 = vmax.f32 %v4343, 0.0
        %v4374 = vmax.f32 %v4346, 0.0
        %v4375 = vmax.f32 %v4351, 0.0
        %v4376 = vmax.f32 %v4354, 0.0
        %v4377 = vmax.f32 %v4359, 0.0
        %v4378 = vmax.f32 %v4362, 0.0
        %v4379 = vmax.f32 %v4367, 0.0
        %v4380 = vmax.f32 %v4370, 0.0
        %v4381 = vld [vmem:[%s5] sm:$0xf]
        %v4382 = vld [vmem:[%s5 + $0x4] sm:$0xf]
        %v4383 = vld [vmem:[%s5 + $0x8] sm:$0xf]
        %v4384 = vld [vmem:[%s5 + $0xc] sm:$0xf]
        %v4385 = vld [vmem:[#allocation8] sm:$0x1]
        %v4387 = vlaneseq
        %v4388 = vshrl.u32 %v4387, 7
        %v4389 = vsub.s32 0, %v4388
        %v4390 = vrot.slane %v4385, %v4389
        %v4424 = vunpack.c.l.b16 %v475
        %v4425 = vunpack.c.l.b16 %v476
        %v4426 = vunpack.c.l.b16 %v477
        %v4427 = vunpack.c.l.b16 %v478
        %v4428 = vunpack.c.l.b16 %v479
        %v4429 = vunpack.c.l.b16 %v480
        %v4430 = vunpack.c.l.b16 %v481
        %v4431 = vunpack.c.l.b16 %v482
        %v4432 = vunpack.c.l.b16 %v483
        %v4433 = vunpack.c.l.b16 %v484
        %v4434 = vunpack.c.l.b16 %v485
        %v4435 = vunpack.c.l.b16 %v486
        %v4436 = vunpack.c.l.b16 %v487
        %v4437 = vunpack.c.l.b16 %v488
        %v4438 = vunpack.c.l.b16 %v489
        %v4439 = vunpack.c.l.b16 %v490
        %v4440 = vunpack.c.l.b16 %v491
        %v4441 = vunpack.c.l.b16 %v492
        %v4442 = vunpack.c.l.b16 %v493
        %v4443 = vunpack.c.l.b16 %v494
        %v4444 = vunpack.c.l.b16 %v495
        %v4445 = vunpack.c.l.b16 %v496
        %v4446 = vunpack.c.l.b16 %v497
        %v4447 = vunpack.c.l.b16 %v498
        %v4448 = vunpack.c.l.b16 %v499
        %v4449 = vunpack.c.l.b16 %v500
        %v4450 = vunpack.c.l.b16 %v501
        %v4451 = vunpack.c.l.b16 %v502
        %v4452 = vunpack.c.l.b16 %v503
        %v4453 = vunpack.c.l.b16 %v504
        %v4454 = vunpack.c.l.b16 %v505
        %v4455 = vunpack.c.l.b16 %v506
        %v4456 = vpack.c.b16 %v4425, %v4424
        %v4457 = vpack.c.b16 %v4427, %v4426
        %v4458 = vpack.c.b16 %v4429, %v4428
        %v4459 = vpack.c.b16 %v4431, %v4430
        %v4460 = vpack.c.b16 %v4433, %v4432
        %v4461 = vpack.c.b16 %v4435, %v4434
        %v4462 = vpack.c.b16 %v4437, %v4436
        %v4463 = vpack.c.b16 %v4439, %v4438
        %v4464 = vpack.c.b16 %v4441, %v4440
        %v4465 = vpack.c.b16 %v4443, %v4442
        %v4466 = vpack.c.b16 %v4445, %v4444
        %v4467 = vpack.c.b16 %v4447, %v4446
        %v4468 = vpack.c.b16 %v4449, %v4448
        %v4469 = vpack.c.b16 %v4451, %v4450
        %v4470 = vpack.c.b16 %v4453, %v4452
        %v4471 = vpack.c.b16 %v4455, %v4454
        %v4476 = vunpack.c.l.b16 %v4381
        %v4477 = vunpack.c.l.b16 %v4382
        %v4478 = vunpack.c.l.b16 %v4383
        %v4479 = vunpack.c.l.b16 %v4384
        %v4480 = vpack.c.b16 %v4477, %v4476
        %v4481 = vpack.c.b16 %v4479, %v4478
        %v4485 = vsel %vm4295, %v4456, 0
        %v4488 = vsel %vm4295, %v4457, 0
        %v4491 = vsel %vm4295, %v4458, 0
        %v4494 = vsel %vm4295, %v4459, 0
        %v4497 = vsel %vm4295, %v4460, 0
        %v4500 = vsel %vm4295, %v4461, 0
        %v4503 = vsel %vm4295, %v4462, 0
        %v4506 = vsel %vm4295, %v4463, 0
        %v4509 = vsel %vm4295, %v4464, 0
        %v4512 = vsel %vm4295, %v4465, 0
        %v4515 = vsel %vm4295, %v4466, 0
        %v4518 = vsel %vm4295, %v4467, 0
        %v4521 = vsel %vm4295, %v4468, 0
        %v4524 = vsel %vm4295, %v4469, 0
        %v4527 = vsel %vm4295, %v4470, 0
        %v4530 = vsel %vm4295, %v4471, 0
        %4532 = vmatprep.subr.bf16.mxu0 0
        %4533 = vmatpush1.bf16.msra.mxu0 %v4480
        %4534 = vmatprep.subr.bf16.mxu0 0
        %4535 = vmatpush1.bf16.msra.mxu0 %v4481
        %4536 = vmatprep.subr.bf16.mxu0 0
        %4537 = vmatpush1.bf16.msra.mxu0 0
        %4538 = vmatprep.subr.bf16.mxu0 0
        %4539 = vmatpush1.bf16.msra.mxu0 0
        %4540 = vmatprep.subr.bf16.mxu0 0
        %4541 = vmatpush1.bf16.msra.mxu0 0
        %4542 = vmatprep.subr.bf16.mxu0 0
        %4543 = vmatpush1.bf16.msra.mxu0 0
        %4544 = vmatprep.subr.bf16.mxu0 0
        %4545 = vmatpush1.bf16.msra.mxu0 0
        %4546 = vmatprep.subr.bf16.mxu0 0
        %4547 = vmatpush1.bf16.msra.mxu0 0
        %4548 = vmatprep.subr.bf16.mxu0 0
        %4549 = vmatpush1.bf16.msra.mxu0 0
        %4550 = vmatprep.subr.bf16.mxu0 0
        %4551 = vmatpush1.bf16.msra.mxu0 0
        %4552 = vmatprep.subr.bf16.mxu0 0
        %4553 = vmatpush1.bf16.msra.mxu0 0
        %4554 = vmatprep.subr.bf16.mxu0 0
        %4555 = vmatpush1.bf16.msra.mxu0 0
        %4556 = vmatprep.subr.bf16.mxu0 0
        %4557 = vmatpush1.bf16.msra.mxu0 0
        %4558 = vmatprep.subr.bf16.mxu0 0
        %4559 = vmatpush1.bf16.msra.mxu0 0
        %4560 = vmatprep.subr.bf16.mxu0 0
        %4561 = vmatpush1.bf16.msra.mxu0 0
        %4562 = vmatprep.subr.bf16.mxu0 0
        %4563 = vmatpush1.bf16.msra.mxu0 0
        %4564 = vmatprep.mubr.bf16.mxu0 0
        %4565 = vmatmul.mubr.bf16.gmra.mrb[0].mxu0 %v4485
        %v4566 = vpop.f32.mrb[0].mxu0
        %v4567 = vadd.f32 %v4390, %v4566
        %v4568 = vpop.f32.mrb[0].mxu0
        %v4569 = vpop.f32.mrb[0].mxu0
        %v4570 = vadd.f32 %v4390, %v4569
        %v4571 = vpop.f32.mrb[0].mxu0
        %4572 = vmatprep.mubr.bf16.mxu0 0
        %4573 = vmatmul.mubr.bf16.gmra.mrb[0].mxu0 %v4488
        %v4574 = vpop.f32.mrb[0].mxu0
        %v4575 = vadd.f32 %v4390, %v4574
        %v4576 = vpop.f32.mrb[0].mxu0
        %v4577 = vpop.f32.mrb[0].mxu0
        %v4578 = vadd.f32 %v4390, %v4577
        %v4579 = vpop.f32.mrb[0].mxu0
        %4580 = vmatprep.mubr.bf16.mxu0 0
        %4581 = vmatmul.mubr.bf16.gmra.mrb[0].mxu0 %v4491
        %v4582 = vpop.f32.mrb[0].mxu0
        %v4583 = vadd.f32 %v4390, %v4582
        %v4584 = vpop.f32.mrb[0].mxu0
        %v4585 = vpop.f32.mrb[0].mxu0
        %v4586 = vadd.f32 %v4390, %v4585
        %v4587 = vpop.f32.mrb[0].mxu0
        %4588 = vmatprep.mubr.bf16.mxu0 0
        %4589 = vmatmul.mubr.bf16.gmra.mrb[0].mxu0 %v4494
        %v4590 = vpop.f32.mrb[0].mxu0
        %v4591 = vadd.f32 %v4390, %v4590
        %v4592 = vpop.f32.mrb[0].mxu0
        %v4593 = vpop.f32.mrb[0].mxu0
        %v4594 = vadd.f32 %v4390, %v4593
        %v4595 = vpop.f32.mrb[0].mxu0
        %4596 = vmatprep.mubr.bf16.mxu0 0
        %4597 = vmatmul.mubr.bf16.gmra.mrb[0].mxu0 %v4497
        %v4598 = vpop.f32.mrb[0].mxu0
        %v4599 = vadd.f32 %v4390, %v4598
        %v4600 = vpop.f32.mrb[0].mxu0
        %v4601 = vpop.f32.mrb[0].mxu0
        %v4602 = vadd.f32 %v4390, %v4601
        %v4603 = vpop.f32.mrb[0].mxu0
        %4604 = vmatprep.mubr.bf16.mxu0 0
        %4605 = vmatmul.mubr.bf16.gmra.mrb[0].mxu0 %v4500
        %v4606 = vpop.f32.mrb[0].mxu0
        %v4607 = vadd.f32 %v4390, %v4606
        %v4608 = vpop.f32.mrb[0].mxu0
        %v4609 = vpop.f32.mrb[0].mxu0
        %v4610 = vadd.f32 %v4390, %v4609
        %v4611 = vpop.f32.mrb[0].mxu0
        %4612 = vmatprep.mubr.bf16.mxu0 0
        %4613 = vmatmul.mubr.bf16.gmra.mrb[0].mxu0 %v4503
        %v4614 = vpop.f32.mrb[0].mxu0
        %v4615 = vadd.f32 %v4390, %v4614
        %v4616 = vpop.f32.mrb[0].mxu0
        %v4617 = vpop.f32.mrb[0].mxu0
        %v4618 = vadd.f32 %v4390, %v4617
        %v4619 = vpop.f32.mrb[0].mxu0
        %4620 = vmatprep.mubr.bf16.mxu0 0
        %4621 = vmatmul.mubr.bf16.gmra.mrb[0].mxu0 %v4506
        %v4622 = vpop.f32.mrb[0].mxu0
        %v4623 = vadd.f32 %v4390, %v4622
        %v4624 = vpop.f32.mrb[0].mxu0
        %v4625 = vpop.f32.mrb[0].mxu0
        %v4626 = vadd.f32 %v4390, %v4625
        %v4627 = vpop.f32.mrb[0].mxu0
        %4628 = vmatprep.mubr.bf16.mxu0 0
        %4629 = vmatmul.mubr.bf16.gmra.mrb[0].mxu0 %v4509
        %v4630 = vpop.f32.mrb[0].mxu0
        %v4631 = vadd.f32 %v4390, %v4630
        %v4632 = vpop.f32.mrb[0].mxu0
        %v4633 = vpop.f32.mrb[0].mxu0
        %v4634 = vadd.f32 %v4390, %v4633
        %v4635 = vpop.f32.mrb[0].mxu0
        %4636 = vmatprep.mubr.bf16.mxu0 0
        %4637 = vmatmul.mubr.bf16.gmra.mrb[0].mxu0 %v4512
        %v4638 = vpop.f32.mrb[0].mxu0
        %v4639 = vadd.f32 %v4390, %v4638
        %v4640 = vpop.f32.mrb[0].mxu0
        %v4641 = vpop.f32.mrb[0].mxu0
        %v4642 = vadd.f32 %v4390, %v4641
        %v4643 = vpop.f32.mrb[0].mxu0
        %4644 = vmatprep.mubr.bf16.mxu0 0
        %4645 = vmatmul.mubr.bf16.gmra.mrb[0].mxu0 %v4515
        %v4646 = vpop.f32.mrb[0].mxu0
        %v4647 = vadd.f32 %v4390, %v4646
        %v4648 = vpop.f32.mrb[0].mxu0
        %v4649 = vpop.f32.mrb[0].mxu0
        %v4650 = vadd.f32 %v4390, %v4649
        %v4651 = vpop.f32.mrb[0].mxu0
        %4652 = vmatprep.mubr.bf16.mxu0 0
        %4653 = vmatmul.mubr.bf16.gmra.mrb[0].mxu0 %v4518
        %v4654 = vpop.f32.mrb[0].mxu0
        %v4655 = vadd.f32 %v4390, %v4654
        %v4656 = vpop.f32.mrb[0].mxu0
        %v4657 = vpop.f32.mrb[0].mxu0
        %v4658 = vadd.f32 %v4390, %v4657
        %v4659 = vpop.f32.mrb[0].mxu0
        %4660 = vmatprep.mubr.bf16.mxu0 0
        %4661 = vmatmul.mubr.bf16.gmra.mrb[0].mxu0 %v4521
        %v4662 = vpop.f32.mrb[0].mxu0
        %v4663 = vadd.f32 %v4390, %v4662
        %v4664 = vpop.f32.mrb[0].mxu0
        %v4665 = vpop.f32.mrb[0].mxu0
        %v4666 = vadd.f32 %v4390, %v4665
        %v4667 = vpop.f32.mrb[0].mxu0
        %4668 = vmatprep.mubr.bf16.mxu0 0
        %4669 = vmatmul.mubr.bf16.gmra.mrb[0].mxu0 %v4524
        %v4670 = vpop.f32.mrb[0].mxu0
        %v4671 = vadd.f32 %v4390, %v4670
        %v4672 = vpop.f32.mrb[0].mxu0
        %v4673 = vpop.f32.mrb[0].mxu0
        %v4674 = vadd.f32 %v4390, %v4673
        %v4675 = vpop.f32.mrb[0].mxu0
        %4676 = vmatprep.mubr.bf16.mxu0 0
        %4677 = vmatmul.mubr.bf16.gmra.mrb[0].mxu0 %v4527
        %v4678 = vpop.f32.mrb[0].mxu0
        %v4679 = vadd.f32 %v4390, %v4678
        %v4680 = vpop.f32.mrb[0].mxu0
        %v4681 = vpop.f32.mrb[0].mxu0
        %v4682 = vadd.f32 %v4390, %v4681
        %v4683 = vpop.f32.mrb[0].mxu0
        %4684 = vmatprep.mubr.bf16.mxu0 0
        %4685 = vmatmul.mubr.bf16.gmra.mrb[0].mxu0 %v4530
        %v4686 = vpop.f32.mrb[0].mxu0
        %v4687 = vadd.f32 %v4390, %v4686
        %v4688 = vpop.f32.mrb[0].mxu0
        %v4689 = vpop.f32.mrb[0].mxu0
        %v4690 = vadd.f32 %v4390, %v4689
        %v4691 = vpop.f32.mrb[0].mxu0
        %4692 = vdwg.mxu0
        %v4693 = vmax.f32 %v4567, 0.0
        %v4694 = vmax.f32 %v4570, 0.0
        %v4695 = vmax.f32 %v4575, 0.0
        %v4696 = vmax.f32 %v4578, 0.0
        %v4697 = vmax.f32 %v4583, 0.0
        %v4698 = vmax.f32 %v4586, 0.0
        %v4699 = vmax.f32 %v4591, 0.0
        %v4700 = vmax.f32 %v4594, 0.0
        %v4701 = vmax.f32 %v4599, 0.0
        %v4702 = vmax.f32 %v4602, 0.0
        %v4703 = vmax.f32 %v4607, 0.0
        %v4704 = vmax.f32 %v4610, 0.0
        %v4705 = vmax.f32 %v4615, 0.0
        %v4706 = vmax.f32 %v4618, 0.0
        %v4707 = vmax.f32 %v4623, 0.0
        %v4708 = vmax.f32 %v4626, 0.0
        %v4709 = vmax.f32 %v4631, 0.0
        %v4710 = vmax.f32 %v4634, 0.0
        %v4711 = vmax.f32 %v4639, 0.0
        %v4712 = vmax.f32 %v4642, 0.0
        %v4713 = vmax.f32 %v4647, 0.0
        %v4714 = vmax.f32 %v4650, 0.0
        %v4715 = vmax.f32 %v4655, 0.0
        %v4716 = vmax.f32 %v4658, 0.0
        %v4717 = vmax.f32 %v4663, 0.0
        %v4718 = vmax.f32 %v4666, 0.0
        %v4719 = vmax.f32 %v4671, 0.0
        %v4720 = vmax.f32 %v4674, 0.0
        %v4721 = vmax.f32 %v4679, 0.0
        %v4722 = vmax.f32 %v4682, 0.0
        %v4723 = vmax.f32 %v4687, 0.0
        %v4724 = vmax.f32 %v4690, 0.0
        %v4725 = vld [vmem:[#allocation10] sm:$0xff]
        %v4726 = vld [vmem:[#allocation10 + $0x8] sm:$0x1]
        %v4727 = vld [vmem:[#allocation11] sm:$0x1]
        %v4744 = vcombine.high %v4693, %v4693
        %v4746 = vunpack.c.l.s4 1983009808
        %v4747 = vunpack.c.0.s8 %v4746
        %v4748 = vlaneseq
        %v4749 = vshrl.u32 %v4748, 7
        %v4750 = vsub.s32 %v4747, %v4749
        %v4751 = vrot.slane %v4693, %v4750
        %v4753 = vunpack.c.l.s4 1983009808
        %v4754 = vunpack.c.0.s8 %v4753
        %v4755 = vlaneseq
        %v4756 = vshrl.u32 %v4755, 7
        %v4757 = vsub.s32 %v4754, %v4756
        %v4758 = vrot.slane %v4744, %v4757
        %v4759 = vcombine.high %v4751, %v4751
        %v4760 = vcombine.high %v4758, %v4758
        %v4761 = vcombine.high %v4694, %v4694
        %v4763 = vunpack.c.l.s4 1983009808
        %v4764 = vunpack.c.0.s8 %v4763
        %v4765 = vlaneseq
        %v4766 = vshrl.u32 %v4765, 7
        %v4767 = vsub.s32 %v4764, %v4766
        %v4768 = vrot.slane %v4694, %v4767
        %v4770 = vunpack.c.l.s4 1983009808
        %v4771 = vunpack.c.0.s8 %v4770
        %v4772 = vlaneseq
        %v4773 = vshrl.u32 %v4772, 7
        %v4774 = vsub.s32 %v4771, %v4773
        %v4775 = vrot.slane %v4761, %v4774
        %v4776 = vcombine.high %v4768, %v4768
        %v4777 = vcombine.high %v4775, %v4775
        %v4778 = vcombine.high %v4697, %v4697
        %v4780 = vunpack.c.l.s4 1983009808
        %v4781 = vunpack.c.0.s8 %v4780
        %v4782 = vlaneseq
        %v4783 = vshrl.u32 %v4782, 7
        %v4784 = vsub.s32 %v4781, %v4783
        %v4785 = vrot.slane %v4697, %v4784
        %v4787 = vunpack.c.l.s4 1983009808
        %v4788 = vunpack.c.0.s8 %v4787
        %v4789 = vlaneseq
        %v4790 = vshrl.u32 %v4789, 7
        %v4791 = vsub.s32 %v4788, %v4790
        %v4792 = vrot.slane %v4778, %v4791
        %v4793 = vcombine.high %v4785, %v4785
        %v4794 = vcombine.high %v4792, %v4792
        %v4795 = vcombine.high %v4698, %v4698
        %v4797 = vunpack.c.l.s4 1983009808
        %v4798 = vunpack.c.0.s8 %v4797
        %v4799 = vlaneseq
        %v4800 = vshrl.u32 %v4799, 7
        %v4801 = vsub.s32 %v4798, %v4800
        %v4802 = vrot.slane %v4698, %v4801
        %v4804 = vunpack.c.l.s4 1983009808
        %v4805 = vunpack.c.0.s8 %v4804
        %v4806 = vlaneseq
        %v4807 = vshrl.u32 %v4806, 7
        %v4808 = vsub.s32 %v4805, %v4807
        %v4809 = vrot.slane %v4795, %v4808
        %v4810 = vcombine.high %v4802, %v4802
        %v4811 = vcombine.high %v4809, %v4809
        %v4812 = vcombine.high %v4701, %v4701
        %v4814 = vunpack.c.l.s4 1983009808
        %v4815 = vunpack.c.0.s8 %v4814
        %v4816 = vlaneseq
        %v4817 = vshrl.u32 %v4816, 7
        %v4818 = vsub.s32 %v4815, %v4817
        %v4819 = vrot.slane %v4701, %v4818
        %v4821 = vunpack.c.l.s4 1983009808
        %v4822 = vunpack.c.0.s8 %v4821
        %v4823 = vlaneseq
        %v4824 = vshrl.u32 %v4823, 7
        %v4825 = vsub.s32 %v4822, %v4824
        %v4826 = vrot.slane %v4812, %v4825
        %v4827 = vcombine.high %v4819, %v4819
        %v4828 = vcombine.high %v4826, %v4826
        %v4829 = vcombine.high %v4702, %v4702
        %v4831 = vunpack.c.l.s4 1983009808
        %v4832 = vunpack.c.0.s8 %v4831
        %v4833 = vlaneseq
        %v4834 = vshrl.u32 %v4833, 7
        %v4835 = vsub.s32 %v4832, %v4834
        %v4836 = vrot.slane %v4702, %v4835
        %v4838 = vunpack.c.l.s4 1983009808
        %v4839 = vunpack.c.0.s8 %v4838
        %v4840 = vlaneseq
        %v4841 = vshrl.u32 %v4840, 7
        %v4842 = vsub.s32 %v4839, %v4841
        %v4843 = vrot.slane %v4829, %v4842
        %v4844 = vcombine.high %v4836, %v4836
        %v4845 = vcombine.high %v4843, %v4843
        %v4846 = vcombine.high %v4705, %v4705
        %v4848 = vunpack.c.l.s4 1983009808
        %v4849 = vunpack.c.0.s8 %v4848
        %v4850 = vlaneseq
        %v4851 = vshrl.u32 %v4850, 7
        %v4852 = vsub.s32 %v4849, %v4851
        %v4853 = vrot.slane %v4705, %v4852
        %v4855 = vunpack.c.l.s4 1983009808
        %v4856 = vunpack.c.0.s8 %v4855
        %v4857 = vlaneseq
        %v4858 = vshrl.u32 %v4857, 7
        %v4859 = vsub.s32 %v4856, %v4858
        %v4860 = vrot.slane %v4846, %v4859
        %v4861 = vcombine.high %v4853, %v4853
        %v4862 = vcombine.high %v4860, %v4860
        %v4863 = vcombine.high %v4706, %v4706
        %v4865 = vunpack.c.l.s4 1983009808
        %v4866 = vunpack.c.0.s8 %v4865
        %v4867 = vlaneseq
        %v4868 = vshrl.u32 %v4867, 7
        %v4869 = vsub.s32 %v4866, %v4868
        %v4870 = vrot.slane %v4706, %v4869
        %v4872 = vunpack.c.l.s4 1983009808
        %v4873 = vunpack.c.0.s8 %v4872
        %v4874 = vlaneseq
        %v4875 = vshrl.u32 %v4874, 7
        %v4876 = vsub.s32 %v4873, %v4875
        %v4877 = vrot.slane %v4863, %v4876
        %v4878 = vcombine.high %v4870, %v4870
        %v4879 = vcombine.high %v4877, %v4877
        %v4880 = vcombine.high %v4709, %v4709
        %v4882 = vunpack.c.l.s4 1983009808
        %v4883 = vunpack.c.0.s8 %v4882
        %v4884 = vlaneseq
        %v4885 = vshrl.u32 %v4884, 7
        %v4886 = vsub.s32 %v4883, %v4885
        %v4887 = vrot.slane %v4709, %v4886
        %v4889 = vunpack.c.l.s4 1983009808
        %v4890 = vunpack.c.0.s8 %v4889
        %v4891 = vlaneseq
        %v4892 = vshrl.u32 %v4891, 7
        %v4893 = vsub.s32 %v4890, %v4892
        %v4894 = vrot.slane %v4880, %v4893
        %v4895 = vcombine.high %v4887, %v4887
        %v4896 = vcombine.high %v4894, %v4894
        %v4897 = vcombine.high %v4710, %v4710
        %v4899 = vunpack.c.l.s4 1983009808
        %v4900 = vunpack.c.0.s8 %v4899
        %v4901 = vlaneseq
        %v4902 = vshrl.u32 %v4901, 7
        %v4903 = vsub.s32 %v4900, %v4902
        %v4904 = vrot.slane %v4710, %v4903
        %v4906 = vunpack.c.l.s4 1983009808
        %v4907 = vunpack.c.0.s8 %v4906
        %v4908 = vlaneseq
        %v4909 = vshrl.u32 %v4908, 7
        %v4910 = vsub.s32 %v4907, %v4909
        %v4911 = vrot.slane %v4897, %v4910
        %v4912 = vcombine.high %v4904, %v4904
        %v4913 = vcombine.high %v4911, %v4911
        %v4914 = vcombine.high %v4713, %v4713
        %v4916 = vunpack.c.l.s4 1983009808
        %v4917 = vunpack.c.0.s8 %v4916
        %v4918 = vlaneseq
        %v4919 = vshrl.u32 %v4918, 7
        %v4920 = vsub.s32 %v4917, %v4919
        %v4921 = vrot.slane %v4713, %v4920
        %v4923 = vunpack.c.l.s4 1983009808
        %v4924 = vunpack.c.0.s8 %v4923
        %v4925 = vlaneseq
        %v4926 = vshrl.u32 %v4925, 7
        %v4927 = vsub.s32 %v4924, %v4926
        %v4928 = vrot.slane %v4914, %v4927
        %v4929 = vcombine.high %v4921, %v4921
        %v4930 = vcombine.high %v4928, %v4928
        %v4931 = vcombine.high %v4714, %v4714
        %v4933 = vunpack.c.l.s4 1983009808
        %v4934 = vunpack.c.0.s8 %v4933
        %v4935 = vlaneseq
        %v4936 = vshrl.u32 %v4935, 7
        %v4937 = vsub.s32 %v4934, %v4936
        %v4938 = vrot.slane %v4714, %v4937
        %v4940 = vunpack.c.l.s4 1983009808
        %v4941 = vunpack.c.0.s8 %v4940
        %v4942 = vlaneseq
        %v4943 = vshrl.u32 %v4942, 7
        %v4944 = vsub.s32 %v4941, %v4943
        %v4945 = vrot.slane %v4931, %v4944
        %v4946 = vcombine.high %v4938, %v4938
        %v4947 = vcombine.high %v4945, %v4945
        %v4948 = vcombine.high %v4717, %v4717
        %v4950 = vunpack.c.l.s4 1983009808
        %v4951 = vunpack.c.0.s8 %v4950
        %v4952 = vlaneseq
        %v4953 = vshrl.u32 %v4952, 7
        %v4954 = vsub.s32 %v4951, %v4953
        %v4955 = vrot.slane %v4717, %v4954
        %v4957 = vunpack.c.l.s4 1983009808
        %v4958 = vunpack.c.0.s8 %v4957
        %v4959 = vlaneseq
        %v4960 = vshrl.u32 %v4959, 7
        %v4961 = vsub.s32 %v4958, %v4960
        %v4962 = vrot.slane %v4948, %v4961
        %v4963 = vcombine.high %v4955, %v4955
        %v4964 = vcombine.high %v4962, %v4962
        %v4965 = vcombine.high %v4718, %v4718
        %v4967 = vunpack.c.l.s4 1983009808
        %v4968 = vunpack.c.0.s8 %v4967
        %v4969 = vlaneseq
        %v4970 = vshrl.u32 %v4969, 7
        %v4971 = vsub.s32 %v4968, %v4970
        %v4972 = vrot.slane %v4718, %v4971
        %v4974 = vunpack.c.l.s4 1983009808
        %v4975 = vunpack.c.0.s8 %v4974
        %v4976 = vlaneseq
        %v4977 = vshrl.u32 %v4976, 7
        %v4978 = vsub.s32 %v4975, %v4977
        %v4979 = vrot.slane %v4965, %v4978
        %v4980 = vcombine.high %v4972, %v4972
        %v4981 = vcombine.high %v4979, %v4979
        %v4982 = vcombine.high %v4721, %v4721
        %v4984 = vunpack.c.l.s4 1983009808
        %v4985 = vunpack.c.0.s8 %v4984
        %v4986 = vlaneseq
        %v4987 = vshrl.u32 %v4986, 7
        %v4988 = vsub.s32 %v4985, %v4987
        %v4989 = vrot.slane %v4721, %v4988
        %v4991 = vunpack.c.l.s4 1983009808
        %v4992 = vunpack.c.0.s8 %v4991
        %v4993 = vlaneseq
        %v4994 = vshrl.u32 %v4993, 7
        %v4995 = vsub.s32 %v4992, %v4994
        %v4996 = vrot.slane %v4982, %v4995
        %v4997 = vcombine.high %v4989, %v4989
        %v4998 = vcombine.high %v4996, %v4996
        %v4999 = vcombine.high %v4722, %v4722
        %v5001 = vunpack.c.l.s4 1983009808
        %v5002 = vunpack.c.0.s8 %v5001
        %v5003 = vlaneseq
        %v5004 = vshrl.u32 %v5003, 7
        %v5005 = vsub.s32 %v5002, %v5004
        %v5006 = vrot.slane %v4722, %v5005
        %v5008 = vunpack.c.l.s4 1983009808
        %v5009 = vunpack.c.0.s8 %v5008
        %v5010 = vlaneseq
        %v5011 = vshrl.u32 %v5010, 7
        %v5012 = vsub.s32 %v5009, %v5011
        %v5013 = vrot.slane %v4999, %v5012
        %v5014 = vcombine.high %v5006, %v5006
        %v5015 = vcombine.high %v5013, %v5013
        %v5096 = vcombine.high %v4695, %v4695
        %v5098 = vunpack.c.l.s4 1983009808
        %v5099 = vunpack.c.0.s8 %v5098
        %v5100 = vlaneseq
        %v5101 = vshrl.u32 %v5100, 7
        %v5102 = vsub.s32 %v5099, %v5101
        %v5103 = vrot.slane %v4695, %v5102
        %v5105 = vunpack.c.l.s4 1983009808
        %v5106 = vunpack.c.0.s8 %v5105
        %v5107 = vlaneseq
        %v5108 = vshrl.u32 %v5107, 7
        %v5109 = vsub.s32 %v5106, %v5108
        %v5110 = vrot.slane %v5096, %v5109
        %v5111 = vcombine.high %v5103, %v5103
        %v5112 = vcombine.high %v5110, %v5110
        %v5113 = vcombine.high %v4696, %v4696
        %v5115 = vunpack.c.l.s4 1983009808
        %v5116 = vunpack.c.0.s8 %v5115
        %v5117 = vlaneseq
        %v5118 = vshrl.u32 %v5117, 7
        %v5119 = vsub.s32 %v5116, %v5118
        %v5120 = vrot.slane %v4696, %v5119
        %v5122 = vunpack.c.l.s4 1983009808
        %v5123 = vunpack.c.0.s8 %v5122
        %v5124 = vlaneseq
        %v5125 = vshrl.u32 %v5124, 7
        %v5126 = vsub.s32 %v5123, %v5125
        %v5127 = vrot.slane %v5113, %v5126
        %v5128 = vcombine.high %v5120, %v5120
        %v5129 = vcombine.high %v5127, %v5127
        %v5130 = vcombine.high %v4699, %v4699
        %v5132 = vunpack.c.l.s4 1983009808
        %v5133 = vunpack.c.0.s8 %v5132
        %v5134 = vlaneseq
        %v5135 = vshrl.u32 %v5134, 7
        %v5136 = vsub.s32 %v5133, %v5135
        %v5137 = vrot.slane %v4699, %v5136
        %v5139 = vunpack.c.l.s4 1983009808
        %v5140 = vunpack.c.0.s8 %v5139
        %v5141 = vlaneseq
        %v5142 = vshrl.u32 %v5141, 7
        %v5143 = vsub.s32 %v5140, %v5142
        %v5144 = vrot.slane %v5130, %v5143
        %v5145 = vcombine.high %v5137, %v5137
        %v5146 = vcombine.high %v5144, %v5144
        %v5147 = vcombine.high %v4700, %v4700
        %v5149 = vunpack.c.l.s4 1983009808
        %v5150 = vunpack.c.0.s8 %v5149
        %v5151 = vlaneseq
        %v5152 = vshrl.u32 %v5151, 7
        %v5153 = vsub.s32 %v5150, %v5152
        %v5154 = vrot.slane %v4700, %v5153
        %v5156 = vunpack.c.l.s4 1983009808
        %v5157 = vunpack.c.0.s8 %v5156
        %v5158 = vlaneseq
        %v5159 = vshrl.u32 %v5158, 7
        %v5160 = vsub.s32 %v5157, %v5159
        %v5161 = vrot.slane %v5147, %v5160
        %v5162 = vcombine.high %v5154, %v5154
        %v5163 = vcombine.high %v5161, %v5161
        %v5164 = vcombine.high %v4703, %v4703
        %v5166 = vunpack.c.l.s4 1983009808
        %v5167 = vunpack.c.0.s8 %v5166
        %v5168 = vlaneseq
        %v5169 = vshrl.u32 %v5168, 7
        %v5170 = vsub.s32 %v5167, %v5169
        %v5171 = vrot.slane %v4703, %v5170
        %v5173 = vunpack.c.l.s4 1983009808
        %v5174 = vunpack.c.0.s8 %v5173
        %v5175 = vlaneseq
        %v5176 = vshrl.u32 %v5175, 7
        %v5177 = vsub.s32 %v5174, %v5176
        %v5178 = vrot.slane %v5164, %v5177
        %v5179 = vcombine.high %v5171, %v5171
        %v5180 = vcombine.high %v5178, %v5178
        %v5181 = vcombine.high %v4704, %v4704
        %v5183 = vunpack.c.l.s4 1983009808
        %v5184 = vunpack.c.0.s8 %v5183
        %v5185 = vlaneseq
        %v5186 = vshrl.u32 %v5185, 7
        %v5187 = vsub.s32 %v5184, %v5186
        %v5188 = vrot.slane %v4704, %v5187
        %v5190 = vunpack.c.l.s4 1983009808
        %v5191 = vunpack.c.0.s8 %v5190
        %v5192 = vlaneseq
        %v5193 = vshrl.u32 %v5192, 7
        %v5194 = vsub.s32 %v5191, %v5193
        %v5195 = vrot.slane %v5181, %v5194
        %v5196 = vcombine.high %v5188, %v5188
        %v5197 = vcombine.high %v5195, %v5195
        %v5198 = vcombine.high %v4707, %v4707
        %v5200 = vunpack.c.l.s4 1983009808
        %v5201 = vunpack.c.0.s8 %v5200
        %v5202 = vlaneseq
        %v5203 = vshrl.u32 %v5202, 7
        %v5204 = vsub.s32 %v5201, %v5203
        %v5205 = vrot.slane %v4707, %v5204
        %v5207 = vunpack.c.l.s4 1983009808
        %v5208 = vunpack.c.0.s8 %v5207
        %v5209 = vlaneseq
        %v5210 = vshrl.u32 %v5209, 7
        %v5211 = vsub.s32 %v5208, %v5210
        %v5212 = vrot.slane %v5198, %v5211
        %v5213 = vcombine.high %v5205, %v5205
        %v5214 = vcombine.high %v5212, %v5212
        %v5215 = vcombine.high %v4708, %v4708
        %v5217 = vunpack.c.l.s4 1983009808
        %v5218 = vunpack.c.0.s8 %v5217
        %v5219 = vlaneseq
        %v5220 = vshrl.u32 %v5219, 7
        %v5221 = vsub.s32 %v5218, %v5220
        %v5222 = vrot.slane %v4708, %v5221
        %v5224 = vunpack.c.l.s4 1983009808
        %v5225 = vunpack.c.0.s8 %v5224
        %v5226 = vlaneseq
        %v5227 = vshrl.u32 %v5226, 7
        %v5228 = vsub.s32 %v5225, %v5227
        %v5229 = vrot.slane %v5215, %v5228
        %v5230 = vcombine.high %v5222, %v5222
        %v5231 = vcombine.high %v5229, %v5229
        %v5232 = vcombine.high %v4711, %v4711
        %v5234 = vunpack.c.l.s4 1983009808
        %v5235 = vunpack.c.0.s8 %v5234
        %v5236 = vlaneseq
        %v5237 = vshrl.u32 %v5236, 7
        %v5238 = vsub.s32 %v5235, %v5237
        %v5239 = vrot.slane %v4711, %v5238
        %v5241 = vunpack.c.l.s4 1983009808
        %v5242 = vunpack.c.0.s8 %v5241
        %v5243 = vlaneseq
        %v5244 = vshrl.u32 %v5243, 7
        %v5245 = vsub.s32 %v5242, %v5244
        %v5246 = vrot.slane %v5232, %v5245
        %v5247 = vcombine.high %v5239, %v5239
        %v5248 = vcombine.high %v5246, %v5246
        %v5249 = vcombine.high %v4712, %v4712
        %v5251 = vunpack.c.l.s4 1983009808
        %v5252 = vunpack.c.0.s8 %v5251
        %v5253 = vlaneseq
        %v5254 = vshrl.u32 %v5253, 7
        %v5255 = vsub.s32 %v5252, %v5254
        %v5256 = vrot.slane %v4712, %v5255
        %v5258 = vunpack.c.l.s4 1983009808
        %v5259 = vunpack.c.0.s8 %v5258
        %v5260 = vlaneseq
        %v5261 = vshrl.u32 %v5260, 7
        %v5262 = vsub.s32 %v5259, %v5261
        %v5263 = vrot.slane %v5249, %v5262
        %v5264 = vcombine.high %v5256, %v5256
        %v5265 = vcombine.high %v5263, %v5263
        %v5266 = vcombine.high %v4715, %v4715
        %v5268 = vunpack.c.l.s4 1983009808
        %v5269 = vunpack.c.0.s8 %v5268
        %v5270 = vlaneseq
        %v5271 = vshrl.u32 %v5270, 7
        %v5272 = vsub.s32 %v5269, %v5271
        %v5273 = vrot.slane %v4715, %v5272
        %v5275 = vunpack.c.l.s4 1983009808
        %v5276 = vunpack.c.0.s8 %v5275
        %v5277 = vlaneseq
        %v5278 = vshrl.u32 %v5277, 7
        %v5279 = vsub.s32 %v5276, %v5278
        %v5280 = vrot.slane %v5266, %v5279
        %v5281 = vcombine.high %v5273, %v5273
        %v5282 = vcombine.high %v5280, %v5280
        %v5283 = vcombine.high %v4716, %v4716
        %v5285 = vunpack.c.l.s4 1983009808
        %v5286 = vunpack.c.0.s8 %v5285
        %v5287 = vlaneseq
        %v5288 = vshrl.u32 %v5287, 7
        %v5289 = vsub.s32 %v5286, %v5288
        %v5290 = vrot.slane %v4716, %v5289
        %v5292 = vunpack.c.l.s4 1983009808
        %v5293 = vunpack.c.0.s8 %v5292
        %v5294 = vlaneseq
        %v5295 = vshrl.u32 %v5294, 7
        %v5296 = vsub.s32 %v5293, %v5295
        %v5297 = vrot.slane %v5283, %v5296
        %v5298 = vcombine.high %v5290, %v5290
        %v5299 = vcombine.high %v5297, %v5297
        %v5300 = vcombine.high %v4719, %v4719
        %v5302 = vunpack.c.l.s4 1983009808
        %v5303 = vunpack.c.0.s8 %v5302
        %v5304 = vlaneseq
        %v5305 = vshrl.u32 %v5304, 7
        %v5306 = vsub.s32 %v5303, %v5305
        %v5307 = vrot.slane %v4719, %v5306
        %v5309 = vunpack.c.l.s4 1983009808
        %v5310 = vunpack.c.0.s8 %v5309
        %v5311 = vlaneseq
        %v5312 = vshrl.u32 %v5311, 7
        %v5313 = vsub.s32 %v5310, %v5312
        %v5314 = vrot.slane %v5300, %v5313
        %v5315 = vcombine.high %v5307, %v5307
        %v5316 = vcombine.high %v5314, %v5314
        %v5317 = vcombine.high %v4720, %v4720
        %v5319 = vunpack.c.l.s4 1983009808
        %v5320 = vunpack.c.0.s8 %v5319
        %v5321 = vlaneseq
        %v5322 = vshrl.u32 %v5321, 7
        %v5323 = vsub.s32 %v5320, %v5322
        %v5324 = vrot.slane %v4720, %v5323
        %v5326 = vunpack.c.l.s4 1983009808
        %v5327 = vunpack.c.0.s8 %v5326
        %v5328 = vlaneseq
        %v5329 = vshrl.u32 %v5328, 7
        %v5330 = vsub.s32 %v5327, %v5329
        %v5331 = vrot.slane %v5317, %v5330
        %v5332 = vcombine.high %v5324, %v5324
        %v5333 = vcombine.high %v5331, %v5331
        %v5334 = vcombine.high %v4723, %v4723
        %v5336 = vunpack.c.l.s4 1983009808
        %v5337 = vunpack.c.0.s8 %v5336
        %v5338 = vlaneseq
        %v5339 = vshrl.u32 %v5338, 7
        %v5340 = vsub.s32 %v5337, %v5339
        %v5341 = vrot.slane %v4723, %v5340
        %v5343 = vunpack.c.l.s4 1983009808
        %v5344 = vunpack.c.0.s8 %v5343
        %v5345 = vlaneseq
        %v5346 = vshrl.u32 %v5345, 7
        %v5347 = vsub.s32 %v5344, %v5346
        %v5348 = vrot.slane %v5334, %v5347
        %v5349 = vcombine.high %v5341, %v5341
        %v5350 = vcombine.high %v5348, %v5348
        %v5351 = vcombine.high %v4724, %v4724
        %v5353 = vunpack.c.l.s4 1983009808
        %v5354 = vunpack.c.0.s8 %v5353
        %v5355 = vlaneseq
        %v5356 = vshrl.u32 %v5355, 7
        %v5357 = vsub.s32 %v5354, %v5356
        %v5358 = vrot.slane %v4724, %v5357
        %v5360 = vunpack.c.l.s4 1983009808
        %v5361 = vunpack.c.0.s8 %v5360
        %v5362 = vlaneseq
        %v5363 = vshrl.u32 %v5362, 7
        %v5364 = vsub.s32 %v5361, %v5363
        %v5365 = vrot.slane %v5351, %v5364
        %v5366 = vcombine.high %v5358, %v5358
        %v5367 = vcombine.high %v5365, %v5365
        %v5432 = vlaneseq
        %v5433 = vshrl.u32 %v5432, 7
        %v5434 = vsub.s32 1, %v5433
        %v5435 = vrot.slane %v4751, %v5434
        %v5436 = vlaneseq
        %v5437 = vshrl.u32 %v5436, 7
        %v5438 = vsub.s32 1, %v5437
        %v5439 = vrot.slane %v4759, %v5438
        %v5440 = vlaneseq
        %v5441 = vshrl.u32 %v5440, 7
        %v5442 = vsub.s32 1, %v5441
        %v5443 = vrot.slane %v4758, %v5442
        %v5444 = vlaneseq
        %v5445 = vshrl.u32 %v5444, 7
        %v5446 = vsub.s32 1, %v5445
        %v5447 = vrot.slane %v4760, %v5446
        %v5448 = vlaneseq
        %v5449 = vshrl.u32 %v5448, 7
        %v5450 = vsub.s32 1, %v5449
        %v5451 = vrot.slane %v4768, %v5450
        %v5452 = vlaneseq
        %v5453 = vshrl.u32 %v5452, 7
        %v5454 = vsub.s32 1, %v5453
        %v5455 = vrot.slane %v4776, %v5454
        %v5456 = vlaneseq
        %v5457 = vshrl.u32 %v5456, 7
        %v5458 = vsub.s32 1, %v5457
        %v5459 = vrot.slane %v4775, %v5458
        %v5460 = vlaneseq
        %v5461 = vshrl.u32 %v5460, 7
        %v5462 = vsub.s32 1, %v5461
        %v5463 = vrot.slane %v4785, %v5462
        %v5464 = vlaneseq
        %v5465 = vshrl.u32 %v5464, 7
        %v5466 = vsub.s32 1, %v5465
        %v5467 = vrot.slane %v4793, %v5466
        %v5468 = vlaneseq
        %v5469 = vshrl.u32 %v5468, 7
        %v5470 = vsub.s32 1, %v5469
        %v5471 = vrot.slane %v4792, %v5470
        %v5472 = vlaneseq
        %v5473 = vshrl.u32 %v5472, 7
        %v5474 = vsub.s32 1, %v5473
        %v5475 = vrot.slane %v4794, %v5474
        %v5476 = vlaneseq
        %v5477 = vshrl.u32 %v5476, 7
        %v5478 = vsub.s32 1, %v5477
        %v5479 = vrot.slane %v4802, %v5478
        %v5480 = vlaneseq
        %v5481 = vshrl.u32 %v5480, 7
        %v5482 = vsub.s32 1, %v5481
        %v5483 = vrot.slane %v4810, %v5482
        %v5484 = vlaneseq
        %v5485 = vshrl.u32 %v5484, 7
        %v5486 = vsub.s32 1, %v5485
        %v5487 = vrot.slane %v4809, %v5486
        %v5488 = vlaneseq
        %v5489 = vshrl.u32 %v5488, 7
        %v5490 = vsub.s32 1, %v5489
        %v5491 = vrot.slane %v4819, %v5490
        %v5492 = vlaneseq
        %v5493 = vshrl.u32 %v5492, 7
        %v5494 = vsub.s32 1, %v5493
        %v5495 = vrot.slane %v4827, %v5494
        %v5496 = vlaneseq
        %v5497 = vshrl.u32 %v5496, 7
        %v5498 = vsub.s32 1, %v5497
        %v5499 = vrot.slane %v4826, %v5498
        %v5500 = vlaneseq
        %v5501 = vshrl.u32 %v5500, 7
        %v5502 = vsub.s32 1, %v5501
        %v5503 = vrot.slane %v4828, %v5502
        %v5504 = vlaneseq
        %v5505 = vshrl.u32 %v5504, 7
        %v5506 = vsub.s32 1, %v5505
        %v5507 = vrot.slane %v4836, %v5506
        %v5508 = vlaneseq
        %v5509 = vshrl.u32 %v5508, 7
        %v5510 = vsub.s32 1, %v5509
        %v5511 = vrot.slane %v4844, %v5510
        %v5512 = vlaneseq
        %v5513 = vshrl.u32 %v5512, 7
        %v5514 = vsub.s32 1, %v5513
        %v5515 = vrot.slane %v4843, %v5514
        %v5516 = vlaneseq
        %v5517 = vshrl.u32 %v5516, 7
        %v5518 = vsub.s32 1, %v5517
        %v5519 = vrot.slane %v4853, %v5518
        %v5520 = vlaneseq
        %v5521 = vshrl.u32 %v5520, 7
        %v5522 = vsub.s32 1, %v5521
        %v5523 = vrot.slane %v4861, %v5522
        %v5524 = vlaneseq
        %v5525 = vshrl.u32 %v5524, 7
        %v5526 = vsub.s32 1, %v5525
        %v5527 = vrot.slane %v4860, %v5526
        %v5528 = vlaneseq
        %v5529 = vshrl.u32 %v5528, 7
        %v5530 = vsub.s32 1, %v5529
        %v5531 = vrot.slane %v4862, %v5530
        %v5532 = vlaneseq
        %v5533 = vshrl.u32 %v5532, 7
        %v5534 = vsub.s32 1, %v5533
        %v5535 = vrot.slane %v4870, %v5534
        %v5536 = vlaneseq
        %v5537 = vshrl.u32 %v5536, 7
        %v5538 = vsub.s32 1, %v5537
        %v5539 = vrot.slane %v4878, %v5538
        %v5540 = vlaneseq
        %v5541 = vshrl.u32 %v5540, 7
        %v5542 = vsub.s32 1, %v5541
        %v5543 = vrot.slane %v4877, %v5542
        %v5544 = vlaneseq
        %v5545 = vshrl.u32 %v5544, 7
        %v5546 = vsub.s32 1, %v5545
        %v5547 = vrot.slane %v4887, %v5546
        %v5548 = vlaneseq
        %v5549 = vshrl.u32 %v5548, 7
        %v5550 = vsub.s32 1, %v5549
        %v5551 = vrot.slane %v4895, %v5550
        %v5552 = vlaneseq
        %v5553 = vshrl.u32 %v5552, 7
        %v5554 = vsub.s32 1, %v5553
        %v5555 = vrot.slane %v4894, %v5554
        %v5556 = vlaneseq
        %v5557 = vshrl.u32 %v5556, 7
        %v5558 = vsub.s32 1, %v5557
        %v5559 = vrot.slane %v4896, %v5558
        %v5560 = vlaneseq
        %v5561 = vshrl.u32 %v5560, 7
        %v5562 = vsub.s32 1, %v5561
        %v5563 = vrot.slane %v4904, %v5562
        %v5564 = vlaneseq
        %v5565 = vshrl.u32 %v5564, 7
        %v5566 = vsub.s32 1, %v5565
        %v5567 = vrot.slane %v4912, %v5566
        %v5568 = vlaneseq
        %v5569 = vshrl.u32 %v5568, 7
        %v5570 = vsub.s32 1, %v5569
        %v5571 = vrot.slane %v4911, %v5570
        %v5572 = vlaneseq
        %v5573 = vshrl.u32 %v5572, 7
        %v5574 = vsub.s32 1, %v5573
        %v5575 = vrot.slane %v4921, %v5574
        %v5576 = vlaneseq
        %v5577 = vshrl.u32 %v5576, 7
        %v5578 = vsub.s32 1, %v5577
        %v5579 = vrot.slane %v4929, %v5578
        %v5580 = vlaneseq
        %v5581 = vshrl.u32 %v5580, 7
        %v5582 = vsub.s32 1, %v5581
        %v5583 = vrot.slane %v4928, %v5582
        %v5584 = vlaneseq
        %v5585 = vshrl.u32 %v5584, 7
        %v5586 = vsub.s32 1, %v5585
        %v5587 = vrot.slane %v4930, %v5586
        %v5588 = vlaneseq
        %v5589 = vshrl.u32 %v5588, 7
        %v5590 = vsub.s32 1, %v5589
        %v5591 = vrot.slane %v4938, %v5590
        %v5592 = vlaneseq
        %v5593 = vshrl.u32 %v5592, 7
        %v5594 = vsub.s32 1, %v5593
        %v5595 = vrot.slane %v4946, %v5594
        %v5596 = vlaneseq
        %v5597 = vshrl.u32 %v5596, 7
        %v5598 = vsub.s32 1, %v5597
        %v5599 = vrot.slane %v4945, %v5598
        %v5600 = vlaneseq
        %v5601 = vshrl.u32 %v5600, 7
        %v5602 = vsub.s32 1, %v5601
        %v5603 = vrot.slane %v4955, %v5602
        %v5604 = vlaneseq
        %v5605 = vshrl.u32 %v5604, 7
        %v5606 = vsub.s32 1, %v5605
        %v5607 = vrot.slane %v4963, %v5606
        %v5608 = vlaneseq
        %v5609 = vshrl.u32 %v5608, 7
        %v5610 = vsub.s32 1, %v5609
        %v5611 = vrot.slane %v4962, %v5610
        %v5612 = vlaneseq
        %v5613 = vshrl.u32 %v5612, 7
        %v5614 = vsub.s32 1, %v5613
        %v5615 = vrot.slane %v4964, %v5614
        %v5616 = vlaneseq
        %v5617 = vshrl.u32 %v5616, 7
        %v5618 = vsub.s32 1, %v5617
        %v5619 = vrot.slane %v4972, %v5618
        %v5620 = vlaneseq
        %v5621 = vshrl.u32 %v5620, 7
        %v5622 = vsub.s32 1, %v5621
        %v5623 = vrot.slane %v4980, %v5622
        %v5624 = vlaneseq
        %v5625 = vshrl.u32 %v5624, 7
        %v5626 = vsub.s32 1, %v5625
        %v5627 = vrot.slane %v4979, %v5626
        %v5628 = vlaneseq
        %v5629 = vshrl.u32 %v5628, 7
        %v5630 = vsub.s32 1, %v5629
        %v5631 = vrot.slane %v4989, %v5630
        %v5632 = vlaneseq
        %v5633 = vshrl.u32 %v5632, 7
        %v5634 = vsub.s32 1, %v5633
        %v5635 = vrot.slane %v4997, %v5634
        %v5636 = vlaneseq
        %v5637 = vshrl.u32 %v5636, 7
        %v5638 = vsub.s32 1, %v5637
        %v5639 = vrot.slane %v4996, %v5638
        %v5640 = vlaneseq
        %v5641 = vshrl.u32 %v5640, 7
        %v5642 = vsub.s32 1, %v5641
        %v5643 = vrot.slane %v4998, %v5642
        %v5644 = vlaneseq
        %v5645 = vshrl.u32 %v5644, 7
        %v5646 = vsub.s32 1, %v5645
        %v5647 = vrot.slane %v5006, %v5646
        %v5648 = vlaneseq
        %v5649 = vshrl.u32 %v5648, 7
        %v5650 = vsub.s32 1, %v5649
        %v5651 = vrot.slane %v5014, %v5650
        %v5652 = vlaneseq
        %v5653 = vshrl.u32 %v5652, 7
        %v5654 = vsub.s32 1, %v5653
        %v5655 = vrot.slane %v5013, %v5654
        %v5656 = vsel %vm1470, %v5439, %v5435
        %v5657 = vsel %vm1472, %v5443, %v5656
        %v5658 = vsel %vm1474, %v5447, %v5657
        %v5659 = vsel %vm1476, %v5451, %v5658
        %v5660 = vsel %vm1478, %v5455, %v5659
        %v5661 = vsel %vm1480, %v5459, %v5660
        %v5662 = vsel %vm1470, %v5467, %v5463
        %v5663 = vsel %vm1472, %v5471, %v5662
        %v5664 = vsel %vm1474, %v5475, %v5663
        %v5665 = vsel %vm1476, %v5479, %v5664
        %v5666 = vsel %vm1478, %v5483, %v5665
        %v5667 = vsel %vm1480, %v5487, %v5666
        %v5668 = vsel %vm1470, %v5495, %v5491
        %v5669 = vsel %vm1472, %v5499, %v5668
        %v5670 = vsel %vm1474, %v5503, %v5669
        %v5671 = vsel %vm1476, %v5507, %v5670
        %v5672 = vsel %vm1478, %v5511, %v5671
        %v5673 = vsel %vm1480, %v5515, %v5672
        %v5674 = vsel %vm1470, %v5523, %v5519
        %v5675 = vsel %vm1472, %v5527, %v5674
        %v5676 = vsel %vm1474, %v5531, %v5675
        %v5677 = vsel %vm1476, %v5535, %v5676
        %v5678 = vsel %vm1478, %v5539, %v5677
        %v5679 = vsel %vm1480, %v5543, %v5678
        %v5680 = vsel %vm1470, %v5551, %v5547
        %v5681 = vsel %vm1472, %v5555, %v5680
        %v5682 = vsel %vm1474, %v5559, %v5681
        %v5683 = vsel %vm1476, %v5563, %v5682
        %v5684 = vsel %vm1478, %v5567, %v5683
        %v5685 = vsel %vm1480, %v5571, %v5684
        %v5686 = vsel %vm1470, %v5579, %v5575
        %v5687 = vsel %vm1472, %v5583, %v5686
        %v5688 = vsel %vm1474, %v5587, %v5687
        %v5689 = vsel %vm1476, %v5591, %v5688
        %v5690 = vsel %vm1478, %v5595, %v5689
        %v5691 = vsel %vm1480, %v5599, %v5690
        %v5692 = vsel %vm1470, %v5607, %v5603
        %v5693 = vsel %vm1472, %v5611, %v5692
        %v5694 = vsel %vm1474, %v5615, %v5693
        %v5695 = vsel %vm1476, %v5619, %v5694
        %v5696 = vsel %vm1478, %v5623, %v5695
        %v5697 = vsel %vm1480, %v5627, %v5696
        %v5698 = vsel %vm1470, %v5635, %v5631
        %v5699 = vsel %vm1472, %v5639, %v5698
        %v5700 = vsel %vm1474, %v5643, %v5699
        %v5701 = vsel %vm1476, %v5647, %v5700
        %v5702 = vsel %vm1478, %v5651, %v5701
        %v5703 = vsel %vm1480, %v5655, %v5702
        %v5712 = vsel %vm1532, 0.0, %v5661
        %v5713 = vsel %vm1532, 0.0, %v5667
        %v5714 = vsel %vm1532, 0.0, %v5673
        %v5715 = vsel %vm1532, 0.0, %v5679
        %v5716 = vsel %vm1532, 0.0, %v5685
        %v5717 = vsel %vm1532, 0.0, %v5691
        %v5718 = vsel %vm1532, 0.0, %v5697
        %v5719 = vsel %vm1532, 0.0, %v5703
        %v5720 = vlaneseq
        %v5721 = vshrl.u32 %v5720, 7
        %v5722 = vsub.s32 1, %v5721
        %v5723 = vrot.slane %v5103, %v5722
        %v5724 = vlaneseq
        %v5725 = vshrl.u32 %v5724, 7
        %v5726 = vsub.s32 1, %v5725
        %v5727 = vrot.slane %v5111, %v5726
        %v5728 = vlaneseq
        %v5729 = vshrl.u32 %v5728, 7
        %v5730 = vsub.s32 1, %v5729
        %v5731 = vrot.slane %v5110, %v5730
        %v5732 = vlaneseq
        %v5733 = vshrl.u32 %v5732, 7
        %v5734 = vsub.s32 1, %v5733
        %v5735 = vrot.slane %v5112, %v5734
        %v5736 = vlaneseq
        %v5737 = vshrl.u32 %v5736, 7
        %v5738 = vsub.s32 1, %v5737
        %v5739 = vrot.slane %v5120, %v5738
        %v5740 = vlaneseq
        %v5741 = vshrl.u32 %v5740, 7
        %v5742 = vsub.s32 1, %v5741
        %v5743 = vrot.slane %v5128, %v5742
        %v5744 = vlaneseq
        %v5745 = vshrl.u32 %v5744, 7
        %v5746 = vsub.s32 1, %v5745
        %v5747 = vrot.slane %v5127, %v5746
        %v5748 = vlaneseq
        %v5749 = vshrl.u32 %v5748, 7
        %v5750 = vsub.s32 1, %v5749
        %v5751 = vrot.slane %v5137, %v5750
        %v5752 = vlaneseq
        %v5753 = vshrl.u32 %v5752, 7
        %v5754 = vsub.s32 1, %v5753
        %v5755 = vrot.slane %v5145, %v5754
        %v5756 = vlaneseq
        %v5757 = vshrl.u32 %v5756, 7
        %v5758 = vsub.s32 1, %v5757
        %v5759 = vrot.slane %v5144, %v5758
        %v5760 = vlaneseq
        %v5761 = vshrl.u32 %v5760, 7
        %v5762 = vsub.s32 1, %v5761
        %v5763 = vrot.slane %v5146, %v5762
        %v5764 = vlaneseq
        %v5765 = vshrl.u32 %v5764, 7
        %v5766 = vsub.s32 1, %v5765
        %v5767 = vrot.slane %v5154, %v5766
        %v5768 = vlaneseq
        %v5769 = vshrl.u32 %v5768, 7
        %v5770 = vsub.s32 1, %v5769
        %v5771 = vrot.slane %v5162, %v5770
        %v5772 = vlaneseq
        %v5773 = vshrl.u32 %v5772, 7
        %v5774 = vsub.s32 1, %v5773
        %v5775 = vrot.slane %v5161, %v5774
        %v5776 = vlaneseq
        %v5777 = vshrl.u32 %v5776, 7
        %v5778 = vsub.s32 1, %v5777
        %v5779 = vrot.slane %v5171, %v5778
        %v5780 = vlaneseq
        %v5781 = vshrl.u32 %v5780, 7
        %v5782 = vsub.s32 1, %v5781
        %v5783 = vrot.slane %v5179, %v5782
        %v5784 = vlaneseq
        %v5785 = vshrl.u32 %v5784, 7
        %v5786 = vsub.s32 1, %v5785
        %v5787 = vrot.slane %v5178, %v5786
        %v5788 = vlaneseq
        %v5789 = vshrl.u32 %v5788, 7
        %v5790 = vsub.s32 1, %v5789
        %v5791 = vrot.slane %v5180, %v5790
        %v5792 = vlaneseq
        %v5793 = vshrl.u32 %v5792, 7
        %v5794 = vsub.s32 1, %v5793
        %v5795 = vrot.slane %v5188, %v5794
        %v5796 = vlaneseq
        %v5797 = vshrl.u32 %v5796, 7
        %v5798 = vsub.s32 1, %v5797
        %v5799 = vrot.slane %v5196, %v5798
        %v5800 = vlaneseq
        %v5801 = vshrl.u32 %v5800, 7
        %v5802 = vsub.s32 1, %v5801
        %v5803 = vrot.slane %v5195, %v5802
        %v5804 = vlaneseq
        %v5805 = vshrl.u32 %v5804, 7
        %v5806 = vsub.s32 1, %v5805
        %v5807 = vrot.slane %v5205, %v5806
        %v5808 = vlaneseq
        %v5809 = vshrl.u32 %v5808, 7
        %v5810 = vsub.s32 1, %v5809
        %v5811 = vrot.slane %v5213, %v5810
        %v5812 = vlaneseq
        %v5813 = vshrl.u32 %v5812, 7
        %v5814 = vsub.s32 1, %v5813
        %v5815 = vrot.slane %v5212, %v5814
        %v5816 = vlaneseq
        %v5817 = vshrl.u32 %v5816, 7
        %v5818 = vsub.s32 1, %v5817
        %v5819 = vrot.slane %v5214, %v5818
        %v5820 = vlaneseq
        %v5821 = vshrl.u32 %v5820, 7
        %v5822 = vsub.s32 1, %v5821
        %v5823 = vrot.slane %v5222, %v5822
        %v5824 = vlaneseq
        %v5825 = vshrl.u32 %v5824, 7
        %v5826 = vsub.s32 1, %v5825
        %v5827 = vrot.slane %v5230, %v5826
        %v5828 = vlaneseq
        %v5829 = vshrl.u32 %v5828, 7
        %v5830 = vsub.s32 1, %v5829
        %v5831 = vrot.slane %v5229, %v5830
        %v5832 = vlaneseq
        %v5833 = vshrl.u32 %v5832, 7
        %v5834 = vsub.s32 1, %v5833
        %v5835 = vrot.slane %v5239, %v5834
        %v5836 = vlaneseq
        %v5837 = vshrl.u32 %v5836, 7
        %v5838 = vsub.s32 1, %v5837
        %v5839 = vrot.slane %v5247, %v5838
        %v5840 = vlaneseq
        %v5841 = vshrl.u32 %v5840, 7
        %v5842 = vsub.s32 1, %v5841
        %v5843 = vrot.slane %v5246, %v5842
        %v5844 = vlaneseq
        %v5845 = vshrl.u32 %v5844, 7
        %v5846 = vsub.s32 1, %v5845
        %v5847 = vrot.slane %v5248, %v5846
        %v5848 = vlaneseq
        %v5849 = vshrl.u32 %v5848, 7
        %v5850 = vsub.s32 1, %v5849
        %v5851 = vrot.slane %v5256, %v5850
        %v5852 = vlaneseq
        %v5853 = vshrl.u32 %v5852, 7
        %v5854 = vsub.s32 1, %v5853
        %v5855 = vrot.slane %v5264, %v5854
        %v5856 = vlaneseq
        %v5857 = vshrl.u32 %v5856, 7
        %v5858 = vsub.s32 1, %v5857
        %v5859 = vrot.slane %v5263, %v5858
        %v5860 = vlaneseq
        %v5861 = vshrl.u32 %v5860, 7
        %v5862 = vsub.s32 1, %v5861
        %v5863 = vrot.slane %v5273, %v5862
        %v5864 = vlaneseq
        %v5865 = vshrl.u32 %v5864, 7
        %v5866 = vsub.s32 1, %v5865
        %v5867 = vrot.slane %v5281, %v5866
        %v5868 = vlaneseq
        %v5869 = vshrl.u32 %v5868, 7
        %v5870 = vsub.s32 1, %v5869
        %v5871 = vrot.slane %v5280, %v5870
        %v5872 = vlaneseq
        %v5873 = vshrl.u32 %v5872, 7
        %v5874 = vsub.s32 1, %v5873
        %v5875 = vrot.slane %v5282, %v5874
        %v5876 = vlaneseq
        %v5877 = vshrl.u32 %v5876, 7
        %v5878 = vsub.s32 1, %v5877
        %v5879 = vrot.slane %v5290, %v5878
        %v5880 = vlaneseq
        %v5881 = vshrl.u32 %v5880, 7
        %v5882 = vsub.s32 1, %v5881
        %v5883 = vrot.slane %v5298, %v5882
        %v5884 = vlaneseq
        %v5885 = vshrl.u32 %v5884, 7
        %v5886 = vsub.s32 1, %v5885
        %v5887 = vrot.slane %v5297, %v5886
        %v5888 = vlaneseq
        %v5889 = vshrl.u32 %v5888, 7
        %v5890 = vsub.s32 1, %v5889
        %v5891 = vrot.slane %v5307, %v5890
        %v5892 = vlaneseq
        %v5893 = vshrl.u32 %v5892, 7
        %v5894 = vsub.s32 1, %v5893
        %v5895 = vrot.slane %v5315, %v5894
        %v5896 = vlaneseq
        %v5897 = vshrl.u32 %v5896, 7
        %v5898 = vsub.s32 1, %v5897
        %v5899 = vrot.slane %v5314, %v5898
        %v5900 = vlaneseq
        %v5901 = vshrl.u32 %v5900, 7
        %v5902 = vsub.s32 1, %v5901
        %v5903 = vrot.slane %v5316, %v5902
        %v5904 = vlaneseq
        %v5905 = vshrl.u32 %v5904, 7
        %v5906 = vsub.s32 1, %v5905
        %v5907 = vrot.slane %v5324, %v5906
        %v5908 = vlaneseq
        %v5909 = vshrl.u32 %v5908, 7
        %v5910 = vsub.s32 1, %v5909
        %v5911 = vrot.slane %v5332, %v5910
        %v5912 = vlaneseq
        %v5913 = vshrl.u32 %v5912, 7
        %v5914 = vsub.s32 1, %v5913
        %v5915 = vrot.slane %v5331, %v5914
        %v5916 = vlaneseq
        %v5917 = vshrl.u32 %v5916, 7
        %v5918 = vsub.s32 1, %v5917
        %v5919 = vrot.slane %v5341, %v5918
        %v5920 = vlaneseq
        %v5921 = vshrl.u32 %v5920, 7
        %v5922 = vsub.s32 1, %v5921
        %v5923 = vrot.slane %v5349, %v5922
        %v5924 = vlaneseq
        %v5925 = vshrl.u32 %v5924, 7
        %v5926 = vsub.s32 1, %v5925
        %v5927 = vrot.slane %v5348, %v5926
        %v5928 = vlaneseq
        %v5929 = vshrl.u32 %v5928, 7
        %v5930 = vsub.s32 1, %v5929
        %v5931 = vrot.slane %v5350, %v5930
        %v5932 = vlaneseq
        %v5933 = vshrl.u32 %v5932, 7
        %v5934 = vsub.s32 1, %v5933
        %v5935 = vrot.slane %v5358, %v5934
        %v5936 = vlaneseq
        %v5937 = vshrl.u32 %v5936, 7
        %v5938 = vsub.s32 1, %v5937
        %v5939 = vrot.slane %v5366, %v5938
        %v5940 = vlaneseq
        %v5941 = vshrl.u32 %v5940, 7
        %v5942 = vsub.s32 1, %v5941
        %v5943 = vrot.slane %v5365, %v5942
        %v5944 = vsel %vm1470, %v5727, %v5723
        %v5945 = vsel %vm1472, %v5731, %v5944
        %v5946 = vsel %vm1474, %v5735, %v5945
        %v5947 = vsel %vm1476, %v5739, %v5946
        %v5948 = vsel %vm1478, %v5743, %v5947
        %v5949 = vsel %vm1480, %v5747, %v5948
        %v5950 = vsel %vm1470, %v5755, %v5751
        %v5951 = vsel %vm1472, %v5759, %v5950
        %v5952 = vsel %vm1474, %v5763, %v5951
        %v5953 = vsel %vm1476, %v5767, %v5952
        %v5954 = vsel %vm1478, %v5771, %v5953
        %v5955 = vsel %vm1480, %v5775, %v5954
        %v5956 = vsel %vm1470, %v5783, %v5779
        %v5957 = vsel %vm1472, %v5787, %v5956
        %v5958 = vsel %vm1474, %v5791, %v5957
        %v5959 = vsel %vm1476, %v5795, %v5958
        %v5960 = vsel %vm1478, %v5799, %v5959
        %v5961 = vsel %vm1480, %v5803, %v5960
        %v5962 = vsel %vm1470, %v5811, %v5807
        %v5963 = vsel %vm1472, %v5815, %v5962
        %v5964 = vsel %vm1474, %v5819, %v5963
        %v5965 = vsel %vm1476, %v5823, %v5964
        %v5966 = vsel %vm1478, %v5827, %v5965
        %v5967 = vsel %vm1480, %v5831, %v5966
        %v5968 = vsel %vm1470, %v5839, %v5835
        %v5969 = vsel %vm1472, %v5843, %v5968
        %v5970 = vsel %vm1474, %v5847, %v5969
        %v5971 = vsel %vm1476, %v5851, %v5970
        %v5972 = vsel %vm1478, %v5855, %v5971
        %v5973 = vsel %vm1480, %v5859, %v5972
        %v5974 = vsel %vm1470, %v5867, %v5863
        %v5975 = vsel %vm1472, %v5871, %v5974
        %v5976 = vsel %vm1474, %v5875, %v5975
        %v5977 = vsel %vm1476, %v5879, %v5976
        %v5978 = vsel %vm1478, %v5883, %v5977
        %v5979 = vsel %vm1480, %v5887, %v5978
        %v5980 = vsel %vm1470, %v5895, %v5891
        %v5981 = vsel %vm1472, %v5899, %v5980
        %v5982 = vsel %vm1474, %v5903, %v5981
        %v5983 = vsel %vm1476, %v5907, %v5982
        %v5984 = vsel %vm1478, %v5911, %v5983
        %v5985 = vsel %vm1480, %v5915, %v5984
        %v5986 = vsel %vm1470, %v5923, %v5919
        %v5987 = vsel %vm1472, %v5927, %v5986
        %v5988 = vsel %vm1474, %v5931, %v5987
        %v5989 = vsel %vm1476, %v5935, %v5988
        %v5990 = vsel %vm1478, %v5939, %v5989
        %v5991 = vsel %vm1480, %v5943, %v5990
        %v6000 = vsel %vm1532, 0.0, %v5949
        %v6001 = vsel %vm1532, 0.0, %v5955
        %v6002 = vsel %vm1532, 0.0, %v5961
        %v6003 = vsel %vm1532, 0.0, %v5967
        %v6004 = vsel %vm1532, 0.0, %v5973
        %v6005 = vsel %vm1532, 0.0, %v5979
        %v6006 = vsel %vm1532, 0.0, %v5985
        %v6007 = vsel %vm1532, 0.0, %v5991
        %v6008 = vlaneseq
        %v6009 = vshrl.u32 %v6008, 7
        %v6010 = vsub.s32 0, %v6009
        %v6011 = vrot.slane %v5103, %v6010
        %v6012 = vlaneseq
        %v6013 = vshrl.u32 %v6012, 7
        %v6014 = vsub.s32 0, %v6013
        %v6015 = vrot.slane %v5111, %v6014
        %v6016 = vlaneseq
        %v6017 = vshrl.u32 %v6016, 7
        %v6018 = vsub.s32 0, %v6017
        %v6019 = vrot.slane %v5110, %v6018
        %v6020 = vlaneseq
        %v6021 = vshrl.u32 %v6020, 7
        %v6022 = vsub.s32 0, %v6021
        %v6023 = vrot.slane %v5112, %v6022
        %v6024 = vlaneseq
        %v6025 = vshrl.u32 %v6024, 7
        %v6026 = vsub.s32 0, %v6025
        %v6027 = vrot.slane %v5120, %v6026
        %v6028 = vlaneseq
        %v6029 = vshrl.u32 %v6028, 7
        %v6030 = vsub.s32 0, %v6029
        %v6031 = vrot.slane %v5128, %v6030
        %v6032 = vlaneseq
        %v6033 = vshrl.u32 %v6032, 7
        %v6034 = vsub.s32 0, %v6033
        %v6035 = vrot.slane %v5127, %v6034
        %v6036 = vlaneseq
        %v6037 = vshrl.u32 %v6036, 7
        %v6038 = vsub.s32 0, %v6037
        %v6039 = vrot.slane %v5129, %v6038
        %v6040 = vlaneseq
        %v6041 = vshrl.u32 %v6040, 7
        %v6042 = vsub.s32 0, %v6041
        %v6043 = vrot.slane %v5137, %v6042
        %v6044 = vlaneseq
        %v6045 = vshrl.u32 %v6044, 7
        %v6046 = vsub.s32 0, %v6045
        %v6047 = vrot.slane %v5145, %v6046
        %v6048 = vlaneseq
        %v6049 = vshrl.u32 %v6048, 7
        %v6050 = vsub.s32 0, %v6049
        %v6051 = vrot.slane %v5144, %v6050
        %v6052 = vlaneseq
        %v6053 = vshrl.u32 %v6052, 7
        %v6054 = vsub.s32 0, %v6053
        %v6055 = vrot.slane %v5146, %v6054
        %v6056 = vlaneseq
        %v6057 = vshrl.u32 %v6056, 7
        %v6058 = vsub.s32 0, %v6057
        %v6059 = vrot.slane %v5154, %v6058
        %v6060 = vlaneseq
        %v6061 = vshrl.u32 %v6060, 7
        %v6062 = vsub.s32 0, %v6061
        %v6063 = vrot.slane %v5162, %v6062
        %v6064 = vlaneseq
        %v6065 = vshrl.u32 %v6064, 7
        %v6066 = vsub.s32 0, %v6065
        %v6067 = vrot.slane %v5161, %v6066
        %v6068 = vlaneseq
        %v6069 = vshrl.u32 %v6068, 7
        %v6070 = vsub.s32 0, %v6069
        %v6071 = vrot.slane %v5163, %v6070
        %v6072 = vlaneseq
        %v6073 = vshrl.u32 %v6072, 7
        %v6074 = vsub.s32 0, %v6073
        %v6075 = vrot.slane %v5171, %v6074
        %v6076 = vlaneseq
        %v6077 = vshrl.u32 %v6076, 7
        %v6078 = vsub.s32 0, %v6077
        %v6079 = vrot.slane %v5179, %v6078
        %v6080 = vlaneseq
        %v6081 = vshrl.u32 %v6080, 7
        %v6082 = vsub.s32 0, %v6081
        %v6083 = vrot.slane %v5178, %v6082
        %v6084 = vlaneseq
        %v6085 = vshrl.u32 %v6084, 7
        %v6086 = vsub.s32 0, %v6085
        %v6087 = vrot.slane %v5180, %v6086
        %v6088 = vlaneseq
        %v6089 = vshrl.u32 %v6088, 7
        %v6090 = vsub.s32 0, %v6089
        %v6091 = vrot.slane %v5188, %v6090
        %v6092 = vlaneseq
        %v6093 = vshrl.u32 %v6092, 7
        %v6094 = vsub.s32 0, %v6093
        %v6095 = vrot.slane %v5196, %v6094
        %v6096 = vlaneseq
        %v6097 = vshrl.u32 %v6096, 7
        %v6098 = vsub.s32 0, %v6097
        %v6099 = vrot.slane %v5195, %v6098
        %v6100 = vlaneseq
        %v6101 = vshrl.u32 %v6100, 7
        %v6102 = vsub.s32 0, %v6101
        %v6103 = vrot.slane %v5197, %v6102
        %v6104 = vlaneseq
        %v6105 = vshrl.u32 %v6104, 7
        %v6106 = vsub.s32 0, %v6105
        %v6107 = vrot.slane %v5205, %v6106
        %v6108 = vlaneseq
        %v6109 = vshrl.u32 %v6108, 7
        %v6110 = vsub.s32 0, %v6109
        %v6111 = vrot.slane %v5213, %v6110
        %v6112 = vlaneseq
        %v6113 = vshrl.u32 %v6112, 7
        %v6114 = vsub.s32 0, %v6113
        %v6115 = vrot.slane %v5212, %v6114
        %v6116 = vlaneseq
        %v6117 = vshrl.u32 %v6116, 7
        %v6118 = vsub.s32 0, %v6117
        %v6119 = vrot.slane %v5214, %v6118
        %v6120 = vlaneseq
        %v6121 = vshrl.u32 %v6120, 7
        %v6122 = vsub.s32 0, %v6121
        %v6123 = vrot.slane %v5222, %v6122
        %v6124 = vlaneseq
        %v6125 = vshrl.u32 %v6124, 7
        %v6126 = vsub.s32 0, %v6125
        %v6127 = vrot.slane %v5230, %v6126
        %v6128 = vlaneseq
        %v6129 = vshrl.u32 %v6128, 7
        %v6130 = vsub.s32 0, %v6129
        %v6131 = vrot.slane %v5229, %v6130
        %v6132 = vlaneseq
        %v6133 = vshrl.u32 %v6132, 7
        %v6134 = vsub.s32 0, %v6133
        %v6135 = vrot.slane %v5231, %v6134
        %v6136 = vlaneseq
        %v6137 = vshrl.u32 %v6136, 7
        %v6138 = vsub.s32 0, %v6137
        %v6139 = vrot.slane %v5239, %v6138
        %v6140 = vlaneseq
        %v6141 = vshrl.u32 %v6140, 7
        %v6142 = vsub.s32 0, %v6141
        %v6143 = vrot.slane %v5247, %v6142
        %v6144 = vlaneseq
        %v6145 = vshrl.u32 %v6144, 7
        %v6146 = vsub.s32 0, %v6145
        %v6147 = vrot.slane %v5246, %v6146
        %v6148 = vlaneseq
        %v6149 = vshrl.u32 %v6148, 7
        %v6150 = vsub.s32 0, %v6149
        %v6151 = vrot.slane %v5248, %v6150
        %v6152 = vlaneseq
        %v6153 = vshrl.u32 %v6152, 7
        %v6154 = vsub.s32 0, %v6153
        %v6155 = vrot.slane %v5256, %v6154
        %v6156 = vlaneseq
        %v6157 = vshrl.u32 %v6156, 7
        %v6158 = vsub.s32 0, %v6157
        %v6159 = vrot.slane %v5264, %v6158
        %v6160 = vlaneseq
        %v6161 = vshrl.u32 %v6160, 7
        %v6162 = vsub.s32 0, %v6161
        %v6163 = vrot.slane %v5263, %v6162
        %v6164 = vlaneseq
        %v6165 = vshrl.u32 %v6164, 7
        %v6166 = vsub.s32 0, %v6165
        %v6167 = vrot.slane %v5265, %v6166
        %v6168 = vlaneseq
        %v6169 = vshrl.u32 %v6168, 7
        %v6170 = vsub.s32 0, %v6169
        %v6171 = vrot.slane %v5273, %v6170
        %v6172 = vlaneseq
        %v6173 = vshrl.u32 %v6172, 7
        %v6174 = vsub.s32 0, %v6173
        %v6175 = vrot.slane %v5281, %v6174
        %v6176 = vlaneseq
        %v6177 = vshrl.u32 %v6176, 7
        %v6178 = vsub.s32 0, %v6177
        %v6179 = vrot.slane %v5280, %v6178
        %v6180 = vlaneseq
        %v6181 = vshrl.u32 %v6180, 7
        %v6182 = vsub.s32 0, %v6181
        %v6183 = vrot.slane %v5282, %v6182
        %v6184 = vlaneseq
        %v6185 = vshrl.u32 %v6184, 7
        %v6186 = vsub.s32 0, %v6185
        %v6187 = vrot.slane %v5290, %v6186
        %v6188 = vlaneseq
        %v6189 = vshrl.u32 %v6188, 7
        %v6190 = vsub.s32 0, %v6189
        %v6191 = vrot.slane %v5298, %v6190
        %v6192 = vlaneseq
        %v6193 = vshrl.u32 %v6192, 7
        %v6194 = vsub.s32 0, %v6193
        %v6195 = vrot.slane %v5297, %v6194
        %v6196 = vlaneseq
        %v6197 = vshrl.u32 %v6196, 7
        %v6198 = vsub.s32 0, %v6197
        %v6199 = vrot.slane %v5299, %v6198
        %v6200 = vlaneseq
        %v6201 = vshrl.u32 %v6200, 7
        %v6202 = vsub.s32 0, %v6201
        %v6203 = vrot.slane %v5307, %v6202
        %v6204 = vlaneseq
        %v6205 = vshrl.u32 %v6204, 7
        %v6206 = vsub.s32 0, %v6205
        %v6207 = vrot.slane %v5315, %v6206
        %v6208 = vlaneseq
        %v6209 = vshrl.u32 %v6208, 7
        %v6210 = vsub.s32 0, %v6209
        %v6211 = vrot.slane %v5314, %v6210
        %v6212 = vlaneseq
        %v6213 = vshrl.u32 %v6212, 7
        %v6214 = vsub.s32 0, %v6213
        %v6215 = vrot.slane %v5316, %v6214
        %v6216 = vlaneseq
        %v6217 = vshrl.u32 %v6216, 7
        %v6218 = vsub.s32 0, %v6217
        %v6219 = vrot.slane %v5324, %v6218
        %v6220 = vlaneseq
        %v6221 = vshrl.u32 %v6220, 7
        %v6222 = vsub.s32 0, %v6221
        %v6223 = vrot.slane %v5332, %v6222
        %v6224 = vlaneseq
        %v6225 = vshrl.u32 %v6224, 7
        %v6226 = vsub.s32 0, %v6225
        %v6227 = vrot.slane %v5331, %v6226
        %v6228 = vlaneseq
        %v6229 = vshrl.u32 %v6228, 7
        %v6230 = vsub.s32 0, %v6229
        %v6231 = vrot.slane %v5333, %v6230
        %v6232 = vsel %vm2053, %v6015, %v6011
        %v6233 = vsel %vm1470, %v6019, %v6232
        %v6234 = vsel %vm1472, %v6023, %v6233
        %v6235 = vsel %vm1474, %v6027, %v6234
        %v6236 = vsel %vm1476, %v6031, %v6235
        %v6237 = vsel %vm1478, %v6035, %v6236
        %v6238 = vsel %vm1480, %v6039, %v6237
        %v6239 = vsel %vm2053, %v6047, %v6043
        %v6240 = vsel %vm1470, %v6051, %v6239
        %v6241 = vsel %vm1472, %v6055, %v6240
        %v6242 = vsel %vm1474, %v6059, %v6241
        %v6243 = vsel %vm1476, %v6063, %v6242
        %v6244 = vsel %vm1478, %v6067, %v6243
        %v6245 = vsel %vm1480, %v6071, %v6244
        %v6246 = vsel %vm2053, %v6079, %v6075
        %v6247 = vsel %vm1470, %v6083, %v6246
        %v6248 = vsel %vm1472, %v6087, %v6247
        %v6249 = vsel %vm1474, %v6091, %v6248
        %v6250 = vsel %vm1476, %v6095, %v6249
        %v6251 = vsel %vm1478, %v6099, %v6250
        %v6252 = vsel %vm1480, %v6103, %v6251
        %v6253 = vsel %vm2053, %v6111, %v6107
        %v6254 = vsel %vm1470, %v6115, %v6253
        %v6255 = vsel %vm1472, %v6119, %v6254
        %v6256 = vsel %vm1474, %v6123, %v6255
        %v6257 = vsel %vm1476, %v6127, %v6256
        %v6258 = vsel %vm1478, %v6131, %v6257
        %v6259 = vsel %vm1480, %v6135, %v6258
        %v6260 = vsel %vm2053, %v6143, %v6139
        %v6261 = vsel %vm1470, %v6147, %v6260
        %v6262 = vsel %vm1472, %v6151, %v6261
        %v6263 = vsel %vm1474, %v6155, %v6262
        %v6264 = vsel %vm1476, %v6159, %v6263
        %v6265 = vsel %vm1478, %v6163, %v6264
        %v6266 = vsel %vm1480, %v6167, %v6265
        %v6267 = vsel %vm2053, %v6175, %v6171
        %v6268 = vsel %vm1470, %v6179, %v6267
        %v6269 = vsel %vm1472, %v6183, %v6268
        %v6270 = vsel %vm1474, %v6187, %v6269
        %v6271 = vsel %vm1476, %v6191, %v6270
        %v6272 = vsel %vm1478, %v6195, %v6271
        %v6273 = vsel %vm1480, %v6199, %v6272
        %v6274 = vsel %vm2053, %v6207, %v6203
        %v6275 = vsel %vm1470, %v6211, %v6274
        %v6276 = vsel %vm1472, %v6215, %v6275
        %v6277 = vsel %vm1474, %v6219, %v6276
        %v6278 = vsel %vm1476, %v6223, %v6277
        %v6279 = vsel %vm1478, %v6227, %v6278
        %v6280 = vsel %vm1480, %v6231, %v6279
        %v6288 = vlaneseq
        %v6289 = vshrl.u32 %v6288, 7
        %v6290 = vsub.s32 1, %v6289
        %v6291 = vrot.slane %v5129, %v6290
        %v6292 = vlaneseq
        %v6293 = vshrl.u32 %v6292, 7
        %v6294 = vsub.s32 1, %v6293
        %v6295 = vrot.slane %v5163, %v6294
        %v6296 = vlaneseq
        %v6297 = vshrl.u32 %v6296, 7
        %v6298 = vsub.s32 1, %v6297
        %v6299 = vrot.slane %v5197, %v6298
        %v6300 = vlaneseq
        %v6301 = vshrl.u32 %v6300, 7
        %v6302 = vsub.s32 1, %v6301
        %v6303 = vrot.slane %v5231, %v6302
        %v6304 = vlaneseq
        %v6305 = vshrl.u32 %v6304, 7
        %v6306 = vsub.s32 1, %v6305
        %v6307 = vrot.slane %v5265, %v6306
        %v6308 = vlaneseq
        %v6309 = vshrl.u32 %v6308, 7
        %v6310 = vsub.s32 1, %v6309
        %v6311 = vrot.slane %v5299, %v6310
        %v6312 = vlaneseq
        %v6313 = vshrl.u32 %v6312, 7
        %v6314 = vsub.s32 1, %v6313
        %v6315 = vrot.slane %v5333, %v6314
        %v6316 = vsel %vm2053, %v5727, %v5723
        %v6317 = vsel %vm1470, %v5731, %v6316
        %v6318 = vsel %vm1472, %v5735, %v6317
        %v6319 = vsel %vm1474, %v5739, %v6318
        %v6320 = vsel %vm1476, %v5743, %v6319
        %v6321 = vsel %vm1478, %v5747, %v6320
        %v6322 = vsel %vm1480, %v6291, %v6321
        %v6323 = vsel %vm2053, %v5755, %v5751
        %v6324 = vsel %vm1470, %v5759, %v6323
        %v6325 = vsel %vm1472, %v5763, %v6324
        %v6326 = vsel %vm1474, %v5767, %v6325
        %v6327 = vsel %vm1476, %v5771, %v6326
        %v6328 = vsel %vm1478, %v5775, %v6327
        %v6329 = vsel %vm1480, %v6295, %v6328
        %v6330 = vsel %vm2053, %v5783, %v5779
        %v6331 = vsel %vm1470, %v5787, %v6330
        %v6332 = vsel %vm1472, %v5791, %v6331
        %v6333 = vsel %vm1474, %v5795, %v6332
        %v6334 = vsel %vm1476, %v5799, %v6333
        %v6335 = vsel %vm1478, %v5803, %v6334
        %v6336 = vsel %vm1480, %v6299, %v6335
        %v6337 = vsel %vm2053, %v5811, %v5807
        %v6338 = vsel %vm1470, %v5815, %v6337
        %v6339 = vsel %vm1472, %v5819, %v6338
        %v6340 = vsel %vm1474, %v5823, %v6339
        %v6341 = vsel %vm1476, %v5827, %v6340
        %v6342 = vsel %vm1478, %v5831, %v6341
        %v6343 = vsel %vm1480, %v6303, %v6342
        %v6344 = vsel %vm2053, %v5839, %v5835
        %v6345 = vsel %vm1470, %v5843, %v6344
        %v6346 = vsel %vm1472, %v5847, %v6345
        %v6347 = vsel %vm1474, %v5851, %v6346
        %v6348 = vsel %vm1476, %v5855, %v6347
        %v6349 = vsel %vm1478, %v5859, %v6348
        %v6350 = vsel %vm1480, %v6307, %v6349
        %v6351 = vsel %vm2053, %v5867, %v5863
        %v6352 = vsel %vm1470, %v5871, %v6351
        %v6353 = vsel %vm1472, %v5875, %v6352
        %v6354 = vsel %vm1474, %v5879, %v6353
        %v6355 = vsel %vm1476, %v5883, %v6354
        %v6356 = vsel %vm1478, %v5887, %v6355
        %v6357 = vsel %vm1480, %v6311, %v6356
        %v6358 = vsel %vm2053, %v5895, %v5891
        %v6359 = vsel %vm1470, %v5899, %v6358
        %v6360 = vsel %vm1472, %v5903, %v6359
        %v6361 = vsel %vm1474, %v5907, %v6360
        %v6362 = vsel %vm1476, %v5911, %v6361
        %v6363 = vsel %vm1478, %v5915, %v6362
        %v6364 = vsel %vm1480, %v6315, %v6363
        %v6372 = vlaneseq
        %v6373 = vshrl.u32 %v6372, 7
        %v6374 = vsub.s32 0, %v6373
        %v6375 = vrot.slane %v4725, %v6374
        %v6376 = vmul.f32 %v6375, 0.0
        %v6377 = vmul.f32 %v6000, %v6375
        %v6378 = vmul.f32 %v6001, %v6375
        %v6379 = vmul.f32 %v6002, %v6375
        %v6380 = vmul.f32 %v6003, %v6375
        %v6381 = vmul.f32 %v6004, %v6375
        %v6382 = vmul.f32 %v6005, %v6375
        %v6383 = vmul.f32 %v6006, %v6375
        %v6384 = vadd.f32 %v6376, 0.0
        %v6385 = vadd.f32 %v6377, 0.0
        %v6386 = vadd.f32 %v6378, 0.0
        %v6387 = vadd.f32 %v6379, 0.0
        %v6388 = vadd.f32 %v6380, 0.0
        %v6389 = vadd.f32 %v6381, 0.0
        %v6390 = vadd.f32 %v6382, 0.0
        %v6391 = vadd.f32 %v6383, 0.0
        %v6392 = vlaneseq
        %v6393 = vshrl.u32 %v6392, 7
        %v6394 = vsub.s32 1, %v6393
        %v6395 = vrot.slane %v4725, %v6394
        %v6396 = vmul.f32 %v6395, 0.0
        %v6397 = vmul.f32 %v6238, %v6395
        %v6398 = vmul.f32 %v6245, %v6395
        %v6399 = vmul.f32 %v6252, %v6395
        %v6400 = vmul.f32 %v6259, %v6395
        %v6401 = vmul.f32 %v6266, %v6395
        %v6402 = vmul.f32 %v6273, %v6395
        %v6403 = vmul.f32 %v6280, %v6395
        %v6404 = vadd.f32 %v6384, %v6396
        %v6405 = vadd.f32 %v6385, %v6397
        %v6406 = vadd.f32 %v6386, %v6398
        %v6407 = vadd.f32 %v6387, %v6399
        %v6408 = vadd.f32 %v6388, %v6400
        %v6409 = vadd.f32 %v6389, %v6401
        %v6410 = vadd.f32 %v6390, %v6402
        %v6411 = vadd.f32 %v6391, %v6403
        %v6412 = vlaneseq
        %v6413 = vshrl.u32 %v6412, 7
        %v6414 = vsub.s32 2, %v6413
        %v6415 = vrot.slane %v4725, %v6414
        %v6416 = vmul.f32 %v6415, 0.0
        %v6417 = vmul.f32 %v6322, %v6415
        %v6418 = vmul.f32 %v6329, %v6415
        %v6419 = vmul.f32 %v6336, %v6415
        %v6420 = vmul.f32 %v6343, %v6415
        %v6421 = vmul.f32 %v6350, %v6415
        %v6422 = vmul.f32 %v6357, %v6415
        %v6423 = vmul.f32 %v6364, %v6415
        %v6424 = vadd.f32 %v6404, %v6416
        %v6425 = vadd.f32 %v6405, %v6417
        %v6426 = vadd.f32 %v6406, %v6418
        %v6427 = vadd.f32 %v6407, %v6419
        %v6428 = vadd.f32 %v6408, %v6420
        %v6429 = vadd.f32 %v6409, %v6421
        %v6430 = vadd.f32 %v6410, %v6422
        %v6431 = vadd.f32 %v6411, %v6423
        %v6432 = vlaneseq
        %v6433 = vshrl.u32 %v6432, 7
        %v6434 = vsub.s32 3, %v6433
        %v6435 = vrot.slane %v4725, %v6434
        %v6436 = vmul.f32 %v5712, %v6435
        %v6437 = vmul.f32 %v5713, %v6435
        %v6438 = vmul.f32 %v5714, %v6435
        %v6439 = vmul.f32 %v5715, %v6435
        %v6440 = vmul.f32 %v5716, %v6435
        %v6441 = vmul.f32 %v5717, %v6435
        %v6442 = vmul.f32 %v5718, %v6435
        %v6443 = vmul.f32 %v5719, %v6435
        %v6444 = vadd.f32 %v6424, %v6436
        %v6445 = vadd.f32 %v6425, %v6437
        %v6446 = vadd.f32 %v6426, %v6438
        %v6447 = vadd.f32 %v6427, %v6439
        %v6448 = vadd.f32 %v6428, %v6440
        %v6449 = vadd.f32 %v6429, %v6441
        %v6450 = vadd.f32 %v6430, %v6442
        %v6451 = vadd.f32 %v6431, %v6443
        %v6452 = vlaneseq
        %v6453 = vshrl.u32 %v6452, 7
        %v6454 = vsub.s32 4, %v6453
        %v6455 = vrot.slane %v4725, %v6454
        %v6457 = vcombine.high %v6455, %v6455
        %v6459 = vunpack.c.l.s4 1983009808
        %v6460 = vunpack.c.0.s8 %v6459
        %v6461 = vlaneseq
        %v6462 = vshrl.u32 %v6461, 7
        %v6463 = vsub.s32 %v6460, %v6462
        %v6464 = vrot.slane %v6455, %v6463
        %v6466 = vunpack.c.l.s4 1983009808
        %v6467 = vunpack.c.0.s8 %v6466
        %v6468 = vlaneseq
        %v6469 = vshrl.u32 %v6468, 7
        %v6470 = vsub.s32 %v6467, %v6469
        %v6471 = vrot.slane %v6457, %v6470
        %v6472 = vcombine.high %v6464, %v6464
        %v6473 = vcombine.high %v6471, %v6471
        %v6474 = vrot.slane %v6464, 1
        %v6475 = vrot.slane %v6472, 1
        %v6476 = vrot.slane %v6471, 1
        %v6477 = vrot.slane %v6473, 1
        %v6486 = vmul.f32 %v4751, %v6464
        %v6487 = vmul.f32 %v4759, %v6474
        %v6488 = vmul.f32 %v4758, %v6472
        %v6489 = vmul.f32 %v4760, %v6475
        %v6490 = vmul.f32 %v4768, %v6471
        %v6491 = vmul.f32 %v4776, %v6476
        %v6492 = vmul.f32 %v4775, %v6473
        %v6493 = vmul.f32 %v4777, %v6477
        %v6494 = vmul.f32 %v4785, %v6464
        %v6495 = vmul.f32 %v4793, %v6474
        %v6496 = vmul.f32 %v4792, %v6472
        %v6497 = vmul.f32 %v4794, %v6475
        %v6498 = vmul.f32 %v4802, %v6471
        %v6499 = vmul.f32 %v4810, %v6476
        %v6500 = vmul.f32 %v4809, %v6473
        %v6501 = vmul.f32 %v4811, %v6477
        %v6502 = vmul.f32 %v4819, %v6464
        %v6503 = vmul.f32 %v4827, %v6474
        %v6504 = vmul.f32 %v4826, %v6472
        %v6505 = vmul.f32 %v4828, %v6475
        %v6506 = vmul.f32 %v4836, %v6471
        %v6507 = vmul.f32 %v4844, %v6476
        %v6508 = vmul.f32 %v4843, %v6473
        %v6509 = vmul.f32 %v4845, %v6477
        %v6510 = vmul.f32 %v4853, %v6464
        %v6511 = vmul.f32 %v4861, %v6474
        %v6512 = vmul.f32 %v4860, %v6472
        %v6513 = vmul.f32 %v4862, %v6475
        %v6514 = vmul.f32 %v4870, %v6471
        %v6515 = vmul.f32 %v4878, %v6476
        %v6516 = vmul.f32 %v4877, %v6473
        %v6517 = vmul.f32 %v4879, %v6477
        %v6518 = vmul.f32 %v4887, %v6464
        %v6519 = vmul.f32 %v4895, %v6474
        %v6520 = vmul.f32 %v4894, %v6472
        %v6521 = vmul.f32 %v4896, %v6475
        %v6522 = vmul.f32 %v4904, %v6471
        %v6523 = vmul.f32 %v4912, %v6476
        %v6524 = vmul.f32 %v4911, %v6473
        %v6525 = vmul.f32 %v4913, %v6477
        %v6526 = vmul.f32 %v4921, %v6464
        %v6527 = vmul.f32 %v4929, %v6474
        %v6528 = vmul.f32 %v4928, %v6472
        %v6529 = vmul.f32 %v4930, %v6475
        %v6530 = vmul.f32 %v4938, %v6471
        %v6531 = vmul.f32 %v4946, %v6476
        %v6532 = vmul.f32 %v4945, %v6473
        %v6533 = vmul.f32 %v4947, %v6477
        %v6534 = vmul.f32 %v4955, %v6464
        %v6535 = vmul.f32 %v4963, %v6474
        %v6536 = vmul.f32 %v4962, %v6472
        %v6537 = vmul.f32 %v4964, %v6475
        %v6538 = vmul.f32 %v4972, %v6471
        %v6539 = vmul.f32 %v4980, %v6476
        %v6540 = vmul.f32 %v4979, %v6473
        %v6541 = vmul.f32 %v4981, %v6477
        %v6542 = vmul.f32 %v4989, %v6464
        %v6543 = vmul.f32 %v4997, %v6474
        %v6544 = vmul.f32 %v4996, %v6472
        %v6545 = vmul.f32 %v4998, %v6475
        %v6546 = vmul.f32 %v5006, %v6471
        %v6547 = vmul.f32 %v5014, %v6476
        %v6548 = vmul.f32 %v5013, %v6473
        %v6549 = vmul.f32 %v5015, %v6477
        %v6614 = vlaneseq
        %v6615 = vshrl.u32 %v6614, 7
        %v6616 = vsub.s32 0, %v6615
        %v6617 = vrot.slane %v6486, %v6616
        %v6618 = vlaneseq
        %v6619 = vshrl.u32 %v6618, 7
        %v6620 = vsub.s32 0, %v6619
        %v6621 = vrot.slane %v6487, %v6620
        %v6622 = vlaneseq
        %v6623 = vshrl.u32 %v6622, 7
        %v6624 = vsub.s32 0, %v6623
        %v6625 = vrot.slane %v6488, %v6624
        %v6626 = vlaneseq
        %v6627 = vshrl.u32 %v6626, 7
        %v6628 = vsub.s32 0, %v6627
        %v6629 = vrot.slane %v6489, %v6628
        %v6630 = vlaneseq
        %v6631 = vshrl.u32 %v6630, 7
        %v6632 = vsub.s32 0, %v6631
        %v6633 = vrot.slane %v6490, %v6632
        %v6634 = vlaneseq
        %v6635 = vshrl.u32 %v6634, 7
        %v6636 = vsub.s32 0, %v6635
        %v6637 = vrot.slane %v6491, %v6636
        %v6638 = vlaneseq
        %v6639 = vshrl.u32 %v6638, 7
        %v6640 = vsub.s32 0, %v6639
        %v6641 = vrot.slane %v6492, %v6640
        %v6642 = vlaneseq
        %v6643 = vshrl.u32 %v6642, 7
        %v6644 = vsub.s32 0, %v6643
        %v6645 = vrot.slane %v6493, %v6644
        %v6646 = vlaneseq
        %v6647 = vshrl.u32 %v6646, 7
        %v6648 = vsub.s32 0, %v6647
        %v6649 = vrot.slane %v6494, %v6648
        %v6650 = vlaneseq
        %v6651 = vshrl.u32 %v6650, 7
        %v6652 = vsub.s32 0, %v6651
        %v6653 = vrot.slane %v6495, %v6652
        %v6654 = vlaneseq
        %v6655 = vshrl.u32 %v6654, 7
        %v6656 = vsub.s32 0, %v6655
        %v6657 = vrot.slane %v6496, %v6656
        %v6658 = vlaneseq
        %v6659 = vshrl.u32 %v6658, 7
        %v6660 = vsub.s32 0, %v6659
        %v6661 = vrot.slane %v6497, %v6660
        %v6662 = vlaneseq
        %v6663 = vshrl.u32 %v6662, 7
        %v6664 = vsub.s32 0, %v6663
        %v6665 = vrot.slane %v6498, %v6664
        %v6666 = vlaneseq
        %v6667 = vshrl.u32 %v6666, 7
        %v6668 = vsub.s32 0, %v6667
        %v6669 = vrot.slane %v6499, %v6668
        %v6670 = vlaneseq
        %v6671 = vshrl.u32 %v6670, 7
        %v6672 = vsub.s32 0, %v6671
        %v6673 = vrot.slane %v6500, %v6672
        %v6674 = vlaneseq
        %v6675 = vshrl.u32 %v6674, 7
        %v6676 = vsub.s32 0, %v6675
        %v6677 = vrot.slane %v6501, %v6676
        %v6678 = vlaneseq
        %v6679 = vshrl.u32 %v6678, 7
        %v6680 = vsub.s32 0, %v6679
        %v6681 = vrot.slane %v6502, %v6680
        %v6682 = vlaneseq
        %v6683 = vshrl.u32 %v6682, 7
        %v6684 = vsub.s32 0, %v6683
        %v6685 = vrot.slane %v6503, %v6684
        %v6686 = vlaneseq
        %v6687 = vshrl.u32 %v6686, 7
        %v6688 = vsub.s32 0, %v6687
        %v6689 = vrot.slane %v6504, %v6688
        %v6690 = vlaneseq
        %v6691 = vshrl.u32 %v6690, 7
        %v6692 = vsub.s32 0, %v6691
        %v6693 = vrot.slane %v6505, %v6692
        %v6694 = vlaneseq
        %v6695 = vshrl.u32 %v6694, 7
        %v6696 = vsub.s32 0, %v6695
        %v6697 = vrot.slane %v6506, %v6696
        %v6698 = vlaneseq
        %v6699 = vshrl.u32 %v6698, 7
        %v6700 = vsub.s32 0, %v6699
        %v6701 = vrot.slane %v6507, %v6700
        %v6702 = vlaneseq
        %v6703 = vshrl.u32 %v6702, 7
        %v6704 = vsub.s32 0, %v6703
        %v6705 = vrot.slane %v6508, %v6704
        %v6706 = vlaneseq
        %v6707 = vshrl.u32 %v6706, 7
        %v6708 = vsub.s32 0, %v6707
        %v6709 = vrot.slane %v6509, %v6708
        %v6710 = vlaneseq
        %v6711 = vshrl.u32 %v6710, 7
        %v6712 = vsub.s32 0, %v6711
        %v6713 = vrot.slane %v6510, %v6712
        %v6714 = vlaneseq
        %v6715 = vshrl.u32 %v6714, 7
        %v6716 = vsub.s32 0, %v6715
        %v6717 = vrot.slane %v6511, %v6716
        %v6718 = vlaneseq
        %v6719 = vshrl.u32 %v6718, 7
        %v6720 = vsub.s32 0, %v6719
        %v6721 = vrot.slane %v6512, %v6720
        %v6722 = vlaneseq
        %v6723 = vshrl.u32 %v6722, 7
        %v6724 = vsub.s32 0, %v6723
        %v6725 = vrot.slane %v6513, %v6724
        %v6726 = vlaneseq
        %v6727 = vshrl.u32 %v6726, 7
        %v6728 = vsub.s32 0, %v6727
        %v6729 = vrot.slane %v6514, %v6728
        %v6730 = vlaneseq
        %v6731 = vshrl.u32 %v6730, 7
        %v6732 = vsub.s32 0, %v6731
        %v6733 = vrot.slane %v6515, %v6732
        %v6734 = vlaneseq
        %v6735 = vshrl.u32 %v6734, 7
        %v6736 = vsub.s32 0, %v6735
        %v6737 = vrot.slane %v6516, %v6736
        %v6738 = vlaneseq
        %v6739 = vshrl.u32 %v6738, 7
        %v6740 = vsub.s32 0, %v6739
        %v6741 = vrot.slane %v6517, %v6740
        %v6742 = vlaneseq
        %v6743 = vshrl.u32 %v6742, 7
        %v6744 = vsub.s32 0, %v6743
        %v6745 = vrot.slane %v6518, %v6744
        %v6746 = vlaneseq
        %v6747 = vshrl.u32 %v6746, 7
        %v6748 = vsub.s32 0, %v6747
        %v6749 = vrot.slane %v6519, %v6748
        %v6750 = vlaneseq
        %v6751 = vshrl.u32 %v6750, 7
        %v6752 = vsub.s32 0, %v6751
        %v6753 = vrot.slane %v6520, %v6752
        %v6754 = vlaneseq
        %v6755 = vshrl.u32 %v6754, 7
        %v6756 = vsub.s32 0, %v6755
        %v6757 = vrot.slane %v6521, %v6756
        %v6758 = vlaneseq
        %v6759 = vshrl.u32 %v6758, 7
        %v6760 = vsub.s32 0, %v6759
        %v6761 = vrot.slane %v6522, %v6760
        %v6762 = vlaneseq
        %v6763 = vshrl.u32 %v6762, 7
        %v6764 = vsub.s32 0, %v6763
        %v6765 = vrot.slane %v6523, %v6764
        %v6766 = vlaneseq
        %v6767 = vshrl.u32 %v6766, 7
        %v6768 = vsub.s32 0, %v6767
        %v6769 = vrot.slane %v6524, %v6768
        %v6770 = vlaneseq
        %v6771 = vshrl.u32 %v6770, 7
        %v6772 = vsub.s32 0, %v6771
        %v6773 = vrot.slane %v6525, %v6772
        %v6774 = vlaneseq
        %v6775 = vshrl.u32 %v6774, 7
        %v6776 = vsub.s32 0, %v6775
        %v6777 = vrot.slane %v6526, %v6776
        %v6778 = vlaneseq
        %v6779 = vshrl.u32 %v6778, 7
        %v6780 = vsub.s32 0, %v6779
        %v6781 = vrot.slane %v6527, %v6780
        %v6782 = vlaneseq
        %v6783 = vshrl.u32 %v6782, 7
        %v6784 = vsub.s32 0, %v6783
        %v6785 = vrot.slane %v6528, %v6784
        %v6786 = vlaneseq
        %v6787 = vshrl.u32 %v6786, 7
        %v6788 = vsub.s32 0, %v6787
        %v6789 = vrot.slane %v6529, %v6788
        %v6790 = vlaneseq
        %v6791 = vshrl.u32 %v6790, 7
        %v6792 = vsub.s32 0, %v6791
        %v6793 = vrot.slane %v6530, %v6792
        %v6794 = vlaneseq
        %v6795 = vshrl.u32 %v6794, 7
        %v6796 = vsub.s32 0, %v6795
        %v6797 = vrot.slane %v6531, %v6796
        %v6798 = vlaneseq
        %v6799 = vshrl.u32 %v6798, 7
        %v6800 = vsub.s32 0, %v6799
        %v6801 = vrot.slane %v6532, %v6800
        %v6802 = vlaneseq
        %v6803 = vshrl.u32 %v6802, 7
        %v6804 = vsub.s32 0, %v6803
        %v6805 = vrot.slane %v6533, %v6804
        %v6806 = vlaneseq
        %v6807 = vshrl.u32 %v6806, 7
        %v6808 = vsub.s32 0, %v6807
        %v6809 = vrot.slane %v6534, %v6808
        %v6810 = vlaneseq
        %v6811 = vshrl.u32 %v6810, 7
        %v6812 = vsub.s32 0, %v6811
        %v6813 = vrot.slane %v6535, %v6812
        %v6814 = vlaneseq
        %v6815 = vshrl.u32 %v6814, 7
        %v6816 = vsub.s32 0, %v6815
        %v6817 = vrot.slane %v6536, %v6816
        %v6818 = vlaneseq
        %v6819 = vshrl.u32 %v6818, 7
        %v6820 = vsub.s32 0, %v6819
        %v6821 = vrot.slane %v6537, %v6820
        %v6822 = vlaneseq
        %v6823 = vshrl.u32 %v6822, 7
        %v6824 = vsub.s32 0, %v6823
        %v6825 = vrot.slane %v6538, %v6824
        %v6826 = vlaneseq
        %v6827 = vshrl.u32 %v6826, 7
        %v6828 = vsub.s32 0, %v6827
        %v6829 = vrot.slane %v6539, %v6828
        %v6830 = vlaneseq
        %v6831 = vshrl.u32 %v6830, 7
        %v6832 = vsub.s32 0, %v6831
        %v6833 = vrot.slane %v6540, %v6832
        %v6834 = vlaneseq
        %v6835 = vshrl.u32 %v6834, 7
        %v6836 = vsub.s32 0, %v6835
        %v6837 = vrot.slane %v6541, %v6836
        %v6838 = vlaneseq
        %v6839 = vshrl.u32 %v6838, 7
        %v6840 = vsub.s32 0, %v6839
        %v6841 = vrot.slane %v6542, %v6840
        %v6842 = vlaneseq
        %v6843 = vshrl.u32 %v6842, 7
        %v6844 = vsub.s32 0, %v6843
        %v6845 = vrot.slane %v6543, %v6844
        %v6846 = vlaneseq
        %v6847 = vshrl.u32 %v6846, 7
        %v6848 = vsub.s32 0, %v6847
        %v6849 = vrot.slane %v6544, %v6848
        %v6850 = vlaneseq
        %v6851 = vshrl.u32 %v6850, 7
        %v6852 = vsub.s32 0, %v6851
        %v6853 = vrot.slane %v6545, %v6852
        %v6854 = vlaneseq
        %v6855 = vshrl.u32 %v6854, 7
        %v6856 = vsub.s32 0, %v6855
        %v6857 = vrot.slane %v6546, %v6856
        %v6858 = vlaneseq
        %v6859 = vshrl.u32 %v6858, 7
        %v6860 = vsub.s32 0, %v6859
        %v6861 = vrot.slane %v6547, %v6860
        %v6862 = vlaneseq
        %v6863 = vshrl.u32 %v6862, 7
        %v6864 = vsub.s32 0, %v6863
        %v6865 = vrot.slane %v6548, %v6864
        %v6866 = vlaneseq
        %v6867 = vshrl.u32 %v6866, 7
        %v6868 = vsub.s32 0, %v6867
        %v6869 = vrot.slane %v6549, %v6868
        %v6870 = vsel %vm2053, %v6621, %v6617
        %v6871 = vsel %vm1470, %v6625, %v6870
        %v6872 = vsel %vm1472, %v6629, %v6871
        %v6873 = vsel %vm1474, %v6633, %v6872
        %v6874 = vsel %vm1476, %v6637, %v6873
        %v6875 = vsel %vm1478, %v6641, %v6874
        %v6876 = vsel %vm1480, %v6645, %v6875
        %v6877 = vsel %vm2053, %v6653, %v6649
        %v6878 = vsel %vm1470, %v6657, %v6877
        %v6879 = vsel %vm1472, %v6661, %v6878
        %v6880 = vsel %vm1474, %v6665, %v6879
        %v6881 = vsel %vm1476, %v6669, %v6880
        %v6882 = vsel %vm1478, %v6673, %v6881
        %v6883 = vsel %vm1480, %v6677, %v6882
        %v6884 = vsel %vm2053, %v6685, %v6681
        %v6885 = vsel %vm1470, %v6689, %v6884
        %v6886 = vsel %vm1472, %v6693, %v6885
        %v6887 = vsel %vm1474, %v6697, %v6886
        %v6888 = vsel %vm1476, %v6701, %v6887
        %v6889 = vsel %vm1478, %v6705, %v6888
        %v6890 = vsel %vm1480, %v6709, %v6889
        %v6891 = vsel %vm2053, %v6717, %v6713
        %v6892 = vsel %vm1470, %v6721, %v6891
        %v6893 = vsel %vm1472, %v6725, %v6892
        %v6894 = vsel %vm1474, %v6729, %v6893
        %v6895 = vsel %vm1476, %v6733, %v6894
        %v6896 = vsel %vm1478, %v6737, %v6895
        %v6897 = vsel %vm1480, %v6741, %v6896
        %v6898 = vsel %vm2053, %v6749, %v6745
        %v6899 = vsel %vm1470, %v6753, %v6898
        %v6900 = vsel %vm1472, %v6757, %v6899
        %v6901 = vsel %vm1474, %v6761, %v6900
        %v6902 = vsel %vm1476, %v6765, %v6901
        %v6903 = vsel %vm1478, %v6769, %v6902
        %v6904 = vsel %vm1480, %v6773, %v6903
        %v6905 = vsel %vm2053, %v6781, %v6777
        %v6906 = vsel %vm1470, %v6785, %v6905
        %v6907 = vsel %vm1472, %v6789, %v6906
        %v6908 = vsel %vm1474, %v6793, %v6907
        %v6909 = vsel %vm1476, %v6797, %v6908
        %v6910 = vsel %vm1478, %v6801, %v6909
        %v6911 = vsel %vm1480, %v6805, %v6910
        %v6912 = vsel %vm2053, %v6813, %v6809
        %v6913 = vsel %vm1470, %v6817, %v6912
        %v6914 = vsel %vm1472, %v6821, %v6913
        %v6915 = vsel %vm1474, %v6825, %v6914
        %v6916 = vsel %vm1476, %v6829, %v6915
        %v6917 = vsel %vm1478, %v6833, %v6916
        %v6918 = vsel %vm1480, %v6837, %v6917
        %v6919 = vsel %vm2053, %v6845, %v6841
        %v6920 = vsel %vm1470, %v6849, %v6919
        %v6921 = vsel %vm1472, %v6853, %v6920
        %v6922 = vsel %vm1474, %v6857, %v6921
        %v6923 = vsel %vm1476, %v6861, %v6922
        %v6924 = vsel %vm1478, %v6865, %v6923
        %v6925 = vsel %vm1480, %v6869, %v6924
        %v6934 = vadd.f32 %v6444, %v6876
        %v6935 = vadd.f32 %v6445, %v6883
        %v6936 = vadd.f32 %v6446, %v6890
        %v6937 = vadd.f32 %v6447, %v6897
        %v6938 = vadd.f32 %v6448, %v6904
        %v6939 = vadd.f32 %v6449, %v6911
        %v6940 = vadd.f32 %v6450, %v6918
        %v6941 = vadd.f32 %v6451, %v6925
        %v6942 = vlaneseq
        %v6943 = vshrl.u32 %v6942, 7
        %v6944 = vsub.s32 5, %v6943
        %v6945 = vrot.slane %v4725, %v6944
        %v6947 = vcombine.high %v6945, %v6945
        %v6949 = vunpack.c.l.s4 1983009808
        %v6950 = vunpack.c.0.s8 %v6949
        %v6951 = vlaneseq
        %v6952 = vshrl.u32 %v6951, 7
        %v6953 = vsub.s32 %v6950, %v6952
        %v6954 = vrot.slane %v6945, %v6953
        %v6956 = vunpack.c.l.s4 1983009808
        %v6957 = vunpack.c.0.s8 %v6956
        %v6958 = vlaneseq
        %v6959 = vshrl.u32 %v6958, 7
        %v6960 = vsub.s32 %v6957, %v6959
        %v6961 = vrot.slane %v6947, %v6960
        %v6962 = vcombine.high %v6954, %v6954
        %v6963 = vcombine.high %v6961, %v6961
        %v6964 = vrot.slane %v6954, 7
        %v6965 = vrot.slane %v6962, 7
        %v6966 = vrot.slane %v6961, 7
        %v6967 = vrot.slane %v6963, 7
        %v6976 = vmul.f32 %v4751, %v6964
        %v6977 = vmul.f32 %v4759, %v6954
        %v6978 = vmul.f32 %v4758, %v6965
        %v6979 = vmul.f32 %v4760, %v6962
        %v6980 = vmul.f32 %v4768, %v6966
        %v6981 = vmul.f32 %v4776, %v6961
        %v6982 = vmul.f32 %v4775, %v6967
        %v6983 = vmul.f32 %v4777, %v6963
        %v6984 = vmul.f32 %v4785, %v6964
        %v6985 = vmul.f32 %v4793, %v6954
        %v6986 = vmul.f32 %v4792, %v6965
        %v6987 = vmul.f32 %v4794, %v6962
        %v6988 = vmul.f32 %v4802, %v6966
        %v6989 = vmul.f32 %v4810, %v6961
        %v6990 = vmul.f32 %v4809, %v6967
        %v6991 = vmul.f32 %v4811, %v6963
        %v6992 = vmul.f32 %v4819, %v6964
        %v6993 = vmul.f32 %v4827, %v6954
        %v6994 = vmul.f32 %v4826, %v6965
        %v6995 = vmul.f32 %v4828, %v6962
        %v6996 = vmul.f32 %v4836, %v6966
        %v6997 = vmul.f32 %v4844, %v6961
        %v6998 = vmul.f32 %v4843, %v6967
        %v6999 = vmul.f32 %v4845, %v6963
        %v7000 = vmul.f32 %v4853, %v6964
        %v7001 = vmul.f32 %v4861, %v6954
        %v7002 = vmul.f32 %v4860, %v6965
        %v7003 = vmul.f32 %v4862, %v6962
        %v7004 = vmul.f32 %v4870, %v6966
        %v7005 = vmul.f32 %v4878, %v6961
        %v7006 = vmul.f32 %v4877, %v6967
        %v7007 = vmul.f32 %v4879, %v6963
        %v7008 = vmul.f32 %v4887, %v6964
        %v7009 = vmul.f32 %v4895, %v6954
        %v7010 = vmul.f32 %v4894, %v6965
        %v7011 = vmul.f32 %v4896, %v6962
        %v7012 = vmul.f32 %v4904, %v6966
        %v7013 = vmul.f32 %v4912, %v6961
        %v7014 = vmul.f32 %v4911, %v6967
        %v7015 = vmul.f32 %v4913, %v6963
        %v7016 = vmul.f32 %v4921, %v6964
        %v7017 = vmul.f32 %v4929, %v6954
        %v7018 = vmul.f32 %v4928, %v6965
        %v7019 = vmul.f32 %v4930, %v6962
        %v7020 = vmul.f32 %v4938, %v6966
        %v7021 = vmul.f32 %v4946, %v6961
        %v7022 = vmul.f32 %v4945, %v6967
        %v7023 = vmul.f32 %v4947, %v6963
        %v7024 = vmul.f32 %v4955, %v6964
        %v7025 = vmul.f32 %v4963, %v6954
        %v7026 = vmul.f32 %v4962, %v6965
        %v7027 = vmul.f32 %v4964, %v6962
        %v7028 = vmul.f32 %v4972, %v6966
        %v7029 = vmul.f32 %v4980, %v6961
        %v7030 = vmul.f32 %v4979, %v6967
        %v7031 = vmul.f32 %v4981, %v6963
        %v7032 = vmul.f32 %v4989, %v6964
        %v7033 = vmul.f32 %v4997, %v6954
        %v7034 = vmul.f32 %v4996, %v6965
        %v7035 = vmul.f32 %v4998, %v6962
        %v7036 = vmul.f32 %v5006, %v6966
        %v7037 = vmul.f32 %v5014, %v6961
        %v7038 = vmul.f32 %v5013, %v6967
        %v7039 = vmul.f32 %v5015, %v6963
        %v7104 = vlaneseq
        %v7105 = vshrl.u32 %v7104, 7
        %v7106 = vsub.s32 1, %v7105
        %v7107 = vrot.slane %v6976, %v7106
        %v7108 = vlaneseq
        %v7109 = vshrl.u32 %v7108, 7
        %v7110 = vsub.s32 1, %v7109
        %v7111 = vrot.slane %v6977, %v7110
        %v7112 = vlaneseq
        %v7113 = vshrl.u32 %v7112, 7
        %v7114 = vsub.s32 1, %v7113
        %v7115 = vrot.slane %v6978, %v7114
        %v7116 = vlaneseq
        %v7117 = vshrl.u32 %v7116, 7
        %v7118 = vsub.s32 1, %v7117
        %v7119 = vrot.slane %v6979, %v7118
        %v7120 = vlaneseq
        %v7121 = vshrl.u32 %v7120, 7
        %v7122 = vsub.s32 1, %v7121
        %v7123 = vrot.slane %v6980, %v7122
        %v7124 = vlaneseq
        %v7125 = vshrl.u32 %v7124, 7
        %v7126 = vsub.s32 1, %v7125
        %v7127 = vrot.slane %v6981, %v7126
        %v7128 = vlaneseq
        %v7129 = vshrl.u32 %v7128, 7
        %v7130 = vsub.s32 1, %v7129
        %v7131 = vrot.slane %v6982, %v7130
        %v7132 = vlaneseq
        %v7133 = vshrl.u32 %v7132, 7
        %v7134 = vsub.s32 1, %v7133
        %v7135 = vrot.slane %v6983, %v7134
        %v7136 = vlaneseq
        %v7137 = vshrl.u32 %v7136, 7
        %v7138 = vsub.s32 1, %v7137
        %v7139 = vrot.slane %v6984, %v7138
        %v7140 = vlaneseq
        %v7141 = vshrl.u32 %v7140, 7
        %v7142 = vsub.s32 1, %v7141
        %v7143 = vrot.slane %v6985, %v7142
        %v7144 = vlaneseq
        %v7145 = vshrl.u32 %v7144, 7
        %v7146 = vsub.s32 1, %v7145
        %v7147 = vrot.slane %v6986, %v7146
        %v7148 = vlaneseq
        %v7149 = vshrl.u32 %v7148, 7
        %v7150 = vsub.s32 1, %v7149
        %v7151 = vrot.slane %v6987, %v7150
        %v7152 = vlaneseq
        %v7153 = vshrl.u32 %v7152, 7
        %v7154 = vsub.s32 1, %v7153
        %v7155 = vrot.slane %v6988, %v7154
        %v7156 = vlaneseq
        %v7157 = vshrl.u32 %v7156, 7
        %v7158 = vsub.s32 1, %v7157
        %v7159 = vrot.slane %v6989, %v7158
        %v7160 = vlaneseq
        %v7161 = vshrl.u32 %v7160, 7
        %v7162 = vsub.s32 1, %v7161
        %v7163 = vrot.slane %v6990, %v7162
        %v7164 = vlaneseq
        %v7165 = vshrl.u32 %v7164, 7
        %v7166 = vsub.s32 1, %v7165
        %v7167 = vrot.slane %v6991, %v7166
        %v7168 = vlaneseq
        %v7169 = vshrl.u32 %v7168, 7
        %v7170 = vsub.s32 1, %v7169
        %v7171 = vrot.slane %v6992, %v7170
        %v7172 = vlaneseq
        %v7173 = vshrl.u32 %v7172, 7
        %v7174 = vsub.s32 1, %v7173
        %v7175 = vrot.slane %v6993, %v7174
        %v7176 = vlaneseq
        %v7177 = vshrl.u32 %v7176, 7
        %v7178 = vsub.s32 1, %v7177
        %v7179 = vrot.slane %v6994, %v7178
        %v7180 = vlaneseq
        %v7181 = vshrl.u32 %v7180, 7
        %v7182 = vsub.s32 1, %v7181
        %v7183 = vrot.slane %v6995, %v7182
        %v7184 = vlaneseq
        %v7185 = vshrl.u32 %v7184, 7
        %v7186 = vsub.s32 1, %v7185
        %v7187 = vrot.slane %v6996, %v7186
        %v7188 = vlaneseq
        %v7189 = vshrl.u32 %v7188, 7
        %v7190 = vsub.s32 1, %v7189
        %v7191 = vrot.slane %v6997, %v7190
        %v7192 = vlaneseq
        %v7193 = vshrl.u32 %v7192, 7
        %v7194 = vsub.s32 1, %v7193
        %v7195 = vrot.slane %v6998, %v7194
        %v7196 = vlaneseq
        %v7197 = vshrl.u32 %v7196, 7
        %v7198 = vsub.s32 1, %v7197
        %v7199 = vrot.slane %v6999, %v7198
        %v7200 = vlaneseq
        %v7201 = vshrl.u32 %v7200, 7
        %v7202 = vsub.s32 1, %v7201
        %v7203 = vrot.slane %v7000, %v7202
        %v7204 = vlaneseq
        %v7205 = vshrl.u32 %v7204, 7
        %v7206 = vsub.s32 1, %v7205
        %v7207 = vrot.slane %v7001, %v7206
        %v7208 = vlaneseq
        %v7209 = vshrl.u32 %v7208, 7
        %v7210 = vsub.s32 1, %v7209
        %v7211 = vrot.slane %v7002, %v7210
        %v7212 = vlaneseq
        %v7213 = vshrl.u32 %v7212, 7
        %v7214 = vsub.s32 1, %v7213
        %v7215 = vrot.slane %v7003, %v7214
        %v7216 = vlaneseq
        %v7217 = vshrl.u32 %v7216, 7
        %v7218 = vsub.s32 1, %v7217
        %v7219 = vrot.slane %v7004, %v7218
        %v7220 = vlaneseq
        %v7221 = vshrl.u32 %v7220, 7
        %v7222 = vsub.s32 1, %v7221
        %v7223 = vrot.slane %v7005, %v7222
        %v7224 = vlaneseq
        %v7225 = vshrl.u32 %v7224, 7
        %v7226 = vsub.s32 1, %v7225
        %v7227 = vrot.slane %v7006, %v7226
        %v7228 = vlaneseq
        %v7229 = vshrl.u32 %v7228, 7
        %v7230 = vsub.s32 1, %v7229
        %v7231 = vrot.slane %v7007, %v7230
        %v7232 = vlaneseq
        %v7233 = vshrl.u32 %v7232, 7
        %v7234 = vsub.s32 1, %v7233
        %v7235 = vrot.slane %v7008, %v7234
        %v7236 = vlaneseq
        %v7237 = vshrl.u32 %v7236, 7
        %v7238 = vsub.s32 1, %v7237
        %v7239 = vrot.slane %v7009, %v7238
        %v7240 = vlaneseq
        %v7241 = vshrl.u32 %v7240, 7
        %v7242 = vsub.s32 1, %v7241
        %v7243 = vrot.slane %v7010, %v7242
        %v7244 = vlaneseq
        %v7245 = vshrl.u32 %v7244, 7
        %v7246 = vsub.s32 1, %v7245
        %v7247 = vrot.slane %v7011, %v7246
        %v7248 = vlaneseq
        %v7249 = vshrl.u32 %v7248, 7
        %v7250 = vsub.s32 1, %v7249
        %v7251 = vrot.slane %v7012, %v7250
        %v7252 = vlaneseq
        %v7253 = vshrl.u32 %v7252, 7
        %v7254 = vsub.s32 1, %v7253
        %v7255 = vrot.slane %v7013, %v7254
        %v7256 = vlaneseq
        %v7257 = vshrl.u32 %v7256, 7
        %v7258 = vsub.s32 1, %v7257
        %v7259 = vrot.slane %v7014, %v7258
        %v7260 = vlaneseq
        %v7261 = vshrl.u32 %v7260, 7
        %v7262 = vsub.s32 1, %v7261
        %v7263 = vrot.slane %v7015, %v7262
        %v7264 = vlaneseq
        %v7265 = vshrl.u32 %v7264, 7
        %v7266 = vsub.s32 1, %v7265
        %v7267 = vrot.slane %v7016, %v7266
        %v7268 = vlaneseq
        %v7269 = vshrl.u32 %v7268, 7
        %v7270 = vsub.s32 1, %v7269
        %v7271 = vrot.slane %v7017, %v7270
        %v7272 = vlaneseq
        %v7273 = vshrl.u32 %v7272, 7
        %v7274 = vsub.s32 1, %v7273
        %v7275 = vrot.slane %v7018, %v7274
        %v7276 = vlaneseq
        %v7277 = vshrl.u32 %v7276, 7
        %v7278 = vsub.s32 1, %v7277
        %v7279 = vrot.slane %v7019, %v7278
        %v7280 = vlaneseq
        %v7281 = vshrl.u32 %v7280, 7
        %v7282 = vsub.s32 1, %v7281
        %v7283 = vrot.slane %v7020, %v7282
        %v7284 = vlaneseq
        %v7285 = vshrl.u32 %v7284, 7
        %v7286 = vsub.s32 1, %v7285
        %v7287 = vrot.slane %v7021, %v7286
        %v7288 = vlaneseq
        %v7289 = vshrl.u32 %v7288, 7
        %v7290 = vsub.s32 1, %v7289
        %v7291 = vrot.slane %v7022, %v7290
        %v7292 = vlaneseq
        %v7293 = vshrl.u32 %v7292, 7
        %v7294 = vsub.s32 1, %v7293
        %v7295 = vrot.slane %v7023, %v7294
        %v7296 = vlaneseq
        %v7297 = vshrl.u32 %v7296, 7
        %v7298 = vsub.s32 1, %v7297
        %v7299 = vrot.slane %v7024, %v7298
        %v7300 = vlaneseq
        %v7301 = vshrl.u32 %v7300, 7
        %v7302 = vsub.s32 1, %v7301
        %v7303 = vrot.slane %v7025, %v7302
        %v7304 = vlaneseq
        %v7305 = vshrl.u32 %v7304, 7
        %v7306 = vsub.s32 1, %v7305
        %v7307 = vrot.slane %v7026, %v7306
        %v7308 = vlaneseq
        %v7309 = vshrl.u32 %v7308, 7
        %v7310 = vsub.s32 1, %v7309
        %v7311 = vrot.slane %v7027, %v7310
        %v7312 = vlaneseq
        %v7313 = vshrl.u32 %v7312, 7
        %v7314 = vsub.s32 1, %v7313
        %v7315 = vrot.slane %v7028, %v7314
        %v7316 = vlaneseq
        %v7317 = vshrl.u32 %v7316, 7
        %v7318 = vsub.s32 1, %v7317
        %v7319 = vrot.slane %v7029, %v7318
        %v7320 = vlaneseq
        %v7321 = vshrl.u32 %v7320, 7
        %v7322 = vsub.s32 1, %v7321
        %v7323 = vrot.slane %v7030, %v7322
        %v7324 = vlaneseq
        %v7325 = vshrl.u32 %v7324, 7
        %v7326 = vsub.s32 1, %v7325
        %v7327 = vrot.slane %v7031, %v7326
        %v7328 = vlaneseq
        %v7329 = vshrl.u32 %v7328, 7
        %v7330 = vsub.s32 1, %v7329
        %v7331 = vrot.slane %v7032, %v7330
        %v7332 = vlaneseq
        %v7333 = vshrl.u32 %v7332, 7
        %v7334 = vsub.s32 1, %v7333
        %v7335 = vrot.slane %v7033, %v7334
        %v7336 = vlaneseq
        %v7337 = vshrl.u32 %v7336, 7
        %v7338 = vsub.s32 1, %v7337
        %v7339 = vrot.slane %v7034, %v7338
        %v7340 = vlaneseq
        %v7341 = vshrl.u32 %v7340, 7
        %v7342 = vsub.s32 1, %v7341
        %v7343 = vrot.slane %v7035, %v7342
        %v7344 = vlaneseq
        %v7345 = vshrl.u32 %v7344, 7
        %v7346 = vsub.s32 1, %v7345
        %v7347 = vrot.slane %v7036, %v7346
        %v7348 = vlaneseq
        %v7349 = vshrl.u32 %v7348, 7
        %v7350 = vsub.s32 1, %v7349
        %v7351 = vrot.slane %v7037, %v7350
        %v7352 = vlaneseq
        %v7353 = vshrl.u32 %v7352, 7
        %v7354 = vsub.s32 1, %v7353
        %v7355 = vrot.slane %v7038, %v7354
        %v7356 = vlaneseq
        %v7357 = vshrl.u32 %v7356, 7
        %v7358 = vsub.s32 1, %v7357
        %v7359 = vrot.slane %v7039, %v7358
        %v7360 = vsel %vm2053, %v7111, %v7107
        %v7361 = vsel %vm1470, %v7115, %v7360
        %v7362 = vsel %vm1472, %v7119, %v7361
        %v7363 = vsel %vm1474, %v7123, %v7362
        %v7364 = vsel %vm1476, %v7127, %v7363
        %v7365 = vsel %vm1478, %v7131, %v7364
        %v7366 = vsel %vm1480, %v7135, %v7365
        %v7367 = vsel %vm2053, %v7143, %v7139
        %v7368 = vsel %vm1470, %v7147, %v7367
        %v7369 = vsel %vm1472, %v7151, %v7368
        %v7370 = vsel %vm1474, %v7155, %v7369
        %v7371 = vsel %vm1476, %v7159, %v7370
        %v7372 = vsel %vm1478, %v7163, %v7371
        %v7373 = vsel %vm1480, %v7167, %v7372
        %v7374 = vsel %vm2053, %v7175, %v7171
        %v7375 = vsel %vm1470, %v7179, %v7374
        %v7376 = vsel %vm1472, %v7183, %v7375
        %v7377 = vsel %vm1474, %v7187, %v7376
        %v7378 = vsel %vm1476, %v7191, %v7377
        %v7379 = vsel %vm1478, %v7195, %v7378
        %v7380 = vsel %vm1480, %v7199, %v7379
        %v7381 = vsel %vm2053, %v7207, %v7203
        %v7382 = vsel %vm1470, %v7211, %v7381
        %v7383 = vsel %vm1472, %v7215, %v7382
        %v7384 = vsel %vm1474, %v7219, %v7383
        %v7385 = vsel %vm1476, %v7223, %v7384
        %v7386 = vsel %vm1478, %v7227, %v7385
        %v7387 = vsel %vm1480, %v7231, %v7386
        %v7388 = vsel %vm2053, %v7239, %v7235
        %v7389 = vsel %vm1470, %v7243, %v7388
        %v7390 = vsel %vm1472, %v7247, %v7389
        %v7391 = vsel %vm1474, %v7251, %v7390
        %v7392 = vsel %vm1476, %v7255, %v7391
        %v7393 = vsel %vm1478, %v7259, %v7392
        %v7394 = vsel %vm1480, %v7263, %v7393
        %v7395 = vsel %vm2053, %v7271, %v7267
        %v7396 = vsel %vm1470, %v7275, %v7395
        %v7397 = vsel %vm1472, %v7279, %v7396
        %v7398 = vsel %vm1474, %v7283, %v7397
        %v7399 = vsel %vm1476, %v7287, %v7398
        %v7400 = vsel %vm1478, %v7291, %v7399
        %v7401 = vsel %vm1480, %v7295, %v7400
        %v7402 = vsel %vm2053, %v7303, %v7299
        %v7403 = vsel %vm1470, %v7307, %v7402
        %v7404 = vsel %vm1472, %v7311, %v7403
        %v7405 = vsel %vm1474, %v7315, %v7404
        %v7406 = vsel %vm1476, %v7319, %v7405
        %v7407 = vsel %vm1478, %v7323, %v7406
        %v7408 = vsel %vm1480, %v7327, %v7407
        %v7409 = vsel %vm2053, %v7335, %v7331
        %v7410 = vsel %vm1470, %v7339, %v7409
        %v7411 = vsel %vm1472, %v7343, %v7410
        %v7412 = vsel %vm1474, %v7347, %v7411
        %v7413 = vsel %vm1476, %v7351, %v7412
        %v7414 = vsel %vm1478, %v7355, %v7413
        %v7415 = vsel %vm1480, %v7359, %v7414
        %v7424 = vadd.f32 %v6934, %v7366
        %v7425 = vadd.f32 %v6935, %v7373
        %v7426 = vadd.f32 %v6936, %v7380
        %v7427 = vadd.f32 %v6937, %v7387
        %v7428 = vadd.f32 %v6938, %v7394
        %v7429 = vadd.f32 %v6939, %v7401
        %v7430 = vadd.f32 %v6940, %v7408
        %v7431 = vadd.f32 %v6941, %v7415
        %v7432 = vlaneseq
        %v7433 = vshrl.u32 %v7432, 7
        %v7434 = vsub.s32 6, %v7433
        %v7435 = vrot.slane %v4725, %v7434
        %v7436 = vmul.f32 %v6000, %v7435
        %v7437 = vmul.f32 %v6001, %v7435
        %v7438 = vmul.f32 %v6002, %v7435
        %v7439 = vmul.f32 %v6003, %v7435
        %v7440 = vmul.f32 %v6004, %v7435
        %v7441 = vmul.f32 %v6005, %v7435
        %v7442 = vmul.f32 %v6006, %v7435
        %v7443 = vmul.f32 %v6007, %v7435
        %v7444 = vadd.f32 %v7424, %v7436
        %v7445 = vadd.f32 %v7425, %v7437
        %v7446 = vadd.f32 %v7426, %v7438
        %v7447 = vadd.f32 %v7427, %v7439
        %v7448 = vadd.f32 %v7428, %v7440
        %v7449 = vadd.f32 %v7429, %v7441
        %v7450 = vadd.f32 %v7430, %v7442
        %v7451 = vadd.f32 %v7431, %v7443
        %v7452 = vlaneseq
        %v7453 = vshrl.u32 %v7452, 7
        %v7454 = vsub.s32 7, %v7453
        %v7455 = vrot.slane %v4725, %v7454
        %v7457 = vcombine.high %v7455, %v7455
        %v7459 = vunpack.c.l.s4 1983009808
        %v7460 = vunpack.c.0.s8 %v7459
        %v7461 = vlaneseq
        %v7462 = vshrl.u32 %v7461, 7
        %v7463 = vsub.s32 %v7460, %v7462
        %v7464 = vrot.slane %v7455, %v7463
        %v7466 = vunpack.c.l.s4 1983009808
        %v7467 = vunpack.c.0.s8 %v7466
        %v7468 = vlaneseq
        %v7469 = vshrl.u32 %v7468, 7
        %v7470 = vsub.s32 %v7467, %v7469
        %v7471 = vrot.slane %v7457, %v7470
        %v7472 = vcombine.high %v7464, %v7464
        %v7473 = vcombine.high %v7471, %v7471
        %v7474 = vrot.slane %v7464, 1
        %v7475 = vrot.slane %v7472, 1
        %v7476 = vrot.slane %v7471, 1
        %v7477 = vrot.slane %v7473, 1
        %v7486 = vmul.f32 %v5103, %v7464
        %v7487 = vmul.f32 %v5111, %v7474
        %v7488 = vmul.f32 %v5110, %v7472
        %v7489 = vmul.f32 %v5112, %v7475
        %v7490 = vmul.f32 %v5120, %v7471
        %v7491 = vmul.f32 %v5128, %v7476
        %v7492 = vmul.f32 %v5127, %v7473
        %v7493 = vmul.f32 %v5129, %v7477
        %v7494 = vmul.f32 %v5137, %v7464
        %v7495 = vmul.f32 %v5145, %v7474
        %v7496 = vmul.f32 %v5144, %v7472
        %v7497 = vmul.f32 %v5146, %v7475
        %v7498 = vmul.f32 %v5154, %v7471
        %v7499 = vmul.f32 %v5162, %v7476
        %v7500 = vmul.f32 %v5161, %v7473
        %v7501 = vmul.f32 %v5163, %v7477
        %v7502 = vmul.f32 %v5171, %v7464
        %v7503 = vmul.f32 %v5179, %v7474
        %v7504 = vmul.f32 %v5178, %v7472
        %v7505 = vmul.f32 %v5180, %v7475
        %v7506 = vmul.f32 %v5188, %v7471
        %v7507 = vmul.f32 %v5196, %v7476
        %v7508 = vmul.f32 %v5195, %v7473
        %v7509 = vmul.f32 %v5197, %v7477
        %v7510 = vmul.f32 %v5205, %v7464
        %v7511 = vmul.f32 %v5213, %v7474
        %v7512 = vmul.f32 %v5212, %v7472
        %v7513 = vmul.f32 %v5214, %v7475
        %v7514 = vmul.f32 %v5222, %v7471
        %v7515 = vmul.f32 %v5230, %v7476
        %v7516 = vmul.f32 %v5229, %v7473
        %v7517 = vmul.f32 %v5231, %v7477
        %v7518 = vmul.f32 %v5239, %v7464
        %v7519 = vmul.f32 %v5247, %v7474
        %v7520 = vmul.f32 %v5246, %v7472
        %v7521 = vmul.f32 %v5248, %v7475
        %v7522 = vmul.f32 %v5256, %v7471
        %v7523 = vmul.f32 %v5264, %v7476
        %v7524 = vmul.f32 %v5263, %v7473
        %v7525 = vmul.f32 %v5265, %v7477
        %v7526 = vmul.f32 %v5273, %v7464
        %v7527 = vmul.f32 %v5281, %v7474
        %v7528 = vmul.f32 %v5280, %v7472
        %v7529 = vmul.f32 %v5282, %v7475
        %v7530 = vmul.f32 %v5290, %v7471
        %v7531 = vmul.f32 %v5298, %v7476
        %v7532 = vmul.f32 %v5297, %v7473
        %v7533 = vmul.f32 %v5299, %v7477
        %v7534 = vmul.f32 %v5307, %v7464
        %v7535 = vmul.f32 %v5315, %v7474
        %v7536 = vmul.f32 %v5314, %v7472
        %v7537 = vmul.f32 %v5316, %v7475
        %v7538 = vmul.f32 %v5324, %v7471
        %v7539 = vmul.f32 %v5332, %v7476
        %v7540 = vmul.f32 %v5331, %v7473
        %v7541 = vmul.f32 %v5333, %v7477
        %v7542 = vmul.f32 %v5341, %v7464
        %v7543 = vmul.f32 %v5349, %v7474
        %v7544 = vmul.f32 %v5348, %v7472
        %v7545 = vmul.f32 %v5350, %v7475
        %v7546 = vmul.f32 %v5358, %v7471
        %v7547 = vmul.f32 %v5366, %v7476
        %v7548 = vmul.f32 %v5365, %v7473
        %v7549 = vmul.f32 %v5367, %v7477
        %v7614 = vlaneseq
        %v7615 = vshrl.u32 %v7614, 7
        %v7616 = vsub.s32 0, %v7615
        %v7617 = vrot.slane %v7486, %v7616
        %v7618 = vlaneseq
        %v7619 = vshrl.u32 %v7618, 7
        %v7620 = vsub.s32 0, %v7619
        %v7621 = vrot.slane %v7487, %v7620
        %v7622 = vlaneseq
        %v7623 = vshrl.u32 %v7622, 7
        %v7624 = vsub.s32 0, %v7623
        %v7625 = vrot.slane %v7488, %v7624
        %v7626 = vlaneseq
        %v7627 = vshrl.u32 %v7626, 7
        %v7628 = vsub.s32 0, %v7627
        %v7629 = vrot.slane %v7489, %v7628
        %v7630 = vlaneseq
        %v7631 = vshrl.u32 %v7630, 7
        %v7632 = vsub.s32 0, %v7631
        %v7633 = vrot.slane %v7490, %v7632
        %v7634 = vlaneseq
        %v7635 = vshrl.u32 %v7634, 7
        %v7636 = vsub.s32 0, %v7635
        %v7637 = vrot.slane %v7491, %v7636
        %v7638 = vlaneseq
        %v7639 = vshrl.u32 %v7638, 7
        %v7640 = vsub.s32 0, %v7639
        %v7641 = vrot.slane %v7492, %v7640
        %v7642 = vlaneseq
        %v7643 = vshrl.u32 %v7642, 7
        %v7644 = vsub.s32 0, %v7643
        %v7645 = vrot.slane %v7493, %v7644
        %v7646 = vlaneseq
        %v7647 = vshrl.u32 %v7646, 7
        %v7648 = vsub.s32 0, %v7647
        %v7649 = vrot.slane %v7494, %v7648
        %v7650 = vlaneseq
        %v7651 = vshrl.u32 %v7650, 7
        %v7652 = vsub.s32 0, %v7651
        %v7653 = vrot.slane %v7495, %v7652
        %v7654 = vlaneseq
        %v7655 = vshrl.u32 %v7654, 7
        %v7656 = vsub.s32 0, %v7655
        %v7657 = vrot.slane %v7496, %v7656
        %v7658 = vlaneseq
        %v7659 = vshrl.u32 %v7658, 7
        %v7660 = vsub.s32 0, %v7659
        %v7661 = vrot.slane %v7497, %v7660
        %v7662 = vlaneseq
        %v7663 = vshrl.u32 %v7662, 7
        %v7664 = vsub.s32 0, %v7663
        %v7665 = vrot.slane %v7498, %v7664
        %v7666 = vlaneseq
        %v7667 = vshrl.u32 %v7666, 7
        %v7668 = vsub.s32 0, %v7667
        %v7669 = vrot.slane %v7499, %v7668
        %v7670 = vlaneseq
        %v7671 = vshrl.u32 %v7670, 7
        %v7672 = vsub.s32 0, %v7671
        %v7673 = vrot.slane %v7500, %v7672
        %v7674 = vlaneseq
        %v7675 = vshrl.u32 %v7674, 7
        %v7676 = vsub.s32 0, %v7675
        %v7677 = vrot.slane %v7501, %v7676
        %v7678 = vlaneseq
        %v7679 = vshrl.u32 %v7678, 7
        %v7680 = vsub.s32 0, %v7679
        %v7681 = vrot.slane %v7502, %v7680
        %v7682 = vlaneseq
        %v7683 = vshrl.u32 %v7682, 7
        %v7684 = vsub.s32 0, %v7683
        %v7685 = vrot.slane %v7503, %v7684
        %v7686 = vlaneseq
        %v7687 = vshrl.u32 %v7686, 7
        %v7688 = vsub.s32 0, %v7687
        %v7689 = vrot.slane %v7504, %v7688
        %v7690 = vlaneseq
        %v7691 = vshrl.u32 %v7690, 7
        %v7692 = vsub.s32 0, %v7691
        %v7693 = vrot.slane %v7505, %v7692
        %v7694 = vlaneseq
        %v7695 = vshrl.u32 %v7694, 7
        %v7696 = vsub.s32 0, %v7695
        %v7697 = vrot.slane %v7506, %v7696
        %v7698 = vlaneseq
        %v7699 = vshrl.u32 %v7698, 7
        %v7700 = vsub.s32 0, %v7699
        %v7701 = vrot.slane %v7507, %v7700
        %v7702 = vlaneseq
        %v7703 = vshrl.u32 %v7702, 7
        %v7704 = vsub.s32 0, %v7703
        %v7705 = vrot.slane %v7508, %v7704
        %v7706 = vlaneseq
        %v7707 = vshrl.u32 %v7706, 7
        %v7708 = vsub.s32 0, %v7707
        %v7709 = vrot.slane %v7509, %v7708
        %v7710 = vlaneseq
        %v7711 = vshrl.u32 %v7710, 7
        %v7712 = vsub.s32 0, %v7711
        %v7713 = vrot.slane %v7510, %v7712
        %v7714 = vlaneseq
        %v7715 = vshrl.u32 %v7714, 7
        %v7716 = vsub.s32 0, %v7715
        %v7717 = vrot.slane %v7511, %v7716
        %v7718 = vlaneseq
        %v7719 = vshrl.u32 %v7718, 7
        %v7720 = vsub.s32 0, %v7719
        %v7721 = vrot.slane %v7512, %v7720
        %v7722 = vlaneseq
        %v7723 = vshrl.u32 %v7722, 7
        %v7724 = vsub.s32 0, %v7723
        %v7725 = vrot.slane %v7513, %v7724
        %v7726 = vlaneseq
        %v7727 = vshrl.u32 %v7726, 7
        %v7728 = vsub.s32 0, %v7727
        %v7729 = vrot.slane %v7514, %v7728
        %v7730 = vlaneseq
        %v7731 = vshrl.u32 %v7730, 7
        %v7732 = vsub.s32 0, %v7731
        %v7733 = vrot.slane %v7515, %v7732
        %v7734 = vlaneseq
        %v7735 = vshrl.u32 %v7734, 7
        %v7736 = vsub.s32 0, %v7735
        %v7737 = vrot.slane %v7516, %v7736
        %v7738 = vlaneseq
        %v7739 = vshrl.u32 %v7738, 7
        %v7740 = vsub.s32 0, %v7739
        %v7741 = vrot.slane %v7517, %v7740
        %v7742 = vlaneseq
        %v7743 = vshrl.u32 %v7742, 7
        %v7744 = vsub.s32 0, %v7743
        %v7745 = vrot.slane %v7518, %v7744
        %v7746 = vlaneseq
        %v7747 = vshrl.u32 %v7746, 7
        %v7748 = vsub.s32 0, %v7747
        %v7749 = vrot.slane %v7519, %v7748
        %v7750 = vlaneseq
        %v7751 = vshrl.u32 %v7750, 7
        %v7752 = vsub.s32 0, %v7751
        %v7753 = vrot.slane %v7520, %v7752
        %v7754 = vlaneseq
        %v7755 = vshrl.u32 %v7754, 7
        %v7756 = vsub.s32 0, %v7755
        %v7757 = vrot.slane %v7521, %v7756
        %v7758 = vlaneseq
        %v7759 = vshrl.u32 %v7758, 7
        %v7760 = vsub.s32 0, %v7759
        %v7761 = vrot.slane %v7522, %v7760
        %v7762 = vlaneseq
        %v7763 = vshrl.u32 %v7762, 7
        %v7764 = vsub.s32 0, %v7763
        %v7765 = vrot.slane %v7523, %v7764
        %v7766 = vlaneseq
        %v7767 = vshrl.u32 %v7766, 7
        %v7768 = vsub.s32 0, %v7767
        %v7769 = vrot.slane %v7524, %v7768
        %v7770 = vlaneseq
        %v7771 = vshrl.u32 %v7770, 7
        %v7772 = vsub.s32 0, %v7771
        %v7773 = vrot.slane %v7525, %v7772
        %v7774 = vlaneseq
        %v7775 = vshrl.u32 %v7774, 7
        %v7776 = vsub.s32 0, %v7775
        %v7777 = vrot.slane %v7526, %v7776
        %v7778 = vlaneseq
        %v7779 = vshrl.u32 %v7778, 7
        %v7780 = vsub.s32 0, %v7779
        %v7781 = vrot.slane %v7527, %v7780
        %v7782 = vlaneseq
        %v7783 = vshrl.u32 %v7782, 7
        %v7784 = vsub.s32 0, %v7783
        %v7785 = vrot.slane %v7528, %v7784
        %v7786 = vlaneseq
        %v7787 = vshrl.u32 %v7786, 7
        %v7788 = vsub.s32 0, %v7787
        %v7789 = vrot.slane %v7529, %v7788
        %v7790 = vlaneseq
        %v7791 = vshrl.u32 %v7790, 7
        %v7792 = vsub.s32 0, %v7791
        %v7793 = vrot.slane %v7530, %v7792
        %v7794 = vlaneseq
        %v7795 = vshrl.u32 %v7794, 7
        %v7796 = vsub.s32 0, %v7795
        %v7797 = vrot.slane %v7531, %v7796
        %v7798 = vlaneseq
        %v7799 = vshrl.u32 %v7798, 7
        %v7800 = vsub.s32 0, %v7799
        %v7801 = vrot.slane %v7532, %v7800
        %v7802 = vlaneseq
        %v7803 = vshrl.u32 %v7802, 7
        %v7804 = vsub.s32 0, %v7803
        %v7805 = vrot.slane %v7533, %v7804
        %v7806 = vlaneseq
        %v7807 = vshrl.u32 %v7806, 7
        %v7808 = vsub.s32 0, %v7807
        %v7809 = vrot.slane %v7534, %v7808
        %v7810 = vlaneseq
        %v7811 = vshrl.u32 %v7810, 7
        %v7812 = vsub.s32 0, %v7811
        %v7813 = vrot.slane %v7535, %v7812
        %v7814 = vlaneseq
        %v7815 = vshrl.u32 %v7814, 7
        %v7816 = vsub.s32 0, %v7815
        %v7817 = vrot.slane %v7536, %v7816
        %v7818 = vlaneseq
        %v7819 = vshrl.u32 %v7818, 7
        %v7820 = vsub.s32 0, %v7819
        %v7821 = vrot.slane %v7537, %v7820
        %v7822 = vlaneseq
        %v7823 = vshrl.u32 %v7822, 7
        %v7824 = vsub.s32 0, %v7823
        %v7825 = vrot.slane %v7538, %v7824
        %v7826 = vlaneseq
        %v7827 = vshrl.u32 %v7826, 7
        %v7828 = vsub.s32 0, %v7827
        %v7829 = vrot.slane %v7539, %v7828
        %v7830 = vlaneseq
        %v7831 = vshrl.u32 %v7830, 7
        %v7832 = vsub.s32 0, %v7831
        %v7833 = vrot.slane %v7540, %v7832
        %v7834 = vlaneseq
        %v7835 = vshrl.u32 %v7834, 7
        %v7836 = vsub.s32 0, %v7835
        %v7837 = vrot.slane %v7541, %v7836
        %v7838 = vlaneseq
        %v7839 = vshrl.u32 %v7838, 7
        %v7840 = vsub.s32 0, %v7839
        %v7841 = vrot.slane %v7542, %v7840
        %v7842 = vlaneseq
        %v7843 = vshrl.u32 %v7842, 7
        %v7844 = vsub.s32 0, %v7843
        %v7845 = vrot.slane %v7543, %v7844
        %v7846 = vlaneseq
        %v7847 = vshrl.u32 %v7846, 7
        %v7848 = vsub.s32 0, %v7847
        %v7849 = vrot.slane %v7544, %v7848
        %v7850 = vlaneseq
        %v7851 = vshrl.u32 %v7850, 7
        %v7852 = vsub.s32 0, %v7851
        %v7853 = vrot.slane %v7545, %v7852
        %v7854 = vlaneseq
        %v7855 = vshrl.u32 %v7854, 7
        %v7856 = vsub.s32 0, %v7855
        %v7857 = vrot.slane %v7546, %v7856
        %v7858 = vlaneseq
        %v7859 = vshrl.u32 %v7858, 7
        %v7860 = vsub.s32 0, %v7859
        %v7861 = vrot.slane %v7547, %v7860
        %v7862 = vlaneseq
        %v7863 = vshrl.u32 %v7862, 7
        %v7864 = vsub.s32 0, %v7863
        %v7865 = vrot.slane %v7548, %v7864
        %v7866 = vlaneseq
        %v7867 = vshrl.u32 %v7866, 7
        %v7868 = vsub.s32 0, %v7867
        %v7869 = vrot.slane %v7549, %v7868
        %v7870 = vsel %vm2053, %v7621, %v7617
        %v7871 = vsel %vm1470, %v7625, %v7870
        %v7872 = vsel %vm1472, %v7629, %v7871
        %v7873 = vsel %vm1474, %v7633, %v7872
        %v7874 = vsel %vm1476, %v7637, %v7873
        %v7875 = vsel %vm1478, %v7641, %v7874
        %v7876 = vsel %vm1480, %v7645, %v7875
        %v7877 = vsel %vm2053, %v7653, %v7649
        %v7878 = vsel %vm1470, %v7657, %v7877
        %v7879 = vsel %vm1472, %v7661, %v7878
        %v7880 = vsel %vm1474, %v7665, %v7879
        %v7881 = vsel %vm1476, %v7669, %v7880
        %v7882 = vsel %vm1478, %v7673, %v7881
        %v7883 = vsel %vm1480, %v7677, %v7882
        %v7884 = vsel %vm2053, %v7685, %v7681
        %v7885 = vsel %vm1470, %v7689, %v7884
        %v7886 = vsel %vm1472, %v7693, %v7885
        %v7887 = vsel %vm1474, %v7697, %v7886
        %v7888 = vsel %vm1476, %v7701, %v7887
        %v7889 = vsel %vm1478, %v7705, %v7888
        %v7890 = vsel %vm1480, %v7709, %v7889
        %v7891 = vsel %vm2053, %v7717, %v7713
        %v7892 = vsel %vm1470, %v7721, %v7891
        %v7893 = vsel %vm1472, %v7725, %v7892
        %v7894 = vsel %vm1474, %v7729, %v7893
        %v7895 = vsel %vm1476, %v7733, %v7894
        %v7896 = vsel %vm1478, %v7737, %v7895
        %v7897 = vsel %vm1480, %v7741, %v7896
        %v7898 = vsel %vm2053, %v7749, %v7745
        %v7899 = vsel %vm1470, %v7753, %v7898
        %v7900 = vsel %vm1472, %v7757, %v7899
        %v7901 = vsel %vm1474, %v7761, %v7900
        %v7902 = vsel %vm1476, %v7765, %v7901
        %v7903 = vsel %vm1478, %v7769, %v7902
        %v7904 = vsel %vm1480, %v7773, %v7903
        %v7905 = vsel %vm2053, %v7781, %v7777
        %v7906 = vsel %vm1470, %v7785, %v7905
        %v7907 = vsel %vm1472, %v7789, %v7906
        %v7908 = vsel %vm1474, %v7793, %v7907
        %v7909 = vsel %vm1476, %v7797, %v7908
        %v7910 = vsel %vm1478, %v7801, %v7909
        %v7911 = vsel %vm1480, %v7805, %v7910
        %v7912 = vsel %vm2053, %v7813, %v7809
        %v7913 = vsel %vm1470, %v7817, %v7912
        %v7914 = vsel %vm1472, %v7821, %v7913
        %v7915 = vsel %vm1474, %v7825, %v7914
        %v7916 = vsel %vm1476, %v7829, %v7915
        %v7917 = vsel %vm1478, %v7833, %v7916
        %v7918 = vsel %vm1480, %v7837, %v7917
        %v7919 = vsel %vm2053, %v7845, %v7841
        %v7920 = vsel %vm1470, %v7849, %v7919
        %v7921 = vsel %vm1472, %v7853, %v7920
        %v7922 = vsel %vm1474, %v7857, %v7921
        %v7923 = vsel %vm1476, %v7861, %v7922
        %v7924 = vsel %vm1478, %v7865, %v7923
        %v7925 = vsel %vm1480, %v7869, %v7924
        %v7934 = vadd.f32 %v7444, %v7876
        %v7935 = vadd.f32 %v7445, %v7883
        %v7936 = vadd.f32 %v7446, %v7890
        %v7937 = vadd.f32 %v7447, %v7897
        %v7938 = vadd.f32 %v7448, %v7904
        %v7939 = vadd.f32 %v7449, %v7911
        %v7940 = vadd.f32 %v7450, %v7918
        %v7941 = vadd.f32 %v7451, %v7925
        %v7942 = vlaneseq
        %v7943 = vshrl.u32 %v7942, 7
        %v7944 = vsub.s32 0, %v7943
        %v7945 = vrot.slane %v4726, %v7944
        %v7947 = vcombine.high %v7945, %v7945
        %v7949 = vunpack.c.l.s4 1983009808
        %v7950 = vunpack.c.0.s8 %v7949
        %v7951 = vlaneseq
        %v7952 = vshrl.u32 %v7951, 7
        %v7953 = vsub.s32 %v7950, %v7952
        %v7954 = vrot.slane %v7945, %v7953
        %v7956 = vunpack.c.l.s4 1983009808
        %v7957 = vunpack.c.0.s8 %v7956
        %v7958 = vlaneseq
        %v7959 = vshrl.u32 %v7958, 7
        %v7960 = vsub.s32 %v7957, %v7959
        %v7961 = vrot.slane %v7947, %v7960
        %v7962 = vcombine.high %v7954, %v7954
        %v7963 = vcombine.high %v7961, %v7961
        %v7964 = vrot.slane %v7954, 7
        %v7965 = vrot.slane %v7962, 7
        %v7966 = vrot.slane %v7961, 7
        %v7967 = vrot.slane %v7963, 7
        %v7976 = vmul.f32 %v5103, %v7964
        %v7977 = vmul.f32 %v5111, %v7954
        %v7978 = vmul.f32 %v5110, %v7965
        %v7979 = vmul.f32 %v5112, %v7962
        %v7980 = vmul.f32 %v5120, %v7966
        %v7981 = vmul.f32 %v5128, %v7961
        %v7982 = vmul.f32 %v5127, %v7967
        %v7983 = vmul.f32 %v5129, %v7963
        %v7984 = vmul.f32 %v5137, %v7964
        %v7985 = vmul.f32 %v5145, %v7954
        %v7986 = vmul.f32 %v5144, %v7965
        %v7987 = vmul.f32 %v5146, %v7962
        %v7988 = vmul.f32 %v5154, %v7966
        %v7989 = vmul.f32 %v5162, %v7961
        %v7990 = vmul.f32 %v5161, %v7967
        %v7991 = vmul.f32 %v5163, %v7963
        %v7992 = vmul.f32 %v5171, %v7964
        %v7993 = vmul.f32 %v5179, %v7954
        %v7994 = vmul.f32 %v5178, %v7965
        %v7995 = vmul.f32 %v5180, %v7962
        %v7996 = vmul.f32 %v5188, %v7966
        %v7997 = vmul.f32 %v5196, %v7961
        %v7998 = vmul.f32 %v5195, %v7967
        %v7999 = vmul.f32 %v5197, %v7963
        %v8000 = vmul.f32 %v5205, %v7964
        %v8001 = vmul.f32 %v5213, %v7954
        %v8002 = vmul.f32 %v5212, %v7965
        %v8003 = vmul.f32 %v5214, %v7962
        %v8004 = vmul.f32 %v5222, %v7966
        %v8005 = vmul.f32 %v5230, %v7961
        %v8006 = vmul.f32 %v5229, %v7967
        %v8007 = vmul.f32 %v5231, %v7963
        %v8008 = vmul.f32 %v5239, %v7964
        %v8009 = vmul.f32 %v5247, %v7954
        %v8010 = vmul.f32 %v5246, %v7965
        %v8011 = vmul.f32 %v5248, %v7962
        %v8012 = vmul.f32 %v5256, %v7966
        %v8013 = vmul.f32 %v5264, %v7961
        %v8014 = vmul.f32 %v5263, %v7967
        %v8015 = vmul.f32 %v5265, %v7963
        %v8016 = vmul.f32 %v5273, %v7964
        %v8017 = vmul.f32 %v5281, %v7954
        %v8018 = vmul.f32 %v5280, %v7965
        %v8019 = vmul.f32 %v5282, %v7962
        %v8020 = vmul.f32 %v5290, %v7966
        %v8021 = vmul.f32 %v5298, %v7961
        %v8022 = vmul.f32 %v5297, %v7967
        %v8023 = vmul.f32 %v5299, %v7963
        %v8024 = vmul.f32 %v5307, %v7964
        %v8025 = vmul.f32 %v5315, %v7954
        %v8026 = vmul.f32 %v5314, %v7965
        %v8027 = vmul.f32 %v5316, %v7962
        %v8028 = vmul.f32 %v5324, %v7966
        %v8029 = vmul.f32 %v5332, %v7961
        %v8030 = vmul.f32 %v5331, %v7967
        %v8031 = vmul.f32 %v5333, %v7963
        %v8032 = vmul.f32 %v5341, %v7964
        %v8033 = vmul.f32 %v5349, %v7954
        %v8034 = vmul.f32 %v5348, %v7965
        %v8035 = vmul.f32 %v5350, %v7962
        %v8036 = vmul.f32 %v5358, %v7966
        %v8037 = vmul.f32 %v5366, %v7961
        %v8038 = vmul.f32 %v5365, %v7967
        %v8039 = vmul.f32 %v5367, %v7963
        %v8104 = vlaneseq
        %v8105 = vshrl.u32 %v8104, 7
        %v8106 = vsub.s32 1, %v8105
        %v8107 = vrot.slane %v7976, %v8106
        %v8108 = vlaneseq
        %v8109 = vshrl.u32 %v8108, 7
        %v8110 = vsub.s32 1, %v8109
        %v8111 = vrot.slane %v7977, %v8110
        %v8112 = vlaneseq
        %v8113 = vshrl.u32 %v8112, 7
        %v8114 = vsub.s32 1, %v8113
        %v8115 = vrot.slane %v7978, %v8114
        %v8116 = vlaneseq
        %v8117 = vshrl.u32 %v8116, 7
        %v8118 = vsub.s32 1, %v8117
        %v8119 = vrot.slane %v7979, %v8118
        %v8120 = vlaneseq
        %v8121 = vshrl.u32 %v8120, 7
        %v8122 = vsub.s32 1, %v8121
        %v8123 = vrot.slane %v7980, %v8122
        %v8124 = vlaneseq
        %v8125 = vshrl.u32 %v8124, 7
        %v8126 = vsub.s32 1, %v8125
        %v8127 = vrot.slane %v7981, %v8126
        %v8128 = vlaneseq
        %v8129 = vshrl.u32 %v8128, 7
        %v8130 = vsub.s32 1, %v8129
        %v8131 = vrot.slane %v7982, %v8130
        %v8132 = vlaneseq
        %v8133 = vshrl.u32 %v8132, 7
        %v8134 = vsub.s32 1, %v8133
        %v8135 = vrot.slane %v7983, %v8134
        %v8136 = vlaneseq
        %v8137 = vshrl.u32 %v8136, 7
        %v8138 = vsub.s32 1, %v8137
        %v8139 = vrot.slane %v7984, %v8138
        %v8140 = vlaneseq
        %v8141 = vshrl.u32 %v8140, 7
        %v8142 = vsub.s32 1, %v8141
        %v8143 = vrot.slane %v7985, %v8142
        %v8144 = vlaneseq
        %v8145 = vshrl.u32 %v8144, 7
        %v8146 = vsub.s32 1, %v8145
        %v8147 = vrot.slane %v7986, %v8146
        %v8148 = vlaneseq
        %v8149 = vshrl.u32 %v8148, 7
        %v8150 = vsub.s32 1, %v8149
        %v8151 = vrot.slane %v7987, %v8150
        %v8152 = vlaneseq
        %v8153 = vshrl.u32 %v8152, 7
        %v8154 = vsub.s32 1, %v8153
        %v8155 = vrot.slane %v7988, %v8154
        %v8156 = vlaneseq
        %v8157 = vshrl.u32 %v8156, 7
        %v8158 = vsub.s32 1, %v8157
        %v8159 = vrot.slane %v7989, %v8158
        %v8160 = vlaneseq
        %v8161 = vshrl.u32 %v8160, 7
        %v8162 = vsub.s32 1, %v8161
        %v8163 = vrot.slane %v7990, %v8162
        %v8164 = vlaneseq
        %v8165 = vshrl.u32 %v8164, 7
        %v8166 = vsub.s32 1, %v8165
        %v8167 = vrot.slane %v7991, %v8166
        %v8168 = vlaneseq
        %v8169 = vshrl.u32 %v8168, 7
        %v8170 = vsub.s32 1, %v8169
        %v8171 = vrot.slane %v7992, %v8170
        %v8172 = vlaneseq
        %v8173 = vshrl.u32 %v8172, 7
        %v8174 = vsub.s32 1, %v8173
        %v8175 = vrot.slane %v7993, %v8174
        %v8176 = vlaneseq
        %v8177 = vshrl.u32 %v8176, 7
        %v8178 = vsub.s32 1, %v8177
        %v8179 = vrot.slane %v7994, %v8178
        %v8180 = vlaneseq
        %v8181 = vshrl.u32 %v8180, 7
        %v8182 = vsub.s32 1, %v8181
        %v8183 = vrot.slane %v7995, %v8182
        %v8184 = vlaneseq
        %v8185 = vshrl.u32 %v8184, 7
        %v8186 = vsub.s32 1, %v8185
        %v8187 = vrot.slane %v7996, %v8186
        %v8188 = vlaneseq
        %v8189 = vshrl.u32 %v8188, 7
        %v8190 = vsub.s32 1, %v8189
        %v8191 = vrot.slane %v7997, %v8190
        %v8192 = vlaneseq
        %v8193 = vshrl.u32 %v8192, 7
        %v8194 = vsub.s32 1, %v8193
        %v8195 = vrot.slane %v7998, %v8194
        %v8196 = vlaneseq
        %v8197 = vshrl.u32 %v8196, 7
        %v8198 = vsub.s32 1, %v8197
        %v8199 = vrot.slane %v7999, %v8198
        %v8200 = vlaneseq
        %v8201 = vshrl.u32 %v8200, 7
        %v8202 = vsub.s32 1, %v8201
        %v8203 = vrot.slane %v8000, %v8202
        %v8204 = vlaneseq
        %v8205 = vshrl.u32 %v8204, 7
        %v8206 = vsub.s32 1, %v8205
        %v8207 = vrot.slane %v8001, %v8206
        %v8208 = vlaneseq
        %v8209 = vshrl.u32 %v8208, 7
        %v8210 = vsub.s32 1, %v8209
        %v8211 = vrot.slane %v8002, %v8210
        %v8212 = vlaneseq
        %v8213 = vshrl.u32 %v8212, 7
        %v8214 = vsub.s32 1, %v8213
        %v8215 = vrot.slane %v8003, %v8214
        %v8216 = vlaneseq
        %v8217 = vshrl.u32 %v8216, 7
        %v8218 = vsub.s32 1, %v8217
        %v8219 = vrot.slane %v8004, %v8218
        %v8220 = vlaneseq
        %v8221 = vshrl.u32 %v8220, 7
        %v8222 = vsub.s32 1, %v8221
        %v8223 = vrot.slane %v8005, %v8222
        %v8224 = vlaneseq
        %v8225 = vshrl.u32 %v8224, 7
        %v8226 = vsub.s32 1, %v8225
        %v8227 = vrot.slane %v8006, %v8226
        %v8228 = vlaneseq
        %v8229 = vshrl.u32 %v8228, 7
        %v8230 = vsub.s32 1, %v8229
        %v8231 = vrot.slane %v8007, %v8230
        %v8232 = vlaneseq
        %v8233 = vshrl.u32 %v8232, 7
        %v8234 = vsub.s32 1, %v8233
        %v8235 = vrot.slane %v8008, %v8234
        %v8236 = vlaneseq
        %v8237 = vshrl.u32 %v8236, 7
        %v8238 = vsub.s32 1, %v8237
        %v8239 = vrot.slane %v8009, %v8238
        %v8240 = vlaneseq
        %v8241 = vshrl.u32 %v8240, 7
        %v8242 = vsub.s32 1, %v8241
        %v8243 = vrot.slane %v8010, %v8242
        %v8244 = vlaneseq
        %v8245 = vshrl.u32 %v8244, 7
        %v8246 = vsub.s32 1, %v8245
        %v8247 = vrot.slane %v8011, %v8246
        %v8248 = vlaneseq
        %v8249 = vshrl.u32 %v8248, 7
        %v8250 = vsub.s32 1, %v8249
        %v8251 = vrot.slane %v8012, %v8250
        %v8252 = vlaneseq
        %v8253 = vshrl.u32 %v8252, 7
        %v8254 = vsub.s32 1, %v8253
        %v8255 = vrot.slane %v8013, %v8254
        %v8256 = vlaneseq
        %v8257 = vshrl.u32 %v8256, 7
        %v8258 = vsub.s32 1, %v8257
        %v8259 = vrot.slane %v8014, %v8258
        %v8260 = vlaneseq
        %v8261 = vshrl.u32 %v8260, 7
        %v8262 = vsub.s32 1, %v8261
        %v8263 = vrot.slane %v8015, %v8262
        %v8264 = vlaneseq
        %v8265 = vshrl.u32 %v8264, 7
        %v8266 = vsub.s32 1, %v8265
        %v8267 = vrot.slane %v8016, %v8266
        %v8268 = vlaneseq
        %v8269 = vshrl.u32 %v8268, 7
        %v8270 = vsub.s32 1, %v8269
        %v8271 = vrot.slane %v8017, %v8270
        %v8272 = vlaneseq
        %v8273 = vshrl.u32 %v8272, 7
        %v8274 = vsub.s32 1, %v8273
        %v8275 = vrot.slane %v8018, %v8274
        %v8276 = vlaneseq
        %v8277 = vshrl.u32 %v8276, 7
        %v8278 = vsub.s32 1, %v8277
        %v8279 = vrot.slane %v8019, %v8278
        %v8280 = vlaneseq
        %v8281 = vshrl.u32 %v8280, 7
        %v8282 = vsub.s32 1, %v8281
        %v8283 = vrot.slane %v8020, %v8282
        %v8284 = vlaneseq
        %v8285 = vshrl.u32 %v8284, 7
        %v8286 = vsub.s32 1, %v8285
        %v8287 = vrot.slane %v8021, %v8286
        %v8288 = vlaneseq
        %v8289 = vshrl.u32 %v8288, 7
        %v8290 = vsub.s32 1, %v8289
        %v8291 = vrot.slane %v8022, %v8290
        %v8292 = vlaneseq
        %v8293 = vshrl.u32 %v8292, 7
        %v8294 = vsub.s32 1, %v8293
        %v8295 = vrot.slane %v8023, %v8294
        %v8296 = vlaneseq
        %v8297 = vshrl.u32 %v8296, 7
        %v8298 = vsub.s32 1, %v8297
        %v8299 = vrot.slane %v8024, %v8298
        %v8300 = vlaneseq
        %v8301 = vshrl.u32 %v8300, 7
        %v8302 = vsub.s32 1, %v8301
        %v8303 = vrot.slane %v8025, %v8302
        %v8304 = vlaneseq
        %v8305 = vshrl.u32 %v8304, 7
        %v8306 = vsub.s32 1, %v8305
        %v8307 = vrot.slane %v8026, %v8306
        %v8308 = vlaneseq
        %v8309 = vshrl.u32 %v8308, 7
        %v8310 = vsub.s32 1, %v8309
        %v8311 = vrot.slane %v8027, %v8310
        %v8312 = vlaneseq
        %v8313 = vshrl.u32 %v8312, 7
        %v8314 = vsub.s32 1, %v8313
        %v8315 = vrot.slane %v8028, %v8314
        %v8316 = vlaneseq
        %v8317 = vshrl.u32 %v8316, 7
        %v8318 = vsub.s32 1, %v8317
        %v8319 = vrot.slane %v8029, %v8318
        %v8320 = vlaneseq
        %v8321 = vshrl.u32 %v8320, 7
        %v8322 = vsub.s32 1, %v8321
        %v8323 = vrot.slane %v8030, %v8322
        %v8324 = vlaneseq
        %v8325 = vshrl.u32 %v8324, 7
        %v8326 = vsub.s32 1, %v8325
        %v8327 = vrot.slane %v8031, %v8326
        %v8328 = vlaneseq
        %v8329 = vshrl.u32 %v8328, 7
        %v8330 = vsub.s32 1, %v8329
        %v8331 = vrot.slane %v8032, %v8330
        %v8332 = vlaneseq
        %v8333 = vshrl.u32 %v8332, 7
        %v8334 = vsub.s32 1, %v8333
        %v8335 = vrot.slane %v8033, %v8334
        %v8336 = vlaneseq
        %v8337 = vshrl.u32 %v8336, 7
        %v8338 = vsub.s32 1, %v8337
        %v8339 = vrot.slane %v8034, %v8338
        %v8340 = vlaneseq
        %v8341 = vshrl.u32 %v8340, 7
        %v8342 = vsub.s32 1, %v8341
        %v8343 = vrot.slane %v8035, %v8342
        %v8344 = vlaneseq
        %v8345 = vshrl.u32 %v8344, 7
        %v8346 = vsub.s32 1, %v8345
        %v8347 = vrot.slane %v8036, %v8346
        %v8348 = vlaneseq
        %v8349 = vshrl.u32 %v8348, 7
        %v8350 = vsub.s32 1, %v8349
        %v8351 = vrot.slane %v8037, %v8350
        %v8352 = vlaneseq
        %v8353 = vshrl.u32 %v8352, 7
        %v8354 = vsub.s32 1, %v8353
        %v8355 = vrot.slane %v8038, %v8354
        %v8356 = vlaneseq
        %v8357 = vshrl.u32 %v8356, 7
        %v8358 = vsub.s32 1, %v8357
        %v8359 = vrot.slane %v8039, %v8358
        %v8360 = vsel %vm2053, %v8111, %v8107
        %v8361 = vsel %vm1470, %v8115, %v8360
        %v8362 = vsel %vm1472, %v8119, %v8361
        %v8363 = vsel %vm1474, %v8123, %v8362
        %v8364 = vsel %vm1476, %v8127, %v8363
        %v8365 = vsel %vm1478, %v8131, %v8364
        %v8366 = vsel %vm1480, %v8135, %v8365
        %v8367 = vsel %vm2053, %v8143, %v8139
        %v8368 = vsel %vm1470, %v8147, %v8367
        %v8369 = vsel %vm1472, %v8151, %v8368
        %v8370 = vsel %vm1474, %v8155, %v8369
        %v8371 = vsel %vm1476, %v8159, %v8370
        %v8372 = vsel %vm1478, %v8163, %v8371
        %v8373 = vsel %vm1480, %v8167, %v8372
        %v8374 = vsel %vm2053, %v8175, %v8171
        %v8375 = vsel %vm1470, %v8179, %v8374
        %v8376 = vsel %vm1472, %v8183, %v8375
        %v8377 = vsel %vm1474, %v8187, %v8376
        %v8378 = vsel %vm1476, %v8191, %v8377
        %v8379 = vsel %vm1478, %v8195, %v8378
        %v8380 = vsel %vm1480, %v8199, %v8379
        %v8381 = vsel %vm2053, %v8207, %v8203
        %v8382 = vsel %vm1470, %v8211, %v8381
        %v8383 = vsel %vm1472, %v8215, %v8382
        %v8384 = vsel %vm1474, %v8219, %v8383
        %v8385 = vsel %vm1476, %v8223, %v8384
        %v8386 = vsel %vm1478, %v8227, %v8385
        %v8387 = vsel %vm1480, %v8231, %v8386
        %v8388 = vsel %vm2053, %v8239, %v8235
        %v8389 = vsel %vm1470, %v8243, %v8388
        %v8390 = vsel %vm1472, %v8247, %v8389
        %v8391 = vsel %vm1474, %v8251, %v8390
        %v8392 = vsel %vm1476, %v8255, %v8391
        %v8393 = vsel %vm1478, %v8259, %v8392
        %v8394 = vsel %vm1480, %v8263, %v8393
        %v8395 = vsel %vm2053, %v8271, %v8267
        %v8396 = vsel %vm1470, %v8275, %v8395
        %v8397 = vsel %vm1472, %v8279, %v8396
        %v8398 = vsel %vm1474, %v8283, %v8397
        %v8399 = vsel %vm1476, %v8287, %v8398
        %v8400 = vsel %vm1478, %v8291, %v8399
        %v8401 = vsel %vm1480, %v8295, %v8400
        %v8402 = vsel %vm2053, %v8303, %v8299
        %v8403 = vsel %vm1470, %v8307, %v8402
        %v8404 = vsel %vm1472, %v8311, %v8403
        %v8405 = vsel %vm1474, %v8315, %v8404
        %v8406 = vsel %vm1476, %v8319, %v8405
        %v8407 = vsel %vm1478, %v8323, %v8406
        %v8408 = vsel %vm1480, %v8327, %v8407
        %v8409 = vsel %vm2053, %v8335, %v8331
        %v8410 = vsel %vm1470, %v8339, %v8409
        %v8411 = vsel %vm1472, %v8343, %v8410
        %v8412 = vsel %vm1474, %v8347, %v8411
        %v8413 = vsel %vm1476, %v8351, %v8412
        %v8414 = vsel %vm1478, %v8355, %v8413
        %v8415 = vsel %vm1480, %v8359, %v8414
        %v8424 = vadd.f32 %v7934, %v8366
        %v8425 = vadd.f32 %v7935, %v8373
        %v8426 = vadd.f32 %v7936, %v8380
        %v8427 = vadd.f32 %v7937, %v8387
        %v8428 = vadd.f32 %v7938, %v8394
        %v8429 = vadd.f32 %v7939, %v8401
        %v8430 = vadd.f32 %v7940, %v8408
        %v8431 = vadd.f32 %v7941, %v8415
        %v8433 = vlaneseq
        %v8434 = vshrl.u32 %v8433, 7
        %v8435 = vsub.s32 0, %v8434
        %v8436 = vrot.slane %v4727, %v8435
        %v8438 = vadd.f32 %v8424, %v8436
        %v8439 = vadd.f32 %v8425, %v8436
        %v8440 = vadd.f32 %v8426, %v8436
        %v8441 = vadd.f32 %v8427, %v8436
        %v8442 = vadd.f32 %v8428, %v8436
        %v8443 = vadd.f32 %v8429, %v8436
        %v8444 = vadd.f32 %v8430, %v8436
        %v8445 = vadd.f32 %v8431, %v8436
        %v8446 = vpack.c.bf16 %v8439, %v8438
        %v8447 = vpack.c.bf16 %v8441, %v8440
        %v8448 = vpack.c.bf16 %v8443, %v8442
        %v8449 = vpack.c.bf16 %v8445, %v8444
        %v8450 = vld [vmem:[%s9] sm:$0xf]
        %v8451 = vld [vmem:[%s9 + $0x4] sm:$0xf]
        %v8452 = vld [vmem:[%s9 + $0x8] sm:$0xf]
        %v8453 = vld [vmem:[%s9 + $0xc] sm:$0xf]
        %v8454 = vld [vmem:[%s10] sm:$0x1]
        %v8456 = vlaneseq
        %v8457 = vshrl.u32 %v8456, 7
        %v8458 = vsub.s32 0, %v8457
        %v8459 = vrot.slane %v8454, %v8458
        %v8465 = vunpack.c.l.b16 %v8450
        %v8466 = vunpack.c.l.b16 %v8451
        %v8467 = vunpack.c.l.b16 %v8452
        %v8468 = vunpack.c.l.b16 %v8453
        %v8469 = vpack.c.b16 %v8466, %v8465
        %v8470 = vpack.c.b16 %v8468, %v8467
        %v8474 = vsel %vm4295, %v8446, 0
        %v8477 = vsel %vm4295, %v8447, 0
        %v8480 = vsel %vm4295, %v8448, 0
        %v8483 = vsel %vm4295, %v8449, 0
        %8485 = vmatprep.subr.bf16.mxu0 0
        %8486 = vmatpush1.bf16.msra.mxu0 %v8469
        %8487 = vmatprep.subr.bf16.mxu0 0
        %8488 = vmatpush1.bf16.msra.mxu0 %v8470
        %8489 = vmatprep.subr.bf16.mxu0 0
        %8490 = vmatpush1.bf16.msra.mxu0 0
        %8491 = vmatprep.subr.bf16.mxu0 0
        %8492 = vmatpush1.bf16.msra.mxu0 0
        %8493 = vmatprep.subr.bf16.mxu0 0
        %8494 = vmatpush1.bf16.msra.mxu0 0
        %8495 = vmatprep.subr.bf16.mxu0 0
        %8496 = vmatpush1.bf16.msra.mxu0 0
        %8497 = vmatprep.subr.bf16.mxu0 0
        %8498 = vmatpush1.bf16.msra.mxu0 0
        %8499 = vmatprep.subr.bf16.mxu0 0
        %8500 = vmatpush1.bf16.msra.mxu0 0
        %8501 = vmatprep.subr.bf16.mxu0 0
        %8502 = vmatpush1.bf16.msra.mxu0 0
        %8503 = vmatprep.subr.bf16.mxu0 0
        %8504 = vmatpush1.bf16.msra.mxu0 0
        %8505 = vmatprep.subr.bf16.mxu0 0
        %8506 = vmatpush1.bf16.msra.mxu0 0
        %8507 = vmatprep.subr.bf16.mxu0 0
        %8508 = vmatpush1.bf16.msra.mxu0 0
        %8509 = vmatprep.subr.bf16.mxu0 0
        %8510 = vmatpush1.bf16.msra.mxu0 0
        %8511 = vmatprep.subr.bf16.mxu0 0
        %8512 = vmatpush1.bf16.msra.mxu0 0
        %8513 = vmatprep.subr.bf16.mxu0 0
        %8514 = vmatpush1.bf16.msra.mxu0 0
        %8515 = vmatprep.subr.bf16.mxu0 0
        %8516 = vmatpush1.bf16.msra.mxu0 0
        %8517 = vmatprep.mubr.bf16.mxu0 0
        %8518 = vmatmul.mubr.bf16.gmra.mrb[0].mxu0 %v8474
        %v8519 = vpop.f32.mrb[0].mxu0
        %v8520 = vadd.f32 %v8459, %v8519
        %v8521 = vpop.f32.mrb[0].mxu0
        %v8522 = vpop.f32.mrb[0].mxu0
        %v8523 = vadd.f32 %v8459, %v8522
        %v8524 = vpop.f32.mrb[0].mxu0
        %8525 = vmatprep.mubr.bf16.mxu0 0
        %8526 = vmatmul.mubr.bf16.gmra.mrb[0].mxu0 %v8477
        %v8527 = vpop.f32.mrb[0].mxu0
        %v8528 = vadd.f32 %v8459, %v8527
        %v8529 = vpop.f32.mrb[0].mxu0
        %v8530 = vpop.f32.mrb[0].mxu0
        %v8531 = vadd.f32 %v8459, %v8530
        %v8532 = vpop.f32.mrb[0].mxu0
        %8533 = vmatprep.mubr.bf16.mxu0 0
        %8534 = vmatmul.mubr.bf16.gmra.mrb[0].mxu0 %v8480
        %v8535 = vpop.f32.mrb[0].mxu0
        %v8536 = vadd.f32 %v8459, %v8535
        %v8537 = vpop.f32.mrb[0].mxu0
        %v8538 = vpop.f32.mrb[0].mxu0
        %v8539 = vadd.f32 %v8459, %v8538
        %v8540 = vpop.f32.mrb[0].mxu0
        %8541 = vmatprep.mubr.bf16.mxu0 0
        %8542 = vmatmul.mubr.bf16.gmra.mrb[0].mxu0 %v8483
        %v8543 = vpop.f32.mrb[0].mxu0
        %v8544 = vadd.f32 %v8459, %v8543
        %v8545 = vpop.f32.mrb[0].mxu0
        %v8546 = vpop.f32.mrb[0].mxu0
        %v8547 = vadd.f32 %v8459, %v8546
        %v8548 = vpop.f32.mrb[0].mxu0
        %8549 = vdwg.mxu0
        %v8550 = vmax.f32 %v8520, 0.0
        %v8551 = vmax.f32 %v8523, 0.0
        %v8552 = vmax.f32 %v8528, 0.0
        %v8553 = vmax.f32 %v8531, 0.0
        %v8554 = vmax.f32 %v8536, 0.0
        %v8555 = vmax.f32 %v8539, 0.0
        %v8556 = vmax.f32 %v8544, 0.0
        %v8557 = vmax.f32 %v8547, 0.0
        %v8558 = vpack.c.bf16 %v4373, %v4373
        %v8559 = vpack.c.bf16 %v4374, %v4374
        %v8560 = vpack.c.bf16 %v4375, %v4375
        %v8561 = vpack.c.bf16 %v4376, %v4376
        %v8562 = vpack.c.bf16 %v4377, %v4377
        %v8563 = vpack.c.bf16 %v4378, %v4378
        %v8564 = vpack.c.bf16 %v4379, %v4379
        %v8565 = vpack.c.bf16 %v4380, %v4380
        %vm8566 = vcmask 257024
        %8567 = vst.msk [vmem:[%s473] sm:$0xf] %vm8566, %v8558
        %8568 = vst.msk [vmem:[%s473 + $0x4] sm:$0xf] %vm8566, %v8559
        %8569 = vst.msk [vmem:[%s473 + $0x8] sm:$0xf] %vm8566, %v8560
        %8570 = vst.msk [vmem:[%s473 + $0xc] sm:$0xf] %vm8566, %v8561
        %8571 = vst.msk [vmem:[%s473 + $0x10] sm:$0xf] %vm8566, %v8562
        %8572 = vst.msk [vmem:[%s473 + $0x14] sm:$0xf] %vm8566, %v8563
        %8573 = vst.msk [vmem:[%s473 + $0x18] sm:$0xf] %vm8566, %v8564
        %8574 = vst.msk [vmem:[%s473 + $0x1c] sm:$0xf] %vm8566, %v8565
        %v8575 = vpack.c.bf16 %v8550, %v8550
        %v8576 = vpack.c.bf16 %v8551, %v8551
        %v8577 = vpack.c.bf16 %v8552, %v8552
        %v8578 = vpack.c.bf16 %v8553, %v8553
        %v8579 = vpack.c.bf16 %v8554, %v8554
        %v8580 = vpack.c.bf16 %v8555, %v8555
        %v8581 = vpack.c.bf16 %v8556, %v8556
        %v8582 = vpack.c.bf16 %v8557, %v8557
        %s8583 = scalar_lea.vmem %s473, 32 [#allocation13]
        %8584 = vst.msk [vmem:[%s8583] sm:$0xf] %vm8566, %v8575
        %8585 = vst.msk [vmem:[%s8583 + $0x4] sm:$0xf] %vm8566, %v8576
        %8586 = vst.msk [vmem:[%s8583 + $0x8] sm:$0xf] %vm8566, %v8577
        %8587 = vst.msk [vmem:[%s8583 + $0xc] sm:$0xf] %vm8566, %v8578
        %8588 = vst.msk [vmem:[%s8583 + $0x10] sm:$0xf] %vm8566, %v8579
        %8589 = vst.msk [vmem:[%s8583 + $0x14] sm:$0xf] %vm8566, %v8580
        %8590 = vst.msk [vmem:[%s8583 + $0x18] sm:$0xf] %vm8566, %v8581
        %8591 = vst.msk [vmem:[%s8583 + $0x1c] sm:$0xf] %vm8566, %v8582
        %s8592 = sand.u32 %s275, 1
        %s8593 = scalar_lea.sflag [#allocation4], %s8592
        %s8594 = sand.u32 %s275, 1
        %s8595 = smul.addr %s8594, 64
        %s8596 = scalar_lea.vmem [#allocation13], %s8595
        // Predicated region
        $region89: #{tpu_custom_call.1} parent=63 // pred_check
          %p8597 = pneg %p285
        $region90: #{tpu_custom_call.1} parent=63 // pred_check_branch
          %8599 = sbr.rel (%p8597) target = $region92
        $region91: #{tpu_custom_call.1} parent=63 // pred_region
          %s8601 = ssub.s32 1024, 1024
          %8602 = vsyncadd %s8593, %s8601
          %s8603 = smul.addr %s31, 16
          %s8604 = smul.addr %s8603, 64
          %s8605 = scalar_lea.hbm %s11, %s8604
          %s8606 = sshll.u32 %s8596, 4
          %s8607 = int_to_ptr.vmem [resolvable:$true] %s8606
          %8612 = dma.vmem_to_hbm [thread:$0]  %s8607, 1024, %s8605, %s8593, 64, 64, 4
        $region92: #{tpu_custom_call.1} parent=63 // pred_fallthru
          _
      $region64: #{tpu_custom_call.1} parent=5 // pred_fallthru
        _
      %p8613 = scmp.le.s32.totalorder 2, %s26
      // Predicated region
      $region93: #{tpu_custom_call.1} parent=5 // pred_check
        %p8614 = pneg %p8613
      $region94: #{tpu_custom_call.1} parent=5 // pred_check_branch
        %8616 = sbr.rel (%p8614) target = $region96
      $region95: #{tpu_custom_call.1} parent=5 // pred_region
        %s8617 = ssub.s32 %s26, 2
        // Predicated region
        $region97: #{tpu_custom_call.1} parent=95 // pred_check
          %p8618 = pneg %p291
        $region98: #{tpu_custom_call.1} parent=95 // pred_check_branch
          %8620 = sbr.rel (%p8618) target = $region100
        $region99: #{tpu_custom_call.1} parent=95 // pred_region
          %s8621 = sand.u32 %s276, 1
          %s8622 = scalar_lea.sflag [#allocation4], %s8621
          %s8623 = sand.u32 %s276, 1
          %s8624 = smul.addr %s8623, 64
          %s8625 = scalar_lea.vmem [#allocation13], %s8624
          %8626 = dma.done %s8622, 1024
        $region100: #{tpu_custom_call.1} parent=95 // pred_fallthru
          _
      $region96: #{tpu_custom_call.1} parent=5 // pred_fallthru
        _
    $region6: #{tpu_custom_call.1} parent=1 // loop_footer
      %s30 = sadd.s32 1, %s26
    $region7: #{tpu_custom_call.1} parent=1 // loop_footer_branch
      %25 = sbr.rel target = $region3
    $region8: #{tpu_custom_call.1} parent=1 // loop_exit
      _
    %8627 = vsyncpa [#allocation3], 1
    %s8628 = scalar_lea.sflag [#allocation3], 1
    %8629 = vsyncpa %s8628, 1
    %8630 = vsyncpa [#allocation6], 1
    %8631 = vsyncpa [#allocation9], 1
    %8632 = vsyncpa [#allocation12], 1
    %8633 = vsyncpa [#allocation4], 1
    %s8634 = scalar_lea.sflag [#allocation4], 1
    %8635 = vsyncpa %s8634, 1

</llo_original>
